<compile_context>
chip_gen: v5e
topology: v5e:2x2
jax: 0.10.0
libtpu: 0.0.40
codegen_flags: <defaults>
</compile_context>

<pallas_src>
import math
from functools import partial

import jax
import jax.numpy as jnp
from jax.experimental import pallas as pl
from jax.experimental.pallas import tpu as pltpu


# ------------------------------------------------------------------ in-kernel helpers

def _mm(a_f32, w_bf16):
    """MXU matmul: f32 activation cast to bf16 once, bf16 weight, f32 accum."""
    return jnp.dot(a_f32.astype(jnp.bfloat16), w_bf16,
                   preferred_element_type=jnp.float32)


def _layernorm(x, g, b):
    mu = jnp.mean(x, axis=-1, keepdims=True)
    var = jnp.mean((x - mu) ** 2, axis=-1, keepdims=True)
    return (x - mu) * jax.lax.rsqrt(var + 1e-5) * g + b


def _mha(q2d, k2d, v2d, wo_bf16, keep_masks, *, B, Sq, Sk, H, dk, scale):
    """Multi-head attention with W_o folded into per-head MXU accumulates.

    q2d: (B*Sq, D) f32, k2d/v2d: (B*Sk, D) f32, wo_bf16: (D, D) bf16.
    keep_masks: list of B boolean arrays broadcastable to (Sq, Sk);
                False entries are masked_fill'ed to -1e9 before softmax.
    Returns (B*Sq, D) f32 (W_o applied, bias NOT added).
    """
    q = q2d.astype(jnp.bfloat16)        # cast once, not per head slice
    k = k2d.astype(jnp.bfloat16)
    v = v2d.astype(jnp.bfloat16)
    outs = []
    for b in range(B):                  # B, H small & static -> unrolled
        qb = q[b * Sq:(b + 1) * Sq, :]
        kb = k[b * Sk:(b + 1) * Sk, :]
        vb = v[b * Sk:(b + 1) * Sk, :]
        kmask = keep_masks[b]
        acc = None
        for h in range(H):
            c0 = h * dk
            # q_h @ k_h^T without an explicit transpose op
            s = jax.lax.dot_general(qb[:, c0:c0 + dk], kb[:, c0:c0 + dk],
                                    (((1,), (1,)), ((), ())),
                                    preferred_element_type=jnp.float32)
            s = jnp.where(kmask, s * scale, -1e9)        # masked_fill semantics
            s = s - jnp.max(s, axis=-1, keepdims=True)
            p = jnp.exp(s)
            p = p / jnp.sum(p, axis=-1, keepdims=True)   # exact division
            oh = jnp.dot(p.astype(jnp.bfloat16), vb[:, c0:c0 + dk],
                         preferred_element_type=jnp.float32)
            # fold combine_heads + W_o: accumulate through wo rows of this head
            contrib = jnp.dot(oh.astype(jnp.bfloat16), wo_bf16[c0:c0 + dk, :],
                              preferred_element_type=jnp.float32)
            acc = contrib if acc is None else acc + contrib
        outs.append(acc)
    return jnp.concatenate(outs, axis=0)   # sublane-axis stack, (B*Sq, D)


# ------------------------------------------------------------------ fused stack kernels

def _encoder_stack_kernel(x_ref, keep_ref,
                          wqkv_ref, bqkv_ref, wo_ref, bo_ref,
                          w1_ref, b1_ref, w2_ref, b2_ref,
                          g1_ref, be1_ref, g2_ref, be2_ref,
                          o_ref, *, H):
    l = pl.program_id(0)
    B, S, D = x_ref.shape
    dk = D // H
    scale = 1.0 / math.sqrt(dk)

    # output block index is constant over the layer grid -> resident in VMEM;
    # use it as the layer-to-layer activation carry.
    @pl.when(l == 0)
    def _():
        o_ref[...] = x_ref[...]

    x = o_ref[...].reshape(B * S, D)                    # (B*S, D) f32

    wqkv = wqkv_ref[0]; bqkv = bqkv_ref[0]
    wo = wo_ref[0];     bo = bo_ref[0]
    w1 = w1_ref[0];     b1 = b1_ref[0]
    w2 = w2_ref[0];     b2 = b2_ref[0]
    g1 = g1_ref[0];     be1 = be1_ref[0]
    g2 = g2_ref[0];     be2 = be2_ref[0]

    qkv = _mm(x, wqkv) + bqkv                           # (B*S, 3D)
    q, k, v = qkv[:, :D], qkv[:, D:2 * D], qkv[:, 2 * D:]

    key_keep = [keep_ref[b] > 0.5 for b in range(B)]    # (1, S) bool each
    attn = _mha(q, k, v, wo, key_keep,
                B=B, Sq=S, Sk=S, H=H, dk=dk, scale=scale) + bo

    x1 = _layernorm(x + attn, g1, be1)

    h1 = jnp.maximum(_mm(x1, w1) + b1, 0.0)
    ff = _mm(h1, w2) + b2

    # reference quirk: norm2(ff_output + dropout(ff_output)) -> ff + ff
    y = _layernorm(ff + ff, g2, be2)
    o_ref[...] = y.reshape(B, S, D)


def _decoder_stack_kernel(x_ref, enc_ref, skeep_ref, tkeep_ref,
                          swqkv_ref, sbqkv_ref, swo_ref, sbo_ref,
                          cwq_ref, cbq_ref, cwkv_ref, cbkv_ref, cwo_ref, cbo_ref,
                          w1_ref, b1_ref, w2_ref, b2_ref,
                          g1_ref, be1_ref, g2_ref, be2_ref, g3_ref, be3_ref,
                          wfc_ref, bfc_ref,
                          logits_ref, x_scr, *, H):
    l = pl.program_id(0)
    B, St, D = x_ref.shape
    Ss = enc_ref.shape[1]
    V = wfc_ref.shape[1]
    dk = D // H
    scale = 1.0 / math.sqrt(dk)

    # activation carry lives in VMEM scratch across the layer grid
    @pl.when(l == 0)
    def _():
        x_scr[...] = x_ref[...].reshape(B * St, D)

    x = x_scr[...]                                       # (B*St, D) f32
    enc = enc_ref[...].reshape(B * Ss, D)

    # masks rebuilt in-kernel (no dense (B,S,S) bias DMA)
    row = jax.lax.broadcasted_iota(jnp.int32, (St, St), 0)
    col = jax.lax.broadcasted_iota(jnp.int32, (St, St), 1)
    causal = col <= row
    src_keep = [skeep_ref[b] > 0.5 for b in range(B)]                # (1, Ss)
    # reference quirk: tgt padding mask is indexed by the QUERY position
    tgt_keep = [(tkeep_ref[b] > 0.5) & causal for b in range(B)]     # (St, St)

    swqkv = swqkv_ref[0]; sbqkv = sbqkv_ref[0]
    swo = swo_ref[0];     sbo = sbo_ref[0]
    cwq = cwq_ref[0];     cbq = cbq_ref[0]
    cwkv = cwkv_ref[0];   cbkv = cbkv_ref[0]
    cwo = cwo_ref[0];     cbo = cbo_ref[0]
    w1 = w1_ref[0];       b1 = b1_ref[0]
    w2 = w2_ref[0];       b2 = b2_ref[0]
    g1 = g1_ref[0];  be1 = be1_ref[0]
    g2 = g2_ref[0];  be2 = be2_ref[0]
    g3 = g3_ref[0];  be3 = be3_ref[0]

    # --- masked self-attention ---
    qkv = _mm(x, swqkv) + sbqkv
    q, k, v = qkv[:, :D], qkv[:, D:2 * D], qkv[:, 2 * D:]
    attn = _mha(q, k, v, swo, tgt_keep,
                B=B, Sq=St, Sk=St, H=H, dk=dk, scale=scale) + sbo
    x = _layernorm(x + attn, g1, be1)

    # --- cross-attention ---
    qc = _mm(x, cwq) + cbq
    kv = _mm(enc, cwkv) + cbkv
    kc, vc = kv[:, :D], kv[:, D:]
    attn = _mha(qc, kc, vc, cwo, src_keep,
                B=B, Sq=St, Sk=Ss, H=H, dk=dk, scale=scale) + cbo
    x = _layernorm(x + attn, g2, be2)

    # --- feed-forward ---
    h1 = jnp.maximum(_mm(x, w1) + b1, 0.0)
    ff = _mm(h1, w2) + b2
    y = _layernorm(x + ff, g3, be3)

    x_scr[...] = y

    # final vocab projection folded into the last layer's grid step
    @pl.when(l == pl.num_programs(0) - 1)
    def _():
        logits = _mm(y, wfc_ref[...]) + bfc_ref[...]
        logits_ref[...] = logits.reshape(B, St, V)


# ------------------------------------------------------------------ index maps

def _const3(l):
    return (0, 0, 0)


def _const2(l):
    return (0, 0)


def _layer3(l):
    return (l, 0, 0)


# ------------------------------------------------------------------ pallas_call wrappers

def encoder_stack(ep, x, src_keep, num_heads):
    B, S, D = x.shape
    L = ep['wqkv'].shape[0]
    d_ff = ep['w1'].shape[2]
    kernel = partial(_encoder_stack_kernel, H=num_heads)
    return pl.pallas_call(
        kernel,
        out_shape=jax.ShapeDtypeStruct((B, S, D), jnp.float32),
        grid=(L,),
        in_specs=[
            pl.BlockSpec((B, S, D), _const3),        # x (loaded once)
            pl.BlockSpec((B, 1, S), _const3),        # src key-keep (f32)
            pl.BlockSpec((1, D, 3 * D), _layer3),    # wqkv (bf16, stacked)
            pl.BlockSpec((1, 1, 3 * D), _layer3),    # bqkv
            pl.BlockSpec((1, D, D), _layer3),        # wo (bf16)
            pl.BlockSpec((1, 1, D), _layer3),        # bo
            pl.BlockSpec((1, D, d_ff), _layer3),     # w1 (bf16)
            pl.BlockSpec((1, 1, d_ff), _layer3),     # b1
            pl.BlockSpec((1, d_ff, D), _layer3),     # w2 (bf16)
            pl.BlockSpec((1, 1, D), _layer3),        # b2
            pl.BlockSpec((1, 1, D), _layer3),        # gamma1
            pl.BlockSpec((1, 1, D), _layer3),        # beta1
            pl.BlockSpec((1, 1, D), _layer3),        # gamma2
            pl.BlockSpec((1, 1, D), _layer3),        # beta2
        ],
        out_specs=pl.BlockSpec((B, S, D), _const3),  # resident carry / output
        compiler_params=pltpu.CompilerParams(
            dimension_semantics=("arbitrary",),
            vmem_limit_bytes=32 * 1024 * 1024),
    )(x, src_keep, ep['wqkv'], ep['bqkv'], ep['wo'], ep['bo'],
      ep['w1'], ep['b1'], ep['w2'], ep['b2'],
      ep['g1'], ep['be1'], ep['g2'], ep['be2'])


def decoder_stack(dp, wfc, bfc, x, enc, src_keep, tgt_keep, num_heads):
    B, St, D = x.shape
    Ss = enc.shape[1]
    L = dp['swqkv'].shape[0]
    d_ff = dp['w1'].shape[2]
    V = wfc.shape[1]
    kernel = partial(_decoder_stack_kernel, H=num_heads)
    return pl.pallas_call(
        kernel,
        out_shape=jax.ShapeDtypeStruct((B, St, V), jnp.float32),
        grid=(L,),
        in_specs=[
            pl.BlockSpec((B, St, D), _const3),       # tgt embeddings
            pl.BlockSpec((B, Ss, D), _const3),       # encoder output
            pl.BlockSpec((B, 1, Ss), _const3),       # src key-keep
            pl.BlockSpec((B, St, 1), _const3),       # tgt query-keep
            pl.BlockSpec((1, D, 3 * D), _layer3),    # self wqkv
            pl.BlockSpec((1, 1, 3 * D), _layer3),
            pl.BlockSpec((1, D, D), _layer3),        # self wo
            pl.BlockSpec((1, 1, D), _layer3),
            pl.BlockSpec((1, D, D), _layer3),        # cross wq
            pl.BlockSpec((1, 1, D), _layer3),
            pl.BlockSpec((1, D, 2 * D), _layer3),    # cross wkv
            pl.BlockSpec((1, 1, 2 * D), _layer3),
            pl.BlockSpec((1, D, D), _layer3),        # cross wo
            pl.BlockSpec((1, 1, D), _layer3),
            pl.BlockSpec((1, D, d_ff), _layer3),     # w1
            pl.BlockSpec((1, 1, d_ff), _layer3),
            pl.BlockSpec((1, d_ff, D), _layer3),     # w2
            pl.BlockSpec((1, 1, D), _layer3),
            pl.BlockSpec((1, 1, D), _layer3),        # gamma1 / beta1
            pl.BlockSpec((1, 1, D), _layer3),
            pl.BlockSpec((1, 1, D), _layer3),        # gamma2 / beta2
            pl.BlockSpec((1, 1, D), _layer3),
            pl.BlockSpec((1, 1, D), _layer3),        # gamma3 / beta3
            pl.BlockSpec((1, 1, D), _layer3),
            pl.BlockSpec((D, V), _const2),           # final fc weight (bf16)
            pl.BlockSpec((1, V), _const2),           # final fc bias
        ],
        out_specs=pl.BlockSpec((B, St, V), _const3),
        scratch_shapes=[pltpu.VMEM((B * St, D), jnp.float32)],
        compiler_params=pltpu.CompilerParams(
            dimension_semantics=("arbitrary",),
            vmem_limit_bytes=32 * 1024 * 1024),
    )(x, enc, src_keep, tgt_keep,
      dp['swqkv'], dp['sbqkv'], dp['swo'], dp['sbo'],
      dp['cwq'], dp['cbq'], dp['cwkv'], dp['cbkv'], dp['cwo'], dp['cbo'],
      dp['w1'], dp['b1'], dp['w2'], dp['b2'],
      dp['g1'], dp['be1'], dp['g2'], dp['be2'], dp['g3'], dp['be3'],
      wfc, bfc)


# ------------------------------------------------------------------ one-time param prep (outside jit)

def _stack(layers, fn):
    return jnp.stack([fn(lp) for lp in layers], axis=0)


def _qkv_w(p):
    return jnp.concatenate([p['wq'][0], p['wk'][0], p['wv'][0]], axis=1)


def _qkv_b(p):
    return jnp.concatenate([p['wq'][1], p['wk'][1], p['wv'][1]])[None, :]


def prepare_params(params):
    """Fuse/stack/cast all weights ONCE, outside the jitted forward."""
    enc = params['enc_layers']
    dec = params['dec_layers']
    bf16 = jnp.bfloat16

    enc_prep = {
        'wqkv': _stack(enc, lambda lp: _qkv_w(lp['self_attn'])).astype(bf16),
        'bqkv': _stack(enc, lambda lp: _qkv_b(lp['self_attn'])),
        'wo':   _stack(enc, lambda lp: lp['self_attn']['wo'][0]).astype(bf16),
        'bo':   _stack(enc, lambda lp: lp['self_attn']['wo'][1][None, :]),
        'w1':   _stack(enc, lambda lp: lp['ff']['fc1'][0]).astype(bf16),
        'b1':   _stack(enc, lambda lp: lp['ff']['fc1'][1][None, :]),
        'w2':   _stack(enc, lambda lp: lp['ff']['fc2'][0]).astype(bf16),
        'b2':   _stack(enc, lambda lp: lp['ff']['fc2'][1][None, :]),
        'g1':   _stack(enc, lambda lp: lp['norm1'][0][None, :]),
        'be1':  _stack(enc, lambda lp: lp['norm1'][1][None, :]),
        'g2':   _stack(enc, lambda lp: lp['norm2'][0][None, :]),
        'be2':  _stack(enc, lambda lp: lp['norm2'][1][None, :]),
    }
    dec_prep = {
        'swqkv': _stack(dec, lambda lp: _qkv_w(lp['self_attn'])).astype(bf16),
        'sbqkv': _stack(dec, lambda lp: _qkv_b(lp['self_attn'])),
        'swo':   _stack(dec, lambda lp: lp['self_attn']['wo'][0]).astype(bf16),
        'sbo':   _stack(dec, lambda lp: lp['self_attn']['wo'][1][None, :]),
        'cwq':   _stack(dec, lambda lp: lp['cross_attn']['wq'][0]).astype(bf16),
        'cbq':   _stack(dec, lambda lp: lp['cross_attn']['wq'][1][None, :]),
        'cwkv':  _stack(dec, lambda lp: jnp.concatenate(
            [lp['cross_attn']['wk'][0], lp['cross_attn']['wv'][0]], axis=1)).astype(bf16),
        'cbkv':  _stack(dec, lambda lp: jnp.concatenate(
            [lp['cross_attn']['wk'][1], lp['cross_attn']['wv'][1]])[None, :]),
        'cwo':   _stack(dec, lambda lp: lp['cross_attn']['wo'][0]).astype(bf16),
        'cbo':   _stack(dec, lambda lp: lp['cross_attn']['wo'][1][None, :]),
        'w1':    _stack(dec, lambda lp: lp['ff']['fc1'][0]).astype(bf16),
        'b1':    _stack(dec, lambda lp: lp['ff']['fc1'][1][None, :]),
        'w2':    _stack(dec, lambda lp: lp['ff']['fc2'][0]).astype(bf16),
        'b2':    _stack(dec, lambda lp: lp['ff']['fc2'][1][None, :]),
        'g1':    _stack(dec, lambda lp: lp['norm1'][0][None, :]),
        'be1':   _stack(dec, lambda lp: lp['norm1'][1][None, :]),
        'g2':    _stack(dec, lambda lp: lp['norm2'][0][None, :]),
        'be2':   _stack(dec, lambda lp: lp['norm2'][1][None, :]),
        'g3':    _stack(dec, lambda lp: lp['norm3'][0][None, :]),
        'be3':   _stack(dec, lambda lp: lp['norm3'][1][None, :]),
    }
    return {
        'enc': enc_prep,
        'dec': dec_prep,
        'emb': params['enc_emb'],     # reference quirk: enc emb for src AND tgt
        'pe': params['pe'],
        'wfc': params['fc'][0].astype(bf16),
        'bfc': params['fc'][1][None, :],
    }


# ------------------------------------------------------------------ model glue

def transformer_forward(prep, src, tgt, num_heads):
    B, S_src = src.shape
    _, S_tgt = tgt.shape

    # TODO(synk): embedding gather + positional add kept as tiny XLA ops.
    emb = prep['emb']
    pe = prep['pe']
    src_emb = emb[src] + pe[None, :S_src, :]
    tgt_emb = emb[tgt] + pe[None, :S_tgt, :]
    # dropout is identity (eval semantics)

    # only the rank-1 keep vectors cross into the kernels; masks built in-kernel
    src_keep = (src != 0).astype(jnp.float32)[:, None, :]   # (B, 1, S_src)
    tgt_keep = (tgt != 0).astype(jnp.float32)[:, :, None]   # (B, S_tgt, 1)

    enc_out = encoder_stack(prep['enc'], src_emb, src_keep, num_heads)
    logits = decoder_stack(prep['dec'], prep['wfc'], prep['bfc'],
                           tgt_emb, enc_out, src_keep, tgt_keep, num_heads)
    return logits


# ------------------------------------------------------------------ params

def init_linear(key, d_in, d_out):
    k1, k2 = jax.random.split(key)
    bound = 1.0 / math.sqrt(d_in)
    w = jax.random.uniform(k1, (d_in, d_out), jnp.float32, -bound, bound)
    b = jax.random.uniform(k2, (d_out,), jnp.float32, -bound, bound)
    return w, b


def init_mha(key, d_model):
    ks = jax.random.split(key, 4)
    return {'wq': init_linear(ks[0], d_model, d_model),
            'wk': init_linear(ks[1], d_model, d_model),
            'wv': init_linear(ks[2], d_model, d_model),
            'wo': init_linear(ks[3], d_model, d_model)}


def init_layernorm(d_model):
    return (jnp.ones((d_model,), jnp.float32), jnp.zeros((d_model,), jnp.float32))


def init_enc_layer(key, d_model, d_ff):
    ks = jax.random.split(key, 3)
    return {'self_attn': init_mha(ks[0], d_model),
            'ff': {'fc1': init_linear(ks[1], d_model, d_ff),
                   'fc2': init_linear(ks[2], d_ff, d_model)},
            'norm1': init_layernorm(d_model),
            'norm2': init_layernorm(d_model)}


def init_dec_layer(key, d_model, d_ff):
    ks = jax.random.split(key, 4)
    return {'self_attn': init_mha(ks[0], d_model),
            'cross_attn': init_mha(ks[1], d_model),
            'ff': {'fc1': init_linear(ks[2], d_model, d_ff),
                   'fc2': init_linear(ks[3], d_ff, d_model)},
            'norm1': init_layernorm(d_model),
            'norm2': init_layernorm(d_model),
            'norm3': init_layernorm(d_model)}


def make_positional_encoding(max_len, d_model):
    position = jnp.arange(max_len, dtype=jnp.float32)[:, None]
    div_term = jnp.exp(jnp.arange(0, d_model, 2, dtype=jnp.float32)
                       * (-math.log(10000.0) / d_model))
    pe = jnp.zeros((max_len, d_model), jnp.float32)
    pe = pe.at[:, 0::2].set(jnp.sin(position * div_term))
    pe = pe.at[:, 1::2].set(jnp.cos(position * div_term))
    return pe


def init_transformer(key, src_vocab, tgt_vocab, d_model, num_layers, d_ff,
                     max_seq_length):
    ks = jax.random.split(key, 3 + 2 * num_layers)
    return {
        'enc_emb': jax.random.normal(ks[0], (src_vocab, d_model), jnp.float32),
        'dec_emb': jax.random.normal(ks[1], (tgt_vocab, d_model), jnp.float32),
        'pe': make_positional_encoding(max_seq_length, d_model),
        'enc_layers': [init_enc_layer(ks[3 + i], d_model, d_ff)
                       for i in range(num_layers)],
        'dec_layers': [init_dec_layer(ks[3 + num_layers + i], d_model, d_ff)
                       for i in range(num_layers)],
        'fc': init_linear(ks[2], d_model, tgt_vocab),
    }


# ------------------------------------------------------------------ main

if __name__ == "__main__":
    src_vocab = 16
    tgt_vocab = 16
    d_model = 32
    num_heads = 4
    num_layers = 2
    d_ff = 64
    max_seq_length = 16
    batch = 2
    seq = 8

    key = jax.random.PRNGKey(0)
    kp, ks, kt = jax.random.split(key, 3)

    params = init_transformer(kp, src_vocab, tgt_vocab, d_model, num_layers,
                              d_ff, max_seq_length)
    prep = prepare_params(params)          # one-time weight fuse/stack/cast

    # token ids in [0, vocab); zeros act as padding and exercise the masks
    src = jax.random.randint(ks, (batch, seq), 0, src_vocab, dtype=jnp.int32)
    tgt = jax.random.randint(kt, (batch, seq), 0, tgt_vocab, dtype=jnp.int32)

    fwd = jax.jit(transformer_forward, static_argnums=(3,))
    out = fwd(prep, src, tgt, num_heads)
    out = jax.block_until_ready(out)
    assert out.shape == (batch, seq, tgt_vocab)
    assert bool(jnp.all(jnp.isfinite(out)))
    print("KERNEL_OK")
</pallas_src>

<mosaic_0001>
module attributes {stable_mosaic.version = 11 : i64} {
  func.func @_encoder_stack_kernel(%arg0: i32, %arg1: memref<2x8x32xf32, #tpu.memory_space<vmem>>, %arg2: memref<2x1x8xf32, #tpu.memory_space<vmem>>, %arg3: memref<1x32x96xbf16, #tpu.memory_space<vmem>>, %arg4: memref<1x1x96xf32, #tpu.memory_space<vmem>>, %arg5: memref<1x32x32xbf16, #tpu.memory_space<vmem>>, %arg6: memref<1x1x32xf32, #tpu.memory_space<vmem>>, %arg7: memref<1x32x64xbf16, #tpu.memory_space<vmem>>, %arg8: memref<1x1x64xf32, #tpu.memory_space<vmem>>, %arg9: memref<1x64x32xbf16, #tpu.memory_space<vmem>>, %arg10: memref<1x1x32xf32, #tpu.memory_space<vmem>>, %arg11: memref<1x1x32xf32, #tpu.memory_space<vmem>>, %arg12: memref<1x1x32xf32, #tpu.memory_space<vmem>>, %arg13: memref<1x1x32xf32, #tpu.memory_space<vmem>>, %arg14: memref<1x1x32xf32, #tpu.memory_space<vmem>>, %arg15: memref<2x8x32xf32, #tpu.memory_space<vmem>>) attributes {dimension_semantics = [#tpu.dimension_semantics<arbitrary>], iteration_bounds = array<i64: 2>, scalar_prefetch = 0 : i64, scratch_operands = 0 : i64, tpu.core_type = #tpu.core_type<tc>, window_params = [{pipeline_mode = #tpu.pipeline_mode<synchronous>, transform_indices = @transform_0, window_bounds = array<i64: 2, 8, 32>}, {pipeline_mode = #tpu.pipeline_mode<synchronous>, transform_indices = @transform_1, window_bounds = array<i64: 2, 1, 8>}, {transform_indices = @transform_2, window_bounds = array<i64: 1, 32, 96>}, {transform_indices = @transform_3, window_bounds = array<i64: 1, 1, 96>}, {transform_indices = @transform_4, window_bounds = array<i64: 1, 32, 32>}, {transform_indices = @transform_5, window_bounds = array<i64: 1, 1, 32>}, {transform_indices = @transform_6, window_bounds = array<i64: 1, 32, 64>}, {transform_indices = @transform_7, window_bounds = array<i64: 1, 1, 64>}, {transform_indices = @transform_8, window_bounds = array<i64: 1, 64, 32>}, {transform_indices = @transform_9, window_bounds = array<i64: 1, 1, 32>}, {transform_indices = @transform_10, window_bounds = array<i64: 1, 1, 32>}, {transform_indices = @transform_11, window_bounds = array<i64: 1, 1, 32>}, {transform_indices = @transform_12, window_bounds = array<i64: 1, 1, 32>}, {transform_indices = @transform_13, window_bounds = array<i64: 1, 1, 32>}, {pipeline_mode = #tpu.pipeline_mode<synchronous>, transform_indices = @transform_14, window_bounds = array<i64: 2, 8, 32>}]} {
    %c0_i32 = arith.constant 0 : i32
    %0 = arith.cmpi eq, %arg0, %c0_i32 : i32
    %1 = arith.extui %0 : i1 to i32
    %c0_i32_0 = arith.constant 0 : i32
    %2 = arith.cmpi ne, %1, %c0_i32_0 : i32
    scf.if %2 {
      %c0_118 = arith.constant 0 : index
      %c0_119 = arith.constant 0 : index
      %c0_120 = arith.constant 0 : index
      %312 = vector.load %arg1[%c0_118, %c0_119, %c0_120] : memref<2x8x32xf32, #tpu.memory_space<vmem>>, vector<2x8x32xf32>
      %c0_121 = arith.constant 0 : index
      %c0_122 = arith.constant 0 : index
      %c0_123 = arith.constant 0 : index
      %313 = vector.load %arg15[%c0_121, %c0_122, %c0_123] : memref<2x8x32xf32, #tpu.memory_space<vmem>>, vector<2x8x32xf32>
      tpu.vector_store %arg15[%c0_121, %c0_122, %c0_123], %312 {strides = array<i32>} : memref<2x8x32xf32, #tpu.memory_space<vmem>>, vector<2x8x32xf32>,
    } else {
    }
    %c0 = arith.constant 0 : index
    %c0_1 = arith.constant 0 : index
    %c0_2 = arith.constant 0 : index
    %3 = vector.load %arg15[%c0, %c0_1, %c0_2] : memref<2x8x32xf32, #tpu.memory_space<vmem>>, vector<2x8x32xf32>
    %4 = vector.shape_cast %3 : vector<2x8x32xf32> to vector<16x32xf32>
    %c0_3 = arith.constant 0 : index
    %c0_4 = arith.constant 0 : index
    %c0_5 = arith.constant 0 : index
    %5 = vector.load %arg3[%c0_3, %c0_4, %c0_5] : memref<1x32x96xbf16, #tpu.memory_space<vmem>>, vector<1x32x96xbf16>
    %6 = vector.shape_cast %5 : vector<1x32x96xbf16> to vector<32x96xbf16>
    %c0_6 = arith.constant 0 : index
    %c0_7 = arith.constant 0 : index
    %c0_8 = arith.constant 0 : index
    %7 = vector.load %arg4[%c0_6, %c0_7, %c0_8] : memref<1x1x96xf32, #tpu.memory_space<vmem>>, vector<1x1x96xf32>
    %8 = vector.shape_cast %7 : vector<1x1x96xf32> to vector<1x96xf32>
    %c0_9 = arith.constant 0 : index
    %c0_10 = arith.constant 0 : index
    %c0_11 = arith.constant 0 : index
    %9 = vector.load %arg5[%c0_9, %c0_10, %c0_11] : memref<1x32x32xbf16, #tpu.memory_space<vmem>>, vector<1x32x32xbf16>
    %10 = vector.shape_cast %9 : vector<1x32x32xbf16> to vector<32x32xbf16>
    %c0_12 = arith.constant 0 : index
    %c0_13 = arith.constant 0 : index
    %c0_14 = arith.constant 0 : index
    %11 = vector.load %arg6[%c0_12, %c0_13, %c0_14] : memref<1x1x32xf32, #tpu.memory_space<vmem>>, vector<1x1x32xf32>
    %12 = vector.shape_cast %11 : vector<1x1x32xf32> to vector<1x32xf32>
    %c0_15 = arith.constant 0 : index
    %c0_16 = arith.constant 0 : index
    %c0_17 = arith.constant 0 : index
    %13 = vector.load %arg7[%c0_15, %c0_16, %c0_17] : memref<1x32x64xbf16, #tpu.memory_space<vmem>>, vector<1x32x64xbf16>
    %14 = vector.shape_cast %13 : vector<1x32x64xbf16> to vector<32x64xbf16>
    %c0_18 = arith.constant 0 : index
    %c0_19 = arith.constant 0 : index
    %c0_20 = arith.constant 0 : index
    %15 = vector.load %arg8[%c0_18, %c0_19, %c0_20] : memref<1x1x64xf32, #tpu.memory_space<vmem>>, vector<1x1x64xf32>
    %16 = vector.shape_cast %15 : vector<1x1x64xf32> to vector<1x64xf32>
    %c0_21 = arith.constant 0 : index
    %c0_22 = arith.constant 0 : index
    %c0_23 = arith.constant 0 : index
    %17 = vector.load %arg9[%c0_21, %c0_22, %c0_23] : memref<1x64x32xbf16, #tpu.memory_space<vmem>>, vector<1x64x32xbf16>
    %18 = vector.shape_cast %17 : vector<1x64x32xbf16> to vector<64x32xbf16>
    %c0_24 = arith.constant 0 : index
    %c0_25 = arith.constant 0 : index
    %c0_26 = arith.constant 0 : index
    %19 = vector.load %arg10[%c0_24, %c0_25, %c0_26] : memref<1x1x32xf32, #tpu.memory_space<vmem>>, vector<1x1x32xf32>
    %20 = vector.shape_cast %19 : vector<1x1x32xf32> to vector<1x32xf32>
    %c0_27 = arith.constant 0 : index
    %c0_28 = arith.constant 0 : index
    %c0_29 = arith.constant 0 : index
    %21 = vector.load %arg11[%c0_27, %c0_28, %c0_29] : memref<1x1x32xf32, #tpu.memory_space<vmem>>, vector<1x1x32xf32>
    %22 = vector.shape_cast %21 : vector<1x1x32xf32> to vector<1x32xf32>
    %c0_30 = arith.constant 0 : index
    %c0_31 = arith.constant 0 : index
    %c0_32 = arith.constant 0 : index
    %23 = vector.load %arg12[%c0_30, %c0_31, %c0_32] : memref<1x1x32xf32, #tpu.memory_space<vmem>>, vector<1x1x32xf32>
    %24 = vector.shape_cast %23 : vector<1x1x32xf32> to vector<1x32xf32>
    %c0_33 = arith.constant 0 : index
    %c0_34 = arith.constant 0 : index
    %c0_35 = arith.constant 0 : index
    %25 = vector.load %arg13[%c0_33, %c0_34, %c0_35] : memref<1x1x32xf32, #tpu.memory_space<vmem>>, vector<1x1x32xf32>
    %26 = vector.shape_cast %25 : vector<1x1x32xf32> to vector<1x32xf32>
    %c0_36 = arith.constant 0 : index
    %c0_37 = arith.constant 0 : index
    %c0_38 = arith.constant 0 : index
    %27 = vector.load %arg14[%c0_36, %c0_37, %c0_38] : memref<1x1x32xf32, #tpu.memory_space<vmem>>, vector<1x1x32xf32>
    %28 = vector.shape_cast %27 : vector<1x1x32xf32> to vector<1x32xf32>
    %29 = arith.truncf %4 : vector<16x32xf32> to vector<16x32xbf16>
    %cst = arith.constant dense<0.000000e+00> : vector<16x96xf32>
    %30 = tpu.matmul %29, %6, %cst {dimension_numbers = #tpu.dot_dimension_numbers<[1], [0], [0], [1], [0, 0, 1, 1], [], []>} : vector<16x32xbf16>, vector<32x96xbf16>, vector<16x96xf32> -> vector<16x96xf32>
    %31 = vector.broadcast %8 : vector<1x96xf32> to vector<16x96xf32>
    %32 = arith.addf %30, %31 : vector<16x96xf32>
    %33 = vector.extract_strided_slice %32 {offsets = [0, 0], sizes = [16, 32], strides = [1, 1]} : vector<16x96xf32> to vector<16x32xf32>
    %34 = vector.extract_strided_slice %32 {offsets = [0, 32], sizes = [16, 32], strides = [1, 1]} : vector<16x96xf32> to vector<16x32xf32>
    %35 = vector.extract_strided_slice %32 {offsets = [0, 64], sizes = [16, 32], strides = [1, 1]} : vector<16x96xf32> to vector<16x32xf32>
    %c0_39 = arith.constant 0 : index
    %c0_40 = arith.constant 0 : index
    %c0_41 = arith.constant 0 : index
    %36 = vector.load %arg2[%c0_39, %c0_40, %c0_41] : memref<2x1x8xf32, #tpu.memory_space<vmem>>, vector<1x1x8xf32>
    %37 = vector.shape_cast %36 : vector<1x1x8xf32> to vector<1x8xf32>
    %cst_42 = arith.constant 5.000000e-01 : f32
    %38 = vector.broadcast %cst_42 : f32 to vector<1x8xf32>
    %39 = arith.cmpf ogt, %37, %38 : vector<1x8xf32>
    %c1 = arith.constant 1 : index
    %c0_43 = arith.constant 0 : index
    %c0_44 = arith.constant 0 : index
    %40 = vector.load %arg2[%c1, %c0_43, %c0_44] : memref<2x1x8xf32, #tpu.memory_space<vmem>>, vector<1x1x8xf32>
    %41 = vector.shape_cast %40 : vector<1x1x8xf32> to vector<1x8xf32>
    %cst_45 = arith.constant 5.000000e-01 : f32
    %42 = vector.broadcast %cst_45 : f32 to vector<1x8xf32>
    %43 = arith.cmpf ogt, %41, %42 : vector<1x8xf32>
    %44 = arith.truncf %33 : vector<16x32xf32> to vector<16x32xbf16>
    %45 = arith.truncf %34 : vector<16x32xf32> to vector<16x32xbf16>
    %46 = arith.truncf %35 : vector<16x32xf32> to vector<16x32xbf16>
    %47 = vector.extract_strided_slice %44 {offsets = [0, 0], sizes = [8, 32], strides = [1, 1]} : vector<16x32xbf16> to vector<8x32xbf16>
    %48 = vector.extract_strided_slice %45 {offsets = [0, 0], sizes = [8, 32], strides = [1, 1]} : vector<16x32xbf16> to vector<8x32xbf16>
    %49 = vector.extract_strided_slice %46 {offsets = [0, 0], sizes = [8, 32], strides = [1, 1]} : vector<16x32xbf16> to vector<8x32xbf16>
    %50 = vector.extract_strided_slice %47 {offsets = [0, 0], sizes = [8, 8], strides = [1, 1]} : vector<8x32xbf16> to vector<8x8xbf16>
    %51 = vector.extract_strided_slice %48 {offsets = [0, 0], sizes = [8, 8], strides = [1, 1]} : vector<8x32xbf16> to vector<8x8xbf16>
    %cst_46 = arith.constant dense<0.000000e+00> : vector<8x8xf32>
    %52 = tpu.matmul %50, %51, %cst_46 {dimension_numbers = #tpu.dot_dimension_numbers<[1], [1], [0], [0], [0, 0, 1, 0], [], []>} : vector<8x8xbf16>, vector<8x8xbf16>, vector<8x8xf32> -> vector<8x8xf32>
    %cst_47 = arith.constant 0.353553385 : f32
    %53 = vector.broadcast %cst_47 : f32 to vector<8x8xf32>
    %54 = arith.mulf %52, %53 : vector<8x8xf32>
    %cst_48 = arith.constant -1.000000e+09 : f32
    %55 = vector.shape_cast %39 : vector<1x8xi1> to vector<1x8xi1>
    %56 = vector.broadcast %55 : vector<1x8xi1> to vector<8x8xi1>
    %57 = vector.broadcast %cst_48 : f32 to vector<8x8xf32>
    %58 = arith.select %56, %54, %57 : vector<8x8xi1>, vector<8x8xf32>
    %cst_49 = arith.constant dense<0xFF800000> : vector<8xf32>
    %59 = vector.multi_reduction <maximumf>, %58, %cst_49 [1] : vector<8x8xf32> to vector<8xf32>
    %60 = vector.shape_cast %59 : vector<8xf32> to vector<8x1xf32>
    %61 = vector.broadcast %60 : vector<8x1xf32> to vector<8x8xf32>
    %62 = arith.subf %58, %61 : vector<8x8xf32>
    %63 = math.exp %62 : vector<8x8xf32>
    %cst_50 = arith.constant dense<0.000000e+00> : vector<8xf32>
    %64 = vector.multi_reduction <add>, %63, %cst_50 [1] : vector<8x8xf32> to vector<8xf32>
    %65 = vector.shape_cast %64 : vector<8xf32> to vector<8x1xf32>
    %66 = vector.broadcast %65 : vector<8x1xf32> to vector<8x8xf32>
    %67 = arith.divf %63, %66 : vector<8x8xf32>
    %68 = arith.truncf %67 : vector<8x8xf32> to vector<8x8xbf16>
    %69 = vector.extract_strided_slice %49 {offsets = [0, 0], sizes = [8, 8], strides = [1, 1]} : vector<8x32xbf16> to vector<8x8xbf16>
    %cst_51 = arith.constant dense<0.000000e+00> : vector<8x8xf32>
    %70 = tpu.matmul %68, %69, %cst_51 {dimension_numbers = #tpu.dot_dimension_numbers<[1], [0], [0], [1], [0, 0, 1, 1], [], []>} : vector<8x8xbf16>, vector<8x8xbf16>, vector<8x8xf32> -> vector<8x8xf32>
    %71 = arith.truncf %70 : vector<8x8xf32> to vector<8x8xbf16>
    %72 = vector.extract_strided_slice %10 {offsets = [0, 0], sizes = [8, 32], strides = [1, 1]} : vector<32x32xbf16> to vector<8x32xbf16>
    %cst_52 = arith.constant dense<0.000000e+00> : vector<8x32xf32>
    %73 = tpu.matmul %71, %72, %cst_52 {dimension_numbers = #tpu.dot_dimension_numbers<[1], [0], [0], [1], [0, 0, 1, 1], [], []>} : vector<8x8xbf16>, vector<8x32xbf16>, vector<8x32xf32> -> vector<8x32xf32>
    %74 = vector.extract_strided_slice %47 {offsets = [0, 8], sizes = [8, 8], strides = [1, 1]} : vector<8x32xbf16> to vector<8x8xbf16>
    %75 = vector.extract_strided_slice %48 {offsets = [0, 8], sizes = [8, 8], strides = [1, 1]} : vector<8x32xbf16> to vector<8x8xbf16>
    %cst_53 = arith.constant dense<0.000000e+00> : vector<8x8xf32>
    %76 = tpu.matmul %74, %75, %cst_53 {dimension_numbers = #tpu.dot_dimension_numbers<[1], [1], [0], [0], [0, 0, 1, 0], [], []>} : vector<8x8xbf16>, vector<8x8xbf16>, vector<8x8xf32> -> vector<8x8xf32>
    %cst_54 = arith.constant 0.353553385 : f32
    %77 = vector.broadcast %cst_54 : f32 to vector<8x8xf32>
    %78 = arith.mulf %76, %77 : vector<8x8xf32>
    %cst_55 = arith.constant -1.000000e+09 : f32
    %79 = vector.shape_cast %39 : vector<1x8xi1> to vector<1x8xi1>
    %80 = vector.broadcast %79 : vector<1x8xi1> to vector<8x8xi1>
    %81 = vector.broadcast %cst_55 : f32 to vector<8x8xf32>
    %82 = arith.select %80, %78, %81 : vector<8x8xi1>, vector<8x8xf32>
    %cst_56 = arith.constant dense<0xFF800000> : vector<8xf32>
    %83 = vector.multi_reduction <maximumf>, %82, %cst_56 [1] : vector<8x8xf32> to vector<8xf32>
    %84 = vector.shape_cast %83 : vector<8xf32> to vector<8x1xf32>
    %85 = vector.broadcast %84 : vector<8x1xf32> to vector<8x8xf32>
    %86 = arith.subf %82, %85 : vector<8x8xf32>
    %87 = math.exp %86 : vector<8x8xf32>
    %cst_57 = arith.constant dense<0.000000e+00> : vector<8xf32>
    %88 = vector.multi_reduction <add>, %87, %cst_57 [1] : vector<8x8xf32> to vector<8xf32>
    %89 = vector.shape_cast %88 : vector<8xf32> to vector<8x1xf32>
    %90 = vector.broadcast %89 : vector<8x1xf32> to vector<8x8xf32>
    %91 = arith.divf %87, %90 : vector<8x8xf32>
    %92 = arith.truncf %91 : vector<8x8xf32> to vector<8x8xbf16>
    %93 = vector.extract_strided_slice %49 {offsets = [0, 8], sizes = [8, 8], strides = [1, 1]} : vector<8x32xbf16> to vector<8x8xbf16>
    %cst_58 = arith.constant dense<0.000000e+00> : vector<8x8xf32>
    %94 = tpu.matmul %92, %93, %cst_58 {dimension_numbers = #tpu.dot_dimension_numbers<[1], [0], [0], [1], [0, 0, 1, 1], [], []>} : vector<8x8xbf16>, vector<8x8xbf16>, vector<8x8xf32> -> vector<8x8xf32>
    %95 = arith.truncf %94 : vector<8x8xf32> to vector<8x8xbf16>
    %96 = vector.extract_strided_slice %10 {offsets = [8, 0], sizes = [8, 32], strides = [1, 1]} : vector<32x32xbf16> to vector<8x32xbf16>
    %cst_59 = arith.constant dense<0.000000e+00> : vector<8x32xf32>
    %97 = tpu.matmul %95, %96, %cst_59 {dimension_numbers = #tpu.dot_dimension_numbers<[1], [0], [0], [1], [0, 0, 1, 1], [], []>} : vector<8x8xbf16>, vector<8x32xbf16>, vector<8x32xf32> -> vector<8x32xf32>
    %98 = arith.addf %73, %97 : vector<8x32xf32>
    %99 = vector.extract_strided_slice %47 {offsets = [0, 16], sizes = [8, 8], strides = [1, 1]} : vector<8x32xbf16> to vector<8x8xbf16>
    %100 = vector.extract_strided_slice %48 {offsets = [0, 16], sizes = [8, 8], strides = [1, 1]} : vector<8x32xbf16> to vector<8x8xbf16>
    %cst_60 = arith.constant dense<0.000000e+00> : vector<8x8xf32>
    %101 = tpu.matmul %99, %100, %cst_60 {dimension_numbers = #tpu.dot_dimension_numbers<[1], [1], [0], [0], [0, 0, 1, 0], [], []>} : vector<8x8xbf16>, vector<8x8xbf16>, vector<8x8xf32> -> vector<8x8xf32>
    %cst_61 = arith.constant 0.353553385 : f32
    %102 = vector.broadcast %cst_61 : f32 to vector<8x8xf32>
    %103 = arith.mulf %101, %102 : vector<8x8xf32>
    %cst_62 = arith.constant -1.000000e+09 : f32
    %104 = vector.shape_cast %39 : vector<1x8xi1> to vector<1x8xi1>
    %105 = vector.broadcast %104 : vector<1x8xi1> to vector<8x8xi1>
    %106 = vector.broadcast %cst_62 : f32 to vector<8x8xf32>
    %107 = arith.select %105, %103, %106 : vector<8x8xi1>, vector<8x8xf32>
    %cst_63 = arith.constant dense<0xFF800000> : vector<8xf32>
    %108 = vector.multi_reduction <maximumf>, %107, %cst_63 [1] : vector<8x8xf32> to vector<8xf32>
    %109 = vector.shape_cast %108 : vector<8xf32> to vector<8x1xf32>
    %110 = vector.broadcast %109 : vector<8x1xf32> to vector<8x8xf32>
    %111 = arith.subf %107, %110 : vector<8x8xf32>
    %112 = math.exp %111 : vector<8x8xf32>
    %cst_64 = arith.constant dense<0.000000e+00> : vector<8xf32>
    %113 = vector.multi_reduction <add>, %112, %cst_64 [1] : vector<8x8xf32> to vector<8xf32>
    %114 = vector.shape_cast %113 : vector<8xf32> to vector<8x1xf32>
    %115 = vector.broadcast %114 : vector<8x1xf32> to vector<8x8xf32>
    %116 = arith.divf %112, %115 : vector<8x8xf32>
    %117 = arith.truncf %116 : vector<8x8xf32> to vector<8x8xbf16>
    %118 = vector.extract_strided_slice %49 {offsets = [0, 16], sizes = [8, 8], strides = [1, 1]} : vector<8x32xbf16> to vector<8x8xbf16>
    %cst_65 = arith.constant dense<0.000000e+00> : vector<8x8xf32>
    %119 = tpu.matmul %117, %118, %cst_65 {dimension_numbers = #tpu.dot_dimension_numbers<[1], [0], [0], [1], [0, 0, 1, 1], [], []>} : vector<8x8xbf16>, vector<8x8xbf16>, vector<8x8xf32> -> vector<8x8xf32>
    %120 = arith.truncf %119 : vector<8x8xf32> to vector<8x8xbf16>
    %121 = vector.extract_strided_slice %10 {offsets = [16, 0], sizes = [8, 32], strides = [1, 1]} : vector<32x32xbf16> to vector<8x32xbf16>
    %cst_66 = arith.constant dense<0.000000e+00> : vector<8x32xf32>
    %122 = tpu.matmul %120, %121, %cst_66 {dimension_numbers = #tpu.dot_dimension_numbers<[1], [0], [0], [1], [0, 0, 1, 1], [], []>} : vector<8x8xbf16>, vector<8x32xbf16>, vector<8x32xf32> -> vector<8x32xf32>
    %123 = arith.addf %98, %122 : vector<8x32xf32>
    %124 = vector.extract_strided_slice %47 {offsets = [0, 24], sizes = [8, 8], strides = [1, 1]} : vector<8x32xbf16> to vector<8x8xbf16>
    %125 = vector.extract_strided_slice %48 {offsets = [0, 24], sizes = [8, 8], strides = [1, 1]} : vector<8x32xbf16> to vector<8x8xbf16>
    %cst_67 = arith.constant dense<0.000000e+00> : vector<8x8xf32>
    %126 = tpu.matmul %124, %125, %cst_67 {dimension_numbers = #tpu.dot_dimension_numbers<[1], [1], [0], [0], [0, 0, 1, 0], [], []>} : vector<8x8xbf16>, vector<8x8xbf16>, vector<8x8xf32> -> vector<8x8xf32>
    %cst_68 = arith.constant 0.353553385 : f32
    %127 = vector.broadcast %cst_68 : f32 to vector<8x8xf32>
    %128 = arith.mulf %126, %127 : vector<8x8xf32>
    %cst_69 = arith.constant -1.000000e+09 : f32
    %129 = vector.shape_cast %39 : vector<1x8xi1> to vector<1x8xi1>
    %130 = vector.broadcast %129 : vector<1x8xi1> to vector<8x8xi1>
    %131 = vector.broadcast %cst_69 : f32 to vector<8x8xf32>
    %132 = arith.select %130, %128, %131 : vector<8x8xi1>, vector<8x8xf32>
    %cst_70 = arith.constant dense<0xFF800000> : vector<8xf32>
    %133 = vector.multi_reduction <maximumf>, %132, %cst_70 [1] : vector<8x8xf32> to vector<8xf32>
    %134 = vector.shape_cast %133 : vector<8xf32> to vector<8x1xf32>
    %135 = vector.broadcast %134 : vector<8x1xf32> to vector<8x8xf32>
    %136 = arith.subf %132, %135 : vector<8x8xf32>
    %137 = math.exp %136 : vector<8x8xf32>
    %cst_71 = arith.constant dense<0.000000e+00> : vector<8xf32>
    %138 = vector.multi_reduction <add>, %137, %cst_71 [1] : vector<8x8xf32> to vector<8xf32>
    %139 = vector.shape_cast %138 : vector<8xf32> to vector<8x1xf32>
    %140 = vector.broadcast %139 : vector<8x1xf32> to vector<8x8xf32>
    %141 = arith.divf %137, %140 : vector<8x8xf32>
    %142 = arith.truncf %141 : vector<8x8xf32> to vector<8x8xbf16>
    %143 = vector.extract_strided_slice %49 {offsets = [0, 24], sizes = [8, 8], strides = [1, 1]} : vector<8x32xbf16> to vector<8x8xbf16>
    %cst_72 = arith.constant dense<0.000000e+00> : vector<8x8xf32>
    %144 = tpu.matmul %142, %143, %cst_72 {dimension_numbers = #tpu.dot_dimension_numbers<[1], [0], [0], [1], [0, 0, 1, 1], [], []>} : vector<8x8xbf16>, vector<8x8xbf16>, vector<8x8xf32> -> vector<8x8xf32>
    %145 = arith.truncf %144 : vector<8x8xf32> to vector<8x8xbf16>
    %146 = vector.extract_strided_slice %10 {offsets = [24, 0], sizes = [8, 32], strides = [1, 1]} : vector<32x32xbf16> to vector<8x32xbf16>
    %cst_73 = arith.constant dense<0.000000e+00> : vector<8x32xf32>
    %147 = tpu.matmul %145, %146, %cst_73 {dimension_numbers = #tpu.dot_dimension_numbers<[1], [0], [0], [1], [0, 0, 1, 1], [], []>} : vector<8x8xbf16>, vector<8x32xbf16>, vector<8x32xf32> -> vector<8x32xf32>
    %148 = arith.addf %123, %147 : vector<8x32xf32>
    %149 = vector.extract_strided_slice %44 {offsets = [8, 0], sizes = [8, 32], strides = [1, 1]} : vector<16x32xbf16> to vector<8x32xbf16>
    %150 = vector.extract_strided_slice %45 {offsets = [8, 0], sizes = [8, 32], strides = [1, 1]} : vector<16x32xbf16> to vector<8x32xbf16>
    %151 = vector.extract_strided_slice %46 {offsets = [8, 0], sizes = [8, 32], strides = [1, 1]} : vector<16x32xbf16> to vector<8x32xbf16>
    %152 = vector.extract_strided_slice %149 {offsets = [0, 0], sizes = [8, 8], strides = [1, 1]} : vector<8x32xbf16> to vector<8x8xbf16>
    %153 = vector.extract_strided_slice %150 {offsets = [0, 0], sizes = [8, 8], strides = [1, 1]} : vector<8x32xbf16> to vector<8x8xbf16>
    %cst_74 = arith.constant dense<0.000000e+00> : vector<8x8xf32>
    %154 = tpu.matmul %152, %153, %cst_74 {dimension_numbers = #tpu.dot_dimension_numbers<[1], [1], [0], [0], [0, 0, 1, 0], [], []>} : vector<8x8xbf16>, vector<8x8xbf16>, vector<8x8xf32> -> vector<8x8xf32>
    %cst_75 = arith.constant 0.353553385 : f32
    %155 = vector.broadcast %cst_75 : f32 to vector<8x8xf32>
    %156 = arith.mulf %154, %155 : vector<8x8xf32>
    %cst_76 = arith.constant -1.000000e+09 : f32
    %157 = vector.shape_cast %43 : vector<1x8xi1> to vector<1x8xi1>
    %158 = vector.broadcast %157 : vector<1x8xi1> to vector<8x8xi1>
    %159 = vector.broadcast %cst_76 : f32 to vector<8x8xf32>
    %160 = arith.select %158, %156, %159 : vector<8x8xi1>, vector<8x8xf32>
    %cst_77 = arith.constant dense<0xFF800000> : vector<8xf32>
    %161 = vector.multi_reduction <maximumf>, %160, %cst_77 [1] : vector<8x8xf32> to vector<8xf32>
    %162 = vector.shape_cast %161 : vector<8xf32> to vector<8x1xf32>
    %163 = vector.broadcast %162 : vector<8x1xf32> to vector<8x8xf32>
    %164 = arith.subf %160, %163 : vector<8x8xf32>
    %165 = math.exp %164 : vector<8x8xf32>
    %cst_78 = arith.constant dense<0.000000e+00> : vector<8xf32>
    %166 = vector.multi_reduction <add>, %165, %cst_78 [1] : vector<8x8xf32> to vector<8xf32>
    %167 = vector.shape_cast %166 : vector<8xf32> to vector<8x1xf32>
    %168 = vector.broadcast %167 : vector<8x1xf32> to vector<8x8xf32>
    %169 = arith.divf %165, %168 : vector<8x8xf32>
    %170 = arith.truncf %169 : vector<8x8xf32> to vector<8x8xbf16>
    %171 = vector.extract_strided_slice %151 {offsets = [0, 0], sizes = [8, 8], strides = [1, 1]} : vector<8x32xbf16> to vector<8x8xbf16>
    %cst_79 = arith.constant dense<0.000000e+00> : vector<8x8xf32>
    %172 = tpu.matmul %170, %171, %cst_79 {dimension_numbers = #tpu.dot_dimension_numbers<[1], [0], [0], [1], [0, 0, 1, 1], [], []>} : vector<8x8xbf16>, vector<8x8xbf16>, vector<8x8xf32> -> vector<8x8xf32>
    %173 = arith.truncf %172 : vector<8x8xf32> to vector<8x8xbf16>
    %174 = vector.extract_strided_slice %10 {offsets = [0, 0], sizes = [8, 32], strides = [1, 1]} : vector<32x32xbf16> to vector<8x32xbf16>
    %cst_80 = arith.constant dense<0.000000e+00> : vector<8x32xf32>
    %175 = tpu.matmul %173, %174, %cst_80 {dimension_numbers = #tpu.dot_dimension_numbers<[1], [0], [0], [1], [0, 0, 1, 1], [], []>} : vector<8x8xbf16>, vector<8x32xbf16>, vector<8x32xf32> -> vector<8x32xf32>
    %176 = vector.extract_strided_slice %149 {offsets = [0, 8], sizes = [8, 8], strides = [1, 1]} : vector<8x32xbf16> to vector<8x8xbf16>
    %177 = vector.extract_strided_slice %150 {offsets = [0, 8], sizes = [8, 8], strides = [1, 1]} : vector<8x32xbf16> to vector<8x8xbf16>
    %cst_81 = arith.constant dense<0.000000e+00> : vector<8x8xf32>
    %178 = tpu.matmul %176, %177, %cst_81 {dimension_numbers = #tpu.dot_dimension_numbers<[1], [1], [0], [0], [0, 0, 1, 0], [], []>} : vector<8x8xbf16>, vector<8x8xbf16>, vector<8x8xf32> -> vector<8x8xf32>
    %cst_82 = arith.constant 0.353553385 : f32
    %179 = vector.broadcast %cst_82 : f32 to vector<8x8xf32>
    %180 = arith.mulf %178, %179 : vector<8x8xf32>
    %cst_83 = arith.constant -1.000000e+09 : f32
    %181 = vector.shape_cast %43 : vector<1x8xi1> to vector<1x8xi1>
    %182 = vector.broadcast %181 : vector<1x8xi1> to vector<8x8xi1>
    %183 = vector.broadcast %cst_83 : f32 to vector<8x8xf32>
    %184 = arith.select %182, %180, %183 : vector<8x8xi1>, vector<8x8xf32>
    %cst_84 = arith.constant dense<0xFF800000> : vector<8xf32>
    %185 = vector.multi_reduction <maximumf>, %184, %cst_84 [1] : vector<8x8xf32> to vector<8xf32>
    %186 = vector.shape_cast %185 : vector<8xf32> to vector<8x1xf32>
    %187 = vector.broadcast %186 : vector<8x1xf32> to vector<8x8xf32>
    %188 = arith.subf %184, %187 : vector<8x8xf32>
    %189 = math.exp %188 : vector<8x8xf32>
    %cst_85 = arith.constant dense<0.000000e+00> : vector<8xf32>
    %190 = vector.multi_reduction <add>, %189, %cst_85 [1] : vector<8x8xf32> to vector<8xf32>
    %191 = vector.shape_cast %190 : vector<8xf32> to vector<8x1xf32>
    %192 = vector.broadcast %191 : vector<8x1xf32> to vector<8x8xf32>
    %193 = arith.divf %189, %192 : vector<8x8xf32>
    %194 = arith.truncf %193 : vector<8x8xf32> to vector<8x8xbf16>
    %195 = vector.extract_strided_slice %151 {offsets = [0, 8], sizes = [8, 8], strides = [1, 1]} : vector<8x32xbf16> to vector<8x8xbf16>
    %cst_86 = arith.constant dense<0.000000e+00> : vector<8x8xf32>
    %196 = tpu.matmul %194, %195, %cst_86 {dimension_numbers = #tpu.dot_dimension_numbers<[1], [0], [0], [1], [0, 0, 1, 1], [], []>} : vector<8x8xbf16>, vector<8x8xbf16>, vector<8x8xf32> -> vector<8x8xf32>
    %197 = arith.truncf %196 : vector<8x8xf32> to vector<8x8xbf16>
    %198 = vector.extract_strided_slice %10 {offsets = [8, 0], sizes = [8, 32], strides = [1, 1]} : vector<32x32xbf16> to vector<8x32xbf16>
    %cst_87 = arith.constant dense<0.000000e+00> : vector<8x32xf32>
    %199 = tpu.matmul %197, %198, %cst_87 {dimension_numbers = #tpu.dot_dimension_numbers<[1], [0], [0], [1], [0, 0, 1, 1], [], []>} : vector<8x8xbf16>, vector<8x32xbf16>, vector<8x32xf32> -> vector<8x32xf32>
    %200 = arith.addf %175, %199 : vector<8x32xf32>
    %201 = vector.extract_strided_slice %149 {offsets = [0, 16], sizes = [8, 8], strides = [1, 1]} : vector<8x32xbf16> to vector<8x8xbf16>
    %202 = vector.extract_strided_slice %150 {offsets = [0, 16], sizes = [8, 8], strides = [1, 1]} : vector<8x32xbf16> to vector<8x8xbf16>
    %cst_88 = arith.constant dense<0.000000e+00> : vector<8x8xf32>
    %203 = tpu.matmul %201, %202, %cst_88 {dimension_numbers = #tpu.dot_dimension_numbers<[1], [1], [0], [0], [0, 0, 1, 0], [], []>} : vector<8x8xbf16>, vector<8x8xbf16>, vector<8x8xf32> -> vector<8x8xf32>
    %cst_89 = arith.constant 0.353553385 : f32
    %204 = vector.broadcast %cst_89 : f32 to vector<8x8xf32>
    %205 = arith.mulf %203, %204 : vector<8x8xf32>
    %cst_90 = arith.constant -1.000000e+09 : f32
    %206 = vector.shape_cast %43 : vector<1x8xi1> to vector<1x8xi1>
    %207 = vector.broadcast %206 : vector<1x8xi1> to vector<8x8xi1>
    %208 = vector.broadcast %cst_90 : f32 to vector<8x8xf32>
    %209 = arith.select %207, %205, %208 : vector<8x8xi1>, vector<8x8xf32>
    %cst_91 = arith.constant dense<0xFF800000> : vector<8xf32>
    %210 = vector.multi_reduction <maximumf>, %209, %cst_91 [1] : vector<8x8xf32> to vector<8xf32>
    %211 = vector.shape_cast %210 : vector<8xf32> to vector<8x1xf32>
    %212 = vector.broadcast %211 : vector<8x1xf32> to vector<8x8xf32>
    %213 = arith.subf %209, %212 : vector<8x8xf32>
    %214 = math.exp %213 : vector<8x8xf32>
    %cst_92 = arith.constant dense<0.000000e+00> : vector<8xf32>
    %215 = vector.multi_reduction <add>, %214, %cst_92 [1] : vector<8x8xf32> to vector<8xf32>
    %216 = vector.shape_cast %215 : vector<8xf32> to vector<8x1xf32>
    %217 = vector.broadcast %216 : vector<8x1xf32> to vector<8x8xf32>
    %218 = arith.divf %214, %217 : vector<8x8xf32>
    %219 = arith.truncf %218 : vector<8x8xf32> to vector<8x8xbf16>
    %220 = vector.extract_strided_slice %151 {offsets = [0, 16], sizes = [8, 8], strides = [1, 1]} : vector<8x32xbf16> to vector<8x8xbf16>
    %cst_93 = arith.constant dense<0.000000e+00> : vector<8x8xf32>
    %221 = tpu.matmul %219, %220, %cst_93 {dimension_numbers = #tpu.dot_dimension_numbers<[1], [0], [0], [1], [0, 0, 1, 1], [], []>} : vector<8x8xbf16>, vector<8x8xbf16>, vector<8x8xf32> -> vector<8x8xf32>
    %222 = arith.truncf %221 : vector<8x8xf32> to vector<8x8xbf16>
    %223 = vector.extract_strided_slice %10 {offsets = [16, 0], sizes = [8, 32], strides = [1, 1]} : vector<32x32xbf16> to vector<8x32xbf16>
    %cst_94 = arith.constant dense<0.000000e+00> : vector<8x32xf32>
    %224 = tpu.matmul %222, %223, %cst_94 {dimension_numbers = #tpu.dot_dimension_numbers<[1], [0], [0], [1], [0, 0, 1, 1], [], []>} : vector<8x8xbf16>, vector<8x32xbf16>, vector<8x32xf32> -> vector<8x32xf32>
    %225 = arith.addf %200, %224 : vector<8x32xf32>
    %226 = vector.extract_strided_slice %149 {offsets = [0, 24], sizes = [8, 8], strides = [1, 1]} : vector<8x32xbf16> to vector<8x8xbf16>
    %227 = vector.extract_strided_slice %150 {offsets = [0, 24], sizes = [8, 8], strides = [1, 1]} : vector<8x32xbf16> to vector<8x8xbf16>
    %cst_95 = arith.constant dense<0.000000e+00> : vector<8x8xf32>
    %228 = tpu.matmul %226, %227, %cst_95 {dimension_numbers = #tpu.dot_dimension_numbers<[1], [1], [0], [0], [0, 0, 1, 0], [], []>} : vector<8x8xbf16>, vector<8x8xbf16>, vector<8x8xf32> -> vector<8x8xf32>
    %cst_96 = arith.constant 0.353553385 : f32
    %229 = vector.broadcast %cst_96 : f32 to vector<8x8xf32>
    %230 = arith.mulf %228, %229 : vector<8x8xf32>
    %cst_97 = arith.constant -1.000000e+09 : f32
    %231 = vector.shape_cast %43 : vector<1x8xi1> to vector<1x8xi1>
    %232 = vector.broadcast %231 : vector<1x8xi1> to vector<8x8xi1>
    %233 = vector.broadcast %cst_97 : f32 to vector<8x8xf32>
    %234 = arith.select %232, %230, %233 : vector<8x8xi1>, vector<8x8xf32>
    %cst_98 = arith.constant dense<0xFF800000> : vector<8xf32>
    %235 = vector.multi_reduction <maximumf>, %234, %cst_98 [1] : vector<8x8xf32> to vector<8xf32>
    %236 = vector.shape_cast %235 : vector<8xf32> to vector<8x1xf32>
    %237 = vector.broadcast %236 : vector<8x1xf32> to vector<8x8xf32>
    %238 = arith.subf %234, %237 : vector<8x8xf32>
    %239 = math.exp %238 : vector<8x8xf32>
    %cst_99 = arith.constant dense<0.000000e+00> : vector<8xf32>
    %240 = vector.multi_reduction <add>, %239, %cst_99 [1] : vector<8x8xf32> to vector<8xf32>
    %241 = vector.shape_cast %240 : vector<8xf32> to vector<8x1xf32>
    %242 = vector.broadcast %241 : vector<8x1xf32> to vector<8x8xf32>
    %243 = arith.divf %239, %242 : vector<8x8xf32>
    %244 = arith.truncf %243 : vector<8x8xf32> to vector<8x8xbf16>
    %245 = vector.extract_strided_slice %151 {offsets = [0, 24], sizes = [8, 8], strides = [1, 1]} : vector<8x32xbf16> to vector<8x8xbf16>
    %cst_100 = arith.constant dense<0.000000e+00> : vector<8x8xf32>
    %246 = tpu.matmul %244, %245, %cst_100 {dimension_numbers = #tpu.dot_dimension_numbers<[1], [0], [0], [1], [0, 0, 1, 1], [], []>} : vector<8x8xbf16>, vector<8x8xbf16>, vector<8x8xf32> -> vector<8x8xf32>
    %247 = arith.truncf %246 : vector<8x8xf32> to vector<8x8xbf16>
    %248 = vector.extract_strided_slice %10 {offsets = [24, 0], sizes = [8, 32], strides = [1, 1]} : vector<32x32xbf16> to vector<8x32xbf16>
    %cst_101 = arith.constant dense<0.000000e+00> : vector<8x32xf32>
    %249 = tpu.matmul %247, %248, %cst_101 {dimension_numbers = #tpu.dot_dimension_numbers<[1], [0], [0], [1], [0, 0, 1, 1], [], []>} : vector<8x8xbf16>, vector<8x32xbf16>, vector<8x32xf32> -> vector<8x32xf32>
    %250 = arith.addf %225, %249 : vector<8x32xf32>
    %251 = tpu.concatenate %148, %250 in 0 : vector<8x32xf32>, vector<8x32xf32> -> vector<16x32xf32>
    %252 = vector.broadcast %12 : vector<1x32xf32> to vector<16x32xf32>
    %253 = arith.addf %251, %252 : vector<16x32xf32>
    %254 = arith.addf %4, %253 : vector<16x32xf32>
    %cst_102 = arith.constant dense<0.000000e+00> : vector<16xf32>
    %255 = vector.multi_reduction <add>, %254, %cst_102 [1] : vector<16x32xf32> to vector<16xf32>
    %256 = vector.shape_cast %255 : vector<16xf32> to vector<16x1xf32>
    %cst_103 = arith.constant 3.200000e+01 : f32
    %257 = vector.broadcast %cst_103 : f32 to vector<16x1xf32>
    %258 = arith.divf %256, %257 : vector<16x1xf32>
    %259 = vector.broadcast %258 : vector<16x1xf32> to vector<16x32xf32>
    %260 = arith.subf %254, %259 : vector<16x32xf32>
    %261 = arith.mulf %260, %260 : vector<16x32xf32>
    %cst_104 = arith.constant dense<0.000000e+00> : vector<16xf32>
    %262 = vector.multi_reduction <add>, %261, %cst_104 [1] : vector<16x32xf32> to vector<16xf32>
    %263 = vector.shape_cast %262 : vector<16xf32> to vector<16x1xf32>
    %cst_105 = arith.constant 3.200000e+01 : f32
    %264 = vector.broadcast %cst_105 : f32 to vector<16x1xf32>
    %265 = arith.divf %263, %264 : vector<16x1xf32>
    %266 = vector.broadcast %258 : vector<16x1xf32> to vector<16x32xf32>
    %267 = arith.subf %254, %266 : vector<16x32xf32>
    %cst_106 = arith.constant 9.99999974E-6 : f32
    %268 = vector.broadcast %cst_106 : f32 to vector<16x1xf32>
    %269 = arith.addf %265, %268 : vector<16x1xf32>
    %270 = math.rsqrt %269 : vector<16x1xf32>
    %271 = vector.broadcast %270 : vector<16x1xf32> to vector<16x32xf32>
    %272 = arith.mulf %267, %271 : vector<16x32xf32>
    %273 = vector.broadcast %22 : vector<1x32xf32> to vector<16x32xf32>
    %274 = arith.mulf %272, %273 : vector<16x32xf32>
    %275 = vector.broadcast %24 : vector<1x32xf32> to vector<16x32xf32>
    %276 = arith.addf %274, %275 : vector<16x32xf32>
    %277 = arith.truncf %276 : vector<16x32xf32> to vector<16x32xbf16>
    %cst_107 = arith.constant dense<0.000000e+00> : vector<16x64xf32>
    %278 = tpu.matmul %277, %14, %cst_107 {dimension_numbers = #tpu.dot_dimension_numbers<[1], [0], [0], [1], [0, 0, 1, 1], [], []>} : vector<16x32xbf16>, vector<32x64xbf16>, vector<16x64xf32> -> vector<16x64xf32>
    %279 = vector.broadcast %16 : vector<1x64xf32> to vector<16x64xf32>
    %280 = arith.addf %278, %279 : vector<16x64xf32>
    %cst_108 = arith.constant 0.000000e+00 : f32
    %281 = vector.broadcast %cst_108 : f32 to vector<16x64xf32>
    %282 = arith.maximumf %280, %281 : vector<16x64xf32>
    %283 = arith.truncf %282 : vector<16x64xf32> to vector<16x64xbf16>
    %cst_109 = arith.constant dense<0.000000e+00> : vector<16x32xf32>
    %284 = tpu.matmul %283, %18, %cst_109 {dimension_numbers = #tpu.dot_dimension_numbers<[1], [0], [0], [1], [0, 0, 1, 1], [], []>} : vector<16x64xbf16>, vector<64x32xbf16>, vector<16x32xf32> -> vector<16x32xf32>
    %285 = vector.broadcast %20 : vector<1x32xf32> to vector<16x32xf32>
    %286 = arith.addf %284, %285 : vector<16x32xf32>
    %287 = arith.addf %286, %286 : vector<16x32xf32>
    %cst_110 = arith.constant dense<0.000000e+00> : vector<16xf32>
    %288 = vector.multi_reduction <add>, %287, %cst_110 [1] : vector<16x32xf32> to vector<16xf32>
    %289 = vector.shape_cast %288 : vector<16xf32> to vector<16x1xf32>
    %cst_111 = arith.constant 3.200000e+01 : f32
    %290 = vector.broadcast %cst_111 : f32 to vector<16x1xf32>
    %291 = arith.divf %289, %290 : vector<16x1xf32>
    %292 = vector.broadcast %291 : vector<16x1xf32> to vector<16x32xf32>
    %293 = arith.subf %287, %292 : vector<16x32xf32>
    %294 = arith.mulf %293, %293 : vector<16x32xf32>
    %cst_112 = arith.constant dense<0.000000e+00> : vector<16xf32>
    %295 = vector.multi_reduction <add>, %294, %cst_112 [1] : vector<16x32xf32> to vector<16xf32>
    %296 = vector.shape_cast %295 : vector<16xf32> to vector<16x1xf32>
    %cst_113 = arith.constant 3.200000e+01 : f32
    %297 = vector.broadcast %cst_113 : f32 to vector<16x1xf32>
    %298 = arith.divf %296, %297 : vector<16x1xf32>
    %299 = vector.broadcast %291 : vector<16x1xf32> to vector<16x32xf32>
    %300 = arith.subf %287, %299 : vector<16x32xf32>
    %cst_114 = arith.constant 9.99999974E-6 : f32
    %301 = vector.broadcast %cst_114 : f32 to vector<16x1xf32>
    %302 = arith.addf %298, %301 : vector<16x1xf32>
    %303 = math.rsqrt %302 : vector<16x1xf32>
    %304 = vector.broadcast %303 : vector<16x1xf32> to vector<16x32xf32>
    %305 = arith.mulf %300, %304 : vector<16x32xf32>
    %306 = vector.broadcast %26 : vector<1x32xf32> to vector<16x32xf32>
    %307 = arith.mulf %305, %306 : vector<16x32xf32>
    %308 = vector.broadcast %28 : vector<1x32xf32> to vector<16x32xf32>
    %309 = arith.addf %307, %308 : vector<16x32xf32>
    %310 = vector.shape_cast %309 : vector<16x32xf32> to vector<2x8x32xf32>
    %c0_115 = arith.constant 0 : index
    %c0_116 = arith.constant 0 : index
    %c0_117 = arith.constant 0 : index
    %311 = vector.load %arg15[%c0_115, %c0_116, %c0_117] : memref<2x8x32xf32, #tpu.memory_space<vmem>>, vector<2x8x32xf32>
    tpu.vector_store %arg15[%c0_115, %c0_116, %c0_117], %310 {strides = array<i32>} : memref<2x8x32xf32, #tpu.memory_space<vmem>>, vector<2x8x32xf32>,
    return
  }
  func.func @transform_0(%arg0: i32) -> (i32, i32, i32) {
    %c0_i32 = arith.constant 0 : i32
    %c0_i32_0 = arith.constant 0 : i32
    %c0_i32_1 = arith.constant 0 : i32
    %c0_i32_2 = arith.constant 0 : i32
    return %c0_i32, %c0_i32_0, %c0_i32_1 : i32, i32, i32
  }
  func.func @transform_1(%arg0: i32) -> (i32, i32, i32) {
    %c0_i32 = arith.constant 0 : i32
    %c0_i32_0 = arith.constant 0 : i32
    %c0_i32_1 = arith.constant 0 : i32
    %c0_i32_2 = arith.constant 0 : i32
    return %c0_i32, %c0_i32_0, %c0_i32_1 : i32, i32, i32
  }
  func.func @transform_2(%arg0: i32) -> (i32, i32, i32) {
    %c0_i32 = arith.constant 0 : i32
    %c0_i32_0 = arith.constant 0 : i32
    %c0_i32_1 = arith.constant 0 : i32
    return %arg0, %c0_i32, %c0_i32_0 : i32, i32, i32
  }
  func.func @transform_3(%arg0: i32) -> (i32, i32, i32) {
    %c0_i32 = arith.constant 0 : i32
    %c0_i32_0 = arith.constant 0 : i32
    %c0_i32_1 = arith.constant 0 : i32
    return %arg0, %c0_i32, %c0_i32_0 : i32, i32, i32
  }
  func.func @transform_4(%arg0: i32) -> (i32, i32, i32) {
    %c0_i32 = arith.constant 0 : i32
    %c0_i32_0 = arith.constant 0 : i32
    %c0_i32_1 = arith.constant 0 : i32
    return %arg0, %c0_i32, %c0_i32_0 : i32, i32, i32
  }
  func.func @transform_5(%arg0: i32) -> (i32, i32, i32) {
    %c0_i32 = arith.constant 0 : i32
    %c0_i32_0 = arith.constant 0 : i32
    %c0_i32_1 = arith.constant 0 : i32
    return %arg0, %c0_i32, %c0_i32_0 : i32, i32, i32
  }
  func.func @transform_6(%arg0: i32) -> (i32, i32, i32) {
    %c0_i32 = arith.constant 0 : i32
    %c0_i32_0 = arith.constant 0 : i32
    %c0_i32_1 = arith.constant 0 : i32
    return %arg0, %c0_i32, %c0_i32_0 : i32, i32, i32
  }
  func.func @transform_7(%arg0: i32) -> (i32, i32, i32) {
    %c0_i32 = arith.constant 0 : i32
    %c0_i32_0 = arith.constant 0 : i32
    %c0_i32_1 = arith.constant 0 : i32
    return %arg0, %c0_i32, %c0_i32_0 : i32, i32, i32
  }
  func.func @transform_8(%arg0: i32) -> (i32, i32, i32) {
    %c0_i32 = arith.constant 0 : i32
    %c0_i32_0 = arith.constant 0 : i32
    %c0_i32_1 = arith.constant 0 : i32
    return %arg0, %c0_i32, %c0_i32_0 : i32, i32, i32
  }
  func.func @transform_9(%arg0: i32) -> (i32, i32, i32) {
    %c0_i32 = arith.constant 0 : i32
    %c0_i32_0 = arith.constant 0 : i32
    %c0_i32_1 = arith.constant 0 : i32
    return %arg0, %c0_i32, %c0_i32_0 : i32, i32, i32
  }
  func.func @transform_10(%arg0: i32) -> (i32, i32, i32) {
    %c0_i32 = arith.constant 0 : i32
    %c0_i32_0 = arith.constant 0 : i32
    %c0_i32_1 = arith.constant 0 : i32
    return %arg0, %c0_i32, %c0_i32_0 : i32, i32, i32
  }
  func.func @transform_11(%arg0: i32) -> (i32, i32, i32) {
    %c0_i32 = arith.constant 0 : i32
    %c0_i32_0 = arith.constant 0 : i32
    %c0_i32_1 = arith.constant 0 : i32
    return %arg0, %c0_i32, %c0_i32_0 : i32, i32, i32
  }
  func.func @transform_12(%arg0: i32) -> (i32, i32, i32) {
    %c0_i32 = arith.constant 0 : i32
    %c0_i32_0 = arith.constant 0 : i32
    %c0_i32_1 = arith.constant 0 : i32
    return %arg0, %c0_i32, %c0_i32_0 : i32, i32, i32
  }
  func.func @transform_13(%arg0: i32) -> (i32, i32, i32) {
    %c0_i32 = arith.constant 0 : i32
    %c0_i32_0 = arith.constant 0 : i32
    %c0_i32_1 = arith.constant 0 : i32
    return %arg0, %c0_i32, %c0_i32_0 : i32, i32, i32
  }
  func.func @transform_14(%arg0: i32) -> (i32, i32, i32) {
    %c0_i32 = arith.constant 0 : i32
    %c0_i32_0 = arith.constant 0 : i32
    %c0_i32_1 = arith.constant 0 : i32
    %c0_i32_2 = arith.constant 0 : i32
    return %c0_i32, %c0_i32_0, %c0_i32_1 : i32, i32, i32
  }
}

module attributes {stable_mosaic.version = 11 : i64} {
  func.func @_decoder_stack_kernel(%arg0: i32, %arg1: memref<2x8x32xf32, #tpu.memory_space<vmem>>, %arg2: memref<2x8x32xf32, #tpu.memory_space<vmem>>, %arg3: memref<2x1x8xf32, #tpu.memory_space<vmem>>, %arg4: memref<2x8x1xf32, #tpu.memory_space<vmem>>, %arg5: memref<1x32x96xbf16, #tpu.memory_space<vmem>>, %arg6: memref<1x1x96xf32, #tpu.memory_space<vmem>>, %arg7: memref<1x32x32xbf16, #tpu.memory_space<vmem>>, %arg8: memref<1x1x32xf32, #tpu.memory_space<vmem>>, %arg9: memref<1x32x32xbf16, #tpu.memory_space<vmem>>, %arg10: memref<1x1x32xf32, #tpu.memory_space<vmem>>, %arg11: memref<1x32x64xbf16, #tpu.memory_space<vmem>>, %arg12: memref<1x1x64xf32, #tpu.memory_space<vmem>>, %arg13: memref<1x32x32xbf16, #tpu.memory_space<vmem>>, %arg14: memref<1x1x32xf32, #tpu.memory_space<vmem>>, %arg15: memref<1x32x64xbf16, #tpu.memory_space<vmem>>, %arg16: memref<1x1x64xf32, #tpu.memory_space<vmem>>, %arg17: memref<1x64x32xbf16, #tpu.memory_space<vmem>>, %arg18: memref<1x1x32xf32, #tpu.memory_space<vmem>>, %arg19: memref<1x1x32xf32, #tpu.memory_space<vmem>>, %arg20: memref<1x1x32xf32, #tpu.memory_space<vmem>>, %arg21: memref<1x1x32xf32, #tpu.memory_space<vmem>>, %arg22: memref<1x1x32xf32, #tpu.memory_space<vmem>>, %arg23: memref<1x1x32xf32, #tpu.memory_space<vmem>>, %arg24: memref<1x1x32xf32, #tpu.memory_space<vmem>>, %arg25: memref<32x16xbf16, #tpu.memory_space<vmem>>, %arg26: memref<1x16xf32, #tpu.memory_space<vmem>>, %arg27: memref<2x8x16xf32, #tpu.memory_space<vmem>>, %arg28: memref<16x32xf32, #tpu.memory_space<vmem>>) attributes {dimension_semantics = [#tpu.dimension_semantics<arbitrary>], iteration_bounds = array<i64: 2>, scalar_prefetch = 0 : i64, scratch_operands = 1 : i64, tpu.core_type = #tpu.core_type<tc>, window_params = [{pipeline_mode = #tpu.pipeline_mode<synchronous>, transform_indices = @transform_0, window_bounds = array<i64: 2, 8, 32>}, {pipeline_mode = #tpu.pipeline_mode<synchronous>, transform_indices = @transform_1, window_bounds = array<i64: 2, 8, 32>}, {pipeline_mode = #tpu.pipeline_mode<synchronous>, transform_indices = @transform_2, window_bounds = array<i64: 2, 1, 8>}, {pipeline_mode = #tpu.pipeline_mode<synchronous>, transform_indices = @transform_3, window_bounds = array<i64: 2, 8, 1>}, {transform_indices = @transform_4, window_bounds = array<i64: 1, 32, 96>}, {transform_indices = @transform_5, window_bounds = array<i64: 1, 1, 96>}, {transform_indices = @transform_6, window_bounds = array<i64: 1, 32, 32>}, {transform_indices = @transform_7, window_bounds = array<i64: 1, 1, 32>}, {transform_indices = @transform_8, window_bounds = array<i64: 1, 32, 32>}, {transform_indices = @transform_9, window_bounds = array<i64: 1, 1, 32>}, {transform_indices = @transform_10, window_bounds = array<i64: 1, 32, 64>}, {transform_indices = @transform_11, window_bounds = array<i64: 1, 1, 64>}, {transform_indices = @transform_12, window_bounds = array<i64: 1, 32, 32>}, {transform_indices = @transform_13, window_bounds = array<i64: 1, 1, 32>}, {transform_indices = @transform_14, window_bounds = array<i64: 1, 32, 64>}, {transform_indices = @transform_15, window_bounds = array<i64: 1, 1, 64>}, {transform_indices = @transform_16, window_bounds = array<i64: 1, 64, 32>}, {transform_indices = @transform_17, window_bounds = array<i64: 1, 1, 32>}, {transform_indices = @transform_18, window_bounds = array<i64: 1, 1, 32>}, {transform_indices = @transform_19, window_bounds = array<i64: 1, 1, 32>}, {transform_indices = @transform_20, window_bounds = array<i64: 1, 1, 32>}, {transform_indices = @transform_21, window_bounds = array<i64: 1, 1, 32>}, {transform_indices = @transform_22, window_bounds = array<i64: 1, 1, 32>}, {transform_indices = @transform_23, window_bounds = array<i64: 1, 1, 32>}, {pipeline_mode = #tpu.pipeline_mode<synchronous>, transform_indices = @transform_24, window_bounds = array<i64: 32, 16>}, {pipeline_mode = #tpu.pipeline_mode<synchronous>, transform_indices = @transform_25, window_bounds = array<i64: 1, 16>}, {pipeline_mode = #tpu.pipeline_mode<synchronous>, transform_indices = @transform_26, window_bounds = array<i64: 2, 8, 16>}]} {
    %c0_i32 = arith.constant 0 : i32
    %0 = arith.cmpi eq, %arg0, %c0_i32 : i32
    %1 = arith.extui %0 : i1 to i32
    %c0_i32_0 = arith.constant 0 : i32
    %2 = arith.cmpi ne, %1, %c0_i32_0 : i32
    scf.if %2 {
      %c0_215 = arith.constant 0 : index
      %c0_216 = arith.constant 0 : index
      %c0_217 = arith.constant 0 : index
      %573 = vector.load %arg1[%c0_215, %c0_216, %c0_217] : memref<2x8x32xf32, #tpu.memory_space<vmem>>, vector<2x8x32xf32>
      %574 = vector.shape_cast %573 : vector<2x8x32xf32> to vector<16x32xf32>
      %c0_218 = arith.constant 0 : index
      %c0_219 = arith.constant 0 : index
      %575 = vector.load %arg28[%c0_218, %c0_219] : memref<16x32xf32, #tpu.memory_space<vmem>>, vector<16x32xf32>
      tpu.vector_store %arg28[%c0_218, %c0_219], %574 {strides = array<i32>} : memref<16x32xf32, #tpu.memory_space<vmem>>, vector<16x32xf32>,
    } else {
    }
    %c0 = arith.constant 0 : index
    %c0_1 = arith.constant 0 : index
    %3 = vector.load %arg28[%c0, %c0_1] : memref<16x32xf32, #tpu.memory_space<vmem>>, vector<16x32xf32>
    %c0_2 = arith.constant 0 : index
    %c0_3 = arith.constant 0 : index
    %c0_4 = arith.constant 0 : index
    %4 = vector.load %arg2[%c0_2, %c0_3, %c0_4] : memref<2x8x32xf32, #tpu.memory_space<vmem>>, vector<2x8x32xf32>
    %5 = vector.shape_cast %4 : vector<2x8x32xf32> to vector<16x32xf32>
    %6 = tpu.iota {dimensions = array<i32: 0>} : vector<8x8xi32>
    %7 = tpu.iota {dimensions = array<i32: 1>} : vector<8x8xi32>
    %8 = arith.cmpi sle, %7, %6 : vector<8x8xi32>
    %c0_5 = arith.constant 0 : index
    %c0_6 = arith.constant 0 : index
    %c0_7 = arith.constant 0 : index
    %9 = vector.load %arg3[%c0_5, %c0_6, %c0_7] : memref<2x1x8xf32, #tpu.memory_space<vmem>>, vector<1x1x8xf32>
    %10 = vector.shape_cast %9 : vector<1x1x8xf32> to vector<1x8xf32>
    %cst = arith.constant 5.000000e-01 : f32
    %11 = vector.broadcast %cst : f32 to vector<1x8xf32>
    %12 = arith.cmpf ogt, %10, %11 : vector<1x8xf32>
    %c1 = arith.constant 1 : index
    %c0_8 = arith.constant 0 : index
    %c0_9 = arith.constant 0 : index
    %13 = vector.load %arg3[%c1, %c0_8, %c0_9] : memref<2x1x8xf32, #tpu.memory_space<vmem>>, vector<1x1x8xf32>
    %14 = vector.shape_cast %13 : vector<1x1x8xf32> to vector<1x8xf32>
    %cst_10 = arith.constant 5.000000e-01 : f32
    %15 = vector.broadcast %cst_10 : f32 to vector<1x8xf32>
    %16 = arith.cmpf ogt, %14, %15 : vector<1x8xf32>
    %c0_11 = arith.constant 0 : index
    %c0_12 = arith.constant 0 : index
    %c0_13 = arith.constant 0 : index
    %17 = vector.load %arg4[%c0_11, %c0_12, %c0_13] : memref<2x8x1xf32, #tpu.memory_space<vmem>>, vector<1x8x1xf32>
    %18 = vector.shape_cast %17 : vector<1x8x1xf32> to vector<8x1xf32>
    %cst_14 = arith.constant 5.000000e-01 : f32
    %19 = vector.broadcast %cst_14 : f32 to vector<8x1xf32>
    %20 = arith.cmpf ogt, %18, %19 : vector<8x1xf32>
    %21 = vector.broadcast %20 : vector<8x1xi1> to vector<8x8xi1>
    %22 = arith.andi %21, %8 : vector<8x8xi1>
    %c1_15 = arith.constant 1 : index
    %c0_16 = arith.constant 0 : index
    %c0_17 = arith.constant 0 : index
    %23 = vector.load %arg4[%c1_15, %c0_16, %c0_17] : memref<2x8x1xf32, #tpu.memory_space<vmem>>, vector<1x8x1xf32>
    %24 = vector.shape_cast %23 : vector<1x8x1xf32> to vector<8x1xf32>
    %cst_18 = arith.constant 5.000000e-01 : f32
    %25 = vector.broadcast %cst_18 : f32 to vector<8x1xf32>
    %26 = arith.cmpf ogt, %24, %25 : vector<8x1xf32>
    %27 = vector.broadcast %26 : vector<8x1xi1> to vector<8x8xi1>
    %28 = arith.andi %27, %8 : vector<8x8xi1>
    %c0_19 = arith.constant 0 : index
    %c0_20 = arith.constant 0 : index
    %c0_21 = arith.constant 0 : index
    %29 = vector.load %arg5[%c0_19, %c0_20, %c0_21] : memref<1x32x96xbf16, #tpu.memory_space<vmem>>, vector<1x32x96xbf16>
    %30 = vector.shape_cast %29 : vector<1x32x96xbf16> to vector<32x96xbf16>
    %c0_22 = arith.constant 0 : index
    %c0_23 = arith.constant 0 : index
    %c0_24 = arith.constant 0 : index
    %31 = vector.load %arg6[%c0_22, %c0_23, %c0_24] : memref<1x1x96xf32, #tpu.memory_space<vmem>>, vector<1x1x96xf32>
    %32 = vector.shape_cast %31 : vector<1x1x96xf32> to vector<1x96xf32>
    %c0_25 = arith.constant 0 : index
    %c0_26 = arith.constant 0 : index
    %c0_27 = arith.constant 0 : index
    %33 = vector.load %arg7[%c0_25, %c0_26, %c0_27] : memref<1x32x32xbf16, #tpu.memory_space<vmem>>, vector<1x32x32xbf16>
    %34 = vector.shape_cast %33 : vector<1x32x32xbf16> to vector<32x32xbf16>
    %c0_28 = arith.constant 0 : index
    %c0_29 = arith.constant 0 : index
    %c0_30 = arith.constant 0 : index
    %35 = vector.load %arg8[%c0_28, %c0_29, %c0_30] : memref<1x1x32xf32, #tpu.memory_space<vmem>>, vector<1x1x32xf32>
    %36 = vector.shape_cast %35 : vector<1x1x32xf32> to vector<1x32xf32>
    %c0_31 = arith.constant 0 : index
    %c0_32 = arith.constant 0 : index
    %c0_33 = arith.constant 0 : index
    %37 = vector.load %arg9[%c0_31, %c0_32, %c0_33] : memref<1x32x32xbf16, #tpu.memory_space<vmem>>, vector<1x32x32xbf16>
    %38 = vector.shape_cast %37 : vector<1x32x32xbf16> to vector<32x32xbf16>
    %c0_34 = arith.constant 0 : index
    %c0_35 = arith.constant 0 : index
    %c0_36 = arith.constant 0 : index
    %39 = vector.load %arg10[%c0_34, %c0_35, %c0_36] : memref<1x1x32xf32, #tpu.memory_space<vmem>>, vector<1x1x32xf32>
    %40 = vector.shape_cast %39 : vector<1x1x32xf32> to vector<1x32xf32>
    %c0_37 = arith.constant 0 : index
    %c0_38 = arith.constant 0 : index
    %c0_39 = arith.constant 0 : index
    %41 = vector.load %arg11[%c0_37, %c0_38, %c0_39] : memref<1x32x64xbf16, #tpu.memory_space<vmem>>, vector<1x32x64xbf16>
    %42 = vector.shape_cast %41 : vector<1x32x64xbf16> to vector<32x64xbf16>
    %c0_40 = arith.constant 0 : index
    %c0_41 = arith.constant 0 : index
    %c0_42 = arith.constant 0 : index
    %43 = vector.load %arg12[%c0_40, %c0_41, %c0_42] : memref<1x1x64xf32, #tpu.memory_space<vmem>>, vector<1x1x64xf32>
    %44 = vector.shape_cast %43 : vector<1x1x64xf32> to vector<1x64xf32>
    %c0_43 = arith.constant 0 : index
    %c0_44 = arith.constant 0 : index
    %c0_45 = arith.constant 0 : index
    %45 = vector.load %arg13[%c0_43, %c0_44, %c0_45] : memref<1x32x32xbf16, #tpu.memory_space<vmem>>, vector<1x32x32xbf16>
    %46 = vector.shape_cast %45 : vector<1x32x32xbf16> to vector<32x32xbf16>
    %c0_46 = arith.constant 0 : index
    %c0_47 = arith.constant 0 : index
    %c0_48 = arith.constant 0 : index
    %47 = vector.load %arg14[%c0_46, %c0_47, %c0_48] : memref<1x1x32xf32, #tpu.memory_space<vmem>>, vector<1x1x32xf32>
    %48 = vector.shape_cast %47 : vector<1x1x32xf32> to vector<1x32xf32>
    %c0_49 = arith.constant 0 : index
    %c0_50 = arith.constant 0 : index
    %c0_51 = arith.constant 0 : index
    %49 = vector.load %arg15[%c0_49, %c0_50, %c0_51] : memref<1x32x64xbf16, #tpu.memory_space<vmem>>, vector<1x32x64xbf16>
    %50 = vector.shape_cast %49 : vector<1x32x64xbf16> to vector<32x64xbf16>
    %c0_52 = arith.constant 0 : index
    %c0_53 = arith.constant 0 : index
    %c0_54 = arith.constant 0 : index
    %51 = vector.load %arg16[%c0_52, %c0_53, %c0_54] : memref<1x1x64xf32, #tpu.memory_space<vmem>>, vector<1x1x64xf32>
    %52 = vector.shape_cast %51 : vector<1x1x64xf32> to vector<1x64xf32>
    %c0_55 = arith.constant 0 : index
    %c0_56 = arith.constant 0 : index
    %c0_57 = arith.constant 0 : index
    %53 = vector.load %arg17[%c0_55, %c0_56, %c0_57] : memref<1x64x32xbf16, #tpu.memory_space<vmem>>, vector<1x64x32xbf16>
    %54 = vector.shape_cast %53 : vector<1x64x32xbf16> to vector<64x32xbf16>
    %c0_58 = arith.constant 0 : index
    %c0_59 = arith.constant 0 : index
    %c0_60 = arith.constant 0 : index
    %55 = vector.load %arg18[%c0_58, %c0_59, %c0_60] : memref<1x1x32xf32, #tpu.memory_space<vmem>>, vector<1x1x32xf32>
    %56 = vector.shape_cast %55 : vector<1x1x32xf32> to vector<1x32xf32>
    %c0_61 = arith.constant 0 : index
    %c0_62 = arith.constant 0 : index
    %c0_63 = arith.constant 0 : index
    %57 = vector.load %arg19[%c0_61, %c0_62, %c0_63] : memref<1x1x32xf32, #tpu.memory_space<vmem>>, vector<1x1x32xf32>
    %58 = vector.shape_cast %57 : vector<1x1x32xf32> to vector<1x32xf32>
    %c0_64 = arith.constant 0 : index
    %c0_65 = arith.constant 0 : index
    %c0_66 = arith.constant 0 : index
    %59 = vector.load %arg20[%c0_64, %c0_65, %c0_66] : memref<1x1x32xf32, #tpu.memory_space<vmem>>, vector<1x1x32xf32>
    %60 = vector.shape_cast %59 : vector<1x1x32xf32> to vector<1x32xf32>
    %c0_67 = arith.constant 0 : index
    %c0_68 = arith.constant 0 : index
    %c0_69 = arith.constant 0 : index
    %61 = vector.load %arg21[%c0_67, %c0_68, %c0_69] : memref<1x1x32xf32, #tpu.memory_space<vmem>>, vector<1x1x32xf32>
    %62 = vector.shape_cast %61 : vector<1x1x32xf32> to vector<1x32xf32>
    %c0_70 = arith.constant 0 : index
    %c0_71 = arith.constant 0 : index
    %c0_72 = arith.constant 0 : index
    %63 = vector.load %arg22[%c0_70, %c0_71, %c0_72] : memref<1x1x32xf32, #tpu.memory_space<vmem>>, vector<1x1x32xf32>
    %64 = vector.shape_cast %63 : vector<1x1x32xf32> to vector<1x32xf32>
    %c0_73 = arith.constant 0 : index
    %c0_74 = arith.constant 0 : index
    %c0_75 = arith.constant 0 : index
    %65 = vector.load %arg23[%c0_73, %c0_74, %c0_75] : memref<1x1x32xf32, #tpu.memory_space<vmem>>, vector<1x1x32xf32>
    %66 = vector.shape_cast %65 : vector<1x1x32xf32> to vector<1x32xf32>
    %c0_76 = arith.constant 0 : index
    %c0_77 = arith.constant 0 : index
    %c0_78 = arith.constant 0 : index
    %67 = vector.load %arg24[%c0_76, %c0_77, %c0_78] : memref<1x1x32xf32, #tpu.memory_space<vmem>>, vector<1x1x32xf32>
    %68 = vector.shape_cast %67 : vector<1x1x32xf32> to vector<1x32xf32>
    %69 = arith.truncf %3 : vector<16x32xf32> to vector<16x32xbf16>
    %cst_79 = arith.constant dense<0.000000e+00> : vector<16x96xf32>
    %70 = tpu.matmul %69, %30, %cst_79 {dimension_numbers = #tpu.dot_dimension_numbers<[1], [0], [0], [1], [0, 0, 1, 1], [], []>} : vector<16x32xbf16>, vector<32x96xbf16>, vector<16x96xf32> -> vector<16x96xf32>
    %71 = vector.broadcast %32 : vector<1x96xf32> to vector<16x96xf32>
    %72 = arith.addf %70, %71 : vector<16x96xf32>
    %73 = vector.extract_strided_slice %72 {offsets = [0, 0], sizes = [16, 32], strides = [1, 1]} : vector<16x96xf32> to vector<16x32xf32>
    %74 = vector.extract_strided_slice %72 {offsets = [0, 32], sizes = [16, 32], strides = [1, 1]} : vector<16x96xf32> to vector<16x32xf32>
    %75 = vector.extract_strided_slice %72 {offsets = [0, 64], sizes = [16, 32], strides = [1, 1]} : vector<16x96xf32> to vector<16x32xf32>
    %76 = arith.truncf %73 : vector<16x32xf32> to vector<16x32xbf16>
    %77 = arith.truncf %74 : vector<16x32xf32> to vector<16x32xbf16>
    %78 = arith.truncf %75 : vector<16x32xf32> to vector<16x32xbf16>
    %79 = vector.extract_strided_slice %76 {offsets = [0, 0], sizes = [8, 32], strides = [1, 1]} : vector<16x32xbf16> to vector<8x32xbf16>
    %80 = vector.extract_strided_slice %77 {offsets = [0, 0], sizes = [8, 32], strides = [1, 1]} : vector<16x32xbf16> to vector<8x32xbf16>
    %81 = vector.extract_strided_slice %78 {offsets = [0, 0], sizes = [8, 32], strides = [1, 1]} : vector<16x32xbf16> to vector<8x32xbf16>
    %82 = vector.extract_strided_slice %79 {offsets = [0, 0], sizes = [8, 8], strides = [1, 1]} : vector<8x32xbf16> to vector<8x8xbf16>
    %83 = vector.extract_strided_slice %80 {offsets = [0, 0], sizes = [8, 8], strides = [1, 1]} : vector<8x32xbf16> to vector<8x8xbf16>
    %cst_80 = arith.constant dense<0.000000e+00> : vector<8x8xf32>
    %84 = tpu.matmul %82, %83, %cst_80 {dimension_numbers = #tpu.dot_dimension_numbers<[1], [1], [0], [0], [0, 0, 1, 0], [], []>} : vector<8x8xbf16>, vector<8x8xbf16>, vector<8x8xf32> -> vector<8x8xf32>
    %cst_81 = arith.constant 0.353553385 : f32
    %85 = vector.broadcast %cst_81 : f32 to vector<8x8xf32>
    %86 = arith.mulf %84, %85 : vector<8x8xf32>
    %cst_82 = arith.constant -1.000000e+09 : f32
    %87 = vector.broadcast %cst_82 : f32 to vector<8x8xf32>
    %88 = arith.select %22, %86, %87 : vector<8x8xi1>, vector<8x8xf32>
    %cst_83 = arith.constant dense<0xFF800000> : vector<8xf32>
    %89 = vector.multi_reduction <maximumf>, %88, %cst_83 [1] : vector<8x8xf32> to vector<8xf32>
    %90 = vector.shape_cast %89 : vector<8xf32> to vector<8x1xf32>
    %91 = vector.broadcast %90 : vector<8x1xf32> to vector<8x8xf32>
    %92 = arith.subf %88, %91 : vector<8x8xf32>
    %93 = math.exp %92 : vector<8x8xf32>
    %cst_84 = arith.constant dense<0.000000e+00> : vector<8xf32>
    %94 = vector.multi_reduction <add>, %93, %cst_84 [1] : vector<8x8xf32> to vector<8xf32>
    %95 = vector.shape_cast %94 : vector<8xf32> to vector<8x1xf32>
    %96 = vector.broadcast %95 : vector<8x1xf32> to vector<8x8xf32>
    %97 = arith.divf %93, %96 : vector<8x8xf32>
    %98 = arith.truncf %97 : vector<8x8xf32> to vector<8x8xbf16>
    %99 = vector.extract_strided_slice %81 {offsets = [0, 0], sizes = [8, 8], strides = [1, 1]} : vector<8x32xbf16> to vector<8x8xbf16>
    %cst_85 = arith.constant dense<0.000000e+00> : vector<8x8xf32>
    %100 = tpu.matmul %98, %99, %cst_85 {dimension_numbers = #tpu.dot_dimension_numbers<[1], [0], [0], [1], [0, 0, 1, 1], [], []>} : vector<8x8xbf16>, vector<8x8xbf16>, vector<8x8xf32> -> vector<8x8xf32>
    %101 = arith.truncf %100 : vector<8x8xf32> to vector<8x8xbf16>
    %102 = vector.extract_strided_slice %34 {offsets = [0, 0], sizes = [8, 32], strides = [1, 1]} : vector<32x32xbf16> to vector<8x32xbf16>
    %cst_86 = arith.constant dense<0.000000e+00> : vector<8x32xf32>
    %103 = tpu.matmul %101, %102, %cst_86 {dimension_numbers = #tpu.dot_dimension_numbers<[1], [0], [0], [1], [0, 0, 1, 1], [], []>} : vector<8x8xbf16>, vector<8x32xbf16>, vector<8x32xf32> -> vector<8x32xf32>
    %104 = vector.extract_strided_slice %79 {offsets = [0, 8], sizes = [8, 8], strides = [1, 1]} : vector<8x32xbf16> to vector<8x8xbf16>
    %105 = vector.extract_strided_slice %80 {offsets = [0, 8], sizes = [8, 8], strides = [1, 1]} : vector<8x32xbf16> to vector<8x8xbf16>
    %cst_87 = arith.constant dense<0.000000e+00> : vector<8x8xf32>
    %106 = tpu.matmul %104, %105, %cst_87 {dimension_numbers = #tpu.dot_dimension_numbers<[1], [1], [0], [0], [0, 0, 1, 0], [], []>} : vector<8x8xbf16>, vector<8x8xbf16>, vector<8x8xf32> -> vector<8x8xf32>
    %cst_88 = arith.constant 0.353553385 : f32
    %107 = vector.broadcast %cst_88 : f32 to vector<8x8xf32>
    %108 = arith.mulf %106, %107 : vector<8x8xf32>
    %cst_89 = arith.constant -1.000000e+09 : f32
    %109 = vector.broadcast %cst_89 : f32 to vector<8x8xf32>
    %110 = arith.select %22, %108, %109 : vector<8x8xi1>, vector<8x8xf32>
    %cst_90 = arith.constant dense<0xFF800000> : vector<8xf32>
    %111 = vector.multi_reduction <maximumf>, %110, %cst_90 [1] : vector<8x8xf32> to vector<8xf32>
    %112 = vector.shape_cast %111 : vector<8xf32> to vector<8x1xf32>
    %113 = vector.broadcast %112 : vector<8x1xf32> to vector<8x8xf32>
    %114 = arith.subf %110, %113 : vector<8x8xf32>
    %115 = math.exp %114 : vector<8x8xf32>
    %cst_91 = arith.constant dense<0.000000e+00> : vector<8xf32>
    %116 = vector.multi_reduction <add>, %115, %cst_91 [1] : vector<8x8xf32> to vector<8xf32>
    %117 = vector.shape_cast %116 : vector<8xf32> to vector<8x1xf32>
    %118 = vector.broadcast %117 : vector<8x1xf32> to vector<8x8xf32>
    %119 = arith.divf %115, %118 : vector<8x8xf32>
    %120 = arith.truncf %119 : vector<8x8xf32> to vector<8x8xbf16>
    %121 = vector.extract_strided_slice %81 {offsets = [0, 8], sizes = [8, 8], strides = [1, 1]} : vector<8x32xbf16> to vector<8x8xbf16>
    %cst_92 = arith.constant dense<0.000000e+00> : vector<8x8xf32>
    %122 = tpu.matmul %120, %121, %cst_92 {dimension_numbers = #tpu.dot_dimension_numbers<[1], [0], [0], [1], [0, 0, 1, 1], [], []>} : vector<8x8xbf16>, vector<8x8xbf16>, vector<8x8xf32> -> vector<8x8xf32>
    %123 = arith.truncf %122 : vector<8x8xf32> to vector<8x8xbf16>
    %124 = vector.extract_strided_slice %34 {offsets = [8, 0], sizes = [8, 32], strides = [1, 1]} : vector<32x32xbf16> to vector<8x32xbf16>
    %cst_93 = arith.constant dense<0.000000e+00> : vector<8x32xf32>
    %125 = tpu.matmul %123, %124, %cst_93 {dimension_numbers = #tpu.dot_dimension_numbers<[1], [0], [0], [1], [0, 0, 1, 1], [], []>} : vector<8x8xbf16>, vector<8x32xbf16>, vector<8x32xf32> -> vector<8x32xf32>
    %126 = arith.addf %103, %125 : vector<8x32xf32>
    %127 = vector.extract_strided_slice %79 {offsets = [0, 16], sizes = [8, 8], strides = [1, 1]} : vector<8x32xbf16> to vector<8x8xbf16>
    %128 = vector.extract_strided_slice %80 {offsets = [0, 16], sizes = [8, 8], strides = [1, 1]} : vector<8x32xbf16> to vector<8x8xbf16>
    %cst_94 = arith.constant dense<0.000000e+00> : vector<8x8xf32>
    %129 = tpu.matmul %127, %128, %cst_94 {dimension_numbers = #tpu.dot_dimension_numbers<[1], [1], [0], [0], [0, 0, 1, 0], [], []>} : vector<8x8xbf16>, vector<8x8xbf16>, vector<8x8xf32> -> vector<8x8xf32>
    %cst_95 = arith.constant 0.353553385 : f32
    %130 = vector.broadcast %cst_95 : f32 to vector<8x8xf32>
    %131 = arith.mulf %129, %130 : vector<8x8xf32>
    %cst_96 = arith.constant -1.000000e+09 : f32
    %132 = vector.broadcast %cst_96 : f32 to vector<8x8xf32>
    %133 = arith.select %22, %131, %132 : vector<8x8xi1>, vector<8x8xf32>
    %cst_97 = arith.constant dense<0xFF800000> : vector<8xf32>
    %134 = vector.multi_reduction <maximumf>, %133, %cst_97 [1] : vector<8x8xf32> to vector<8xf32>
    %135 = vector.shape_cast %134 : vector<8xf32> to vector<8x1xf32>
    %136 = vector.broadcast %135 : vector<8x1xf32> to vector<8x8xf32>
    %137 = arith.subf %133, %136 : vector<8x8xf32>
    %138 = math.exp %137 : vector<8x8xf32>
    %cst_98 = arith.constant dense<0.000000e+00> : vector<8xf32>
    %139 = vector.multi_reduction <add>, %138, %cst_98 [1] : vector<8x8xf32> to vector<8xf32>
    %140 = vector.shape_cast %139 : vector<8xf32> to vector<8x1xf32>
    %141 = vector.broadcast %140 : vector<8x1xf32> to vector<8x8xf32>
    %142 = arith.divf %138, %141 : vector<8x8xf32>
    %143 = arith.truncf %142 : vector<8x8xf32> to vector<8x8xbf16>
    %144 = vector.extract_strided_slice %81 {offsets = [0, 16], sizes = [8, 8], strides = [1, 1]} : vector<8x32xbf16> to vector<8x8xbf16>
    %cst_99 = arith.constant dense<0.000000e+00> : vector<8x8xf32>
    %145 = tpu.matmul %143, %144, %cst_99 {dimension_numbers = #tpu.dot_dimension_numbers<[1], [0], [0], [1], [0, 0, 1, 1], [], []>} : vector<8x8xbf16>, vector<8x8xbf16>, vector<8x8xf32> -> vector<8x8xf32>
    %146 = arith.truncf %145 : vector<8x8xf32> to vector<8x8xbf16>
    %147 = vector.extract_strided_slice %34 {offsets = [16, 0], sizes = [8, 32], strides = [1, 1]} : vector<32x32xbf16> to vector<8x32xbf16>
    %cst_100 = arith.constant dense<0.000000e+00> : vector<8x32xf32>
    %148 = tpu.matmul %146, %147, %cst_100 {dimension_numbers = #tpu.dot_dimension_numbers<[1], [0], [0], [1], [0, 0, 1, 1], [], []>} : vector<8x8xbf16>, vector<8x32xbf16>, vector<8x32xf32> -> vector<8x32xf32>
    %149 = arith.addf %126, %148 : vector<8x32xf32>
    %150 = vector.extract_strided_slice %79 {offsets = [0, 24], sizes = [8, 8], strides = [1, 1]} : vector<8x32xbf16> to vector<8x8xbf16>
    %151 = vector.extract_strided_slice %80 {offsets = [0, 24], sizes = [8, 8], strides = [1, 1]} : vector<8x32xbf16> to vector<8x8xbf16>
    %cst_101 = arith.constant dense<0.000000e+00> : vector<8x8xf32>
    %152 = tpu.matmul %150, %151, %cst_101 {dimension_numbers = #tpu.dot_dimension_numbers<[1], [1], [0], [0], [0, 0, 1, 0], [], []>} : vector<8x8xbf16>, vector<8x8xbf16>, vector<8x8xf32> -> vector<8x8xf32>
    %cst_102 = arith.constant 0.353553385 : f32
    %153 = vector.broadcast %cst_102 : f32 to vector<8x8xf32>
    %154 = arith.mulf %152, %153 : vector<8x8xf32>
    %cst_103 = arith.constant -1.000000e+09 : f32
    %155 = vector.broadcast %cst_103 : f32 to vector<8x8xf32>
    %156 = arith.select %22, %154, %155 : vector<8x8xi1>, vector<8x8xf32>
    %cst_104 = arith.constant dense<0xFF800000> : vector<8xf32>
    %157 = vector.multi_reduction <maximumf>, %156, %cst_104 [1] : vector<8x8xf32> to vector<8xf32>
    %158 = vector.shape_cast %157 : vector<8xf32> to vector<8x1xf32>
    %159 = vector.broadcast %158 : vector<8x1xf32> to vector<8x8xf32>
    %160 = arith.subf %156, %159 : vector<8x8xf32>
    %161 = math.exp %160 : vector<8x8xf32>
    %cst_105 = arith.constant dense<0.000000e+00> : vector<8xf32>
    %162 = vector.multi_reduction <add>, %161, %cst_105 [1] : vector<8x8xf32> to vector<8xf32>
    %163 = vector.shape_cast %162 : vector<8xf32> to vector<8x1xf32>
    %164 = vector.broadcast %163 : vector<8x1xf32> to vector<8x8xf32>
    %165 = arith.divf %161, %164 : vector<8x8xf32>
    %166 = arith.truncf %165 : vector<8x8xf32> to vector<8x8xbf16>
    %167 = vector.extract_strided_slice %81 {offsets = [0, 24], sizes = [8, 8], strides = [1, 1]} : vector<8x32xbf16> to vector<8x8xbf16>
    %cst_106 = arith.constant dense<0.000000e+00> : vector<8x8xf32>
    %168 = tpu.matmul %166, %167, %cst_106 {dimension_numbers = #tpu.dot_dimension_numbers<[1], [0], [0], [1], [0, 0, 1, 1], [], []>} : vector<8x8xbf16>, vector<8x8xbf16>, vector<8x8xf32> -> vector<8x8xf32>
    %169 = arith.truncf %168 : vector<8x8xf32> to vector<8x8xbf16>
    %170 = vector.extract_strided_slice %34 {offsets = [24, 0], sizes = [8, 32], strides = [1, 1]} : vector<32x32xbf16> to vector<8x32xbf16>
    %cst_107 = arith.constant dense<0.000000e+00> : vector<8x32xf32>
    %171 = tpu.matmul %169, %170, %cst_107 {dimension_numbers = #tpu.dot_dimension_numbers<[1], [0], [0], [1], [0, 0, 1, 1], [], []>} : vector<8x8xbf16>, vector<8x32xbf16>, vector<8x32xf32> -> vector<8x32xf32>
    %172 = arith.addf %149, %171 : vector<8x32xf32>
    %173 = vector.extract_strided_slice %76 {offsets = [8, 0], sizes = [8, 32], strides = [1, 1]} : vector<16x32xbf16> to vector<8x32xbf16>
    %174 = vector.extract_strided_slice %77 {offsets = [8, 0], sizes = [8, 32], strides = [1, 1]} : vector<16x32xbf16> to vector<8x32xbf16>
    %175 = vector.extract_strided_slice %78 {offsets = [8, 0], sizes = [8, 32], strides = [1, 1]} : vector<16x32xbf16> to vector<8x32xbf16>
    %176 = vector.extract_strided_slice %173 {offsets = [0, 0], sizes = [8, 8], strides = [1, 1]} : vector<8x32xbf16> to vector<8x8xbf16>
    %177 = vector.extract_strided_slice %174 {offsets = [0, 0], sizes = [8, 8], strides = [1, 1]} : vector<8x32xbf16> to vector<8x8xbf16>
    %cst_108 = arith.constant dense<0.000000e+00> : vector<8x8xf32>
    %178 = tpu.matmul %176, %177, %cst_108 {dimension_numbers = #tpu.dot_dimension_numbers<[1], [1], [0], [0], [0, 0, 1, 0], [], []>} : vector<8x8xbf16>, vector<8x8xbf16>, vector<8x8xf32> -> vector<8x8xf32>
    %cst_109 = arith.constant 0.353553385 : f32
    %179 = vector.broadcast %cst_109 : f32 to vector<8x8xf32>
    %180 = arith.mulf %178, %179 : vector<8x8xf32>
    %cst_110 = arith.constant -1.000000e+09 : f32
    %181 = vector.broadcast %cst_110 : f32 to vector<8x8xf32>
    %182 = arith.select %28, %180, %181 : vector<8x8xi1>, vector<8x8xf32>
    %cst_111 = arith.constant dense<0xFF800000> : vector<8xf32>
    %183 = vector.multi_reduction <maximumf>, %182, %cst_111 [1] : vector<8x8xf32> to vector<8xf32>
    %184 = vector.shape_cast %183 : vector<8xf32> to vector<8x1xf32>
    %185 = vector.broadcast %184 : vector<8x1xf32> to vector<8x8xf32>
    %186 = arith.subf %182, %185 : vector<8x8xf32>
    %187 = math.exp %186 : vector<8x8xf32>
    %cst_112 = arith.constant dense<0.000000e+00> : vector<8xf32>
    %188 = vector.multi_reduction <add>, %187, %cst_112 [1] : vector<8x8xf32> to vector<8xf32>
    %189 = vector.shape_cast %188 : vector<8xf32> to vector<8x1xf32>
    %190 = vector.broadcast %189 : vector<8x1xf32> to vector<8x8xf32>
    %191 = arith.divf %187, %190 : vector<8x8xf32>
    %192 = arith.truncf %191 : vector<8x8xf32> to vector<8x8xbf16>
    %193 = vector.extract_strided_slice %175 {offsets = [0, 0], sizes = [8, 8], strides = [1, 1]} : vector<8x32xbf16> to vector<8x8xbf16>
    %cst_113 = arith.constant dense<0.000000e+00> : vector<8x8xf32>
    %194 = tpu.matmul %192, %193, %cst_113 {dimension_numbers = #tpu.dot_dimension_numbers<[1], [0], [0], [1], [0, 0, 1, 1], [], []>} : vector<8x8xbf16>, vector<8x8xbf16>, vector<8x8xf32> -> vector<8x8xf32>
    %195 = arith.truncf %194 : vector<8x8xf32> to vector<8x8xbf16>
    %196 = vector.extract_strided_slice %34 {offsets = [0, 0], sizes = [8, 32], strides = [1, 1]} : vector<32x32xbf16> to vector<8x32xbf16>
    %cst_114 = arith.constant dense<0.000000e+00> : vector<8x32xf32>
    %197 = tpu.matmul %195, %196, %cst_114 {dimension_numbers = #tpu.dot_dimension_numbers<[1], [0], [0], [1], [0, 0, 1, 1], [], []>} : vector<8x8xbf16>, vector<8x32xbf16>, vector<8x32xf32> -> vector<8x32xf32>
    %198 = vector.extract_strided_slice %173 {offsets = [0, 8], sizes = [8, 8], strides = [1, 1]} : vector<8x32xbf16> to vector<8x8xbf16>
    %199 = vector.extract_strided_slice %174 {offsets = [0, 8], sizes = [8, 8], strides = [1, 1]} : vector<8x32xbf16> to vector<8x8xbf16>
    %cst_115 = arith.constant dense<0.000000e+00> : vector<8x8xf32>
    %200 = tpu.matmul %198, %199, %cst_115 {dimension_numbers = #tpu.dot_dimension_numbers<[1], [1], [0], [0], [0, 0, 1, 0], [], []>} : vector<8x8xbf16>, vector<8x8xbf16>, vector<8x8xf32> -> vector<8x8xf32>
    %cst_116 = arith.constant 0.353553385 : f32
    %201 = vector.broadcast %cst_116 : f32 to vector<8x8xf32>
    %202 = arith.mulf %200, %201 : vector<8x8xf32>
    %cst_117 = arith.constant -1.000000e+09 : f32
    %203 = vector.broadcast %cst_117 : f32 to vector<8x8xf32>
    %204 = arith.select %28, %202, %203 : vector<8x8xi1>, vector<8x8xf32>
    %cst_118 = arith.constant dense<0xFF800000> : vector<8xf32>
    %205 = vector.multi_reduction <maximumf>, %204, %cst_118 [1] : vector<8x8xf32> to vector<8xf32>
    %206 = vector.shape_cast %205 : vector<8xf32> to vector<8x1xf32>
    %207 = vector.broadcast %206 : vector<8x1xf32> to vector<8x8xf32>
    %208 = arith.subf %204, %207 : vector<8x8xf32>
    %209 = math.exp %208 : vector<8x8xf32>
    %cst_119 = arith.constant dense<0.000000e+00> : vector<8xf32>
    %210 = vector.multi_reduction <add>, %209, %cst_119 [1] : vector<8x8xf32> to vector<8xf32>
    %211 = vector.shape_cast %210 : vector<8xf32> to vector<8x1xf32>
    %212 = vector.broadcast %211 : vector<8x1xf32> to vector<8x8xf32>
    %213 = arith.divf %209, %212 : vector<8x8xf32>
    %214 = arith.truncf %213 : vector<8x8xf32> to vector<8x8xbf16>
    %215 = vector.extract_strided_slice %175 {offsets = [0, 8], sizes = [8, 8], strides = [1, 1]} : vector<8x32xbf16> to vector<8x8xbf16>
    %cst_120 = arith.constant dense<0.000000e+00> : vector<8x8xf32>
    %216 = tpu.matmul %214, %215, %cst_120 {dimension_numbers = #tpu.dot_dimension_numbers<[1], [0], [0], [1], [0, 0, 1, 1], [], []>} : vector<8x8xbf16>, vector<8x8xbf16>, vector<8x8xf32> -> vector<8x8xf32>
    %217 = arith.truncf %216 : vector<8x8xf32> to vector<8x8xbf16>
    %218 = vector.extract_strided_slice %34 {offsets = [8, 0], sizes = [8, 32], strides = [1, 1]} : vector<32x32xbf16> to vector<8x32xbf16>
    %cst_121 = arith.constant dense<0.000000e+00> : vector<8x32xf32>
    %219 = tpu.matmul %217, %218, %cst_121 {dimension_numbers = #tpu.dot_dimension_numbers<[1], [0], [0], [1], [0, 0, 1, 1], [], []>} : vector<8x8xbf16>, vector<8x32xbf16>, vector<8x32xf32> -> vector<8x32xf32>
    %220 = arith.addf %197, %219 : vector<8x32xf32>
    %221 = vector.extract_strided_slice %173 {offsets = [0, 16], sizes = [8, 8], strides = [1, 1]} : vector<8x32xbf16> to vector<8x8xbf16>
    %222 = vector.extract_strided_slice %174 {offsets = [0, 16], sizes = [8, 8], strides = [1, 1]} : vector<8x32xbf16> to vector<8x8xbf16>
    %cst_122 = arith.constant dense<0.000000e+00> : vector<8x8xf32>
    %223 = tpu.matmul %221, %222, %cst_122 {dimension_numbers = #tpu.dot_dimension_numbers<[1], [1], [0], [0], [0, 0, 1, 0], [], []>} : vector<8x8xbf16>, vector<8x8xbf16>, vector<8x8xf32> -> vector<8x8xf32>
    %cst_123 = arith.constant 0.353553385 : f32
    %224 = vector.broadcast %cst_123 : f32 to vector<8x8xf32>
    %225 = arith.mulf %223, %224 : vector<8x8xf32>
    %cst_124 = arith.constant -1.000000e+09 : f32
    %226 = vector.broadcast %cst_124 : f32 to vector<8x8xf32>
    %227 = arith.select %28, %225, %226 : vector<8x8xi1>, vector<8x8xf32>
    %cst_125 = arith.constant dense<0xFF800000> : vector<8xf32>
    %228 = vector.multi_reduction <maximumf>, %227, %cst_125 [1] : vector<8x8xf32> to vector<8xf32>
    %229 = vector.shape_cast %228 : vector<8xf32> to vector<8x1xf32>
    %230 = vector.broadcast %229 : vector<8x1xf32> to vector<8x8xf32>
    %231 = arith.subf %227, %230 : vector<8x8xf32>
    %232 = math.exp %231 : vector<8x8xf32>
    %cst_126 = arith.constant dense<0.000000e+00> : vector<8xf32>
    %233 = vector.multi_reduction <add>, %232, %cst_126 [1] : vector<8x8xf32> to vector<8xf32>
    %234 = vector.shape_cast %233 : vector<8xf32> to vector<8x1xf32>
    %235 = vector.broadcast %234 : vector<8x1xf32> to vector<8x8xf32>
    %236 = arith.divf %232, %235 : vector<8x8xf32>
    %237 = arith.truncf %236 : vector<8x8xf32> to vector<8x8xbf16>
    %238 = vector.extract_strided_slice %175 {offsets = [0, 16], sizes = [8, 8], strides = [1, 1]} : vector<8x32xbf16> to vector<8x8xbf16>
    %cst_127 = arith.constant dense<0.000000e+00> : vector<8x8xf32>
    %239 = tpu.matmul %237, %238, %cst_127 {dimension_numbers = #tpu.dot_dimension_numbers<[1], [0], [0], [1], [0, 0, 1, 1], [], []>} : vector<8x8xbf16>, vector<8x8xbf16>, vector<8x8xf32> -> vector<8x8xf32>
    %240 = arith.truncf %239 : vector<8x8xf32> to vector<8x8xbf16>
    %241 = vector.extract_strided_slice %34 {offsets = [16, 0], sizes = [8, 32], strides = [1, 1]} : vector<32x32xbf16> to vector<8x32xbf16>
    %cst_128 = arith.constant dense<0.000000e+00> : vector<8x32xf32>
    %242 = tpu.matmul %240, %241, %cst_128 {dimension_numbers = #tpu.dot_dimension_numbers<[1], [0], [0], [1], [0, 0, 1, 1], [], []>} : vector<8x8xbf16>, vector<8x32xbf16>, vector<8x32xf32> -> vector<8x32xf32>
    %243 = arith.addf %220, %242 : vector<8x32xf32>
    %244 = vector.extract_strided_slice %173 {offsets = [0, 24], sizes = [8, 8], strides = [1, 1]} : vector<8x32xbf16> to vector<8x8xbf16>
    %245 = vector.extract_strided_slice %174 {offsets = [0, 24], sizes = [8, 8], strides = [1, 1]} : vector<8x32xbf16> to vector<8x8xbf16>
    %cst_129 = arith.constant dense<0.000000e+00> : vector<8x8xf32>
    %246 = tpu.matmul %244, %245, %cst_129 {dimension_numbers = #tpu.dot_dimension_numbers<[1], [1], [0], [0], [0, 0, 1, 0], [], []>} : vector<8x8xbf16>, vector<8x8xbf16>, vector<8x8xf32> -> vector<8x8xf32>
    %cst_130 = arith.constant 0.353553385 : f32
    %247 = vector.broadcast %cst_130 : f32 to vector<8x8xf32>
    %248 = arith.mulf %246, %247 : vector<8x8xf32>
    %cst_131 = arith.constant -1.000000e+09 : f32
    %249 = vector.broadcast %cst_131 : f32 to vector<8x8xf32>
    %250 = arith.select %28, %248, %249 : vector<8x8xi1>, vector<8x8xf32>
    %cst_132 = arith.constant dense<0xFF800000> : vector<8xf32>
    %251 = vector.multi_reduction <maximumf>, %250, %cst_132 [1] : vector<8x8xf32> to vector<8xf32>
    %252 = vector.shape_cast %251 : vector<8xf32> to vector<8x1xf32>
    %253 = vector.broadcast %252 : vector<8x1xf32> to vector<8x8xf32>
    %254 = arith.subf %250, %253 : vector<8x8xf32>
    %255 = math.exp %254 : vector<8x8xf32>
    %cst_133 = arith.constant dense<0.000000e+00> : vector<8xf32>
    %256 = vector.multi_reduction <add>, %255, %cst_133 [1] : vector<8x8xf32> to vector<8xf32>
    %257 = vector.shape_cast %256 : vector<8xf32> to vector<8x1xf32>
    %258 = vector.broadcast %257 : vector<8x1xf32> to vector<8x8xf32>
    %259 = arith.divf %255, %258 : vector<8x8xf32>
    %260 = arith.truncf %259 : vector<8x8xf32> to vector<8x8xbf16>
    %261 = vector.extract_strided_slice %175 {offsets = [0, 24], sizes = [8, 8], strides = [1, 1]} : vector<8x32xbf16> to vector<8x8xbf16>
    %cst_134 = arith.constant dense<0.000000e+00> : vector<8x8xf32>
    %262 = tpu.matmul %260, %261, %cst_134 {dimension_numbers = #tpu.dot_dimension_numbers<[1], [0], [0], [1], [0, 0, 1, 1], [], []>} : vector<8x8xbf16>, vector<8x8xbf16>, vector<8x8xf32> -> vector<8x8xf32>
    %263 = arith.truncf %262 : vector<8x8xf32> to vector<8x8xbf16>
    %264 = vector.extract_strided_slice %34 {offsets = [24, 0], sizes = [8, 32], strides = [1, 1]} : vector<32x32xbf16> to vector<8x32xbf16>
    %cst_135 = arith.constant dense<0.000000e+00> : vector<8x32xf32>
    %265 = tpu.matmul %263, %264, %cst_135 {dimension_numbers = #tpu.dot_dimension_numbers<[1], [0], [0], [1], [0, 0, 1, 1], [], []>} : vector<8x8xbf16>, vector<8x32xbf16>, vector<8x32xf32> -> vector<8x32xf32>
    %266 = arith.addf %243, %265 : vector<8x32xf32>
    %267 = tpu.concatenate %172, %266 in 0 : vector<8x32xf32>, vector<8x32xf32> -> vector<16x32xf32>
    %268 = vector.broadcast %36 : vector<1x32xf32> to vector<16x32xf32>
    %269 = arith.addf %267, %268 : vector<16x32xf32>
    %270 = arith.addf %3, %269 : vector<16x32xf32>
    %cst_136 = arith.constant dense<0.000000e+00> : vector<16xf32>
    %271 = vector.multi_reduction <add>, %270, %cst_136 [1] : vector<16x32xf32> to vector<16xf32>
    %272 = vector.shape_cast %271 : vector<16xf32> to vector<16x1xf32>
    %cst_137 = arith.constant 3.200000e+01 : f32
    %273 = vector.broadcast %cst_137 : f32 to vector<16x1xf32>
    %274 = arith.divf %272, %273 : vector<16x1xf32>
    %275 = vector.broadcast %274 : vector<16x1xf32> to vector<16x32xf32>
    %276 = arith.subf %270, %275 : vector<16x32xf32>
    %277 = arith.mulf %276, %276 : vector<16x32xf32>
    %cst_138 = arith.constant dense<0.000000e+00> : vector<16xf32>
    %278 = vector.multi_reduction <add>, %277, %cst_138 [1] : vector<16x32xf32> to vector<16xf32>
    %279 = vector.shape_cast %278 : vector<16xf32> to vector<16x1xf32>
    %cst_139 = arith.constant 3.200000e+01 : f32
    %280 = vector.broadcast %cst_139 : f32 to vector<16x1xf32>
    %281 = arith.divf %279, %280 : vector<16x1xf32>
    %282 = vector.broadcast %274 : vector<16x1xf32> to vector<16x32xf32>
    %283 = arith.subf %270, %282 : vector<16x32xf32>
    %cst_140 = arith.constant 9.99999974E-6 : f32
    %284 = vector.broadcast %cst_140 : f32 to vector<16x1xf32>
    %285 = arith.addf %281, %284 : vector<16x1xf32>
    %286 = math.rsqrt %285 : vector<16x1xf32>
    %287 = vector.broadcast %286 : vector<16x1xf32> to vector<16x32xf32>
    %288 = arith.mulf %283, %287 : vector<16x32xf32>
    %289 = vector.broadcast %58 : vector<1x32xf32> to vector<16x32xf32>
    %290 = arith.mulf %288, %289 : vector<16x32xf32>
    %291 = vector.broadcast %60 : vector<1x32xf32> to vector<16x32xf32>
    %292 = arith.addf %290, %291 : vector<16x32xf32>
    %293 = arith.truncf %292 : vector<16x32xf32> to vector<16x32xbf16>
    %cst_141 = arith.constant dense<0.000000e+00> : vector<16x32xf32>
    %294 = tpu.matmul %293, %38, %cst_141 {dimension_numbers = #tpu.dot_dimension_numbers<[1], [0], [0], [1], [0, 0, 1, 1], [], []>} : vector<16x32xbf16>, vector<32x32xbf16>, vector<16x32xf32> -> vector<16x32xf32>
    %295 = vector.broadcast %40 : vector<1x32xf32> to vector<16x32xf32>
    %296 = arith.addf %294, %295 : vector<16x32xf32>
    %297 = arith.truncf %5 : vector<16x32xf32> to vector<16x32xbf16>
    %cst_142 = arith.constant dense<0.000000e+00> : vector<16x64xf32>
    %298 = tpu.matmul %297, %42, %cst_142 {dimension_numbers = #tpu.dot_dimension_numbers<[1], [0], [0], [1], [0, 0, 1, 1], [], []>} : vector<16x32xbf16>, vector<32x64xbf16>, vector<16x64xf32> -> vector<16x64xf32>
    %299 = vector.broadcast %44 : vector<1x64xf32> to vector<16x64xf32>
    %300 = arith.addf %298, %299 : vector<16x64xf32>
    %301 = vector.extract_strided_slice %300 {offsets = [0, 0], sizes = [16, 32], strides = [1, 1]} : vector<16x64xf32> to vector<16x32xf32>
    %302 = vector.extract_strided_slice %300 {offsets = [0, 32], sizes = [16, 32], strides = [1, 1]} : vector<16x64xf32> to vector<16x32xf32>
    %303 = arith.truncf %296 : vector<16x32xf32> to vector<16x32xbf16>
    %304 = arith.truncf %301 : vector<16x32xf32> to vector<16x32xbf16>
    %305 = arith.truncf %302 : vector<16x32xf32> to vector<16x32xbf16>
    %306 = vector.extract_strided_slice %303 {offsets = [0, 0], sizes = [8, 32], strides = [1, 1]} : vector<16x32xbf16> to vector<8x32xbf16>
    %307 = vector.extract_strided_slice %304 {offsets = [0, 0], sizes = [8, 32], strides = [1, 1]} : vector<16x32xbf16> to vector<8x32xbf16>
    %308 = vector.extract_strided_slice %305 {offsets = [0, 0], sizes = [8, 32], strides = [1, 1]} : vector<16x32xbf16> to vector<8x32xbf16>
    %309 = vector.extract_strided_slice %306 {offsets = [0, 0], sizes = [8, 8], strides = [1, 1]} : vector<8x32xbf16> to vector<8x8xbf16>
    %310 = vector.extract_strided_slice %307 {offsets = [0, 0], sizes = [8, 8], strides = [1, 1]} : vector<8x32xbf16> to vector<8x8xbf16>
    %cst_143 = arith.constant dense<0.000000e+00> : vector<8x8xf32>
    %311 = tpu.matmul %309, %310, %cst_143 {dimension_numbers = #tpu.dot_dimension_numbers<[1], [1], [0], [0], [0, 0, 1, 0], [], []>} : vector<8x8xbf16>, vector<8x8xbf16>, vector<8x8xf32> -> vector<8x8xf32>
    %cst_144 = arith.constant 0.353553385 : f32
    %312 = vector.broadcast %cst_144 : f32 to vector<8x8xf32>
    %313 = arith.mulf %311, %312 : vector<8x8xf32>
    %cst_145 = arith.constant -1.000000e+09 : f32
    %314 = vector.shape_cast %12 : vector<1x8xi1> to vector<1x8xi1>
    %315 = vector.broadcast %314 : vector<1x8xi1> to vector<8x8xi1>
    %316 = vector.broadcast %cst_145 : f32 to vector<8x8xf32>
    %317 = arith.select %315, %313, %316 : vector<8x8xi1>, vector<8x8xf32>
    %cst_146 = arith.constant dense<0xFF800000> : vector<8xf32>
    %318 = vector.multi_reduction <maximumf>, %317, %cst_146 [1] : vector<8x8xf32> to vector<8xf32>
    %319 = vector.shape_cast %318 : vector<8xf32> to vector<8x1xf32>
    %320 = vector.broadcast %319 : vector<8x1xf32> to vector<8x8xf32>
    %321 = arith.subf %317, %320 : vector<8x8xf32>
    %322 = math.exp %321 : vector<8x8xf32>
    %cst_147 = arith.constant dense<0.000000e+00> : vector<8xf32>
    %323 = vector.multi_reduction <add>, %322, %cst_147 [1] : vector<8x8xf32> to vector<8xf32>
    %324 = vector.shape_cast %323 : vector<8xf32> to vector<8x1xf32>
    %325 = vector.broadcast %324 : vector<8x1xf32> to vector<8x8xf32>
    %326 = arith.divf %322, %325 : vector<8x8xf32>
    %327 = arith.truncf %326 : vector<8x8xf32> to vector<8x8xbf16>
    %328 = vector.extract_strided_slice %308 {offsets = [0, 0], sizes = [8, 8], strides = [1, 1]} : vector<8x32xbf16> to vector<8x8xbf16>
    %cst_148 = arith.constant dense<0.000000e+00> : vector<8x8xf32>
    %329 = tpu.matmul %327, %328, %cst_148 {dimension_numbers = #tpu.dot_dimension_numbers<[1], [0], [0], [1], [0, 0, 1, 1], [], []>} : vector<8x8xbf16>, vector<8x8xbf16>, vector<8x8xf32> -> vector<8x8xf32>
    %330 = arith.truncf %329 : vector<8x8xf32> to vector<8x8xbf16>
    %331 = vector.extract_strided_slice %46 {offsets = [0, 0], sizes = [8, 32], strides = [1, 1]} : vector<32x32xbf16> to vector<8x32xbf16>
    %cst_149 = arith.constant dense<0.000000e+00> : vector<8x32xf32>
    %332 = tpu.matmul %330, %331, %cst_149 {dimension_numbers = #tpu.dot_dimension_numbers<[1], [0], [0], [1], [0, 0, 1, 1], [], []>} : vector<8x8xbf16>, vector<8x32xbf16>, vector<8x32xf32> -> vector<8x32xf32>
    %333 = vector.extract_strided_slice %306 {offsets = [0, 8], sizes = [8, 8], strides = [1, 1]} : vector<8x32xbf16> to vector<8x8xbf16>
    %334 = vector.extract_strided_slice %307 {offsets = [0, 8], sizes = [8, 8], strides = [1, 1]} : vector<8x32xbf16> to vector<8x8xbf16>
    %cst_150 = arith.constant dense<0.000000e+00> : vector<8x8xf32>
    %335 = tpu.matmul %333, %334, %cst_150 {dimension_numbers = #tpu.dot_dimension_numbers<[1], [1], [0], [0], [0, 0, 1, 0], [], []>} : vector<8x8xbf16>, vector<8x8xbf16>, vector<8x8xf32> -> vector<8x8xf32>
    %cst_151 = arith.constant 0.353553385 : f32
    %336 = vector.broadcast %cst_151 : f32 to vector<8x8xf32>
    %337 = arith.mulf %335, %336 : vector<8x8xf32>
    %cst_152 = arith.constant -1.000000e+09 : f32
    %338 = vector.shape_cast %12 : vector<1x8xi1> to vector<1x8xi1>
    %339 = vector.broadcast %338 : vector<1x8xi1> to vector<8x8xi1>
    %340 = vector.broadcast %cst_152 : f32 to vector<8x8xf32>
    %341 = arith.select %339, %337, %340 : vector<8x8xi1>, vector<8x8xf32>
    %cst_153 = arith.constant dense<0xFF800000> : vector<8xf32>
    %342 = vector.multi_reduction <maximumf>, %341, %cst_153 [1] : vector<8x8xf32> to vector<8xf32>
    %343 = vector.shape_cast %342 : vector<8xf32> to vector<8x1xf32>
    %344 = vector.broadcast %343 : vector<8x1xf32> to vector<8x8xf32>
    %345 = arith.subf %341, %344 : vector<8x8xf32>
    %346 = math.exp %345 : vector<8x8xf32>
    %cst_154 = arith.constant dense<0.000000e+00> : vector<8xf32>
    %347 = vector.multi_reduction <add>, %346, %cst_154 [1] : vector<8x8xf32> to vector<8xf32>
    %348 = vector.shape_cast %347 : vector<8xf32> to vector<8x1xf32>
    %349 = vector.broadcast %348 : vector<8x1xf32> to vector<8x8xf32>
    %350 = arith.divf %346, %349 : vector<8x8xf32>
    %351 = arith.truncf %350 : vector<8x8xf32> to vector<8x8xbf16>
    %352 = vector.extract_strided_slice %308 {offsets = [0, 8], sizes = [8, 8], strides = [1, 1]} : vector<8x32xbf16> to vector<8x8xbf16>
    %cst_155 = arith.constant dense<0.000000e+00> : vector<8x8xf32>
    %353 = tpu.matmul %351, %352, %cst_155 {dimension_numbers = #tpu.dot_dimension_numbers<[1], [0], [0], [1], [0, 0, 1, 1], [], []>} : vector<8x8xbf16>, vector<8x8xbf16>, vector<8x8xf32> -> vector<8x8xf32>
    %354 = arith.truncf %353 : vector<8x8xf32> to vector<8x8xbf16>
    %355 = vector.extract_strided_slice %46 {offsets = [8, 0], sizes = [8, 32], strides = [1, 1]} : vector<32x32xbf16> to vector<8x32xbf16>
    %cst_156 = arith.constant dense<0.000000e+00> : vector<8x32xf32>
    %356 = tpu.matmul %354, %355, %cst_156 {dimension_numbers = #tpu.dot_dimension_numbers<[1], [0], [0], [1], [0, 0, 1, 1], [], []>} : vector<8x8xbf16>, vector<8x32xbf16>, vector<8x32xf32> -> vector<8x32xf32>
    %357 = arith.addf %332, %356 : vector<8x32xf32>
    %358 = vector.extract_strided_slice %306 {offsets = [0, 16], sizes = [8, 8], strides = [1, 1]} : vector<8x32xbf16> to vector<8x8xbf16>
    %359 = vector.extract_strided_slice %307 {offsets = [0, 16], sizes = [8, 8], strides = [1, 1]} : vector<8x32xbf16> to vector<8x8xbf16>
    %cst_157 = arith.constant dense<0.000000e+00> : vector<8x8xf32>
    %360 = tpu.matmul %358, %359, %cst_157 {dimension_numbers = #tpu.dot_dimension_numbers<[1], [1], [0], [0], [0, 0, 1, 0], [], []>} : vector<8x8xbf16>, vector<8x8xbf16>, vector<8x8xf32> -> vector<8x8xf32>
    %cst_158 = arith.constant 0.353553385 : f32
    %361 = vector.broadcast %cst_158 : f32 to vector<8x8xf32>
    %362 = arith.mulf %360, %361 : vector<8x8xf32>
    %cst_159 = arith.constant -1.000000e+09 : f32
    %363 = vector.shape_cast %12 : vector<1x8xi1> to vector<1x8xi1>
    %364 = vector.broadcast %363 : vector<1x8xi1> to vector<8x8xi1>
    %365 = vector.broadcast %cst_159 : f32 to vector<8x8xf32>
    %366 = arith.select %364, %362, %365 : vector<8x8xi1>, vector<8x8xf32>
    %cst_160 = arith.constant dense<0xFF800000> : vector<8xf32>
    %367 = vector.multi_reduction <maximumf>, %366, %cst_160 [1] : vector<8x8xf32> to vector<8xf32>
    %368 = vector.shape_cast %367 : vector<8xf32> to vector<8x1xf32>
    %369 = vector.broadcast %368 : vector<8x1xf32> to vector<8x8xf32>
    %370 = arith.subf %366, %369 : vector<8x8xf32>
    %371 = math.exp %370 : vector<8x8xf32>
    %cst_161 = arith.constant dense<0.000000e+00> : vector<8xf32>
    %372 = vector.multi_reduction <add>, %371, %cst_161 [1] : vector<8x8xf32> to vector<8xf32>
    %373 = vector.shape_cast %372 : vector<8xf32> to vector<8x1xf32>
    %374 = vector.broadcast %373 : vector<8x1xf32> to vector<8x8xf32>
    %375 = arith.divf %371, %374 : vector<8x8xf32>
    %376 = arith.truncf %375 : vector<8x8xf32> to vector<8x8xbf16>
    %377 = vector.extract_strided_slice %308 {offsets = [0, 16], sizes = [8, 8], strides = [1, 1]} : vector<8x32xbf16> to vector<8x8xbf16>
    %cst_162 = arith.constant dense<0.000000e+00> : vector<8x8xf32>
    %378 = tpu.matmul %376, %377, %cst_162 {dimension_numbers = #tpu.dot_dimension_numbers<[1], [0], [0], [1], [0, 0, 1, 1], [], []>} : vector<8x8xbf16>, vector<8x8xbf16>, vector<8x8xf32> -> vector<8x8xf32>
    %379 = arith.truncf %378 : vector<8x8xf32> to vector<8x8xbf16>
    %380 = vector.extract_strided_slice %46 {offsets = [16, 0], sizes = [8, 32], strides = [1, 1]} : vector<32x32xbf16> to vector<8x32xbf16>
    %cst_163 = arith.constant dense<0.000000e+00> : vector<8x32xf32>
    %381 = tpu.matmul %379, %380, %cst_163 {dimension_numbers = #tpu.dot_dimension_numbers<[1], [0], [0], [1], [0, 0, 1, 1], [], []>} : vector<8x8xbf16>, vector<8x32xbf16>, vector<8x32xf32> -> vector<8x32xf32>
    %382 = arith.addf %357, %381 : vector<8x32xf32>
    %383 = vector.extract_strided_slice %306 {offsets = [0, 24], sizes = [8, 8], strides = [1, 1]} : vector<8x32xbf16> to vector<8x8xbf16>
    %384 = vector.extract_strided_slice %307 {offsets = [0, 24], sizes = [8, 8], strides = [1, 1]} : vector<8x32xbf16> to vector<8x8xbf16>
    %cst_164 = arith.constant dense<0.000000e+00> : vector<8x8xf32>
    %385 = tpu.matmul %383, %384, %cst_164 {dimension_numbers = #tpu.dot_dimension_numbers<[1], [1], [0], [0], [0, 0, 1, 0], [], []>} : vector<8x8xbf16>, vector<8x8xbf16>, vector<8x8xf32> -> vector<8x8xf32>
    %cst_165 = arith.constant 0.353553385 : f32
    %386 = vector.broadcast %cst_165 : f32 to vector<8x8xf32>
    %387 = arith.mulf %385, %386 : vector<8x8xf32>
    %cst_166 = arith.constant -1.000000e+09 : f32
    %388 = vector.shape_cast %12 : vector<1x8xi1> to vector<1x8xi1>
    %389 = vector.broadcast %388 : vector<1x8xi1> to vector<8x8xi1>
    %390 = vector.broadcast %cst_166 : f32 to vector<8x8xf32>
    %391 = arith.select %389, %387, %390 : vector<8x8xi1>, vector<8x8xf32>
    %cst_167 = arith.constant dense<0xFF800000> : vector<8xf32>
    %392 = vector.multi_reduction <maximumf>, %391, %cst_167 [1] : vector<8x8xf32> to vector<8xf32>
    %393 = vector.shape_cast %392 : vector<8xf32> to vector<8x1xf32>
    %394 = vector.broadcast %393 : vector<8x1xf32> to vector<8x8xf32>
    %395 = arith.subf %391, %394 : vector<8x8xf32>
    %396 = math.exp %395 : vector<8x8xf32>
    %cst_168 = arith.constant dense<0.000000e+00> : vector<8xf32>
    %397 = vector.multi_reduction <add>, %396, %cst_168 [1] : vector<8x8xf32> to vector<8xf32>
    %398 = vector.shape_cast %397 : vector<8xf32> to vector<8x1xf32>
    %399 = vector.broadcast %398 : vector<8x1xf32> to vector<8x8xf32>
    %400 = arith.divf %396, %399 : vector<8x8xf32>
    %401 = arith.truncf %400 : vector<8x8xf32> to vector<8x8xbf16>
    %402 = vector.extract_strided_slice %308 {offsets = [0, 24], sizes = [8, 8], strides = [1, 1]} : vector<8x32xbf16> to vector<8x8xbf16>
    %cst_169 = arith.constant dense<0.000000e+00> : vector<8x8xf32>
    %403 = tpu.matmul %401, %402, %cst_169 {dimension_numbers = #tpu.dot_dimension_numbers<[1], [0], [0], [1], [0, 0, 1, 1], [], []>} : vector<8x8xbf16>, vector<8x8xbf16>, vector<8x8xf32> -> vector<8x8xf32>
    %404 = arith.truncf %403 : vector<8x8xf32> to vector<8x8xbf16>
    %405 = vector.extract_strided_slice %46 {offsets = [24, 0], sizes = [8, 32], strides = [1, 1]} : vector<32x32xbf16> to vector<8x32xbf16>
    %cst_170 = arith.constant dense<0.000000e+00> : vector<8x32xf32>
    %406 = tpu.matmul %404, %405, %cst_170 {dimension_numbers = #tpu.dot_dimension_numbers<[1], [0], [0], [1], [0, 0, 1, 1], [], []>} : vector<8x8xbf16>, vector<8x32xbf16>, vector<8x32xf32> -> vector<8x32xf32>
    %407 = arith.addf %382, %406 : vector<8x32xf32>
    %408 = vector.extract_strided_slice %303 {offsets = [8, 0], sizes = [8, 32], strides = [1, 1]} : vector<16x32xbf16> to vector<8x32xbf16>
    %409 = vector.extract_strided_slice %304 {offsets = [8, 0], sizes = [8, 32], strides = [1, 1]} : vector<16x32xbf16> to vector<8x32xbf16>
    %410 = vector.extract_strided_slice %305 {offsets = [8, 0], sizes = [8, 32], strides = [1, 1]} : vector<16x32xbf16> to vector<8x32xbf16>
    %411 = vector.extract_strided_slice %408 {offsets = [0, 0], sizes = [8, 8], strides = [1, 1]} : vector<8x32xbf16> to vector<8x8xbf16>
    %412 = vector.extract_strided_slice %409 {offsets = [0, 0], sizes = [8, 8], strides = [1, 1]} : vector<8x32xbf16> to vector<8x8xbf16>
    %cst_171 = arith.constant dense<0.000000e+00> : vector<8x8xf32>
    %413 = tpu.matmul %411, %412, %cst_171 {dimension_numbers = #tpu.dot_dimension_numbers<[1], [1], [0], [0], [0, 0, 1, 0], [], []>} : vector<8x8xbf16>, vector<8x8xbf16>, vector<8x8xf32> -> vector<8x8xf32>
    %cst_172 = arith.constant 0.353553385 : f32
    %414 = vector.broadcast %cst_172 : f32 to vector<8x8xf32>
    %415 = arith.mulf %413, %414 : vector<8x8xf32>
    %cst_173 = arith.constant -1.000000e+09 : f32
    %416 = vector.shape_cast %16 : vector<1x8xi1> to vector<1x8xi1>
    %417 = vector.broadcast %416 : vector<1x8xi1> to vector<8x8xi1>
    %418 = vector.broadcast %cst_173 : f32 to vector<8x8xf32>
    %419 = arith.select %417, %415, %418 : vector<8x8xi1>, vector<8x8xf32>
    %cst_174 = arith.constant dense<0xFF800000> : vector<8xf32>
    %420 = vector.multi_reduction <maximumf>, %419, %cst_174 [1] : vector<8x8xf32> to vector<8xf32>
    %421 = vector.shape_cast %420 : vector<8xf32> to vector<8x1xf32>
    %422 = vector.broadcast %421 : vector<8x1xf32> to vector<8x8xf32>
    %423 = arith.subf %419, %422 : vector<8x8xf32>
    %424 = math.exp %423 : vector<8x8xf32>
    %cst_175 = arith.constant dense<0.000000e+00> : vector<8xf32>
    %425 = vector.multi_reduction <add>, %424, %cst_175 [1] : vector<8x8xf32> to vector<8xf32>
    %426 = vector.shape_cast %425 : vector<8xf32> to vector<8x1xf32>
    %427 = vector.broadcast %426 : vector<8x1xf32> to vector<8x8xf32>
    %428 = arith.divf %424, %427 : vector<8x8xf32>
    %429 = arith.truncf %428 : vector<8x8xf32> to vector<8x8xbf16>
    %430 = vector.extract_strided_slice %410 {offsets = [0, 0], sizes = [8, 8], strides = [1, 1]} : vector<8x32xbf16> to vector<8x8xbf16>
    %cst_176 = arith.constant dense<0.000000e+00> : vector<8x8xf32>
    %431 = tpu.matmul %429, %430, %cst_176 {dimension_numbers = #tpu.dot_dimension_numbers<[1], [0], [0], [1], [0, 0, 1, 1], [], []>} : vector<8x8xbf16>, vector<8x8xbf16>, vector<8x8xf32> -> vector<8x8xf32>
    %432 = arith.truncf %431 : vector<8x8xf32> to vector<8x8xbf16>
    %433 = vector.extract_strided_slice %46 {offsets = [0, 0], sizes = [8, 32], strides = [1, 1]} : vector<32x32xbf16> to vector<8x32xbf16>
    %cst_177 = arith.constant dense<0.000000e+00> : vector<8x32xf32>
    %434 = tpu.matmul %432, %433, %cst_177 {dimension_numbers = #tpu.dot_dimension_numbers<[1], [0], [0], [1], [0, 0, 1, 1], [], []>} : vector<8x8xbf16>, vector<8x32xbf16>, vector<8x32xf32> -> vector<8x32xf32>
    %435 = vector.extract_strided_slice %408 {offsets = [0, 8], sizes = [8, 8], strides = [1, 1]} : vector<8x32xbf16> to vector<8x8xbf16>
    %436 = vector.extract_strided_slice %409 {offsets = [0, 8], sizes = [8, 8], strides = [1, 1]} : vector<8x32xbf16> to vector<8x8xbf16>
    %cst_178 = arith.constant dense<0.000000e+00> : vector<8x8xf32>
    %437 = tpu.matmul %435, %436, %cst_178 {dimension_numbers = #tpu.dot_dimension_numbers<[1], [1], [0], [0], [0, 0, 1, 0], [], []>} : vector<8x8xbf16>, vector<8x8xbf16>, vector<8x8xf32> -> vector<8x8xf32>
    %cst_179 = arith.constant 0.353553385 : f32
    %438 = vector.broadcast %cst_179 : f32 to vector<8x8xf32>
    %439 = arith.mulf %437, %438 : vector<8x8xf32>
    %cst_180 = arith.constant -1.000000e+09 : f32
    %440 = vector.shape_cast %16 : vector<1x8xi1> to vector<1x8xi1>
    %441 = vector.broadcast %440 : vector<1x8xi1> to vector<8x8xi1>
    %442 = vector.broadcast %cst_180 : f32 to vector<8x8xf32>
    %443 = arith.select %441, %439, %442 : vector<8x8xi1>, vector<8x8xf32>
    %cst_181 = arith.constant dense<0xFF800000> : vector<8xf32>
    %444 = vector.multi_reduction <maximumf>, %443, %cst_181 [1] : vector<8x8xf32> to vector<8xf32>
    %445 = vector.shape_cast %444 : vector<8xf32> to vector<8x1xf32>
    %446 = vector.broadcast %445 : vector<8x1xf32> to vector<8x8xf32>
    %447 = arith.subf %443, %446 : vector<8x8xf32>
    %448 = math.exp %447 : vector<8x8xf32>
    %cst_182 = arith.constant dense<0.000000e+00> : vector<8xf32>
    %449 = vector.multi_reduction <add>, %448, %cst_182 [1] : vector<8x8xf32> to vector<8xf32>
    %450 = vector.shape_cast %449 : vector<8xf32> to vector<8x1xf32>
    %451 = vector.broadcast %450 : vector<8x1xf32> to vector<8x8xf32>
    %452 = arith.divf %448, %451 : vector<8x8xf32>
    %453 = arith.truncf %452 : vector<8x8xf32> to vector<8x8xbf16>
    %454 = vector.extract_strided_slice %410 {offsets = [0, 8], sizes = [8, 8], strides = [1, 1]} : vector<8x32xbf16> to vector<8x8xbf16>
    %cst_183 = arith.constant dense<0.000000e+00> : vector<8x8xf32>
    %455 = tpu.matmul %453, %454, %cst_183 {dimension_numbers = #tpu.dot_dimension_numbers<[1], [0], [0], [1], [0, 0, 1, 1], [], []>} : vector<8x8xbf16>, vector<8x8xbf16>, vector<8x8xf32> -> vector<8x8xf32>
    %456 = arith.truncf %455 : vector<8x8xf32> to vector<8x8xbf16>
    %457 = vector.extract_strided_slice %46 {offsets = [8, 0], sizes = [8, 32], strides = [1, 1]} : vector<32x32xbf16> to vector<8x32xbf16>
    %cst_184 = arith.constant dense<0.000000e+00> : vector<8x32xf32>
    %458 = tpu.matmul %456, %457, %cst_184 {dimension_numbers = #tpu.dot_dimension_numbers<[1], [0], [0], [1], [0, 0, 1, 1], [], []>} : vector<8x8xbf16>, vector<8x32xbf16>, vector<8x32xf32> -> vector<8x32xf32>
    %459 = arith.addf %434, %458 : vector<8x32xf32>
    %460 = vector.extract_strided_slice %408 {offsets = [0, 16], sizes = [8, 8], strides = [1, 1]} : vector<8x32xbf16> to vector<8x8xbf16>
    %461 = vector.extract_strided_slice %409 {offsets = [0, 16], sizes = [8, 8], strides = [1, 1]} : vector<8x32xbf16> to vector<8x8xbf16>
    %cst_185 = arith.constant dense<0.000000e+00> : vector<8x8xf32>
    %462 = tpu.matmul %460, %461, %cst_185 {dimension_numbers = #tpu.dot_dimension_numbers<[1], [1], [0], [0], [0, 0, 1, 0], [], []>} : vector<8x8xbf16>, vector<8x8xbf16>, vector<8x8xf32> -> vector<8x8xf32>
    %cst_186 = arith.constant 0.353553385 : f32
    %463 = vector.broadcast %cst_186 : f32 to vector<8x8xf32>
    %464 = arith.mulf %462, %463 : vector<8x8xf32>
    %cst_187 = arith.constant -1.000000e+09 : f32
    %465 = vector.shape_cast %16 : vector<1x8xi1> to vector<1x8xi1>
    %466 = vector.broadcast %465 : vector<1x8xi1> to vector<8x8xi1>
    %467 = vector.broadcast %cst_187 : f32 to vector<8x8xf32>
    %468 = arith.select %466, %464, %467 : vector<8x8xi1>, vector<8x8xf32>
    %cst_188 = arith.constant dense<0xFF800000> : vector<8xf32>
    %469 = vector.multi_reduction <maximumf>, %468, %cst_188 [1] : vector<8x8xf32> to vector<8xf32>
    %470 = vector.shape_cast %469 : vector<8xf32> to vector<8x1xf32>
    %471 = vector.broadcast %470 : vector<8x1xf32> to vector<8x8xf32>
    %472 = arith.subf %468, %471 : vector<8x8xf32>
    %473 = math.exp %472 : vector<8x8xf32>
    %cst_189 = arith.constant dense<0.000000e+00> : vector<8xf32>
    %474 = vector.multi_reduction <add>, %473, %cst_189 [1] : vector<8x8xf32> to vector<8xf32>
    %475 = vector.shape_cast %474 : vector<8xf32> to vector<8x1xf32>
    %476 = vector.broadcast %475 : vector<8x1xf32> to vector<8x8xf32>
    %477 = arith.divf %473, %476 : vector<8x8xf32>
    %478 = arith.truncf %477 : vector<8x8xf32> to vector<8x8xbf16>
    %479 = vector.extract_strided_slice %410 {offsets = [0, 16], sizes = [8, 8], strides = [1, 1]} : vector<8x32xbf16> to vector<8x8xbf16>
    %cst_190 = arith.constant dense<0.000000e+00> : vector<8x8xf32>
    %480 = tpu.matmul %478, %479, %cst_190 {dimension_numbers = #tpu.dot_dimension_numbers<[1], [0], [0], [1], [0, 0, 1, 1], [], []>} : vector<8x8xbf16>, vector<8x8xbf16>, vector<8x8xf32> -> vector<8x8xf32>
    %481 = arith.truncf %480 : vector<8x8xf32> to vector<8x8xbf16>
    %482 = vector.extract_strided_slice %46 {offsets = [16, 0], sizes = [8, 32], strides = [1, 1]} : vector<32x32xbf16> to vector<8x32xbf16>
    %cst_191 = arith.constant dense<0.000000e+00> : vector<8x32xf32>
    %483 = tpu.matmul %481, %482, %cst_191 {dimension_numbers = #tpu.dot_dimension_numbers<[1], [0], [0], [1], [0, 0, 1, 1], [], []>} : vector<8x8xbf16>, vector<8x32xbf16>, vector<8x32xf32> -> vector<8x32xf32>
    %484 = arith.addf %459, %483 : vector<8x32xf32>
    %485 = vector.extract_strided_slice %408 {offsets = [0, 24], sizes = [8, 8], strides = [1, 1]} : vector<8x32xbf16> to vector<8x8xbf16>
    %486 = vector.extract_strided_slice %409 {offsets = [0, 24], sizes = [8, 8], strides = [1, 1]} : vector<8x32xbf16> to vector<8x8xbf16>
    %cst_192 = arith.constant dense<0.000000e+00> : vector<8x8xf32>
    %487 = tpu.matmul %485, %486, %cst_192 {dimension_numbers = #tpu.dot_dimension_numbers<[1], [1], [0], [0], [0, 0, 1, 0], [], []>} : vector<8x8xbf16>, vector<8x8xbf16>, vector<8x8xf32> -> vector<8x8xf32>
    %cst_193 = arith.constant 0.353553385 : f32
    %488 = vector.broadcast %cst_193 : f32 to vector<8x8xf32>
    %489 = arith.mulf %487, %488 : vector<8x8xf32>
    %cst_194 = arith.constant -1.000000e+09 : f32
    %490 = vector.shape_cast %16 : vector<1x8xi1> to vector<1x8xi1>
    %491 = vector.broadcast %490 : vector<1x8xi1> to vector<8x8xi1>
    %492 = vector.broadcast %cst_194 : f32 to vector<8x8xf32>
    %493 = arith.select %491, %489, %492 : vector<8x8xi1>, vector<8x8xf32>
    %cst_195 = arith.constant dense<0xFF800000> : vector<8xf32>
    %494 = vector.multi_reduction <maximumf>, %493, %cst_195 [1] : vector<8x8xf32> to vector<8xf32>
    %495 = vector.shape_cast %494 : vector<8xf32> to vector<8x1xf32>
    %496 = vector.broadcast %495 : vector<8x1xf32> to vector<8x8xf32>
    %497 = arith.subf %493, %496 : vector<8x8xf32>
    %498 = math.exp %497 : vector<8x8xf32>
    %cst_196 = arith.constant dense<0.000000e+00> : vector<8xf32>
    %499 = vector.multi_reduction <add>, %498, %cst_196 [1] : vector<8x8xf32> to vector<8xf32>
    %500 = vector.shape_cast %499 : vector<8xf32> to vector<8x1xf32>
    %501 = vector.broadcast %500 : vector<8x1xf32> to vector<8x8xf32>
    %502 = arith.divf %498, %501 : vector<8x8xf32>
    %503 = arith.truncf %502 : vector<8x8xf32> to vector<8x8xbf16>
    %504 = vector.extract_strided_slice %410 {offsets = [0, 24], sizes = [8, 8], strides = [1, 1]} : vector<8x32xbf16> to vector<8x8xbf16>
    %cst_197 = arith.constant dense<0.000000e+00> : vector<8x8xf32>
    %505 = tpu.matmul %503, %504, %cst_197 {dimension_numbers = #tpu.dot_dimension_numbers<[1], [0], [0], [1], [0, 0, 1, 1], [], []>} : vector<8x8xbf16>, vector<8x8xbf16>, vector<8x8xf32> -> vector<8x8xf32>
    %506 = arith.truncf %505 : vector<8x8xf32> to vector<8x8xbf16>
    %507 = vector.extract_strided_slice %46 {offsets = [24, 0], sizes = [8, 32], strides = [1, 1]} : vector<32x32xbf16> to vector<8x32xbf16>
    %cst_198 = arith.constant dense<0.000000e+00> : vector<8x32xf32>
    %508 = tpu.matmul %506, %507, %cst_198 {dimension_numbers = #tpu.dot_dimension_numbers<[1], [0], [0], [1], [0, 0, 1, 1], [], []>} : vector<8x8xbf16>, vector<8x32xbf16>, vector<8x32xf32> -> vector<8x32xf32>
    %509 = arith.addf %484, %508 : vector<8x32xf32>
    %510 = tpu.concatenate %407, %509 in 0 : vector<8x32xf32>, vector<8x32xf32> -> vector<16x32xf32>
    %511 = vector.broadcast %48 : vector<1x32xf32> to vector<16x32xf32>
    %512 = arith.addf %510, %511 : vector<16x32xf32>
    %513 = arith.addf %292, %512 : vector<16x32xf32>
    %cst_199 = arith.constant dense<0.000000e+00> : vector<16xf32>
    %514 = vector.multi_reduction <add>, %513, %cst_199 [1] : vector<16x32xf32> to vector<16xf32>
    %515 = vector.shape_cast %514 : vector<16xf32> to vector<16x1xf32>
    %cst_200 = arith.constant 3.200000e+01 : f32
    %516 = vector.broadcast %cst_200 : f32 to vector<16x1xf32>
    %517 = arith.divf %515, %516 : vector<16x1xf32>
    %518 = vector.broadcast %517 : vector<16x1xf32> to vector<16x32xf32>
    %519 = arith.subf %513, %518 : vector<16x32xf32>
    %520 = arith.mulf %519, %519 : vector<16x32xf32>
    %cst_201 = arith.constant dense<0.000000e+00> : vector<16xf32>
    %521 = vector.multi_reduction <add>, %520, %cst_201 [1] : vector<16x32xf32> to vector<16xf32>
    %522 = vector.shape_cast %521 : vector<16xf32> to vector<16x1xf32>
    %cst_202 = arith.constant 3.200000e+01 : f32
    %523 = vector.broadcast %cst_202 : f32 to vector<16x1xf32>
    %524 = arith.divf %522, %523 : vector<16x1xf32>
    %525 = vector.broadcast %517 : vector<16x1xf32> to vector<16x32xf32>
    %526 = arith.subf %513, %525 : vector<16x32xf32>
    %cst_203 = arith.constant 9.99999974E-6 : f32
    %527 = vector.broadcast %cst_203 : f32 to vector<16x1xf32>
    %528 = arith.addf %524, %527 : vector<16x1xf32>
    %529 = math.rsqrt %528 : vector<16x1xf32>
    %530 = vector.broadcast %529 : vector<16x1xf32> to vector<16x32xf32>
    %531 = arith.mulf %526, %530 : vector<16x32xf32>
    %532 = vector.broadcast %62 : vector<1x32xf32> to vector<16x32xf32>
    %533 = arith.mulf %531, %532 : vector<16x32xf32>
    %534 = vector.broadcast %64 : vector<1x32xf32> to vector<16x32xf32>
    %535 = arith.addf %533, %534 : vector<16x32xf32>
    %536 = arith.truncf %535 : vector<16x32xf32> to vector<16x32xbf16>
    %cst_204 = arith.constant dense<0.000000e+00> : vector<16x64xf32>
    %537 = tpu.matmul %536, %50, %cst_204 {dimension_numbers = #tpu.dot_dimension_numbers<[1], [0], [0], [1], [0, 0, 1, 1], [], []>} : vector<16x32xbf16>, vector<32x64xbf16>, vector<16x64xf32> -> vector<16x64xf32>
    %538 = vector.broadcast %52 : vector<1x64xf32> to vector<16x64xf32>
    %539 = arith.addf %537, %538 : vector<16x64xf32>
    %cst_205 = arith.constant 0.000000e+00 : f32
    %540 = vector.broadcast %cst_205 : f32 to vector<16x64xf32>
    %541 = arith.maximumf %539, %540 : vector<16x64xf32>
    %542 = arith.truncf %541 : vector<16x64xf32> to vector<16x64xbf16>
    %cst_206 = arith.constant dense<0.000000e+00> : vector<16x32xf32>
    %543 = tpu.matmul %542, %54, %cst_206 {dimension_numbers = #tpu.dot_dimension_numbers<[1], [0], [0], [1], [0, 0, 1, 1], [], []>} : vector<16x64xbf16>, vector<64x32xbf16>, vector<16x32xf32> -> vector<16x32xf32>
    %544 = vector.broadcast %56 : vector<1x32xf32> to vector<16x32xf32>
    %545 = arith.addf %543, %544 : vector<16x32xf32>
    %546 = arith.addf %535, %545 : vector<16x32xf32>
    %cst_207 = arith.constant dense<0.000000e+00> : vector<16xf32>
    %547 = vector.multi_reduction <add>, %546, %cst_207 [1] : vector<16x32xf32> to vector<16xf32>
    %548 = vector.shape_cast %547 : vector<16xf32> to vector<16x1xf32>
    %cst_208 = arith.constant 3.200000e+01 : f32
    %549 = vector.broadcast %cst_208 : f32 to vector<16x1xf32>
    %550 = arith.divf %548, %549 : vector<16x1xf32>
    %551 = vector.broadcast %550 : vector<16x1xf32> to vector<16x32xf32>
    %552 = arith.subf %546, %551 : vector<16x32xf32>
    %553 = arith.mulf %552, %552 : vector<16x32xf32>
    %cst_209 = arith.constant dense<0.000000e+00> : vector<16xf32>
    %554 = vector.multi_reduction <add>, %553, %cst_209 [1] : vector<16x32xf32> to vector<16xf32>
    %555 = vector.shape_cast %554 : vector<16xf32> to vector<16x1xf32>
    %cst_210 = arith.constant 3.200000e+01 : f32
    %556 = vector.broadcast %cst_210 : f32 to vector<16x1xf32>
    %557 = arith.divf %555, %556 : vector<16x1xf32>
    %558 = vector.broadcast %550 : vector<16x1xf32> to vector<16x32xf32>
    %559 = arith.subf %546, %558 : vector<16x32xf32>
    %cst_211 = arith.constant 9.99999974E-6 : f32
    %560 = vector.broadcast %cst_211 : f32 to vector<16x1xf32>
    %561 = arith.addf %557, %560 : vector<16x1xf32>
    %562 = math.rsqrt %561 : vector<16x1xf32>
    %563 = vector.broadcast %562 : vector<16x1xf32> to vector<16x32xf32>
    %564 = arith.mulf %559, %563 : vector<16x32xf32>
    %565 = vector.broadcast %66 : vector<1x32xf32> to vector<16x32xf32>
    %566 = arith.mulf %564, %565 : vector<16x32xf32>
    %567 = vector.broadcast %68 : vector<1x32xf32> to vector<16x32xf32>
    %568 = arith.addf %566, %567 : vector<16x32xf32>
    %c0_212 = arith.constant 0 : index
    %c0_213 = arith.constant 0 : index
    %569 = vector.load %arg28[%c0_212, %c0_213] : memref<16x32xf32, #tpu.memory_space<vmem>>, vector<16x32xf32>
    tpu.vector_store %arg28[%c0_212, %c0_213], %568 {strides = array<i32>} : memref<16x32xf32, #tpu.memory_space<vmem>>, vector<16x32xf32>,
    %c1_i32 = arith.constant 1 : i32
    %570 = arith.cmpi eq, %arg0, %c1_i32 : i32
    %571 = arith.extui %570 : i1 to i32
    %c0_i32_214 = arith.constant 0 : i32
    %572 = arith.cmpi ne, %571, %c0_i32_214 : i32
    scf.if %572 {
      %c0_215 = arith.constant 0 : index
      %c0_216 = arith.constant 0 : index
      %573 = vector.load %arg25[%c0_215, %c0_216] : memref<32x16xbf16, #tpu.memory_space<vmem>>, vector<32x16xbf16>
      %574 = arith.truncf %568 : vector<16x32xf32> to vector<16x32xbf16>
      %cst_217 = arith.constant dense<0.000000e+00> : vector<16x16xf32>
      %575 = tpu.matmul %574, %573, %cst_217 {dimension_numbers = #tpu.dot_dimension_numbers<[1], [0], [0], [1], [0, 0, 1, 1], [], []>} : vector<16x32xbf16>, vector<32x16xbf16>, vector<16x16xf32> -> vector<16x16xf32>
      %c0_218 = arith.constant 0 : index
      %c0_219 = arith.constant 0 : index
      %576 = vector.load %arg26[%c0_218, %c0_219] : memref<1x16xf32, #tpu.memory_space<vmem>>, vector<1x16xf32>
      %577 = vector.broadcast %576 : vector<1x16xf32> to vector<16x16xf32>
      %578 = arith.addf %575, %577 : vector<16x16xf32>
      %579 = vector.shape_cast %578 : vector<16x16xf32> to vector<2x8x16xf32>
      %c0_220 = arith.constant 0 : index
      %c0_221 = arith.constant 0 : index
      %c0_222 = arith.constant 0 : index
      %580 = vector.load %arg27[%c0_220, %c0_221, %c0_222] : memref<2x8x16xf32, #tpu.memory_space<vmem>>, vector<2x8x16xf32>
      tpu.vector_store %arg27[%c0_220, %c0_221, %c0_222], %579 {strides = array<i32>} : memref<2x8x16xf32, #tpu.memory_space<vmem>>, vector<2x8x16xf32>,
    } else {
    }
    return
  }
  func.func @transform_0(%arg0: i32) -> (i32, i32, i32) {
    %c0_i32 = arith.constant 0 : i32
    %c0_i32_0 = arith.constant 0 : i32
    %c0_i32_1 = arith.constant 0 : i32
    %c0_i32_2 = arith.constant 0 : i32
    return %c0_i32, %c0_i32_0, %c0_i32_1 : i32, i32, i32
  }
  func.func @transform_1(%arg0: i32) -> (i32, i32, i32) {
    %c0_i32 = arith.constant 0 : i32
    %c0_i32_0 = arith.constant 0 : i32
    %c0_i32_1 = arith.constant 0 : i32
    %c0_i32_2 = arith.constant 0 : i32
    return %c0_i32, %c0_i32_0, %c0_i32_1 : i32, i32, i32
  }
  func.func @transform_2(%arg0: i32) -> (i32, i32, i32) {
    %c0_i32 = arith.constant 0 : i32
    %c0_i32_0 = arith.constant 0 : i32
    %c0_i32_1 = arith.constant 0 : i32
    %c0_i32_2 = arith.constant 0 : i32
    return %c0_i32, %c0_i32_0, %c0_i32_1 : i32, i32, i32
  }
  func.func @transform_3(%arg0: i32) -> (i32, i32, i32) {
    %c0_i32 = arith.constant 0 : i32
    %c0_i32_0 = arith.constant 0 : i32
    %c0_i32_1 = arith.constant 0 : i32
    %c0_i32_2 = arith.constant 0 : i32
    return %c0_i32, %c0_i32_0, %c0_i32_1 : i32, i32, i32
  }
  func.func @transform_4(%arg0: i32) -> (i32, i32, i32) {
    %c0_i32 = arith.constant 0 : i32
    %c0_i32_0 = arith.constant 0 : i32
    %c0_i32_1 = arith.constant 0 : i32
    return %arg0, %c0_i32, %c0_i32_0 : i32, i32, i32
  }
  func.func @transform_5(%arg0: i32) -> (i32, i32, i32) {
    %c0_i32 = arith.constant 0 : i32
    %c0_i32_0 = arith.constant 0 : i32
    %c0_i32_1 = arith.constant 0 : i32
    return %arg0, %c0_i32, %c0_i32_0 : i32, i32, i32
  }
  func.func @transform_6(%arg0: i32) -> (i32, i32, i32) {
    %c0_i32 = arith.constant 0 : i32
    %c0_i32_0 = arith.constant 0 : i32
    %c0_i32_1 = arith.constant 0 : i32
    return %arg0, %c0_i32, %c0_i32_0 : i32, i32, i32
  }
  func.func @transform_7(%arg0: i32) -> (i32, i32, i32) {
    %c0_i32 = arith.constant 0 : i32
    %c0_i32_0 = arith.constant 0 : i32
    %c0_i32_1 = arith.constant 0 : i32
    return %arg0, %c0_i32, %c0_i32_0 : i32, i32, i32
  }
  func.func @transform_8(%arg0: i32) -> (i32, i32, i32) {
    %c0_i32 = arith.constant 0 : i32
    %c0_i32_0 = arith.constant 0 : i32
    %c0_i32_1 = arith.constant 0 : i32
    return %arg0, %c0_i32, %c0_i32_0 : i32, i32, i32
  }
  func.func @transform_9(%arg0: i32) -> (i32, i32, i32) {
    %c0_i32 = arith.constant 0 : i32
    %c0_i32_0 = arith.constant 0 : i32
    %c0_i32_1 = arith.constant 0 : i32
    return %arg0, %c0_i32, %c0_i32_0 : i32, i32, i32
  }
  func.func @transform_10(%arg0: i32) -> (i32, i32, i32) {
    %c0_i32 = arith.constant 0 : i32
    %c0_i32_0 = arith.constant 0 : i32
    %c0_i32_1 = arith.constant 0 : i32
    return %arg0, %c0_i32, %c0_i32_0 : i32, i32, i32
  }
  func.func @transform_11(%arg0: i32) -> (i32, i32, i32) {
    %c0_i32 = arith.constant 0 : i32
    %c0_i32_0 = arith.constant 0 : i32
    %c0_i32_1 = arith.constant 0 : i32
    return %arg0, %c0_i32, %c0_i32_0 : i32, i32, i32
  }
  func.func @transform_12(%arg0: i32) -> (i32, i32, i32) {
    %c0_i32 = arith.constant 0 : i32
    %c0_i32_0 = arith.constant 0 : i32
    %c0_i32_1 = arith.constant 0 : i32
    return %arg0, %c0_i32, %c0_i32_0 : i32, i32, i32
  }
  func.func @transform_13(%arg0: i32) -> (i32, i32, i32) {
    %c0_i32 = arith.constant 0 : i32
    %c0_i32_0 = arith.constant 0 : i32
    %c0_i32_1 = arith.constant 0 : i32
    return %arg0, %c0_i32, %c0_i32_0 : i32, i32, i32
  }
  func.func @transform_14(%arg0: i32) -> (i32, i32, i32) {
    %c0_i32 = arith.constant 0 : i32
    %c0_i32_0 = arith.constant 0 : i32
    %c0_i32_1 = arith.constant 0 : i32
    return %arg0, %c0_i32, %c0_i32_0 : i32, i32, i32
  }
  func.func @transform_15(%arg0: i32) -> (i32, i32, i32) {
    %c0_i32 = arith.constant 0 : i32
    %c0_i32_0 = arith.constant 0 : i32
    %c0_i32_1 = arith.constant 0 : i32
    return %arg0, %c0_i32, %c0_i32_0 : i32, i32, i32
  }
  func.func @transform_16(%arg0: i32) -> (i32, i32, i32) {
    %c0_i32 = arith.constant 0 : i32
    %c0_i32_0 = arith.constant 0 : i32
    %c0_i32_1 = arith.constant 0 : i32
    return %arg0, %c0_i32, %c0_i32_0 : i32, i32, i32
  }
  func.func @transform_17(%arg0: i32) -> (i32, i32, i32) {
    %c0_i32 = arith.constant 0 : i32
    %c0_i32_0 = arith.constant 0 : i32
    %c0_i32_1 = arith.constant 0 : i32
    return %arg0, %c0_i32, %c0_i32_0 : i32, i32, i32
  }
  func.func @transform_18(%arg0: i32) -> (i32, i32, i32) {
    %c0_i32 = arith.constant 0 : i32
    %c0_i32_0 = arith.constant 0 : i32
    %c0_i32_1 = arith.constant 0 : i32
    return %arg0, %c0_i32, %c0_i32_0 : i32, i32, i32
  }
  func.func @transform_19(%arg0: i32) -> (i32, i32, i32) {
    %c0_i32 = arith.constant 0 : i32
    %c0_i32_0 = arith.constant 0 : i32
    %c0_i32_1 = arith.constant 0 : i32
    return %arg0, %c0_i32, %c0_i32_0 : i32, i32, i32
  }
  func.func @transform_20(%arg0: i32) -> (i32, i32, i32) {
    %c0_i32 = arith.constant 0 : i32
    %c0_i32_0 = arith.constant 0 : i32
    %c0_i32_1 = arith.constant 0 : i32
    return %arg0, %c0_i32, %c0_i32_0 : i32, i32, i32
  }
  func.func @transform_21(%arg0: i32) -> (i32, i32, i32) {
    %c0_i32 = arith.constant 0 : i32
    %c0_i32_0 = arith.constant 0 : i32
    %c0_i32_1 = arith.constant 0 : i32
    return %arg0, %c0_i32, %c0_i32_0 : i32, i32, i32
  }
  func.func @transform_22(%arg0: i32) -> (i32, i32, i32) {
    %c0_i32 = arith.constant 0 : i32
    %c0_i32_0 = arith.constant 0 : i32
    %c0_i32_1 = arith.constant 0 : i32
    return %arg0, %c0_i32, %c0_i32_0 : i32, i32, i32
  }
  func.func @transform_23(%arg0: i32) -> (i32, i32, i32) {
    %c0_i32 = arith.constant 0 : i32
    %c0_i32_0 = arith.constant 0 : i32
    %c0_i32_1 = arith.constant 0 : i32
    return %arg0, %c0_i32, %c0_i32_0 : i32, i32, i32
  }
  func.func @transform_24(%arg0: i32) -> (i32, i32) {
    %c0_i32 = arith.constant 0 : i32
    %c0_i32_0 = arith.constant 0 : i32
    %c0_i32_1 = arith.constant 0 : i32
    return %c0_i32, %c0_i32_0 : i32, i32
  }
  func.func @transform_25(%arg0: i32) -> (i32, i32) {
    %c0_i32 = arith.constant 0 : i32
    %c0_i32_0 = arith.constant 0 : i32
    %c0_i32_1 = arith.constant 0 : i32
    return %c0_i32, %c0_i32_0 : i32, i32
  }
  func.func @transform_26(%arg0: i32) -> (i32, i32, i32) {
    %c0_i32 = arith.constant 0 : i32
    %c0_i32_0 = arith.constant 0 : i32
    %c0_i32_1 = arith.constant 0 : i32
    %c0_i32_2 = arith.constant 0 : i32
    return %c0_i32, %c0_i32_0, %c0_i32_1 : i32, i32, i32
  }
}

</mosaic_0001>

<llo_original>
// kernel: transformer_forward.2
$region0: #{transformer_forward.2}
  #allocation0 [shape = 'u32[]', space=smem, size = 0x4, offset = 0x4, fixed_abs, tag = 'smem constant byte address 0x4 - core index']
  #allocation1 [shape = 'u32[72,128]{1,0:T(1,128)}', space=vmem, size = 0x9000, scoped, tag = 'internal scratch']
  %s0 = inlined_call_operand.vmem [shape: f32[2,8,32], index: 0, kind: input, shape index: {}]
  %s1 = inlined_call_operand.vmem [shape: f32[2,1,8], index: 1, kind: input, shape index: {}]
  %s2 = inlined_call_operand.vmem [shape: bf16[2,32,96], index: 2, kind: input, shape index: {}]
  %s3 = inlined_call_operand.vmem [shape: f32[2,1,96], index: 3, kind: input, shape index: {}]
  %s4 = inlined_call_operand.vmem [shape: bf16[2,32,32], index: 4, kind: input, shape index: {}]
  %s5 = inlined_call_operand.vmem [shape: f32[2,1,32], index: 5, kind: input, shape index: {}]
  %s6 = inlined_call_operand.vmem [shape: bf16[2,32,64], index: 6, kind: input, shape index: {}]
  %s7 = inlined_call_operand.vmem [shape: f32[2,1,64], index: 7, kind: input, shape index: {}]
  %s8 = inlined_call_operand.vmem [shape: bf16[2,64,32], index: 8, kind: input, shape index: {}]
  %s9 = inlined_call_operand.vmem [shape: f32[2,1,32], index: 9, kind: input, shape index: {}]
  %s10 = inlined_call_operand.vmem [shape: f32[2,1,32], index: 10, kind: input, shape index: {}]
  %s11 = inlined_call_operand.vmem [shape: f32[2,1,32], index: 11, kind: input, shape index: {}]
  %s12 = inlined_call_operand.vmem [shape: f32[2,1,32], index: 12, kind: input, shape index: {}]
  %s13 = inlined_call_operand.vmem [shape: f32[2,1,32], index: 13, kind: input, shape index: {}]
  %s14 = inlined_call_operand.vmem [shape: f32[2,8,32], index: 14, kind: output, shape index: {}]
  %s15 = sld [smem:[#allocation0]]
  $region93: #{transformer_forward.2} parent=0
    _
  %s17 = ssub.s32 1, %s15
  %s18 = scalar_select 0, %s17, %s15
  loop: start=0, step=1, limit=4
  $region2: #{transformer_forward.2} parent=0 // loop_pre_header
    _
  $region3: #{transformer_forward.2} parent=0 // loop_header
    %s20 = sphi 0, %s24
    %p21 = scmp.ge.s32.totalorder %s20, 4
    %s28 = sphi 0, %s28
    %s30 = sphi 0, %s28
    %s31 = sphi 0, %s30
    %s45 = sphi 0, %s31
    %s49 = sphi 0, %s49
    %s51 = sphi 0, %s49
    %s52 = sphi 0, %s51
    %s66 = sphi 0, %s52
    %s72 = sphi 0, %s74
    %s75 = sphi 0, %s72
    %s76 = sphi 0, %s75
    %s92 = sphi 0, %s76
    %s98 = sphi 0, %s100
    %s101 = sphi 0, %s98
    %s102 = sphi 0, %s101
    %s118 = sphi 0, %s102
    %s124 = sphi 0, %s126
    %s127 = sphi 0, %s124
    %s128 = sphi 0, %s127
    %s144 = sphi 0, %s128
    %s150 = sphi 0, %s152
    %s153 = sphi 0, %s150
    %s154 = sphi 0, %s153
    %s170 = sphi 0, %s154
    %s176 = sphi 0, %s178
    %s179 = sphi 0, %s176
    %s180 = sphi 0, %s179
    %s196 = sphi 0, %s180
    %s202 = sphi 0, %s204
    %s205 = sphi 0, %s202
    %s206 = sphi 0, %s205
    %s222 = sphi 0, %s206
    %s228 = sphi 0, %s230
    %s231 = sphi 0, %s228
    %s232 = sphi 0, %s231
    %s248 = sphi 0, %s232
    %s254 = sphi 0, %s256
    %s257 = sphi 0, %s254
    %s258 = sphi 0, %s257
    %s274 = sphi 0, %s258
    %s280 = sphi 0, %s282
    %s283 = sphi 0, %s280
    %s284 = sphi 0, %s283
    %s300 = sphi 0, %s284
    %s306 = sphi 0, %s308
    %s309 = sphi 0, %s306
    %s310 = sphi 0, %s309
    %s326 = sphi 0, %s310
    %s332 = sphi 0, %s334
    %s335 = sphi 0, %s332
    %s336 = sphi 0, %s335
    %s352 = sphi 0, %s336
    %s358 = sphi 0, %s360
    %s361 = sphi 0, %s358
    %s362 = sphi 0, %s361
    %s378 = sphi 0, %s362
    %s382 = sphi 0, %s382
    %s384 = sphi 0, %s382
    %s385 = sphi 0, %s384
    %s399 = sphi 0, %s385
  $region4: #{transformer_forward.2} parent=0 // loop_header_branch
    %23 = sbr.rel (%p21) target = $region8
  $region5: #{transformer_forward.2} parent=0 // loop_body
    %s25 = ssub.s32 %s20, 1
    %s26 = ssub.s32 %s20, 2
    %s27 = sadd.s32 %s20, 1
    %s29 = sadd.s32 %s28, 1
    %p32 = scmp.eq.s32.totalorder %s20, 1
    %p33 = scmp.ne.s32.totalorder %s28, %s30
    %p34 = scmp.eq.s32.totalorder %s20, 0
    %p35 = por %p33, %p34
    %p36 = scmp.ne.s32.totalorder %s28, %s30
    %p37 = scmp.eq.s32.totalorder %s25, 1
    %p38 = por %p36, %p37
    %p39 = scmp.ne.s32.totalorder %s30, %s31
    %p40 = scmp.eq.s32.totalorder %s25, 0
    %p41 = por %p39, %p40
    %p42 = scmp.ne.s32.totalorder %s30, %s31
    %p43 = scmp.eq.s32.totalorder %s26, 1
    %p44 = por %p42, %p43
    %p46 = scmp.ne.s32.totalorder %s31, %s45
    %p47 = scmp.eq.s32.totalorder %s26, 0
    %p48 = por %p46, %p47
    %s50 = sadd.s32 %s49, 1
    %p53 = scmp.eq.s32.totalorder %s20, 1
    %p54 = scmp.ne.s32.totalorder %s49, %s51
    %p55 = scmp.eq.s32.totalorder %s20, 0
    %p56 = por %p54, %p55
    %p57 = scmp.ne.s32.totalorder %s49, %s51
    %p58 = scmp.eq.s32.totalorder %s25, 1
    %p59 = por %p57, %p58
    %p60 = scmp.ne.s32.totalorder %s51, %s52
    %p61 = scmp.eq.s32.totalorder %s25, 0
    %p62 = por %p60, %p61
    %p63 = scmp.ne.s32.totalorder %s51, %s52
    %p64 = scmp.eq.s32.totalorder %s26, 1
    %p65 = por %p63, %p64
    %p67 = scmp.ne.s32.totalorder %s52, %s66
    %p68 = scmp.eq.s32.totalorder %s26, 0
    %p69 = por %p67, %p68
    %s70 = ssub.s32 %s20, %s27
    %p71 = scmp.eq.s32.totalorder %s70, 0
    %s73 = sadd.s32 %s72, 1
    %s74 = scalar_select %p71, %s72, %s73
    %p77 = pneg %p71
    %p78 = scmp.eq.s32.totalorder %s20, 1
    %p79 = por %p77, %p78
    %p80 = scmp.ne.s32.totalorder %s72, %s75
    %p81 = scmp.eq.s32.totalorder %s20, 0
    %p82 = por %p80, %p81
    %p83 = scmp.ne.s32.totalorder %s72, %s75
    %p84 = scmp.eq.s32.totalorder %s25, 1
    %p85 = por %p83, %p84
    %p86 = scmp.ne.s32.totalorder %s75, %s76
    %p87 = scmp.eq.s32.totalorder %s25, 0
    %p88 = por %p86, %p87
    %p89 = scmp.ne.s32.totalorder %s75, %s76
    %p90 = scmp.eq.s32.totalorder %s26, 1
    %p91 = por %p89, %p90
    %p93 = scmp.ne.s32.totalorder %s76, %s92
    %p94 = scmp.eq.s32.totalorder %s26, 0
    %p95 = por %p93, %p94
    %s96 = ssub.s32 %s20, %s27
    %p97 = scmp.eq.s32.totalorder %s96, 0
    %s99 = sadd.s32 %s98, 1
    %s100 = scalar_select %p97, %s98, %s99
    %p103 = pneg %p97
    %p104 = scmp.eq.s32.totalorder %s20, 1
    %p105 = por %p103, %p104
    %p106 = scmp.ne.s32.totalorder %s98, %s101
    %p107 = scmp.eq.s32.totalorder %s20, 0
    %p108 = por %p106, %p107
    %p109 = scmp.ne.s32.totalorder %s98, %s101
    %p110 = scmp.eq.s32.totalorder %s25, 1
    %p111 = por %p109, %p110
    %p112 = scmp.ne.s32.totalorder %s101, %s102
    %p113 = scmp.eq.s32.totalorder %s25, 0
    %p114 = por %p112, %p113
    %p115 = scmp.ne.s32.totalorder %s101, %s102
    %p116 = scmp.eq.s32.totalorder %s26, 1
    %p117 = por %p115, %p116
    %p119 = scmp.ne.s32.totalorder %s102, %s118
    %p120 = scmp.eq.s32.totalorder %s26, 0
    %p121 = por %p119, %p120
    %s122 = ssub.s32 %s20, %s27
    %p123 = scmp.eq.s32.totalorder %s122, 0
    %s125 = sadd.s32 %s124, 1
    %s126 = scalar_select %p123, %s124, %s125
    %p129 = pneg %p123
    %p130 = scmp.eq.s32.totalorder %s20, 1
    %p131 = por %p129, %p130
    %p132 = scmp.ne.s32.totalorder %s124, %s127
    %p133 = scmp.eq.s32.totalorder %s20, 0
    %p134 = por %p132, %p133
    %p135 = scmp.ne.s32.totalorder %s124, %s127
    %p136 = scmp.eq.s32.totalorder %s25, 1
    %p137 = por %p135, %p136
    %p138 = scmp.ne.s32.totalorder %s127, %s128
    %p139 = scmp.eq.s32.totalorder %s25, 0
    %p140 = por %p138, %p139
    %p141 = scmp.ne.s32.totalorder %s127, %s128
    %p142 = scmp.eq.s32.totalorder %s26, 1
    %p143 = por %p141, %p142
    %p145 = scmp.ne.s32.totalorder %s128, %s144
    %p146 = scmp.eq.s32.totalorder %s26, 0
    %p147 = por %p145, %p146
    %s148 = ssub.s32 %s20, %s27
    %p149 = scmp.eq.s32.totalorder %s148, 0
    %s151 = sadd.s32 %s150, 1
    %s152 = scalar_select %p149, %s150, %s151
    %p155 = pneg %p149
    %p156 = scmp.eq.s32.totalorder %s20, 1
    %p157 = por %p155, %p156
    %p158 = scmp.ne.s32.totalorder %s150, %s153
    %p159 = scmp.eq.s32.totalorder %s20, 0
    %p160 = por %p158, %p159
    %p161 = scmp.ne.s32.totalorder %s150, %s153
    %p162 = scmp.eq.s32.totalorder %s25, 1
    %p163 = por %p161, %p162
    %p164 = scmp.ne.s32.totalorder %s153, %s154
    %p165 = scmp.eq.s32.totalorder %s25, 0
    %p166 = por %p164, %p165
    %p167 = scmp.ne.s32.totalorder %s153, %s154
    %p168 = scmp.eq.s32.totalorder %s26, 1
    %p169 = por %p167, %p168
    %p171 = scmp.ne.s32.totalorder %s154, %s170
    %p172 = scmp.eq.s32.totalorder %s26, 0
    %p173 = por %p171, %p172
    %s174 = ssub.s32 %s20, %s27
    %p175 = scmp.eq.s32.totalorder %s174, 0
    %s177 = sadd.s32 %s176, 1
    %s178 = scalar_select %p175, %s176, %s177
    %p181 = pneg %p175
    %p182 = scmp.eq.s32.totalorder %s20, 1
    %p183 = por %p181, %p182
    %p184 = scmp.ne.s32.totalorder %s176, %s179
    %p185 = scmp.eq.s32.totalorder %s20, 0
    %p186 = por %p184, %p185
    %p187 = scmp.ne.s32.totalorder %s176, %s179
    %p188 = scmp.eq.s32.totalorder %s25, 1
    %p189 = por %p187, %p188
    %p190 = scmp.ne.s32.totalorder %s179, %s180
    %p191 = scmp.eq.s32.totalorder %s25, 0
    %p192 = por %p190, %p191
    %p193 = scmp.ne.s32.totalorder %s179, %s180
    %p194 = scmp.eq.s32.totalorder %s26, 1
    %p195 = por %p193, %p194
    %p197 = scmp.ne.s32.totalorder %s180, %s196
    %p198 = scmp.eq.s32.totalorder %s26, 0
    %p199 = por %p197, %p198
    %s200 = ssub.s32 %s20, %s27
    %p201 = scmp.eq.s32.totalorder %s200, 0
    %s203 = sadd.s32 %s202, 1
    %s204 = scalar_select %p201, %s202, %s203
    %p207 = pneg %p201
    %p208 = scmp.eq.s32.totalorder %s20, 1
    %p209 = por %p207, %p208
    %p210 = scmp.ne.s32.totalorder %s202, %s205
    %p211 = scmp.eq.s32.totalorder %s20, 0
    %p212 = por %p210, %p211
    %p213 = scmp.ne.s32.totalorder %s202, %s205
    %p214 = scmp.eq.s32.totalorder %s25, 1
    %p215 = por %p213, %p214
    %p216 = scmp.ne.s32.totalorder %s205, %s206
    %p217 = scmp.eq.s32.totalorder %s25, 0
    %p218 = por %p216, %p217
    %p219 = scmp.ne.s32.totalorder %s205, %s206
    %p220 = scmp.eq.s32.totalorder %s26, 1
    %p221 = por %p219, %p220
    %p223 = scmp.ne.s32.totalorder %s206, %s222
    %p224 = scmp.eq.s32.totalorder %s26, 0
    %p225 = por %p223, %p224
    %s226 = ssub.s32 %s20, %s27
    %p227 = scmp.eq.s32.totalorder %s226, 0
    %s229 = sadd.s32 %s228, 1
    %s230 = scalar_select %p227, %s228, %s229
    %p233 = pneg %p227
    %p234 = scmp.eq.s32.totalorder %s20, 1
    %p235 = por %p233, %p234
    %p236 = scmp.ne.s32.totalorder %s228, %s231
    %p237 = scmp.eq.s32.totalorder %s20, 0
    %p238 = por %p236, %p237
    %p239 = scmp.ne.s32.totalorder %s228, %s231
    %p240 = scmp.eq.s32.totalorder %s25, 1
    %p241 = por %p239, %p240
    %p242 = scmp.ne.s32.totalorder %s231, %s232
    %p243 = scmp.eq.s32.totalorder %s25, 0
    %p244 = por %p242, %p243
    %p245 = scmp.ne.s32.totalorder %s231, %s232
    %p246 = scmp.eq.s32.totalorder %s26, 1
    %p247 = por %p245, %p246
    %p249 = scmp.ne.s32.totalorder %s232, %s248
    %p250 = scmp.eq.s32.totalorder %s26, 0
    %p251 = por %p249, %p250
    %s252 = ssub.s32 %s20, %s27
    %p253 = scmp.eq.s32.totalorder %s252, 0
    %s255 = sadd.s32 %s254, 1
    %s256 = scalar_select %p253, %s254, %s255
    %p259 = pneg %p253
    %p260 = scmp.eq.s32.totalorder %s20, 1
    %p261 = por %p259, %p260
    %p262 = scmp.ne.s32.totalorder %s254, %s257
    %p263 = scmp.eq.s32.totalorder %s20, 0
    %p264 = por %p262, %p263
    %p265 = scmp.ne.s32.totalorder %s254, %s257
    %p266 = scmp.eq.s32.totalorder %s25, 1
    %p267 = por %p265, %p266
    %p268 = scmp.ne.s32.totalorder %s257, %s258
    %p269 = scmp.eq.s32.totalorder %s25, 0
    %p270 = por %p268, %p269
    %p271 = scmp.ne.s32.totalorder %s257, %s258
    %p272 = scmp.eq.s32.totalorder %s26, 1
    %p273 = por %p271, %p272
    %p275 = scmp.ne.s32.totalorder %s258, %s274
    %p276 = scmp.eq.s32.totalorder %s26, 0
    %p277 = por %p275, %p276
    %s278 = ssub.s32 %s20, %s27
    %p279 = scmp.eq.s32.totalorder %s278, 0
    %s281 = sadd.s32 %s280, 1
    %s282 = scalar_select %p279, %s280, %s281
    %p285 = pneg %p279
    %p286 = scmp.eq.s32.totalorder %s20, 1
    %p287 = por %p285, %p286
    %p288 = scmp.ne.s32.totalorder %s280, %s283
    %p289 = scmp.eq.s32.totalorder %s20, 0
    %p290 = por %p288, %p289
    %p291 = scmp.ne.s32.totalorder %s280, %s283
    %p292 = scmp.eq.s32.totalorder %s25, 1
    %p293 = por %p291, %p292
    %p294 = scmp.ne.s32.totalorder %s283, %s284
    %p295 = scmp.eq.s32.totalorder %s25, 0
    %p296 = por %p294, %p295
    %p297 = scmp.ne.s32.totalorder %s283, %s284
    %p298 = scmp.eq.s32.totalorder %s26, 1
    %p299 = por %p297, %p298
    %p301 = scmp.ne.s32.totalorder %s284, %s300
    %p302 = scmp.eq.s32.totalorder %s26, 0
    %p303 = por %p301, %p302
    %s304 = ssub.s32 %s20, %s27
    %p305 = scmp.eq.s32.totalorder %s304, 0
    %s307 = sadd.s32 %s306, 1
    %s308 = scalar_select %p305, %s306, %s307
    %p311 = pneg %p305
    %p312 = scmp.eq.s32.totalorder %s20, 1
    %p313 = por %p311, %p312
    %p314 = scmp.ne.s32.totalorder %s306, %s309
    %p315 = scmp.eq.s32.totalorder %s20, 0
    %p316 = por %p314, %p315
    %p317 = scmp.ne.s32.totalorder %s306, %s309
    %p318 = scmp.eq.s32.totalorder %s25, 1
    %p319 = por %p317, %p318
    %p320 = scmp.ne.s32.totalorder %s309, %s310
    %p321 = scmp.eq.s32.totalorder %s25, 0
    %p322 = por %p320, %p321
    %p323 = scmp.ne.s32.totalorder %s309, %s310
    %p324 = scmp.eq.s32.totalorder %s26, 1
    %p325 = por %p323, %p324
    %p327 = scmp.ne.s32.totalorder %s310, %s326
    %p328 = scmp.eq.s32.totalorder %s26, 0
    %p329 = por %p327, %p328
    %s330 = ssub.s32 %s20, %s27
    %p331 = scmp.eq.s32.totalorder %s330, 0
    %s333 = sadd.s32 %s332, 1
    %s334 = scalar_select %p331, %s332, %s333
    %p337 = pneg %p331
    %p338 = scmp.eq.s32.totalorder %s20, 1
    %p339 = por %p337, %p338
    %p340 = scmp.ne.s32.totalorder %s332, %s335
    %p341 = scmp.eq.s32.totalorder %s20, 0
    %p342 = por %p340, %p341
    %p343 = scmp.ne.s32.totalorder %s332, %s335
    %p344 = scmp.eq.s32.totalorder %s25, 1
    %p345 = por %p343, %p344
    %p346 = scmp.ne.s32.totalorder %s335, %s336
    %p347 = scmp.eq.s32.totalorder %s25, 0
    %p348 = por %p346, %p347
    %p349 = scmp.ne.s32.totalorder %s335, %s336
    %p350 = scmp.eq.s32.totalorder %s26, 1
    %p351 = por %p349, %p350
    %p353 = scmp.ne.s32.totalorder %s336, %s352
    %p354 = scmp.eq.s32.totalorder %s26, 0
    %p355 = por %p353, %p354
    %s356 = ssub.s32 %s20, %s27
    %p357 = scmp.eq.s32.totalorder %s356, 0
    %s359 = sadd.s32 %s358, 1
    %s360 = scalar_select %p357, %s358, %s359
    %p363 = pneg %p357
    %p364 = scmp.eq.s32.totalorder %s20, 1
    %p365 = por %p363, %p364
    %p366 = scmp.ne.s32.totalorder %s358, %s361
    %p367 = scmp.eq.s32.totalorder %s20, 0
    %p368 = por %p366, %p367
    %p369 = scmp.ne.s32.totalorder %s358, %s361
    %p370 = scmp.eq.s32.totalorder %s25, 1
    %p371 = por %p369, %p370
    %p372 = scmp.ne.s32.totalorder %s361, %s362
    %p373 = scmp.eq.s32.totalorder %s25, 0
    %p374 = por %p372, %p373
    %p375 = scmp.ne.s32.totalorder %s361, %s362
    %p376 = scmp.eq.s32.totalorder %s26, 1
    %p377 = por %p375, %p376
    %p379 = scmp.ne.s32.totalorder %s362, %s378
    %p380 = scmp.eq.s32.totalorder %s26, 0
    %p381 = por %p379, %p380
    %s383 = sadd.s32 %s382, 1
    %p386 = scmp.eq.s32.totalorder %s20, 1
    %p387 = scmp.ne.s32.totalorder %s382, %s384
    %p388 = scmp.eq.s32.totalorder %s20, 0
    %p389 = por %p387, %p388
    %p390 = scmp.ne.s32.totalorder %s382, %s384
    %p391 = scmp.eq.s32.totalorder %s25, 1
    %p392 = por %p390, %p391
    %p393 = scmp.ne.s32.totalorder %s384, %s385
    %p394 = scmp.eq.s32.totalorder %s25, 0
    %p395 = por %p393, %p394
    %p396 = scmp.ne.s32.totalorder %s384, %s385
    %p397 = scmp.eq.s32.totalorder %s26, 1
    %p398 = por %p396, %p397
    %p400 = scmp.ne.s32.totalorder %s385, %s399
    %p401 = scmp.eq.s32.totalorder %s26, 0
    %p402 = por %p400, %p401
    %p403 = scmp.le.s32.totalorder 1, %s20
    %p404 = scmp.lt.s32.totalorder %s20, 3
    %p405 = pnand %p403, %p404
    %p406 = pneg %p405
    // Predicated region
    $region9: #{transformer_forward.2} parent=5 // pred_check
      _
    $region10: #{transformer_forward.2} parent=5 // pred_check_branch
      %408 = sbr.rel (%p405) target = $region12
    $region11: #{transformer_forward.2} parent=5 // pred_region
      %s409 = ssub.s32 %s20, 1
      // Predicated region
      $region13: #{transformer_forward.2} parent=11 // pred_check
        %p410 = pneg %p41
      $region14: #{transformer_forward.2} parent=11 // pred_check_branch
        %412 = sbr.rel (%p410) target = $region16
      $region15: #{transformer_forward.2} parent=11 // pred_region
        _
      $region16: #{transformer_forward.2} parent=11 // pred_fallthru
        _
      // Predicated region
      $region17: #{transformer_forward.2} parent=11 // pred_check
        %p413 = pneg %p62
      $region18: #{transformer_forward.2} parent=11 // pred_check_branch
        %415 = sbr.rel (%p413) target = $region20
      $region19: #{transformer_forward.2} parent=11 // pred_region
        _
      $region20: #{transformer_forward.2} parent=11 // pred_fallthru
        _
    $region12: #{transformer_forward.2} parent=5 // pred_fallthru
      _
    %p416 = scmp.lt.s32.totalorder %s20, 2
    // Predicated region
    $region21: #{transformer_forward.2} parent=5 // pred_check
      %p417 = pneg %p416
    $region22: #{transformer_forward.2} parent=5 // pred_check_branch
      %419 = sbr.rel (%p417) target = $region24
    $region23: #{transformer_forward.2} parent=5 // pred_region
      // Predicated region
      $region25: #{transformer_forward.2} parent=23 // pred_check
        %p420 = pneg %p82
      $region26: #{transformer_forward.2} parent=23 // pred_check_branch
        %422 = sbr.rel (%p420) target = $region28
      $region27: #{transformer_forward.2} parent=23 // pred_region
        %p423 = scmp.lt.s32.totalorder %s20, 1
        %s424 = scalar_select %p423, %s20, 1
        %s425 = smul.addr %s424, 4
        %s426 = smul.addr %s425, 4
        %s427 = scalar_lea.vmem %s2, %s426
      $region28: #{transformer_forward.2} parent=23 // pred_fallthru
        _
      // Predicated region
      $region29: #{transformer_forward.2} parent=23 // pred_check
        %p428 = pneg %p108
      $region30: #{transformer_forward.2} parent=23 // pred_check_branch
        %430 = sbr.rel (%p428) target = $region32
      $region31: #{transformer_forward.2} parent=23 // pred_region
        %p431 = scmp.lt.s32.totalorder %s20, 1
        %s432 = scalar_select %p431, %s20, 1
        %s433 = scalar_lea.vmem %s3, %s432
      $region32: #{transformer_forward.2} parent=23 // pred_fallthru
        _
      // Predicated region
      $region33: #{transformer_forward.2} parent=23 // pred_check
        %p434 = pneg %p134
      $region34: #{transformer_forward.2} parent=23 // pred_check_branch
        %436 = sbr.rel (%p434) target = $region36
      $region35: #{transformer_forward.2} parent=23 // pred_region
        %p437 = scmp.lt.s32.totalorder %s20, 1
        %s438 = scalar_select %p437, %s20, 1
        %s439 = smul.addr %s438, 4
        %s440 = smul.addr %s439, 4
        %s441 = scalar_lea.vmem %s4, %s440
      $region36: #{transformer_forward.2} parent=23 // pred_fallthru
        _
      // Predicated region
      $region37: #{transformer_forward.2} parent=23 // pred_check
        %p442 = pneg %p160
      $region38: #{transformer_forward.2} parent=23 // pred_check_branch
        %444 = sbr.rel (%p442) target = $region40
      $region39: #{transformer_forward.2} parent=23 // pred_region
        %p445 = scmp.lt.s32.totalorder %s20, 1
        %s446 = scalar_select %p445, %s20, 1
        %s447 = scalar_lea.vmem %s5, %s446
      $region40: #{transformer_forward.2} parent=23 // pred_fallthru
        _
      // Predicated region
      $region41: #{transformer_forward.2} parent=23 // pred_check
        %p448 = pneg %p186
      $region42: #{transformer_forward.2} parent=23 // pred_check_branch
        %450 = sbr.rel (%p448) target = $region44
      $region43: #{transformer_forward.2} parent=23 // pred_region
        %p451 = scmp.lt.s32.totalorder %s20, 1
        %s452 = scalar_select %p451, %s20, 1
        %s453 = smul.addr %s452, 4
        %s454 = smul.addr %s453, 4
        %s455 = scalar_lea.vmem %s6, %s454
      $region44: #{transformer_forward.2} parent=23 // pred_fallthru
        _
      // Predicated region
      $region45: #{transformer_forward.2} parent=23 // pred_check
        %p456 = pneg %p212
      $region46: #{transformer_forward.2} parent=23 // pred_check_branch
        %458 = sbr.rel (%p456) target = $region48
      $region47: #{transformer_forward.2} parent=23 // pred_region
        %p459 = scmp.lt.s32.totalorder %s20, 1
        %s460 = scalar_select %p459, %s20, 1
        %s461 = scalar_lea.vmem %s7, %s460
      $region48: #{transformer_forward.2} parent=23 // pred_fallthru
        _
      // Predicated region
      $region49: #{transformer_forward.2} parent=23 // pred_check
        %p462 = pneg %p238
      $region50: #{transformer_forward.2} parent=23 // pred_check_branch
        %464 = sbr.rel (%p462) target = $region52
      $region51: #{transformer_forward.2} parent=23 // pred_region
        %p465 = scmp.lt.s32.totalorder %s20, 1
        %s466 = scalar_select %p465, %s20, 1
        %s467 = smul.addr %s466, 8
        %s468 = smul.addr %s467, 4
        %s469 = scalar_lea.vmem %s8, %s468
      $region52: #{transformer_forward.2} parent=23 // pred_fallthru
        _
      // Predicated region
      $region53: #{transformer_forward.2} parent=23 // pred_check
        %p470 = pneg %p264
      $region54: #{transformer_forward.2} parent=23 // pred_check_branch
        %472 = sbr.rel (%p470) target = $region56
      $region55: #{transformer_forward.2} parent=23 // pred_region
        %p473 = scmp.lt.s32.totalorder %s20, 1
        %s474 = scalar_select %p473, %s20, 1
        %s475 = scalar_lea.vmem %s9, %s474
      $region56: #{transformer_forward.2} parent=23 // pred_fallthru
        _
      // Predicated region
      $region57: #{transformer_forward.2} parent=23 // pred_check
        %p476 = pneg %p290
      $region58: #{transformer_forward.2} parent=23 // pred_check_branch
        %478 = sbr.rel (%p476) target = $region60
      $region59: #{transformer_forward.2} parent=23 // pred_region
        %p479 = scmp.lt.s32.totalorder %s20, 1
        %s480 = scalar_select %p479, %s20, 1
        %s481 = scalar_lea.vmem %s10, %s480
      $region60: #{transformer_forward.2} parent=23 // pred_fallthru
        _
      // Predicated region
      $region61: #{transformer_forward.2} parent=23 // pred_check
        %p482 = pneg %p316
      $region62: #{transformer_forward.2} parent=23 // pred_check_branch
        %484 = sbr.rel (%p482) target = $region64
      $region63: #{transformer_forward.2} parent=23 // pred_region
        %p485 = scmp.lt.s32.totalorder %s20, 1
        %s486 = scalar_select %p485, %s20, 1
        %s487 = scalar_lea.vmem %s11, %s486
      $region64: #{transformer_forward.2} parent=23 // pred_fallthru
        _
      // Predicated region
      $region65: #{transformer_forward.2} parent=23 // pred_check
        %p488 = pneg %p342
      $region66: #{transformer_forward.2} parent=23 // pred_check_branch
        %490 = sbr.rel (%p488) target = $region68
      $region67: #{transformer_forward.2} parent=23 // pred_region
        %p491 = scmp.lt.s32.totalorder %s20, 1
        %s492 = scalar_select %p491, %s20, 1
        %s493 = scalar_lea.vmem %s12, %s492
      $region68: #{transformer_forward.2} parent=23 // pred_fallthru
        _
      // Predicated region
      $region69: #{transformer_forward.2} parent=23 // pred_check
        %p494 = pneg %p368
      $region70: #{transformer_forward.2} parent=23 // pred_check_branch
        %496 = sbr.rel (%p494) target = $region72
      $region71: #{transformer_forward.2} parent=23 // pred_region
        %p497 = scmp.lt.s32.totalorder %s20, 1
        %s498 = scalar_select %p497, %s20, 1
        %s499 = scalar_lea.vmem %s13, %s498
      $region72: #{transformer_forward.2} parent=23 // pred_fallthru
        _
    $region24: #{transformer_forward.2} parent=5 // pred_fallthru
      _
    %p500 = scmp.le.s32.totalorder 1, %s20
    %p501 = scmp.lt.s32.totalorder %s20, 3
    %p502 = pnand %p500, %p501
    %p503 = pneg %p502
    // Predicated region
    $region73: #{transformer_forward.2} parent=5 // pred_check
      _
    $region74: #{transformer_forward.2} parent=5 // pred_check_branch
      %505 = sbr.rel (%p502) target = $region76
    $region75: #{transformer_forward.2} parent=5 // pred_region
      %s506 = ssub.s32 %s20, 1
      %p507 = pneg %p41
      %p508 = pneg %p38
      %p509 = pneg %p62
      %p510 = pneg %p59
      %p511 = scmp.lt.s32.totalorder %s25, 1
      %s512 = scalar_select %p511, %s25, 1
      %s513 = smul.addr %s512, 4
      %s514 = smul.addr %s513, 4
      %s515 = scalar_lea.vmem %s2, %s514
      %p516 = pneg %p88
      %p517 = pneg %p85
      %p518 = scmp.lt.s32.totalorder %s25, 1
      %s519 = scalar_select %p518, %s25, 1
      %s520 = scalar_lea.vmem %s3, %s519
      %p521 = pneg %p114
      %p522 = pneg %p111
      %p523 = scmp.lt.s32.totalorder %s25, 1
      %s524 = scalar_select %p523, %s25, 1
      %s525 = smul.addr %s524, 4
      %s526 = smul.addr %s525, 4
      %s527 = scalar_lea.vmem %s4, %s526
      %p528 = pneg %p140
      %p529 = pneg %p137
      %p530 = scmp.lt.s32.totalorder %s25, 1
      %s531 = scalar_select %p530, %s25, 1
      %s532 = scalar_lea.vmem %s5, %s531
      %p533 = pneg %p166
      %p534 = pneg %p163
      %p535 = scmp.lt.s32.totalorder %s25, 1
      %s536 = scalar_select %p535, %s25, 1
      %s537 = smul.addr %s536, 4
      %s538 = smul.addr %s537, 4
      %s539 = scalar_lea.vmem %s6, %s538
      %p540 = pneg %p192
      %p541 = pneg %p189
      %p542 = scmp.lt.s32.totalorder %s25, 1
      %s543 = scalar_select %p542, %s25, 1
      %s544 = scalar_lea.vmem %s7, %s543
      %p545 = pneg %p218
      %p546 = pneg %p215
      %p547 = scmp.lt.s32.totalorder %s25, 1
      %s548 = scalar_select %p547, %s25, 1
      %s549 = smul.addr %s548, 8
      %s550 = smul.addr %s549, 4
      %s551 = scalar_lea.vmem %s8, %s550
      %p552 = pneg %p244
      %p553 = pneg %p241
      %p554 = scmp.lt.s32.totalorder %s25, 1
      %s555 = scalar_select %p554, %s25, 1
      %s556 = scalar_lea.vmem %s9, %s555
      %p557 = pneg %p270
      %p558 = pneg %p267
      %p559 = scmp.lt.s32.totalorder %s25, 1
      %s560 = scalar_select %p559, %s25, 1
      %s561 = scalar_lea.vmem %s10, %s560
      %p562 = pneg %p296
      %p563 = pneg %p293
      %p564 = scmp.lt.s32.totalorder %s25, 1
      %s565 = scalar_select %p564, %s25, 1
      %s566 = scalar_lea.vmem %s11, %s565
      %p567 = pneg %p322
      %p568 = pneg %p319
      %p569 = scmp.lt.s32.totalorder %s25, 1
      %s570 = scalar_select %p569, %s25, 1
      %s571 = scalar_lea.vmem %s12, %s570
      %p572 = pneg %p348
      %p573 = pneg %p345
      %p574 = scmp.lt.s32.totalorder %s25, 1
      %s575 = scalar_select %p574, %s25, 1
      %s576 = scalar_lea.vmem %s13, %s575
      %p577 = pneg %p374
      %p578 = pneg %p371
      %p579 = pneg %p395
      %p580 = pneg %p392
      %p581 = scmp.lt.s32.totalorder %s25, 1
      %s582 = scalar_select %p581, %s25, 1
      %s583 = smul.addr %s582, 4
      %s584 = smul.addr %s583, 4
      %s585 = scalar_lea.vmem %s2, %s584
      %p586 = scmp.lt.s32.totalorder %s25, 1
      %s587 = scalar_select %p586, %s25, 1
      %s588 = scalar_lea.vmem %s3, %s587
      %p589 = scmp.lt.s32.totalorder %s25, 1
      %s590 = scalar_select %p589, %s25, 1
      %s591 = smul.addr %s590, 4
      %s592 = smul.addr %s591, 4
      %s593 = scalar_lea.vmem %s4, %s592
      %p594 = scmp.lt.s32.totalorder %s25, 1
      %s595 = scalar_select %p594, %s25, 1
      %s596 = scalar_lea.vmem %s5, %s595
      %p597 = scmp.lt.s32.totalorder %s25, 1
      %s598 = scalar_select %p597, %s25, 1
      %s599 = smul.addr %s598, 4
      %s600 = smul.addr %s599, 4
      %s601 = scalar_lea.vmem %s6, %s600
      %p602 = scmp.lt.s32.totalorder %s25, 1
      %s603 = scalar_select %p602, %s25, 1
      %s604 = scalar_lea.vmem %s7, %s603
      %p605 = scmp.lt.s32.totalorder %s25, 1
      %s606 = scalar_select %p605, %s25, 1
      %s607 = smul.addr %s606, 8
      %s608 = smul.addr %s607, 4
      %s609 = scalar_lea.vmem %s8, %s608
      %p610 = scmp.lt.s32.totalorder %s25, 1
      %s611 = scalar_select %p610, %s25, 1
      %s612 = scalar_lea.vmem %s9, %s611
      %p613 = scmp.lt.s32.totalorder %s25, 1
      %s614 = scalar_select %p613, %s25, 1
      %s615 = scalar_lea.vmem %s10, %s614
      %p616 = scmp.lt.s32.totalorder %s25, 1
      %s617 = scalar_select %p616, %s25, 1
      %s618 = scalar_lea.vmem %s11, %s617
      %p619 = scmp.lt.s32.totalorder %s25, 1
      %s620 = scalar_select %p619, %s25, 1
      %s621 = scalar_lea.vmem %s12, %s620
      %p622 = scmp.lt.s32.totalorder %s25, 1
      %s623 = scalar_select %p622, %s25, 1
      %s624 = scalar_lea.vmem %s13, %s623
      %p626 = scmp.eq.s32.totalorder %s25, 0
      // Predicated region
      $region77: #{transformer_forward.2} parent=75 // pred_check
        %p627 = pneg %p626
      $region78: #{transformer_forward.2} parent=75 // pred_check_branch
        %629 = sbr.rel (%p627) target = $region80
      $region79: #{transformer_forward.2} parent=75 // pred_region
        %v630 = vld [vmem:[%s0] sm:$0xff]
        %v631 = vld [vmem:[%s0 + $0x8] sm:$0xff]
        %vm632 = vcmask 261120
        %633 = vst.msk [vmem:[%s14] sm:$0xff] %vm632, %v630
        %634 = vst.msk [vmem:[%s14 + $0x8] sm:$0xff] %vm632, %v631
      $region80: #{transformer_forward.2} parent=75 // pred_fallthru
        _
      %v635 = vld [vmem:[%s14] sm:$0xff]
      %v636 = vld [vmem:[%s14 + $0x8] sm:$0xff]
      %v637 = vld [vmem:[%s585] sm:$0xf]
      %v638 = vld [vmem:[%s585 + $0x4] sm:$0xf]
      %v639 = vld [vmem:[%s585 + $0x8] sm:$0xf]
      %v640 = vld [vmem:[%s585 + $0xc] sm:$0xf]
      %v641 = vld [vmem:[%s588] sm:$0x1]
      %v642 = vld [vmem:[%s593] sm:$0xf]
      %v643 = vld [vmem:[%s593 + $0x4] sm:$0xf]
      %v644 = vld [vmem:[%s593 + $0x8] sm:$0xf]
      %v645 = vld [vmem:[%s593 + $0xc] sm:$0xf]
      %v646 = vld [vmem:[%s596] sm:$0x1]
      %v647 = vld [vmem:[%s601] sm:$0xf]
      %v648 = vld [vmem:[%s601 + $0x4] sm:$0xf]
      %v649 = vld [vmem:[%s601 + $0x8] sm:$0xf]
      %v650 = vld [vmem:[%s601 + $0xc] sm:$0xf]
      %v651 = vld [vmem:[%s604] sm:$0x1]
      %v652 = vld [vmem:[%s609] sm:$0xf]
      %v653 = vld [vmem:[%s609 + $0x4] sm:$0xf]
      %v654 = vld [vmem:[%s609 + $0x8] sm:$0xf]
      %v655 = vld [vmem:[%s609 + $0xc] sm:$0xf]
      %v656 = vld [vmem:[%s609 + $0x10] sm:$0xf]
      %v657 = vld [vmem:[%s609 + $0x14] sm:$0xf]
      %v658 = vld [vmem:[%s609 + $0x18] sm:$0xf]
      %v659 = vld [vmem:[%s609 + $0x1c] sm:$0xf]
      %v660 = vld [vmem:[%s612] sm:$0x1]
      %v661 = vld [vmem:[%s615] sm:$0x1]
      %v662 = vld [vmem:[%s618] sm:$0x1]
      %v663 = vld [vmem:[%s621] sm:$0x1]
      %v664 = vld [vmem:[%s624] sm:$0x1]
      %v665 = vpack.c.bf16 %v636, %v635
      %v667 = vperm.slane %v641, 0
      %v673 = vunpack.c.l.b16 %v637
      %v674 = vunpack.c.l.b16 %v638
      %v675 = vunpack.c.l.b16 %v639
      %v676 = vunpack.c.l.b16 %v640
      %v677 = vpack.c.b16 %v674, %v673
      %v678 = vpack.c.b16 %v676, %v675
      %vm681 = vcmask 261120
      %v683 = vsel %vm681, %v665, 0
      %685 = vmatpush.bf16.msra.mxu0 0
      %686 = vmatpush.bf16.msra.mxu0 0
      %687 = vmatpush.bf16.msra.mxu0 0
      %688 = vmatpush.bf16.msra.mxu0 0
      %689 = vmatpush.bf16.msra.mxu0 0
      %690 = vmatpush.bf16.msra.mxu0 0
      %691 = vmatpush.bf16.msra.mxu0 %v678
      %692 = vmatpush.bf16.msra.mxu0 %v677
      %693 = vmatmul.bf16.gmra.mxu0 %v683
      %v694 = vpop.f32.mrf.mxu0
      %v695 = vadd.f32 %v667, %v694
      %v696 = vpop.f32.mrf.mxu0
      %v697 = vadd.f32 %v667, %v696
      %698 = vdwg.mxu0
      %v699 = vld [vmem:[%s1] sm:$0x1]
      %vm700 = vcmp.gt.f32.partialorder %v699, 0.5
      %s701 = scalar_lea.vmem %s1, 1
      %v702 = vld [vmem:[%s701] sm:$0x1]
      %vm703 = vcmp.gt.f32.partialorder %v702, 0.5
      %v704 = vpack.c.bf16 %v695, %v695
      %v705 = vpack.c.bf16 %v697, %v697
      %v707 = vunpack.c.l.b16 %v704
      %v708 = vpack.c.b16 %v707, %v707
      %709 = vrot.lane.b32.xlu0 %v708, 96
      %v710 = vpop.permute.xlu0 %709
      %vm711 = vcmask 64512
      %v713 = vsel %vm711, %v704, 0
      %v716 = vsel %vm711, %v710, 0
      %718 = vmatpush.bf16.xpose.msra.mxu0 0
      %719 = vmatpush.bf16.xpose.msra.mxu0 0
      %720 = vmatpush.bf16.xpose.msra.mxu0 0
      %721 = vmatpush.bf16.xpose.msra.mxu0 0
      %722 = vmatpush.bf16.xpose.msra.mxu0 0
      %723 = vmatpush.bf16.xpose.msra.mxu0 0
      %724 = vmatpush.bf16.xpose.msra.mxu0 0
      %725 = vmatpush.bf16.xpose.msra.mxu0 %v716
      %726 = vmatmul.bf16.gmra.mxu0 %v713
      %v727 = vpop.f32.mrf.mxu0
      %v728 = vadd.f32 0.0, %v727
      %v729 = vpop.f32.mrf.mxu0
      %730 = vdwg.mxu0
      %v731 = vmul.f32 %v728, 0.35355338
      %v732 = vsel %vm700, 1, 0
      %v733 = vperm.slane %v732, 0
      %vm734 = vcmp.eq.s32.totalorder %v733, 1
      %v735 = vsel %vm734, %v731, -1e+09
      %v736 = vsel %vm711, %v735, -inf
      %737 = vmax.xlane.f32.xlu0 %v736
      %v738 = vpop.xlane.xlu0 %737
      %v739 = vsub.f32 %v735, %v738
      %v740 = vmul.f32 %v739, 1.442695
      %v741 = vpow.pop %v740
      %v742 = vsel %vm711, %v741, 0.0
      %743 = vadd.xlane.f32.xlu0 %v742
      %v744 = vpop.xlane.xlu0 %743
      %v745 = vrcp.pop %v744
      %v746 = vmul.f32 %v744, %v745
      %v747 = vsub.f32 1.0, %v746
      %v748 = vmul.f32 %v745, %v747
      %v749 = vadd.f32 %v745, %v748
      %vm750 = vweird.f32 %v744
      %vm751 = vweird.f32 %v745
      %vm752 = vmor %vm750, %vm751
      %v753 = vsel %vm752, %v745, %v749
      %v754 = vand.u32 2147483647, %v744
      %vm755 = vcmp.eq.f32.partialorder %v754, 8.507059e+37
      %v756 = vand.u32 %v744, 2147483648
      %v757 = vor.u32 1.1754944e-38, %v756
      %v758 = vsel %vm755, %v757, %v753
      %v759 = vmul.f32 %v741, %v758
      %v760 = vpack.c.bf16 %v759, %v759
      %761 = vrot.lane.b32.xlu0 %v708, 64
      %v762 = vpop.permute.xlu0 %761
      %v764 = vsel %vm711, %v760, 0
      %vm766 = vcmask 1043456
      %v768 = vsel %vm766, %v762, 0
      %770 = vmatpush.bf16.msra.mxu0 0
      %771 = vmatpush.bf16.msra.mxu0 0
      %772 = vmatpush.bf16.msra.mxu0 0
      %773 = vmatpush.bf16.msra.mxu0 0
      %774 = vmatpush.bf16.msra.mxu0 0
      %775 = vmatpush.bf16.msra.mxu0 0
      %776 = vmatpush.bf16.msra.mxu0 0
      %777 = vmatpush.bf16.msra.mxu0 %v768
      %778 = vmatmul.bf16.gmra.mxu0 %v764
      %v779 = vpop.f32.mrf.mxu0
      %v780 = vadd.f32 0.0, %v779
      %v781 = vpop.f32.mrf.mxu0
      %782 = vdwg.mxu0
      %v783 = vpack.c.bf16 %v780, %v780
      %784 = vrot.lane.b32.xlu0 %v708, 120
      %v785 = vpop.permute.xlu0 %784
      %786 = vrot.lane.b32.xlu0 %v708, 88
      %v787 = vpop.permute.xlu0 %786
      %v789 = vsel %vm711, %v785, 0
      %v792 = vsel %vm711, %v787, 0
      %794 = vmatpush.bf16.xpose.msra.mxu0 0
      %795 = vmatpush.bf16.xpose.msra.mxu0 0
      %796 = vmatpush.bf16.xpose.msra.mxu0 0
      %797 = vmatpush.bf16.xpose.msra.mxu0 0
      %798 = vmatpush.bf16.xpose.msra.mxu0 0
      %799 = vmatpush.bf16.xpose.msra.mxu0 0
      %800 = vmatpush.bf16.xpose.msra.mxu0 0
      %801 = vmatpush.bf16.xpose.msra.mxu0 %v792
      %802 = vmatmul.bf16.gmra.mxu0 %v789
      %v803 = vpop.f32.mrf.mxu0
      %v804 = vadd.f32 0.0, %v803
      %v805 = vpop.f32.mrf.mxu0
      %806 = vdwg.mxu0
      %v807 = vmul.f32 %v804, 0.35355338
      %v808 = vsel %vm734, %v807, -1e+09
      %v809 = vsel %vm711, %v808, -inf
      %810 = vmax.xlane.f32.xlu0 %v809
      %v811 = vpop.xlane.xlu0 %810
      %v812 = vsub.f32 %v808, %v811
      %v813 = vmul.f32 %v812, 1.442695
      %v814 = vpow.pop %v813
      %v815 = vsel %vm711, %v814, 0.0
      %816 = vadd.xlane.f32.xlu0 %v815
      %v817 = vpop.xlane.xlu0 %816
      %v818 = vrcp.pop %v817
      %v819 = vmul.f32 %v817, %v818
      %v820 = vsub.f32 1.0, %v819
      %v821 = vmul.f32 %v818, %v820
      %v822 = vadd.f32 %v818, %v821
      %vm823 = vweird.f32 %v817
      %vm824 = vweird.f32 %v818
      %vm825 = vmor %vm823, %vm824
      %v826 = vsel %vm825, %v818, %v822
      %v827 = vand.u32 2147483647, %v817
      %vm828 = vcmp.eq.f32.partialorder %v827, 8.507059e+37
      %v829 = vand.u32 %v817, 2147483648
      %v830 = vor.u32 1.1754944e-38, %v829
      %v831 = vsel %vm828, %v830, %v826
      %v832 = vmul.f32 %v814, %v831
      %v833 = vpack.c.bf16 %v832, %v832
      %834 = vrot.lane.b32.xlu0 %v708, 56
      %v835 = vpop.permute.xlu0 %834
      %v837 = vsel %vm711, %v833, 0
      %v840 = vsel %vm766, %v835, 0
      %842 = vmatpush.bf16.msra.mxu0 0
      %843 = vmatpush.bf16.msra.mxu0 0
      %844 = vmatpush.bf16.msra.mxu0 0
      %845 = vmatpush.bf16.msra.mxu0 0
      %846 = vmatpush.bf16.msra.mxu0 0
      %847 = vmatpush.bf16.msra.mxu0 0
      %848 = vmatpush.bf16.msra.mxu0 0
      %849 = vmatpush.bf16.msra.mxu0 %v840
      %850 = vmatmul.bf16.gmra.mxu0 %v837
      %v851 = vpop.f32.mrf.mxu0
      %v852 = vadd.f32 0.0, %v851
      %v853 = vpop.f32.mrf.mxu0
      %854 = vdwg.mxu0
      %v855 = vpack.c.bf16 %v852, %v852
      %v857 = vsel %vm711, %v855, 0
      %v860 = vsel %vm766, %v643, 0
      %862 = vmatpush.bf16.msra.mxu0 0
      %863 = vmatpush.bf16.msra.mxu0 0
      %864 = vmatpush.bf16.msra.mxu0 0
      %865 = vmatpush.bf16.msra.mxu0 0
      %866 = vmatpush.bf16.msra.mxu0 0
      %867 = vmatpush.bf16.msra.mxu0 0
      %868 = vmatpush.bf16.msra.mxu0 0
      %869 = vmatpush.bf16.msra.mxu0 %v860
      %870 = vmatmul.bf16.gmra.mxu0 %v857
      %v871 = vpop.f32.mrf.mxu0
      %v872 = vadd.f32 0.0, %v871
      %v873 = vpop.f32.mrf.mxu0
      %874 = vdwg.mxu0
      %v876 = vsel %vm711, %v783, 0
      %v879 = vsel %vm766, %v642, 0
      %881 = vmatpush.bf16.msra.mxu0 0
      %882 = vmatpush.bf16.msra.mxu0 0
      %883 = vmatpush.bf16.msra.mxu0 0
      %884 = vmatpush.bf16.msra.mxu0 0
      %885 = vmatpush.bf16.msra.mxu0 0
      %886 = vmatpush.bf16.msra.mxu0 0
      %887 = vmatpush.bf16.msra.mxu0 0
      %888 = vmatpush.bf16.msra.mxu0 %v879
      %889 = vmatmul.bf16.gmra.mxu0 %v876
      %v890 = vpop.f32.mrf.mxu0
      %v891 = vadd.f32 %v872, %v890
      %v892 = vpop.f32.mrf.mxu0
      %893 = vdwg.mxu0
      %894 = vrot.lane.b32.xlu0 %v708, 112
      %v895 = vpop.permute.xlu0 %894
      %896 = vrot.lane.b32.xlu0 %v708, 80
      %v897 = vpop.permute.xlu0 %896
      %v899 = vsel %vm711, %v895, 0
      %v902 = vsel %vm711, %v897, 0
      %904 = vmatpush.bf16.xpose.msra.mxu0 0
      %905 = vmatpush.bf16.xpose.msra.mxu0 0
      %906 = vmatpush.bf16.xpose.msra.mxu0 0
      %907 = vmatpush.bf16.xpose.msra.mxu0 0
      %908 = vmatpush.bf16.xpose.msra.mxu0 0
      %909 = vmatpush.bf16.xpose.msra.mxu0 0
      %910 = vmatpush.bf16.xpose.msra.mxu0 0
      %911 = vmatpush.bf16.xpose.msra.mxu0 %v902
      %912 = vmatmul.bf16.gmra.mxu0 %v899
      %v913 = vpop.f32.mrf.mxu0
      %v914 = vadd.f32 0.0, %v913
      %v915 = vpop.f32.mrf.mxu0
      %916 = vdwg.mxu0
      %v917 = vmul.f32 %v914, 0.35355338
      %v918 = vsel %vm734, %v917, -1e+09
      %v919 = vsel %vm711, %v918, -inf
      %920 = vmax.xlane.f32.xlu0 %v919
      %v921 = vpop.xlane.xlu0 %920
      %v922 = vsub.f32 %v918, %v921
      %v923 = vmul.f32 %v922, 1.442695
      %v924 = vpow.pop %v923
      %v925 = vsel %vm711, %v924, 0.0
      %926 = vadd.xlane.f32.xlu0 %v925
      %v927 = vpop.xlane.xlu0 %926
      %v928 = vrcp.pop %v927
      %v929 = vmul.f32 %v927, %v928
      %v930 = vsub.f32 1.0, %v929
      %v931 = vmul.f32 %v928, %v930
      %v932 = vadd.f32 %v928, %v931
      %vm933 = vweird.f32 %v927
      %vm934 = vweird.f32 %v928
      %vm935 = vmor %vm933, %vm934
      %v936 = vsel %vm935, %v928, %v932
      %v937 = vand.u32 2147483647, %v927
      %vm938 = vcmp.eq.f32.partialorder %v937, 8.507059e+37
      %v939 = vand.u32 %v927, 2147483648
      %v940 = vor.u32 1.1754944e-38, %v939
      %v941 = vsel %vm938, %v940, %v936
      %v942 = vmul.f32 %v924, %v941
      %v943 = vpack.c.bf16 %v942, %v942
      %944 = vrot.lane.b32.xlu0 %v708, 48
      %v945 = vpop.permute.xlu0 %944
      %v947 = vsel %vm711, %v943, 0
      %v950 = vsel %vm766, %v945, 0
      %952 = vmatpush.bf16.msra.mxu0 0
      %953 = vmatpush.bf16.msra.mxu0 0
      %954 = vmatpush.bf16.msra.mxu0 0
      %955 = vmatpush.bf16.msra.mxu0 0
      %956 = vmatpush.bf16.msra.mxu0 0
      %957 = vmatpush.bf16.msra.mxu0 0
      %958 = vmatpush.bf16.msra.mxu0 0
      %959 = vmatpush.bf16.msra.mxu0 %v950
      %960 = vmatmul.bf16.gmra.mxu0 %v947
      %v961 = vpop.f32.mrf.mxu0
      %v962 = vadd.f32 0.0, %v961
      %v963 = vpop.f32.mrf.mxu0
      %964 = vdwg.mxu0
      %v965 = vpack.c.bf16 %v962, %v962
      %v967 = vsel %vm711, %v965, 0
      %v970 = vsel %vm766, %v644, 0
      %972 = vmatpush.bf16.msra.mxu0 0
      %973 = vmatpush.bf16.msra.mxu0 0
      %974 = vmatpush.bf16.msra.mxu0 0
      %975 = vmatpush.bf16.msra.mxu0 0
      %976 = vmatpush.bf16.msra.mxu0 0
      %977 = vmatpush.bf16.msra.mxu0 0
      %978 = vmatpush.bf16.msra.mxu0 0
      %979 = vmatpush.bf16.msra.mxu0 %v970
      %980 = vmatmul.bf16.gmra.mxu0 %v967
      %v981 = vpop.f32.mrf.mxu0
      %v982 = vadd.f32 0.0, %v981
      %v983 = vpop.f32.mrf.mxu0
      %984 = vdwg.mxu0
      %v985 = vadd.f32 %v891, %v982
      %986 = vrot.lane.b32.xlu0 %v708, 104
      %v987 = vpop.permute.xlu0 %986
      %988 = vrot.lane.b32.xlu0 %v708, 72
      %v989 = vpop.permute.xlu0 %988
      %v991 = vsel %vm711, %v987, 0
      %v994 = vsel %vm711, %v989, 0
      %996 = vmatpush.bf16.xpose.msra.mxu0 0
      %997 = vmatpush.bf16.xpose.msra.mxu0 0
      %998 = vmatpush.bf16.xpose.msra.mxu0 0
      %999 = vmatpush.bf16.xpose.msra.mxu0 0
      %1000 = vmatpush.bf16.xpose.msra.mxu0 0
      %1001 = vmatpush.bf16.xpose.msra.mxu0 0
      %1002 = vmatpush.bf16.xpose.msra.mxu0 0
      %1003 = vmatpush.bf16.xpose.msra.mxu0 %v994
      %1004 = vmatmul.bf16.gmra.mxu0 %v991
      %v1005 = vpop.f32.mrf.mxu0
      %v1006 = vadd.f32 0.0, %v1005
      %v1007 = vpop.f32.mrf.mxu0
      %1008 = vdwg.mxu0
      %v1009 = vmul.f32 %v1006, 0.35355338
      %v1010 = vsel %vm734, %v1009, -1e+09
      %v1011 = vsel %vm711, %v1010, -inf
      %1012 = vmax.xlane.f32.xlu0 %v1011
      %v1013 = vpop.xlane.xlu0 %1012
      %v1014 = vsub.f32 %v1010, %v1013
      %v1015 = vmul.f32 %v1014, 1.442695
      %v1016 = vpow.pop %v1015
      %v1017 = vsel %vm711, %v1016, 0.0
      %1018 = vadd.xlane.f32.xlu0 %v1017
      %v1019 = vpop.xlane.xlu0 %1018
      %v1020 = vrcp.pop %v1019
      %v1021 = vmul.f32 %v1019, %v1020
      %v1022 = vsub.f32 1.0, %v1021
      %v1023 = vmul.f32 %v1020, %v1022
      %v1024 = vadd.f32 %v1020, %v1023
      %vm1025 = vweird.f32 %v1019
      %vm1026 = vweird.f32 %v1020
      %vm1027 = vmor %vm1025, %vm1026
      %v1028 = vsel %vm1027, %v1020, %v1024
      %v1029 = vand.u32 2147483647, %v1019
      %vm1030 = vcmp.eq.f32.partialorder %v1029, 8.507059e+37
      %v1031 = vand.u32 %v1019, 2147483648
      %v1032 = vor.u32 1.1754944e-38, %v1031
      %v1033 = vsel %vm1030, %v1032, %v1028
      %v1034 = vmul.f32 %v1016, %v1033
      %v1035 = vpack.c.bf16 %v1034, %v1034
      %1036 = vrot.lane.b32.xlu0 %v708, 40
      %v1037 = vpop.permute.xlu0 %1036
      %v1039 = vsel %vm711, %v1035, 0
      %v1042 = vsel %vm766, %v1037, 0
      %1044 = vmatpush.bf16.msra.mxu0 0
      %1045 = vmatpush.bf16.msra.mxu0 0
      %1046 = vmatpush.bf16.msra.mxu0 0
      %1047 = vmatpush.bf16.msra.mxu0 0
      %1048 = vmatpush.bf16.msra.mxu0 0
      %1049 = vmatpush.bf16.msra.mxu0 0
      %1050 = vmatpush.bf16.msra.mxu0 0
      %1051 = vmatpush.bf16.msra.mxu0 %v1042
      %1052 = vmatmul.bf16.gmra.mxu0 %v1039
      %v1053 = vpop.f32.mrf.mxu0
      %v1054 = vadd.f32 0.0, %v1053
      %v1055 = vpop.f32.mrf.mxu0
      %1056 = vdwg.mxu0
      %v1057 = vpack.c.bf16 %v1054, %v1054
      %v1059 = vsel %vm711, %v1057, 0
      %v1062 = vsel %vm766, %v645, 0
      %1064 = vmatpush.bf16.msra.mxu0 0
      %1065 = vmatpush.bf16.msra.mxu0 0
      %1066 = vmatpush.bf16.msra.mxu0 0
      %1067 = vmatpush.bf16.msra.mxu0 0
      %1068 = vmatpush.bf16.msra.mxu0 0
      %1069 = vmatpush.bf16.msra.mxu0 0
      %1070 = vmatpush.bf16.msra.mxu0 0
      %1071 = vmatpush.bf16.msra.mxu0 %v1062
      %1072 = vmatmul.bf16.gmra.mxu0 %v1059
      %v1073 = vpop.f32.mrf.mxu0
      %v1074 = vadd.f32 0.0, %v1073
      %v1075 = vpop.f32.mrf.mxu0
      %1076 = vdwg.mxu0
      %v1077 = vadd.f32 %v985, %v1074
      %v1079 = vunpack.c.l.b16 %v705
      %v1080 = vpack.c.b16 %v1079, %v1079
      %1081 = vrot.lane.b32.xlu0 %v1080, 96
      %v1082 = vpop.permute.xlu0 %1081
      %v1084 = vsel %vm711, %v705, 0
      %v1087 = vsel %vm711, %v1082, 0
      %1089 = vmatpush.bf16.xpose.msra.mxu0 0
      %1090 = vmatpush.bf16.xpose.msra.mxu0 0
      %1091 = vmatpush.bf16.xpose.msra.mxu0 0
      %1092 = vmatpush.bf16.xpose.msra.mxu0 0
      %1093 = vmatpush.bf16.xpose.msra.mxu0 0
      %1094 = vmatpush.bf16.xpose.msra.mxu0 0
      %1095 = vmatpush.bf16.xpose.msra.mxu0 0
      %1096 = vmatpush.bf16.xpose.msra.mxu0 %v1087
      %1097 = vmatmul.bf16.gmra.mxu0 %v1084
      %v1098 = vpop.f32.mrf.mxu0
      %v1099 = vadd.f32 0.0, %v1098
      %v1100 = vpop.f32.mrf.mxu0
      %1101 = vdwg.mxu0
      %v1102 = vmul.f32 %v1099, 0.35355338
      %v1103 = vsel %vm703, 1, 0
      %v1104 = vperm.slane %v1103, 0
      %vm1105 = vcmp.eq.s32.totalorder %v1104, 1
      %v1106 = vsel %vm1105, %v1102, -1e+09
      %v1107 = vsel %vm711, %v1106, -inf
      %1108 = vmax.xlane.f32.xlu0 %v1107
      %v1109 = vpop.xlane.xlu0 %1108
      %v1110 = vsub.f32 %v1106, %v1109
      %v1111 = vmul.f32 %v1110, 1.442695
      %v1112 = vpow.pop %v1111
      %v1113 = vsel %vm711, %v1112, 0.0
      %1114 = vadd.xlane.f32.xlu0 %v1113
      %v1115 = vpop.xlane.xlu0 %1114
      %v1116 = vrcp.pop %v1115
      %v1117 = vmul.f32 %v1115, %v1116
      %v1118 = vsub.f32 1.0, %v1117
      %v1119 = vmul.f32 %v1116, %v1118
      %v1120 = vadd.f32 %v1116, %v1119
      %vm1121 = vweird.f32 %v1115
      %vm1122 = vweird.f32 %v1116
      %vm1123 = vmor %vm1121, %vm1122
      %v1124 = vsel %vm1123, %v1116, %v1120
      %v1125 = vand.u32 2147483647, %v1115
      %vm1126 = vcmp.eq.f32.partialorder %v1125, 8.507059e+37
      %v1127 = vand.u32 %v1115, 2147483648
      %v1128 = vor.u32 1.1754944e-38, %v1127
      %v1129 = vsel %vm1126, %v1128, %v1124
      %v1130 = vmul.f32 %v1112, %v1129
      %v1131 = vpack.c.bf16 %v1130, %v1130
      %1132 = vrot.lane.b32.xlu0 %v1080, 64
      %v1133 = vpop.permute.xlu0 %1132
      %v1135 = vsel %vm711, %v1131, 0
      %v1138 = vsel %vm766, %v1133, 0
      %1140 = vmatpush.bf16.msra.mxu0 0
      %1141 = vmatpush.bf16.msra.mxu0 0
      %1142 = vmatpush.bf16.msra.mxu0 0
      %1143 = vmatpush.bf16.msra.mxu0 0
      %1144 = vmatpush.bf16.msra.mxu0 0
      %1145 = vmatpush.bf16.msra.mxu0 0
      %1146 = vmatpush.bf16.msra.mxu0 0
      %1147 = vmatpush.bf16.msra.mxu0 %v1138
      %1148 = vmatmul.bf16.gmra.mxu0 %v1135
      %v1149 = vpop.f32.mrf.mxu0
      %v1150 = vadd.f32 0.0, %v1149
      %v1151 = vpop.f32.mrf.mxu0
      %1152 = vdwg.mxu0
      %v1153 = vpack.c.bf16 %v1150, %v1150
      %1154 = vrot.lane.b32.xlu0 %v1080, 120
      %v1155 = vpop.permute.xlu0 %1154
      %1156 = vrot.lane.b32.xlu0 %v1080, 88
      %v1157 = vpop.permute.xlu0 %1156
      %v1159 = vsel %vm711, %v1155, 0
      %v1162 = vsel %vm711, %v1157, 0
      %1164 = vmatpush.bf16.xpose.msra.mxu0 0
      %1165 = vmatpush.bf16.xpose.msra.mxu0 0
      %1166 = vmatpush.bf16.xpose.msra.mxu0 0
      %1167 = vmatpush.bf16.xpose.msra.mxu0 0
      %1168 = vmatpush.bf16.xpose.msra.mxu0 0
      %1169 = vmatpush.bf16.xpose.msra.mxu0 0
      %1170 = vmatpush.bf16.xpose.msra.mxu0 0
      %1171 = vmatpush.bf16.xpose.msra.mxu0 %v1162
      %1172 = vmatmul.bf16.gmra.mxu0 %v1159
      %v1173 = vpop.f32.mrf.mxu0
      %v1174 = vadd.f32 0.0, %v1173
      %v1175 = vpop.f32.mrf.mxu0
      %1176 = vdwg.mxu0
      %v1177 = vmul.f32 %v1174, 0.35355338
      %v1178 = vsel %vm1105, %v1177, -1e+09
      %v1179 = vsel %vm711, %v1178, -inf
      %1180 = vmax.xlane.f32.xlu0 %v1179
      %v1181 = vpop.xlane.xlu0 %1180
      %v1182 = vsub.f32 %v1178, %v1181
      %v1183 = vmul.f32 %v1182, 1.442695
      %v1184 = vpow.pop %v1183
      %v1185 = vsel %vm711, %v1184, 0.0
      %1186 = vadd.xlane.f32.xlu0 %v1185
      %v1187 = vpop.xlane.xlu0 %1186
      %v1188 = vrcp.pop %v1187
      %v1189 = vmul.f32 %v1187, %v1188
      %v1190 = vsub.f32 1.0, %v1189
      %v1191 = vmul.f32 %v1188, %v1190
      %v1192 = vadd.f32 %v1188, %v1191
      %vm1193 = vweird.f32 %v1187
      %vm1194 = vweird.f32 %v1188
      %vm1195 = vmor %vm1193, %vm1194
      %v1196 = vsel %vm1195, %v1188, %v1192
      %v1197 = vand.u32 2147483647, %v1187
      %vm1198 = vcmp.eq.f32.partialorder %v1197, 8.507059e+37
      %v1199 = vand.u32 %v1187, 2147483648
      %v1200 = vor.u32 1.1754944e-38, %v1199
      %v1201 = vsel %vm1198, %v1200, %v1196
      %v1202 = vmul.f32 %v1184, %v1201
      %v1203 = vpack.c.bf16 %v1202, %v1202
      %1204 = vrot.lane.b32.xlu0 %v1080, 56
      %v1205 = vpop.permute.xlu0 %1204
      %v1207 = vsel %vm711, %v1203, 0
      %v1210 = vsel %vm766, %v1205, 0
      %1212 = vmatpush.bf16.msra.mxu0 0
      %1213 = vmatpush.bf16.msra.mxu0 0
      %1214 = vmatpush.bf16.msra.mxu0 0
      %1215 = vmatpush.bf16.msra.mxu0 0
      %1216 = vmatpush.bf16.msra.mxu0 0
      %1217 = vmatpush.bf16.msra.mxu0 0
      %1218 = vmatpush.bf16.msra.mxu0 0
      %1219 = vmatpush.bf16.msra.mxu0 %v1210
      %1220 = vmatmul.bf16.gmra.mxu0 %v1207
      %v1221 = vpop.f32.mrf.mxu0
      %v1222 = vadd.f32 0.0, %v1221
      %v1223 = vpop.f32.mrf.mxu0
      %1224 = vdwg.mxu0
      %v1225 = vpack.c.bf16 %v1222, %v1222
      %v1227 = vsel %vm711, %v1225, 0
      %1229 = vmatpush.bf16.msra.mxu0 0
      %1230 = vmatpush.bf16.msra.mxu0 0
      %1231 = vmatpush.bf16.msra.mxu0 0
      %1232 = vmatpush.bf16.msra.mxu0 0
      %1233 = vmatpush.bf16.msra.mxu0 0
      %1234 = vmatpush.bf16.msra.mxu0 0
      %1235 = vmatpush.bf16.msra.mxu0 0
      %1236 = vmatpush.bf16.msra.mxu0 %v860
      %1237 = vmatmul.bf16.gmra.mxu0 %v1227
      %v1238 = vpop.f32.mrf.mxu0
      %v1239 = vadd.f32 0.0, %v1238
      %v1240 = vpop.f32.mrf.mxu0
      %1241 = vdwg.mxu0
      %v1243 = vsel %vm711, %v1153, 0
      %1245 = vmatpush.bf16.msra.mxu0 0
      %1246 = vmatpush.bf16.msra.mxu0 0
      %1247 = vmatpush.bf16.msra.mxu0 0
      %1248 = vmatpush.bf16.msra.mxu0 0
      %1249 = vmatpush.bf16.msra.mxu0 0
      %1250 = vmatpush.bf16.msra.mxu0 0
      %1251 = vmatpush.bf16.msra.mxu0 0
      %1252 = vmatpush.bf16.msra.mxu0 %v879
      %1253 = vmatmul.bf16.gmra.mxu0 %v1243
      %v1254 = vpop.f32.mrf.mxu0
      %v1255 = vadd.f32 %v1239, %v1254
      %v1256 = vpop.f32.mrf.mxu0
      %1257 = vdwg.mxu0
      %1258 = vrot.lane.b32.xlu0 %v1080, 112
      %v1259 = vpop.permute.xlu0 %1258
      %1260 = vrot.lane.b32.xlu0 %v1080, 80
      %v1261 = vpop.permute.xlu0 %1260
      %v1263 = vsel %vm711, %v1259, 0
      %v1266 = vsel %vm711, %v1261, 0
      %1268 = vmatpush.bf16.xpose.msra.mxu0 0
      %1269 = vmatpush.bf16.xpose.msra.mxu0 0
      %1270 = vmatpush.bf16.xpose.msra.mxu0 0
      %1271 = vmatpush.bf16.xpose.msra.mxu0 0
      %1272 = vmatpush.bf16.xpose.msra.mxu0 0
      %1273 = vmatpush.bf16.xpose.msra.mxu0 0
      %1274 = vmatpush.bf16.xpose.msra.mxu0 0
      %1275 = vmatpush.bf16.xpose.msra.mxu0 %v1266
      %1276 = vmatmul.bf16.gmra.mxu0 %v1263
      %v1277 = vpop.f32.mrf.mxu0
      %v1278 = vadd.f32 0.0, %v1277
      %v1279 = vpop.f32.mrf.mxu0
      %1280 = vdwg.mxu0
      %v1281 = vmul.f32 %v1278, 0.35355338
      %v1282 = vsel %vm1105, %v1281, -1e+09
      %v1283 = vsel %vm711, %v1282, -inf
      %1284 = vmax.xlane.f32.xlu0 %v1283
      %v1285 = vpop.xlane.xlu0 %1284
      %v1286 = vsub.f32 %v1282, %v1285
      %v1287 = vmul.f32 %v1286, 1.442695
      %v1288 = vpow.pop %v1287
      %v1289 = vsel %vm711, %v1288, 0.0
      %1290 = vadd.xlane.f32.xlu0 %v1289
      %v1291 = vpop.xlane.xlu0 %1290
      %v1292 = vrcp.pop %v1291
      %v1293 = vmul.f32 %v1291, %v1292
      %v1294 = vsub.f32 1.0, %v1293
      %v1295 = vmul.f32 %v1292, %v1294
      %v1296 = vadd.f32 %v1292, %v1295
      %vm1297 = vweird.f32 %v1291
      %vm1298 = vweird.f32 %v1292
      %vm1299 = vmor %vm1297, %vm1298
      %v1300 = vsel %vm1299, %v1292, %v1296
      %v1301 = vand.u32 2147483647, %v1291
      %vm1302 = vcmp.eq.f32.partialorder %v1301, 8.507059e+37
      %v1303 = vand.u32 %v1291, 2147483648
      %v1304 = vor.u32 1.1754944e-38, %v1303
      %v1305 = vsel %vm1302, %v1304, %v1300
      %v1306 = vmul.f32 %v1288, %v1305
      %v1307 = vpack.c.bf16 %v1306, %v1306
      %1308 = vrot.lane.b32.xlu0 %v1080, 48
      %v1309 = vpop.permute.xlu0 %1308
      %v1311 = vsel %vm711, %v1307, 0
      %v1314 = vsel %vm766, %v1309, 0
      %1316 = vmatpush.bf16.msra.mxu0 0
      %1317 = vmatpush.bf16.msra.mxu0 0
      %1318 = vmatpush.bf16.msra.mxu0 0
      %1319 = vmatpush.bf16.msra.mxu0 0
      %1320 = vmatpush.bf16.msra.mxu0 0
      %1321 = vmatpush.bf16.msra.mxu0 0
      %1322 = vmatpush.bf16.msra.mxu0 0
      %1323 = vmatpush.bf16.msra.mxu0 %v1314
      %1324 = vmatmul.bf16.gmra.mxu0 %v1311
      %v1325 = vpop.f32.mrf.mxu0
      %v1326 = vadd.f32 0.0, %v1325
      %v1327 = vpop.f32.mrf.mxu0
      %1328 = vdwg.mxu0
      %v1329 = vpack.c.bf16 %v1326, %v1326
      %v1331 = vsel %vm711, %v1329, 0
      %1333 = vmatpush.bf16.msra.mxu0 0
      %1334 = vmatpush.bf16.msra.mxu0 0
      %1335 = vmatpush.bf16.msra.mxu0 0
      %1336 = vmatpush.bf16.msra.mxu0 0
      %1337 = vmatpush.bf16.msra.mxu0 0
      %1338 = vmatpush.bf16.msra.mxu0 0
      %1339 = vmatpush.bf16.msra.mxu0 0
      %1340 = vmatpush.bf16.msra.mxu0 %v970
      %1341 = vmatmul.bf16.gmra.mxu0 %v1331
      %v1342 = vpop.f32.mrf.mxu0
      %v1343 = vadd.f32 0.0, %v1342
      %v1344 = vpop.f32.mrf.mxu0
      %1345 = vdwg.mxu0
      %v1346 = vadd.f32 %v1255, %v1343
      %1347 = vrot.lane.b32.xlu0 %v1080, 104
      %v1348 = vpop.permute.xlu0 %1347
      %1349 = vrot.lane.b32.xlu0 %v1080, 72
      %v1350 = vpop.permute.xlu0 %1349
      %v1352 = vsel %vm711, %v1348, 0
      %v1355 = vsel %vm711, %v1350, 0
      %1357 = vmatpush.bf16.xpose.msra.mxu0 0
      %1358 = vmatpush.bf16.xpose.msra.mxu0 0
      %1359 = vmatpush.bf16.xpose.msra.mxu0 0
      %1360 = vmatpush.bf16.xpose.msra.mxu0 0
      %1361 = vmatpush.bf16.xpose.msra.mxu0 0
      %1362 = vmatpush.bf16.xpose.msra.mxu0 0
      %1363 = vmatpush.bf16.xpose.msra.mxu0 0
      %1364 = vmatpush.bf16.xpose.msra.mxu0 %v1355
      %1365 = vmatmul.bf16.gmra.mxu0 %v1352
      %v1366 = vpop.f32.mrf.mxu0
      %v1367 = vadd.f32 0.0, %v1366
      %v1368 = vpop.f32.mrf.mxu0
      %1369 = vdwg.mxu0
      %v1370 = vmul.f32 %v1367, 0.35355338
      %v1371 = vsel %vm1105, %v1370, -1e+09
      %v1372 = vsel %vm711, %v1371, -inf
      %1373 = vmax.xlane.f32.xlu0 %v1372
      %v1374 = vpop.xlane.xlu0 %1373
      %v1375 = vsub.f32 %v1371, %v1374
      %v1376 = vmul.f32 %v1375, 1.442695
      %v1377 = vpow.pop %v1376
      %v1378 = vsel %vm711, %v1377, 0.0
      %1379 = vadd.xlane.f32.xlu0 %v1378
      %v1380 = vpop.xlane.xlu0 %1379
      %v1381 = vrcp.pop %v1380
      %v1382 = vmul.f32 %v1380, %v1381
      %v1383 = vsub.f32 1.0, %v1382
      %v1384 = vmul.f32 %v1381, %v1383
      %v1385 = vadd.f32 %v1381, %v1384
      %vm1386 = vweird.f32 %v1380
      %vm1387 = vweird.f32 %v1381
      %vm1388 = vmor %vm1386, %vm1387
      %v1389 = vsel %vm1388, %v1381, %v1385
      %v1390 = vand.u32 2147483647, %v1380
      %vm1391 = vcmp.eq.f32.partialorder %v1390, 8.507059e+37
      %v1392 = vand.u32 %v1380, 2147483648
      %v1393 = vor.u32 1.1754944e-38, %v1392
      %v1394 = vsel %vm1391, %v1393, %v1389
      %v1395 = vmul.f32 %v1377, %v1394
      %v1396 = vpack.c.bf16 %v1395, %v1395
      %1397 = vrot.lane.b32.xlu0 %v1080, 40
      %v1398 = vpop.permute.xlu0 %1397
      %v1400 = vsel %vm711, %v1396, 0
      %v1403 = vsel %vm766, %v1398, 0
      %1405 = vmatpush.bf16.msra.mxu0 0
      %1406 = vmatpush.bf16.msra.mxu0 0
      %1407 = vmatpush.bf16.msra.mxu0 0
      %1408 = vmatpush.bf16.msra.mxu0 0
      %1409 = vmatpush.bf16.msra.mxu0 0
      %1410 = vmatpush.bf16.msra.mxu0 0
      %1411 = vmatpush.bf16.msra.mxu0 0
      %1412 = vmatpush.bf16.msra.mxu0 %v1403
      %1413 = vmatmul.bf16.gmra.mxu0 %v1400
      %v1414 = vpop.f32.mrf.mxu0
      %v1415 = vadd.f32 0.0, %v1414
      %v1416 = vpop.f32.mrf.mxu0
      %1417 = vdwg.mxu0
      %v1418 = vpack.c.bf16 %v1415, %v1415
      %v1420 = vsel %vm711, %v1418, 0
      %1422 = vmatpush.bf16.msra.mxu0 0
      %1423 = vmatpush.bf16.msra.mxu0 0
      %1424 = vmatpush.bf16.msra.mxu0 0
      %1425 = vmatpush.bf16.msra.mxu0 0
      %1426 = vmatpush.bf16.msra.mxu0 0
      %1427 = vmatpush.bf16.msra.mxu0 0
      %1428 = vmatpush.bf16.msra.mxu0 0
      %1429 = vmatpush.bf16.msra.mxu0 %v1062
      %1430 = vmatmul.bf16.gmra.mxu0 %v1420
      %v1431 = vpop.f32.mrf.mxu0
      %v1432 = vadd.f32 0.0, %v1431
      %v1433 = vpop.f32.mrf.mxu0
      %1434 = vdwg.mxu0
      %v1435 = vadd.f32 %v1346, %v1432
      %v1437 = vperm.slane %v646, 0
      %v1439 = vadd.f32 %v1077, %v1437
      %v1440 = vadd.f32 %v1435, %v1437
      %v1441 = vadd.f32 %v635, %v1439
      %v1442 = vadd.f32 %v636, %v1440
      %v1443 = vsel %vm681, %v1441, 0.0
      %1444 = vadd.xlane.f32.xlu0 %v1443
      %v1445 = vpop.xlane.xlu0 %1444
      %v1446 = vsel %vm681, %v1442, 0.0
      %1447 = vadd.xlane.f32.xlu0 %v1446
      %v1448 = vpop.xlane.xlu0 %1447
      %v1449 = vrcp.pop 32.0
      %v1450 = vmul.f32 32.0, %v1449
      %v1451 = vsub.f32 1.0, %v1450
      %v1452 = vmul.f32 %v1449, %v1451
      %v1453 = vadd.f32 %v1449, %v1452
      %vm1454 = vweird.f32 %v1449
      %v1455 = vsel %vm1454, %v1449, %v1453
      %v1456 = vmul.f32 %v1445, %v1455
      %v1457 = vmul.f32 %v1448, %v1455
      %v1458 = vsub.f32 %v1441, %v1456
      %v1459 = vsub.f32 %v1442, %v1457
      %v1460 = vmul.f32 %v1458, %v1458
      %v1461 = vmul.f32 %v1459, %v1459
      %v1462 = vsel %vm681, %v1460, 0.0
      %1463 = vadd.xlane.f32.xlu0 %v1462
      %v1464 = vpop.xlane.xlu0 %1463
      %v1465 = vsel %vm681, %v1461, 0.0
      %1466 = vadd.xlane.f32.xlu0 %v1465
      %v1467 = vpop.xlane.xlu0 %1466
      %v1468 = vmul.f32 %v1464, %v1455
      %v1469 = vmul.f32 %v1467, %v1455
      %v1470 = vadd.f32 %v1468, 1e-05
      %v1471 = vadd.f32 %v1469, 1e-05
      %v1472 = vrsqrt.pop %v1470
      %v1473 = vmul.f32 %v1472, %v1470
      %v1474 = vmul.f32 %v1473, %v1472
      %v1475 = vmul.f32 0.5, %v1474
      %v1476 = vsub.f32 1.5, %v1475
      %v1477 = vmul.f32 %v1472, %v1476
      %vm1478 = vweird.f32 %v1470
      %vm1479 = vweird.f32 %v1472
      %vm1480 = vmor %vm1478, %vm1479
      %v1481 = vsel %vm1480, %v1472, %v1477
      %v1482 = vrsqrt.pop %v1471
      %v1483 = vmul.f32 %v1482, %v1471
      %v1484 = vmul.f32 %v1483, %v1482
      %v1485 = vmul.f32 0.5, %v1484
      %v1486 = vsub.f32 1.5, %v1485
      %v1487 = vmul.f32 %v1482, %v1486
      %vm1488 = vweird.f32 %v1471
      %vm1489 = vweird.f32 %v1482
      %vm1490 = vmor %vm1488, %vm1489
      %v1491 = vsel %vm1490, %v1482, %v1487
      %v1492 = vmul.f32 %v1458, %v1481
      %v1493 = vmul.f32 %v1459, %v1491
      %v1495 = vperm.slane %v661, 0
      %v1497 = vmul.f32 %v1492, %v1495
      %v1498 = vmul.f32 %v1493, %v1495
      %v1500 = vperm.slane %v662, 0
      %v1502 = vadd.f32 %v1497, %v1500
      %v1503 = vadd.f32 %v1498, %v1500
      %v1504 = vpack.c.bf16 %v1503, %v1502
      %v1506 = vperm.slane %v651, 0
      %v1512 = vunpack.c.l.b16 %v647
      %v1513 = vunpack.c.l.b16 %v648
      %v1514 = vunpack.c.l.b16 %v649
      %v1515 = vunpack.c.l.b16 %v650
      %v1516 = vpack.c.b16 %v1513, %v1512
      %v1517 = vpack.c.b16 %v1515, %v1514
      %v1521 = vsel %vm681, %v1504, 0
      %1523 = vmatpush.bf16.msra.mxu0 0
      %1524 = vmatpush.bf16.msra.mxu0 0
      %1525 = vmatpush.bf16.msra.mxu0 0
      %1526 = vmatpush.bf16.msra.mxu0 0
      %1527 = vmatpush.bf16.msra.mxu0 0
      %1528 = vmatpush.bf16.msra.mxu0 0
      %1529 = vmatpush.bf16.msra.mxu0 %v1517
      %1530 = vmatpush.bf16.msra.mxu0 %v1516
      %1531 = vmatmul.bf16.gmra.mxu0 %v1521
      %v1532 = vpop.f32.mrf.mxu0
      %v1533 = vadd.f32 %v1506, %v1532
      %v1534 = vpop.f32.mrf.mxu0
      %v1535 = vadd.f32 %v1506, %v1534
      %1536 = vdwg.mxu0
      %v1537 = vmax.f32 %v1533, 0.0
      %v1538 = vmax.f32 %v1535, 0.0
      %v1539 = vpack.c.bf16 %v1538, %v1537
      %v1541 = vperm.slane %v660, 0
      %v1551 = vunpack.c.l.b16 %v652
      %v1552 = vunpack.c.l.b16 %v653
      %v1553 = vunpack.c.l.b16 %v654
      %v1554 = vunpack.c.l.b16 %v655
      %v1555 = vunpack.c.l.b16 %v656
      %v1556 = vunpack.c.l.b16 %v657
      %v1557 = vunpack.c.l.b16 %v658
      %v1558 = vunpack.c.l.b16 %v659
      %v1559 = vpack.c.b16 %v1552, %v1551
      %v1560 = vpack.c.b16 %v1554, %v1553
      %v1561 = vpack.c.b16 %v1556, %v1555
      %v1562 = vpack.c.b16 %v1558, %v1557
      %vm1567 = vcmask 523264
      %v1569 = vsel %vm1567, %v1539, 0
      %1571 = vmatpush.bf16.msra.mxu0 0
      %1572 = vmatpush.bf16.msra.mxu0 0
      %1573 = vmatpush.bf16.msra.mxu0 0
      %1574 = vmatpush.bf16.msra.mxu0 0
      %1575 = vmatpush.bf16.msra.mxu0 %v1562
      %1576 = vmatpush.bf16.msra.mxu0 %v1561
      %1577 = vmatpush.bf16.msra.mxu0 %v1560
      %1578 = vmatpush.bf16.msra.mxu0 %v1559
      %1579 = vmatmul.bf16.gmra.mxu0 %v1569
      %v1580 = vpop.f32.mrf.mxu0
      %v1581 = vadd.f32 %v1541, %v1580
      %v1582 = vpop.f32.mrf.mxu0
      %v1583 = vadd.f32 %v1541, %v1582
      %1584 = vdwg.mxu0
      %v1585 = vadd.f32 %v1581, %v1581
      %v1586 = vadd.f32 %v1583, %v1583
      %v1587 = vsel %vm681, %v1585, 0.0
      %1588 = vadd.xlane.f32.xlu0 %v1587
      %v1589 = vpop.xlane.xlu0 %1588
      %v1590 = vsel %vm681, %v1586, 0.0
      %1591 = vadd.xlane.f32.xlu0 %v1590
      %v1592 = vpop.xlane.xlu0 %1591
      %v1593 = vmul.f32 %v1589, %v1455
      %v1594 = vmul.f32 %v1592, %v1455
      %v1595 = vsub.f32 %v1585, %v1593
      %v1596 = vsub.f32 %v1586, %v1594
      %v1597 = vmul.f32 %v1595, %v1595
      %v1598 = vmul.f32 %v1596, %v1596
      %v1599 = vsel %vm681, %v1597, 0.0
      %1600 = vadd.xlane.f32.xlu0 %v1599
      %v1601 = vpop.xlane.xlu0 %1600
      %v1602 = vsel %vm681, %v1598, 0.0
      %1603 = vadd.xlane.f32.xlu0 %v1602
      %v1604 = vpop.xlane.xlu0 %1603
      %v1605 = vmul.f32 %v1601, %v1455
      %v1606 = vmul.f32 %v1604, %v1455
      %v1607 = vadd.f32 %v1605, 1e-05
      %v1608 = vadd.f32 %v1606, 1e-05
      %v1609 = vrsqrt.pop %v1607
      %v1610 = vmul.f32 %v1609, %v1607
      %v1611 = vmul.f32 %v1610, %v1609
      %v1612 = vmul.f32 0.5, %v1611
      %v1613 = vsub.f32 1.5, %v1612
      %v1614 = vmul.f32 %v1609, %v1613
      %vm1615 = vweird.f32 %v1607
      %vm1616 = vweird.f32 %v1609
      %vm1617 = vmor %vm1615, %vm1616
      %v1618 = vsel %vm1617, %v1609, %v1614
      %v1619 = vrsqrt.pop %v1608
      %v1620 = vmul.f32 %v1619, %v1608
      %v1621 = vmul.f32 %v1620, %v1619
      %v1622 = vmul.f32 0.5, %v1621
      %v1623 = vsub.f32 1.5, %v1622
      %v1624 = vmul.f32 %v1619, %v1623
      %vm1625 = vweird.f32 %v1608
      %vm1626 = vweird.f32 %v1619
      %vm1627 = vmor %vm1625, %vm1626
      %v1628 = vsel %vm1627, %v1619, %v1624
      %v1629 = vmul.f32 %v1595, %v1618
      %v1630 = vmul.f32 %v1596, %v1628
      %v1632 = vperm.slane %v663, 0
      %v1634 = vmul.f32 %v1629, %v1632
      %v1635 = vmul.f32 %v1630, %v1632
      %v1637 = vperm.slane %v664, 0
      %v1639 = vadd.f32 %v1634, %v1637
      %v1640 = vadd.f32 %v1635, %v1637
      %1641 = vst.msk [vmem:[%s14] sm:$0xff] %vm681, %v1639
      %1642 = vst.msk [vmem:[%s14 + $0x8] sm:$0xff] %vm681, %v1640
      // Predicated region
      $region81: #{transformer_forward.2} parent=75 // pred_check
        %p1643 = pneg %p392
      $region82: #{transformer_forward.2} parent=75 // pred_check_branch
        %1645 = sbr.rel (%p1643) target = $region84
      $region83: #{transformer_forward.2} parent=75 // pred_region
        _
      $region84: #{transformer_forward.2} parent=75 // pred_fallthru
        _
      // Predicated region
      $region85: #{transformer_forward.2} parent=75 // pred_check
        %p1646 = pneg %p392
      $region86: #{transformer_forward.2} parent=75 // pred_check_branch
        %1648 = sbr.rel (%p1646) target = $region88
      $region87: #{transformer_forward.2} parent=75 // pred_region
        _
      $region88: #{transformer_forward.2} parent=75 // pred_fallthru
        _
    $region76: #{transformer_forward.2} parent=5 // pred_fallthru
      _
    %p1649 = scmp.le.s32.totalorder 2, %s20
    // Predicated region
    $region89: #{transformer_forward.2} parent=5 // pred_check
      %p1650 = pneg %p1649
    $region90: #{transformer_forward.2} parent=5 // pred_check_branch
      %1652 = sbr.rel (%p1650) target = $region92
    $region91: #{transformer_forward.2} parent=5 // pred_region
      %s1653 = ssub.s32 %s20, 2
    $region92: #{transformer_forward.2} parent=5 // pred_fallthru
      _
  $region6: #{transformer_forward.2} parent=0 // loop_footer
    %s24 = sadd.s32 1, %s20
  $region7: #{transformer_forward.2} parent=0 // loop_footer_branch
    %19 = sbr.rel target = $region3
  $region8: #{transformer_forward.2} parent=0 // loop_exit
    _

// kernel: transformer_forward.3
$region0: #{transformer_forward.3}
  #allocation0 [shape = 'u32[]', space=smem, size = 0x4, offset = 0x4, fixed_abs, tag = 'smem constant byte address 0x4 - core index']
  #allocation1 [shape = 'u32[72,128]{1,0:T(1,128)}', space=vmem, size = 0x9000, scoped, tag = 'internal scratch']
  #allocation2 [shape = 'f32[16,32]{1,0:T(8,128)}', space=vmem, size = 0x2000, scoped, tag = 'scratch operand']
  %s0 = inlined_call_operand.vmem [shape: f32[2,8,32], index: 0, kind: input, shape index: {}]
  %s1 = inlined_call_operand.vmem [shape: f32[2,8,32], index: 1, kind: input, shape index: {}]
  %s2 = inlined_call_operand.vmem [shape: f32[2,1,8], index: 2, kind: input, shape index: {}]
  %s3 = inlined_call_operand.vmem [shape: f32[2,8,1], index: 3, kind: input, shape index: {}]
  %s4 = inlined_call_operand.vmem [shape: bf16[2,32,96], index: 4, kind: input, shape index: {}]
  %s5 = inlined_call_operand.vmem [shape: f32[2,1,96], index: 5, kind: input, shape index: {}]
  %s6 = inlined_call_operand.vmem [shape: bf16[2,32,32], index: 6, kind: input, shape index: {}]
  %s7 = inlined_call_operand.vmem [shape: f32[2,1,32], index: 7, kind: input, shape index: {}]
  %s8 = inlined_call_operand.vmem [shape: bf16[2,32,32], index: 8, kind: input, shape index: {}]
  %s9 = inlined_call_operand.vmem [shape: f32[2,1,32], index: 9, kind: input, shape index: {}]
  %s10 = inlined_call_operand.vmem [shape: bf16[2,32,64], index: 10, kind: input, shape index: {}]
  %s11 = inlined_call_operand.vmem [shape: f32[2,1,64], index: 11, kind: input, shape index: {}]
  %s12 = inlined_call_operand.vmem [shape: bf16[2,32,32], index: 12, kind: input, shape index: {}]
  %s13 = inlined_call_operand.vmem [shape: f32[2,1,32], index: 13, kind: input, shape index: {}]
  %s14 = inlined_call_operand.vmem [shape: bf16[2,32,64], index: 14, kind: input, shape index: {}]
  %s15 = inlined_call_operand.vmem [shape: f32[2,1,64], index: 15, kind: input, shape index: {}]
  %s16 = inlined_call_operand.vmem [shape: bf16[2,64,32], index: 16, kind: input, shape index: {}]
  %s17 = inlined_call_operand.vmem [shape: f32[2,1,32], index: 17, kind: input, shape index: {}]
  %s18 = inlined_call_operand.vmem [shape: f32[2,1,32], index: 18, kind: input, shape index: {}]
  %s19 = inlined_call_operand.vmem [shape: f32[2,1,32], index: 19, kind: input, shape index: {}]
  %s20 = inlined_call_operand.vmem [shape: f32[2,1,32], index: 20, kind: input, shape index: {}]
  %s21 = inlined_call_operand.vmem [shape: f32[2,1,32], index: 21, kind: input, shape index: {}]
  %s22 = inlined_call_operand.vmem [shape: f32[2,1,32], index: 22, kind: input, shape index: {}]
  %s23 = inlined_call_operand.vmem [shape: f32[2,1,32], index: 23, kind: input, shape index: {}]
  %s24 = inlined_call_operand.vmem [shape: bf16[32,16], index: 24, kind: input, shape index: {}]
  %s25 = inlined_call_operand.vmem [shape: f32[1,16], index: 25, kind: input, shape index: {}]
  %s26 = inlined_call_operand.hbm [shape: f32[2,8,16], index: 26, kind: output, shape index: {}]
  %s27 = sld [smem:[#allocation0]]
  $region145: #{transformer_forward.3} parent=0
    _
  %s29 = ssub.s32 1, %s27
  %s30 = scalar_select 0, %s29, %s27
  $region1: #{transformer_forward.3} parent=0
    #allocation3 [shape = 'u8[8192]{0}', space=vmem, size = 0x2000, scoped, tag = 'output window, operand 0, single buffered']
    #allocation4 [shape = 's32[2]{0}', space=sflag, size = 0x8, scoped, tag = 'scoped memory for transformer_forward.3']
    %31 = vsyncpa [#allocation4], 0
    loop: start=0, step=1, limit=4
    $region2: #{transformer_forward.3} parent=1 // loop_pre_header
      _
    $region3: #{transformer_forward.3} parent=1 // loop_header
      %s33 = sphi 0, %s37
      %p34 = scmp.ge.s32.totalorder %s33, 4
      %s41 = sphi 0, %s41
      %s43 = sphi 0, %s41
      %s44 = sphi 0, %s43
      %s58 = sphi 0, %s44
      %s62 = sphi 0, %s62
      %s64 = sphi 0, %s62
      %s65 = sphi 0, %s64
      %s79 = sphi 0, %s65
      %s83 = sphi 0, %s83
      %s85 = sphi 0, %s83
      %s86 = sphi 0, %s85
      %s100 = sphi 0, %s86
      %s104 = sphi 0, %s104
      %s106 = sphi 0, %s104
      %s107 = sphi 0, %s106
      %s121 = sphi 0, %s107
      %s127 = sphi 0, %s129
      %s130 = sphi 0, %s127
      %s131 = sphi 0, %s130
      %s147 = sphi 0, %s131
      %s153 = sphi 0, %s155
      %s156 = sphi 0, %s153
      %s157 = sphi 0, %s156
      %s173 = sphi 0, %s157
      %s179 = sphi 0, %s181
      %s182 = sphi 0, %s179
      %s183 = sphi 0, %s182
      %s199 = sphi 0, %s183
      %s205 = sphi 0, %s207
      %s208 = sphi 0, %s205
      %s209 = sphi 0, %s208
      %s225 = sphi 0, %s209
      %s231 = sphi 0, %s233
      %s234 = sphi 0, %s231
      %s235 = sphi 0, %s234
      %s251 = sphi 0, %s235
      %s257 = sphi 0, %s259
      %s260 = sphi 0, %s257
      %s261 = sphi 0, %s260
      %s277 = sphi 0, %s261
      %s283 = sphi 0, %s285
      %s286 = sphi 0, %s283
      %s287 = sphi 0, %s286
      %s303 = sphi 0, %s287
      %s309 = sphi 0, %s311
      %s312 = sphi 0, %s309
      %s313 = sphi 0, %s312
      %s329 = sphi 0, %s313
      %s335 = sphi 0, %s337
      %s338 = sphi 0, %s335
      %s339 = sphi 0, %s338
      %s355 = sphi 0, %s339
      %s361 = sphi 0, %s363
      %s364 = sphi 0, %s361
      %s365 = sphi 0, %s364
      %s381 = sphi 0, %s365
      %s387 = sphi 0, %s389
      %s390 = sphi 0, %s387
      %s391 = sphi 0, %s390
      %s407 = sphi 0, %s391
      %s413 = sphi 0, %s415
      %s416 = sphi 0, %s413
      %s417 = sphi 0, %s416
      %s433 = sphi 0, %s417
      %s439 = sphi 0, %s441
      %s442 = sphi 0, %s439
      %s443 = sphi 0, %s442
      %s459 = sphi 0, %s443
      %s465 = sphi 0, %s467
      %s468 = sphi 0, %s465
      %s469 = sphi 0, %s468
      %s485 = sphi 0, %s469
      %s491 = sphi 0, %s493
      %s494 = sphi 0, %s491
      %s495 = sphi 0, %s494
      %s511 = sphi 0, %s495
      %s517 = sphi 0, %s519
      %s520 = sphi 0, %s517
      %s521 = sphi 0, %s520
      %s537 = sphi 0, %s521
      %s543 = sphi 0, %s545
      %s546 = sphi 0, %s543
      %s547 = sphi 0, %s546
      %s563 = sphi 0, %s547
      %s569 = sphi 0, %s571
      %s572 = sphi 0, %s569
      %s573 = sphi 0, %s572
      %s589 = sphi 0, %s573
      %s595 = sphi 0, %s597
      %s598 = sphi 0, %s595
      %s599 = sphi 0, %s598
      %s615 = sphi 0, %s599
      %s621 = sphi 0, %s623
      %s624 = sphi 0, %s621
      %s625 = sphi 0, %s624
      %s641 = sphi 0, %s625
      %s645 = sphi 0, %s645
      %s647 = sphi 0, %s645
      %s648 = sphi 0, %s647
      %s662 = sphi 0, %s648
      %s666 = sphi 0, %s666
      %s668 = sphi 0, %s666
      %s669 = sphi 0, %s668
      %s683 = sphi 0, %s669
      %s687 = sphi 0, %s687
      %s689 = sphi 0, %s687
      %s690 = sphi 0, %s689
      %s704 = sphi 0, %s690
    $region4: #{transformer_forward.3} parent=1 // loop_header_branch
      %36 = sbr.rel (%p34) target = $region8
    $region5: #{transformer_forward.3} parent=1 // loop_body
      %s38 = ssub.s32 %s33, 1
      %s39 = ssub.s32 %s33, 2
      %s40 = sadd.s32 %s33, 1
      %s42 = sadd.s32 %s41, 1
      %p45 = scmp.eq.s32.totalorder %s33, 1
      %p46 = scmp.ne.s32.totalorder %s41, %s43
      %p47 = scmp.eq.s32.totalorder %s33, 0
      %p48 = por %p46, %p47
      %p49 = scmp.ne.s32.totalorder %s41, %s43
      %p50 = scmp.eq.s32.totalorder %s38, 1
      %p51 = por %p49, %p50
      %p52 = scmp.ne.s32.totalorder %s43, %s44
      %p53 = scmp.eq.s32.totalorder %s38, 0
      %p54 = por %p52, %p53
      %p55 = scmp.ne.s32.totalorder %s43, %s44
      %p56 = scmp.eq.s32.totalorder %s39, 1
      %p57 = por %p55, %p56
      %p59 = scmp.ne.s32.totalorder %s44, %s58
      %p60 = scmp.eq.s32.totalorder %s39, 0
      %p61 = por %p59, %p60
      %s63 = sadd.s32 %s62, 1
      %p66 = scmp.eq.s32.totalorder %s33, 1
      %p67 = scmp.ne.s32.totalorder %s62, %s64
      %p68 = scmp.eq.s32.totalorder %s33, 0
      %p69 = por %p67, %p68
      %p70 = scmp.ne.s32.totalorder %s62, %s64
      %p71 = scmp.eq.s32.totalorder %s38, 1
      %p72 = por %p70, %p71
      %p73 = scmp.ne.s32.totalorder %s64, %s65
      %p74 = scmp.eq.s32.totalorder %s38, 0
      %p75 = por %p73, %p74
      %p76 = scmp.ne.s32.totalorder %s64, %s65
      %p77 = scmp.eq.s32.totalorder %s39, 1
      %p78 = por %p76, %p77
      %p80 = scmp.ne.s32.totalorder %s65, %s79
      %p81 = scmp.eq.s32.totalorder %s39, 0
      %p82 = por %p80, %p81
      %s84 = sadd.s32 %s83, 1
      %p87 = scmp.eq.s32.totalorder %s33, 1
      %p88 = scmp.ne.s32.totalorder %s83, %s85
      %p89 = scmp.eq.s32.totalorder %s33, 0
      %p90 = por %p88, %p89
      %p91 = scmp.ne.s32.totalorder %s83, %s85
      %p92 = scmp.eq.s32.totalorder %s38, 1
      %p93 = por %p91, %p92
      %p94 = scmp.ne.s32.totalorder %s85, %s86
      %p95 = scmp.eq.s32.totalorder %s38, 0
      %p96 = por %p94, %p95
      %p97 = scmp.ne.s32.totalorder %s85, %s86
      %p98 = scmp.eq.s32.totalorder %s39, 1
      %p99 = por %p97, %p98
      %p101 = scmp.ne.s32.totalorder %s86, %s100
      %p102 = scmp.eq.s32.totalorder %s39, 0
      %p103 = por %p101, %p102
      %s105 = sadd.s32 %s104, 1
      %p108 = scmp.eq.s32.totalorder %s33, 1
      %p109 = scmp.ne.s32.totalorder %s104, %s106
      %p110 = scmp.eq.s32.totalorder %s33, 0
      %p111 = por %p109, %p110
      %p112 = scmp.ne.s32.totalorder %s104, %s106
      %p113 = scmp.eq.s32.totalorder %s38, 1
      %p114 = por %p112, %p113
      %p115 = scmp.ne.s32.totalorder %s106, %s107
      %p116 = scmp.eq.s32.totalorder %s38, 0
      %p117 = por %p115, %p116
      %p118 = scmp.ne.s32.totalorder %s106, %s107
      %p119 = scmp.eq.s32.totalorder %s39, 1
      %p120 = por %p118, %p119
      %p122 = scmp.ne.s32.totalorder %s107, %s121
      %p123 = scmp.eq.s32.totalorder %s39, 0
      %p124 = por %p122, %p123
      %s125 = ssub.s32 %s33, %s40
      %p126 = scmp.eq.s32.totalorder %s125, 0
      %s128 = sadd.s32 %s127, 1
      %s129 = scalar_select %p126, %s127, %s128
      %p132 = pneg %p126
      %p133 = scmp.eq.s32.totalorder %s33, 1
      %p134 = por %p132, %p133
      %p135 = scmp.ne.s32.totalorder %s127, %s130
      %p136 = scmp.eq.s32.totalorder %s33, 0
      %p137 = por %p135, %p136
      %p138 = scmp.ne.s32.totalorder %s127, %s130
      %p139 = scmp.eq.s32.totalorder %s38, 1
      %p140 = por %p138, %p139
      %p141 = scmp.ne.s32.totalorder %s130, %s131
      %p142 = scmp.eq.s32.totalorder %s38, 0
      %p143 = por %p141, %p142
      %p144 = scmp.ne.s32.totalorder %s130, %s131
      %p145 = scmp.eq.s32.totalorder %s39, 1
      %p146 = por %p144, %p145
      %p148 = scmp.ne.s32.totalorder %s131, %s147
      %p149 = scmp.eq.s32.totalorder %s39, 0
      %p150 = por %p148, %p149
      %s151 = ssub.s32 %s33, %s40
      %p152 = scmp.eq.s32.totalorder %s151, 0
      %s154 = sadd.s32 %s153, 1
      %s155 = scalar_select %p152, %s153, %s154
      %p158 = pneg %p152
      %p159 = scmp.eq.s32.totalorder %s33, 1
      %p160 = por %p158, %p159
      %p161 = scmp.ne.s32.totalorder %s153, %s156
      %p162 = scmp.eq.s32.totalorder %s33, 0
      %p163 = por %p161, %p162
      %p164 = scmp.ne.s32.totalorder %s153, %s156
      %p165 = scmp.eq.s32.totalorder %s38, 1
      %p166 = por %p164, %p165
      %p167 = scmp.ne.s32.totalorder %s156, %s157
      %p168 = scmp.eq.s32.totalorder %s38, 0
      %p169 = por %p167, %p168
      %p170 = scmp.ne.s32.totalorder %s156, %s157
      %p171 = scmp.eq.s32.totalorder %s39, 1
      %p172 = por %p170, %p171
      %p174 = scmp.ne.s32.totalorder %s157, %s173
      %p175 = scmp.eq.s32.totalorder %s39, 0
      %p176 = por %p174, %p175
      %s177 = ssub.s32 %s33, %s40
      %p178 = scmp.eq.s32.totalorder %s177, 0
      %s180 = sadd.s32 %s179, 1
      %s181 = scalar_select %p178, %s179, %s180
      %p184 = pneg %p178
      %p185 = scmp.eq.s32.totalorder %s33, 1
      %p186 = por %p184, %p185
      %p187 = scmp.ne.s32.totalorder %s179, %s182
      %p188 = scmp.eq.s32.totalorder %s33, 0
      %p189 = por %p187, %p188
      %p190 = scmp.ne.s32.totalorder %s179, %s182
      %p191 = scmp.eq.s32.totalorder %s38, 1
      %p192 = por %p190, %p191
      %p193 = scmp.ne.s32.totalorder %s182, %s183
      %p194 = scmp.eq.s32.totalorder %s38, 0
      %p195 = por %p193, %p194
      %p196 = scmp.ne.s32.totalorder %s182, %s183
      %p197 = scmp.eq.s32.totalorder %s39, 1
      %p198 = por %p196, %p197
      %p200 = scmp.ne.s32.totalorder %s183, %s199
      %p201 = scmp.eq.s32.totalorder %s39, 0
      %p202 = por %p200, %p201
      %s203 = ssub.s32 %s33, %s40
      %p204 = scmp.eq.s32.totalorder %s203, 0
      %s206 = sadd.s32 %s205, 1
      %s207 = scalar_select %p204, %s205, %s206
      %p210 = pneg %p204
      %p211 = scmp.eq.s32.totalorder %s33, 1
      %p212 = por %p210, %p211
      %p213 = scmp.ne.s32.totalorder %s205, %s208
      %p214 = scmp.eq.s32.totalorder %s33, 0
      %p215 = por %p213, %p214
      %p216 = scmp.ne.s32.totalorder %s205, %s208
      %p217 = scmp.eq.s32.totalorder %s38, 1
      %p218 = por %p216, %p217
      %p219 = scmp.ne.s32.totalorder %s208, %s209
      %p220 = scmp.eq.s32.totalorder %s38, 0
      %p221 = por %p219, %p220
      %p222 = scmp.ne.s32.totalorder %s208, %s209
      %p223 = scmp.eq.s32.totalorder %s39, 1
      %p224 = por %p222, %p223
      %p226 = scmp.ne.s32.totalorder %s209, %s225
      %p227 = scmp.eq.s32.totalorder %s39, 0
      %p228 = por %p226, %p227
      %s229 = ssub.s32 %s33, %s40
      %p230 = scmp.eq.s32.totalorder %s229, 0
      %s232 = sadd.s32 %s231, 1
      %s233 = scalar_select %p230, %s231, %s232
      %p236 = pneg %p230
      %p237 = scmp.eq.s32.totalorder %s33, 1
      %p238 = por %p236, %p237
      %p239 = scmp.ne.s32.totalorder %s231, %s234
      %p240 = scmp.eq.s32.totalorder %s33, 0
      %p241 = por %p239, %p240
      %p242 = scmp.ne.s32.totalorder %s231, %s234
      %p243 = scmp.eq.s32.totalorder %s38, 1
      %p244 = por %p242, %p243
      %p245 = scmp.ne.s32.totalorder %s234, %s235
      %p246 = scmp.eq.s32.totalorder %s38, 0
      %p247 = por %p245, %p246
      %p248 = scmp.ne.s32.totalorder %s234, %s235
      %p249 = scmp.eq.s32.totalorder %s39, 1
      %p250 = por %p248, %p249
      %p252 = scmp.ne.s32.totalorder %s235, %s251
      %p253 = scmp.eq.s32.totalorder %s39, 0
      %p254 = por %p252, %p253
      %s255 = ssub.s32 %s33, %s40
      %p256 = scmp.eq.s32.totalorder %s255, 0
      %s258 = sadd.s32 %s257, 1
      %s259 = scalar_select %p256, %s257, %s258
      %p262 = pneg %p256
      %p263 = scmp.eq.s32.totalorder %s33, 1
      %p264 = por %p262, %p263
      %p265 = scmp.ne.s32.totalorder %s257, %s260
      %p266 = scmp.eq.s32.totalorder %s33, 0
      %p267 = por %p265, %p266
      %p268 = scmp.ne.s32.totalorder %s257, %s260
      %p269 = scmp.eq.s32.totalorder %s38, 1
      %p270 = por %p268, %p269
      %p271 = scmp.ne.s32.totalorder %s260, %s261
      %p272 = scmp.eq.s32.totalorder %s38, 0
      %p273 = por %p271, %p272
      %p274 = scmp.ne.s32.totalorder %s260, %s261
      %p275 = scmp.eq.s32.totalorder %s39, 1
      %p276 = por %p274, %p275
      %p278 = scmp.ne.s32.totalorder %s261, %s277
      %p279 = scmp.eq.s32.totalorder %s39, 0
      %p280 = por %p278, %p279
      %s281 = ssub.s32 %s33, %s40
      %p282 = scmp.eq.s32.totalorder %s281, 0
      %s284 = sadd.s32 %s283, 1
      %s285 = scalar_select %p282, %s283, %s284
      %p288 = pneg %p282
      %p289 = scmp.eq.s32.totalorder %s33, 1
      %p290 = por %p288, %p289
      %p291 = scmp.ne.s32.totalorder %s283, %s286
      %p292 = scmp.eq.s32.totalorder %s33, 0
      %p293 = por %p291, %p292
      %p294 = scmp.ne.s32.totalorder %s283, %s286
      %p295 = scmp.eq.s32.totalorder %s38, 1
      %p296 = por %p294, %p295
      %p297 = scmp.ne.s32.totalorder %s286, %s287
      %p298 = scmp.eq.s32.totalorder %s38, 0
      %p299 = por %p297, %p298
      %p300 = scmp.ne.s32.totalorder %s286, %s287
      %p301 = scmp.eq.s32.totalorder %s39, 1
      %p302 = por %p300, %p301
      %p304 = scmp.ne.s32.totalorder %s287, %s303
      %p305 = scmp.eq.s32.totalorder %s39, 0
      %p306 = por %p304, %p305
      %s307 = ssub.s32 %s33, %s40
      %p308 = scmp.eq.s32.totalorder %s307, 0
      %s310 = sadd.s32 %s309, 1
      %s311 = scalar_select %p308, %s309, %s310
      %p314 = pneg %p308
      %p315 = scmp.eq.s32.totalorder %s33, 1
      %p316 = por %p314, %p315
      %p317 = scmp.ne.s32.totalorder %s309, %s312
      %p318 = scmp.eq.s32.totalorder %s33, 0
      %p319 = por %p317, %p318
      %p320 = scmp.ne.s32.totalorder %s309, %s312
      %p321 = scmp.eq.s32.totalorder %s38, 1
      %p322 = por %p320, %p321
      %p323 = scmp.ne.s32.totalorder %s312, %s313
      %p324 = scmp.eq.s32.totalorder %s38, 0
      %p325 = por %p323, %p324
      %p326 = scmp.ne.s32.totalorder %s312, %s313
      %p327 = scmp.eq.s32.totalorder %s39, 1
      %p328 = por %p326, %p327
      %p330 = scmp.ne.s32.totalorder %s313, %s329
      %p331 = scmp.eq.s32.totalorder %s39, 0
      %p332 = por %p330, %p331
      %s333 = ssub.s32 %s33, %s40
      %p334 = scmp.eq.s32.totalorder %s333, 0
      %s336 = sadd.s32 %s335, 1
      %s337 = scalar_select %p334, %s335, %s336
      %p340 = pneg %p334
      %p341 = scmp.eq.s32.totalorder %s33, 1
      %p342 = por %p340, %p341
      %p343 = scmp.ne.s32.totalorder %s335, %s338
      %p344 = scmp.eq.s32.totalorder %s33, 0
      %p345 = por %p343, %p344
      %p346 = scmp.ne.s32.totalorder %s335, %s338
      %p347 = scmp.eq.s32.totalorder %s38, 1
      %p348 = por %p346, %p347
      %p349 = scmp.ne.s32.totalorder %s338, %s339
      %p350 = scmp.eq.s32.totalorder %s38, 0
      %p351 = por %p349, %p350
      %p352 = scmp.ne.s32.totalorder %s338, %s339
      %p353 = scmp.eq.s32.totalorder %s39, 1
      %p354 = por %p352, %p353
      %p356 = scmp.ne.s32.totalorder %s339, %s355
      %p357 = scmp.eq.s32.totalorder %s39, 0
      %p358 = por %p356, %p357
      %s359 = ssub.s32 %s33, %s40
      %p360 = scmp.eq.s32.totalorder %s359, 0
      %s362 = sadd.s32 %s361, 1
      %s363 = scalar_select %p360, %s361, %s362
      %p366 = pneg %p360
      %p367 = scmp.eq.s32.totalorder %s33, 1
      %p368 = por %p366, %p367
      %p369 = scmp.ne.s32.totalorder %s361, %s364
      %p370 = scmp.eq.s32.totalorder %s33, 0
      %p371 = por %p369, %p370
      %p372 = scmp.ne.s32.totalorder %s361, %s364
      %p373 = scmp.eq.s32.totalorder %s38, 1
      %p374 = por %p372, %p373
      %p375 = scmp.ne.s32.totalorder %s364, %s365
      %p376 = scmp.eq.s32.totalorder %s38, 0
      %p377 = por %p375, %p376
      %p378 = scmp.ne.s32.totalorder %s364, %s365
      %p379 = scmp.eq.s32.totalorder %s39, 1
      %p380 = por %p378, %p379
      %p382 = scmp.ne.s32.totalorder %s365, %s381
      %p383 = scmp.eq.s32.totalorder %s39, 0
      %p384 = por %p382, %p383
      %s385 = ssub.s32 %s33, %s40
      %p386 = scmp.eq.s32.totalorder %s385, 0
      %s388 = sadd.s32 %s387, 1
      %s389 = scalar_select %p386, %s387, %s388
      %p392 = pneg %p386
      %p393 = scmp.eq.s32.totalorder %s33, 1
      %p394 = por %p392, %p393
      %p395 = scmp.ne.s32.totalorder %s387, %s390
      %p396 = scmp.eq.s32.totalorder %s33, 0
      %p397 = por %p395, %p396
      %p398 = scmp.ne.s32.totalorder %s387, %s390
      %p399 = scmp.eq.s32.totalorder %s38, 1
      %p400 = por %p398, %p399
      %p401 = scmp.ne.s32.totalorder %s390, %s391
      %p402 = scmp.eq.s32.totalorder %s38, 0
      %p403 = por %p401, %p402
      %p404 = scmp.ne.s32.totalorder %s390, %s391
      %p405 = scmp.eq.s32.totalorder %s39, 1
      %p406 = por %p404, %p405
      %p408 = scmp.ne.s32.totalorder %s391, %s407
      %p409 = scmp.eq.s32.totalorder %s39, 0
      %p410 = por %p408, %p409
      %s411 = ssub.s32 %s33, %s40
      %p412 = scmp.eq.s32.totalorder %s411, 0
      %s414 = sadd.s32 %s413, 1
      %s415 = scalar_select %p412, %s413, %s414
      %p418 = pneg %p412
      %p419 = scmp.eq.s32.totalorder %s33, 1
      %p420 = por %p418, %p419
      %p421 = scmp.ne.s32.totalorder %s413, %s416
      %p422 = scmp.eq.s32.totalorder %s33, 0
      %p423 = por %p421, %p422
      %p424 = scmp.ne.s32.totalorder %s413, %s416
      %p425 = scmp.eq.s32.totalorder %s38, 1
      %p426 = por %p424, %p425
      %p427 = scmp.ne.s32.totalorder %s416, %s417
      %p428 = scmp.eq.s32.totalorder %s38, 0
      %p429 = por %p427, %p428
      %p430 = scmp.ne.s32.totalorder %s416, %s417
      %p431 = scmp.eq.s32.totalorder %s39, 1
      %p432 = por %p430, %p431
      %p434 = scmp.ne.s32.totalorder %s417, %s433
      %p435 = scmp.eq.s32.totalorder %s39, 0
      %p436 = por %p434, %p435
      %s437 = ssub.s32 %s33, %s40
      %p438 = scmp.eq.s32.totalorder %s437, 0
      %s440 = sadd.s32 %s439, 1
      %s441 = scalar_select %p438, %s439, %s440
      %p444 = pneg %p438
      %p445 = scmp.eq.s32.totalorder %s33, 1
      %p446 = por %p444, %p445
      %p447 = scmp.ne.s32.totalorder %s439, %s442
      %p448 = scmp.eq.s32.totalorder %s33, 0
      %p449 = por %p447, %p448
      %p450 = scmp.ne.s32.totalorder %s439, %s442
      %p451 = scmp.eq.s32.totalorder %s38, 1
      %p452 = por %p450, %p451
      %p453 = scmp.ne.s32.totalorder %s442, %s443
      %p454 = scmp.eq.s32.totalorder %s38, 0
      %p455 = por %p453, %p454
      %p456 = scmp.ne.s32.totalorder %s442, %s443
      %p457 = scmp.eq.s32.totalorder %s39, 1
      %p458 = por %p456, %p457
      %p460 = scmp.ne.s32.totalorder %s443, %s459
      %p461 = scmp.eq.s32.totalorder %s39, 0
      %p462 = por %p460, %p461
      %s463 = ssub.s32 %s33, %s40
      %p464 = scmp.eq.s32.totalorder %s463, 0
      %s466 = sadd.s32 %s465, 1
      %s467 = scalar_select %p464, %s465, %s466
      %p470 = pneg %p464
      %p471 = scmp.eq.s32.totalorder %s33, 1
      %p472 = por %p470, %p471
      %p473 = scmp.ne.s32.totalorder %s465, %s468
      %p474 = scmp.eq.s32.totalorder %s33, 0
      %p475 = por %p473, %p474
      %p476 = scmp.ne.s32.totalorder %s465, %s468
      %p477 = scmp.eq.s32.totalorder %s38, 1
      %p478 = por %p476, %p477
      %p479 = scmp.ne.s32.totalorder %s468, %s469
      %p480 = scmp.eq.s32.totalorder %s38, 0
      %p481 = por %p479, %p480
      %p482 = scmp.ne.s32.totalorder %s468, %s469
      %p483 = scmp.eq.s32.totalorder %s39, 1
      %p484 = por %p482, %p483
      %p486 = scmp.ne.s32.totalorder %s469, %s485
      %p487 = scmp.eq.s32.totalorder %s39, 0
      %p488 = por %p486, %p487
      %s489 = ssub.s32 %s33, %s40
      %p490 = scmp.eq.s32.totalorder %s489, 0
      %s492 = sadd.s32 %s491, 1
      %s493 = scalar_select %p490, %s491, %s492
      %p496 = pneg %p490
      %p497 = scmp.eq.s32.totalorder %s33, 1
      %p498 = por %p496, %p497
      %p499 = scmp.ne.s32.totalorder %s491, %s494
      %p500 = scmp.eq.s32.totalorder %s33, 0
      %p501 = por %p499, %p500
      %p502 = scmp.ne.s32.totalorder %s491, %s494
      %p503 = scmp.eq.s32.totalorder %s38, 1
      %p504 = por %p502, %p503
      %p505 = scmp.ne.s32.totalorder %s494, %s495
      %p506 = scmp.eq.s32.totalorder %s38, 0
      %p507 = por %p505, %p506
      %p508 = scmp.ne.s32.totalorder %s494, %s495
      %p509 = scmp.eq.s32.totalorder %s39, 1
      %p510 = por %p508, %p509
      %p512 = scmp.ne.s32.totalorder %s495, %s511
      %p513 = scmp.eq.s32.totalorder %s39, 0
      %p514 = por %p512, %p513
      %s515 = ssub.s32 %s33, %s40
      %p516 = scmp.eq.s32.totalorder %s515, 0
      %s518 = sadd.s32 %s517, 1
      %s519 = scalar_select %p516, %s517, %s518
      %p522 = pneg %p516
      %p523 = scmp.eq.s32.totalorder %s33, 1
      %p524 = por %p522, %p523
      %p525 = scmp.ne.s32.totalorder %s517, %s520
      %p526 = scmp.eq.s32.totalorder %s33, 0
      %p527 = por %p525, %p526
      %p528 = scmp.ne.s32.totalorder %s517, %s520
      %p529 = scmp.eq.s32.totalorder %s38, 1
      %p530 = por %p528, %p529
      %p531 = scmp.ne.s32.totalorder %s520, %s521
      %p532 = scmp.eq.s32.totalorder %s38, 0
      %p533 = por %p531, %p532
      %p534 = scmp.ne.s32.totalorder %s520, %s521
      %p535 = scmp.eq.s32.totalorder %s39, 1
      %p536 = por %p534, %p535
      %p538 = scmp.ne.s32.totalorder %s521, %s537
      %p539 = scmp.eq.s32.totalorder %s39, 0
      %p540 = por %p538, %p539
      %s541 = ssub.s32 %s33, %s40
      %p542 = scmp.eq.s32.totalorder %s541, 0
      %s544 = sadd.s32 %s543, 1
      %s545 = scalar_select %p542, %s543, %s544
      %p548 = pneg %p542
      %p549 = scmp.eq.s32.totalorder %s33, 1
      %p550 = por %p548, %p549
      %p551 = scmp.ne.s32.totalorder %s543, %s546
      %p552 = scmp.eq.s32.totalorder %s33, 0
      %p553 = por %p551, %p552
      %p554 = scmp.ne.s32.totalorder %s543, %s546
      %p555 = scmp.eq.s32.totalorder %s38, 1
      %p556 = por %p554, %p555
      %p557 = scmp.ne.s32.totalorder %s546, %s547
      %p558 = scmp.eq.s32.totalorder %s38, 0
      %p559 = por %p557, %p558
      %p560 = scmp.ne.s32.totalorder %s546, %s547
      %p561 = scmp.eq.s32.totalorder %s39, 1
      %p562 = por %p560, %p561
      %p564 = scmp.ne.s32.totalorder %s547, %s563
      %p565 = scmp.eq.s32.totalorder %s39, 0
      %p566 = por %p564, %p565
      %s567 = ssub.s32 %s33, %s40
      %p568 = scmp.eq.s32.totalorder %s567, 0
      %s570 = sadd.s32 %s569, 1
      %s571 = scalar_select %p568, %s569, %s570
      %p574 = pneg %p568
      %p575 = scmp.eq.s32.totalorder %s33, 1
      %p576 = por %p574, %p575
      %p577 = scmp.ne.s32.totalorder %s569, %s572
      %p578 = scmp.eq.s32.totalorder %s33, 0
      %p579 = por %p577, %p578
      %p580 = scmp.ne.s32.totalorder %s569, %s572
      %p581 = scmp.eq.s32.totalorder %s38, 1
      %p582 = por %p580, %p581
      %p583 = scmp.ne.s32.totalorder %s572, %s573
      %p584 = scmp.eq.s32.totalorder %s38, 0
      %p585 = por %p583, %p584
      %p586 = scmp.ne.s32.totalorder %s572, %s573
      %p587 = scmp.eq.s32.totalorder %s39, 1
      %p588 = por %p586, %p587
      %p590 = scmp.ne.s32.totalorder %s573, %s589
      %p591 = scmp.eq.s32.totalorder %s39, 0
      %p592 = por %p590, %p591
      %s593 = ssub.s32 %s33, %s40
      %p594 = scmp.eq.s32.totalorder %s593, 0
      %s596 = sadd.s32 %s595, 1
      %s597 = scalar_select %p594, %s595, %s596
      %p600 = pneg %p594
      %p601 = scmp.eq.s32.totalorder %s33, 1
      %p602 = por %p600, %p601
      %p603 = scmp.ne.s32.totalorder %s595, %s598
      %p604 = scmp.eq.s32.totalorder %s33, 0
      %p605 = por %p603, %p604
      %p606 = scmp.ne.s32.totalorder %s595, %s598
      %p607 = scmp.eq.s32.totalorder %s38, 1
      %p608 = por %p606, %p607
      %p609 = scmp.ne.s32.totalorder %s598, %s599
      %p610 = scmp.eq.s32.totalorder %s38, 0
      %p611 = por %p609, %p610
      %p612 = scmp.ne.s32.totalorder %s598, %s599
      %p613 = scmp.eq.s32.totalorder %s39, 1
      %p614 = por %p612, %p613
      %p616 = scmp.ne.s32.totalorder %s599, %s615
      %p617 = scmp.eq.s32.totalorder %s39, 0
      %p618 = por %p616, %p617
      %s619 = ssub.s32 %s33, %s40
      %p620 = scmp.eq.s32.totalorder %s619, 0
      %s622 = sadd.s32 %s621, 1
      %s623 = scalar_select %p620, %s621, %s622
      %p626 = pneg %p620
      %p627 = scmp.eq.s32.totalorder %s33, 1
      %p628 = por %p626, %p627
      %p629 = scmp.ne.s32.totalorder %s621, %s624
      %p630 = scmp.eq.s32.totalorder %s33, 0
      %p631 = por %p629, %p630
      %p632 = scmp.ne.s32.totalorder %s621, %s624
      %p633 = scmp.eq.s32.totalorder %s38, 1
      %p634 = por %p632, %p633
      %p635 = scmp.ne.s32.totalorder %s624, %s625
      %p636 = scmp.eq.s32.totalorder %s38, 0
      %p637 = por %p635, %p636
      %p638 = scmp.ne.s32.totalorder %s624, %s625
      %p639 = scmp.eq.s32.totalorder %s39, 1
      %p640 = por %p638, %p639
      %p642 = scmp.ne.s32.totalorder %s625, %s641
      %p643 = scmp.eq.s32.totalorder %s39, 0
      %p644 = por %p642, %p643
      %s646 = sadd.s32 %s645, 1
      %p649 = scmp.eq.s32.totalorder %s33, 1
      %p650 = scmp.ne.s32.totalorder %s645, %s647
      %p651 = scmp.eq.s32.totalorder %s33, 0
      %p652 = por %p650, %p651
      %p653 = scmp.ne.s32.totalorder %s645, %s647
      %p654 = scmp.eq.s32.totalorder %s38, 1
      %p655 = por %p653, %p654
      %p656 = scmp.ne.s32.totalorder %s647, %s648
      %p657 = scmp.eq.s32.totalorder %s38, 0
      %p658 = por %p656, %p657
      %p659 = scmp.ne.s32.totalorder %s647, %s648
      %p660 = scmp.eq.s32.totalorder %s39, 1
      %p661 = por %p659, %p660
      %p663 = scmp.ne.s32.totalorder %s648, %s662
      %p664 = scmp.eq.s32.totalorder %s39, 0
      %p665 = por %p663, %p664
      %s667 = sadd.s32 %s666, 1
      %p670 = scmp.eq.s32.totalorder %s33, 1
      %p671 = scmp.ne.s32.totalorder %s666, %s668
      %p672 = scmp.eq.s32.totalorder %s33, 0
      %p673 = por %p671, %p672
      %p674 = scmp.ne.s32.totalorder %s666, %s668
      %p675 = scmp.eq.s32.totalorder %s38, 1
      %p676 = por %p674, %p675
      %p677 = scmp.ne.s32.totalorder %s668, %s669
      %p678 = scmp.eq.s32.totalorder %s38, 0
      %p679 = por %p677, %p678
      %p680 = scmp.ne.s32.totalorder %s668, %s669
      %p681 = scmp.eq.s32.totalorder %s39, 1
      %p682 = por %p680, %p681
      %p684 = scmp.ne.s32.totalorder %s669, %s683
      %p685 = scmp.eq.s32.totalorder %s39, 0
      %p686 = por %p684, %p685
      %s688 = sadd.s32 %s687, 1
      %p691 = scmp.eq.s32.totalorder %s33, 1
      %p692 = scmp.ne.s32.totalorder %s687, %s689
      %p693 = scmp.eq.s32.totalorder %s33, 0
      %p694 = por %p692, %p693
      %p695 = scmp.ne.s32.totalorder %s687, %s689
      %p696 = scmp.eq.s32.totalorder %s38, 1
      %p697 = por %p695, %p696
      %p698 = scmp.ne.s32.totalorder %s689, %s690
      %p699 = scmp.eq.s32.totalorder %s38, 0
      %p700 = por %p698, %p699
      %p701 = scmp.ne.s32.totalorder %s689, %s690
      %p702 = scmp.eq.s32.totalorder %s39, 1
      %p703 = por %p701, %p702
      %p705 = scmp.ne.s32.totalorder %s690, %s704
      %p706 = scmp.eq.s32.totalorder %s39, 0
      %p707 = por %p705, %p706
      %p708 = scmp.le.s32.totalorder 1, %s33
      %p709 = scmp.lt.s32.totalorder %s33, 3
      %p710 = pnand %p708, %p709
      %p711 = pneg %p710
      // Predicated region
      $region9: #{transformer_forward.3} parent=5 // pred_check
        _
      $region10: #{transformer_forward.3} parent=5 // pred_check_branch
        %713 = sbr.rel (%p710) target = $region12
      $region11: #{transformer_forward.3} parent=5 // pred_region
        %s714 = ssub.s32 %s33, 1
        // Predicated region
        $region13: #{transformer_forward.3} parent=11 // pred_check
          %p715 = pneg %p54
        $region14: #{transformer_forward.3} parent=11 // pred_check_branch
          %717 = sbr.rel (%p715) target = $region16
        $region15: #{transformer_forward.3} parent=11 // pred_region
          _
        $region16: #{transformer_forward.3} parent=11 // pred_fallthru
          _
        // Predicated region
        $region17: #{transformer_forward.3} parent=11 // pred_check
          %p718 = pneg %p75
        $region18: #{transformer_forward.3} parent=11 // pred_check_branch
          %720 = sbr.rel (%p718) target = $region20
        $region19: #{transformer_forward.3} parent=11 // pred_region
          _
        $region20: #{transformer_forward.3} parent=11 // pred_fallthru
          _
        // Predicated region
        $region21: #{transformer_forward.3} parent=11 // pred_check
          %p721 = pneg %p96
        $region22: #{transformer_forward.3} parent=11 // pred_check_branch
          %723 = sbr.rel (%p721) target = $region24
        $region23: #{transformer_forward.3} parent=11 // pred_region
          _
        $region24: #{transformer_forward.3} parent=11 // pred_fallthru
          _
        // Predicated region
        $region25: #{transformer_forward.3} parent=11 // pred_check
          %p724 = pneg %p117
        $region26: #{transformer_forward.3} parent=11 // pred_check_branch
          %726 = sbr.rel (%p724) target = $region28
        $region27: #{transformer_forward.3} parent=11 // pred_region
          _
        $region28: #{transformer_forward.3} parent=11 // pred_fallthru
          _
        // Predicated region
        $region29: #{transformer_forward.3} parent=11 // pred_check
          %p727 = pneg %p658
        $region30: #{transformer_forward.3} parent=11 // pred_check_branch
          %729 = sbr.rel (%p727) target = $region32
        $region31: #{transformer_forward.3} parent=11 // pred_region
          _
        $region32: #{transformer_forward.3} parent=11 // pred_fallthru
          _
        // Predicated region
        $region33: #{transformer_forward.3} parent=11 // pred_check
          %p730 = pneg %p679
        $region34: #{transformer_forward.3} parent=11 // pred_check_branch
          %732 = sbr.rel (%p730) target = $region36
        $region35: #{transformer_forward.3} parent=11 // pred_region
          _
        $region36: #{transformer_forward.3} parent=11 // pred_fallthru
          _
      $region12: #{transformer_forward.3} parent=5 // pred_fallthru
        _
      %p733 = scmp.lt.s32.totalorder %s33, 2
      // Predicated region
      $region37: #{transformer_forward.3} parent=5 // pred_check
        %p734 = pneg %p733
      $region38: #{transformer_forward.3} parent=5 // pred_check_branch
        %736 = sbr.rel (%p734) target = $region40
      $region39: #{transformer_forward.3} parent=5 // pred_region
        // Predicated region
        $region41: #{transformer_forward.3} parent=39 // pred_check
          %p737 = pneg %p137
        $region42: #{transformer_forward.3} parent=39 // pred_check_branch
          %739 = sbr.rel (%p737) target = $region44
        $region43: #{transformer_forward.3} parent=39 // pred_region
          %p740 = scmp.lt.s32.totalorder %s33, 1
          %s741 = scalar_select %p740, %s33, 1
          %s742 = smul.addr %s741, 4
          %s743 = smul.addr %s742, 4
          %s744 = scalar_lea.vmem %s4, %s743
        $region44: #{transformer_forward.3} parent=39 // pred_fallthru
          _
        // Predicated region
        $region45: #{transformer_forward.3} parent=39 // pred_check
          %p745 = pneg %p163
        $region46: #{transformer_forward.3} parent=39 // pred_check_branch
          %747 = sbr.rel (%p745) target = $region48
        $region47: #{transformer_forward.3} parent=39 // pred_region
          %p748 = scmp.lt.s32.totalorder %s33, 1
          %s749 = scalar_select %p748, %s33, 1
          %s750 = scalar_lea.vmem %s5, %s749
        $region48: #{transformer_forward.3} parent=39 // pred_fallthru
          _
        // Predicated region
        $region49: #{transformer_forward.3} parent=39 // pred_check
          %p751 = pneg %p189
        $region50: #{transformer_forward.3} parent=39 // pred_check_branch
          %753 = sbr.rel (%p751) target = $region52
        $region51: #{transformer_forward.3} parent=39 // pred_region
          %p754 = scmp.lt.s32.totalorder %s33, 1
          %s755 = scalar_select %p754, %s33, 1
          %s756 = smul.addr %s755, 4
          %s757 = smul.addr %s756, 4
          %s758 = scalar_lea.vmem %s6, %s757
        $region52: #{transformer_forward.3} parent=39 // pred_fallthru
          _
        // Predicated region
        $region53: #{transformer_forward.3} parent=39 // pred_check
          %p759 = pneg %p215
        $region54: #{transformer_forward.3} parent=39 // pred_check_branch
          %761 = sbr.rel (%p759) target = $region56
        $region55: #{transformer_forward.3} parent=39 // pred_region
          %p762 = scmp.lt.s32.totalorder %s33, 1
          %s763 = scalar_select %p762, %s33, 1
          %s764 = scalar_lea.vmem %s7, %s763
        $region56: #{transformer_forward.3} parent=39 // pred_fallthru
          _
        // Predicated region
        $region57: #{transformer_forward.3} parent=39 // pred_check
          %p765 = pneg %p241
        $region58: #{transformer_forward.3} parent=39 // pred_check_branch
          %767 = sbr.rel (%p765) target = $region60
        $region59: #{transformer_forward.3} parent=39 // pred_region
          %p768 = scmp.lt.s32.totalorder %s33, 1
          %s769 = scalar_select %p768, %s33, 1
          %s770 = smul.addr %s769, 4
          %s771 = smul.addr %s770, 4
          %s772 = scalar_lea.vmem %s8, %s771
        $region60: #{transformer_forward.3} parent=39 // pred_fallthru
          _
        // Predicated region
        $region61: #{transformer_forward.3} parent=39 // pred_check
          %p773 = pneg %p267
        $region62: #{transformer_forward.3} parent=39 // pred_check_branch
          %775 = sbr.rel (%p773) target = $region64
        $region63: #{transformer_forward.3} parent=39 // pred_region
          %p776 = scmp.lt.s32.totalorder %s33, 1
          %s777 = scalar_select %p776, %s33, 1
          %s778 = scalar_lea.vmem %s9, %s777
        $region64: #{transformer_forward.3} parent=39 // pred_fallthru
          _
        // Predicated region
        $region65: #{transformer_forward.3} parent=39 // pred_check
          %p779 = pneg %p293
        $region66: #{transformer_forward.3} parent=39 // pred_check_branch
          %781 = sbr.rel (%p779) target = $region68
        $region67: #{transformer_forward.3} parent=39 // pred_region
          %p782 = scmp.lt.s32.totalorder %s33, 1
          %s783 = scalar_select %p782, %s33, 1
          %s784 = smul.addr %s783, 4
          %s785 = smul.addr %s784, 4
          %s786 = scalar_lea.vmem %s10, %s785
        $region68: #{transformer_forward.3} parent=39 // pred_fallthru
          _
        // Predicated region
        $region69: #{transformer_forward.3} parent=39 // pred_check
          %p787 = pneg %p319
        $region70: #{transformer_forward.3} parent=39 // pred_check_branch
          %789 = sbr.rel (%p787) target = $region72
        $region71: #{transformer_forward.3} parent=39 // pred_region
          %p790 = scmp.lt.s32.totalorder %s33, 1
          %s791 = scalar_select %p790, %s33, 1
          %s792 = scalar_lea.vmem %s11, %s791
        $region72: #{transformer_forward.3} parent=39 // pred_fallthru
          _
        // Predicated region
        $region73: #{transformer_forward.3} parent=39 // pred_check
          %p793 = pneg %p345
        $region74: #{transformer_forward.3} parent=39 // pred_check_branch
          %795 = sbr.rel (%p793) target = $region76
        $region75: #{transformer_forward.3} parent=39 // pred_region
          %p796 = scmp.lt.s32.totalorder %s33, 1
          %s797 = scalar_select %p796, %s33, 1
          %s798 = smul.addr %s797, 4
          %s799 = smul.addr %s798, 4
          %s800 = scalar_lea.vmem %s12, %s799
        $region76: #{transformer_forward.3} parent=39 // pred_fallthru
          _
        // Predicated region
        $region77: #{transformer_forward.3} parent=39 // pred_check
          %p801 = pneg %p371
        $region78: #{transformer_forward.3} parent=39 // pred_check_branch
          %803 = sbr.rel (%p801) target = $region80
        $region79: #{transformer_forward.3} parent=39 // pred_region
          %p804 = scmp.lt.s32.totalorder %s33, 1
          %s805 = scalar_select %p804, %s33, 1
          %s806 = scalar_lea.vmem %s13, %s805
        $region80: #{transformer_forward.3} parent=39 // pred_fallthru
          _
        // Predicated region
        $region81: #{transformer_forward.3} parent=39 // pred_check
          %p807 = pneg %p397
        $region82: #{transformer_forward.3} parent=39 // pred_check_branch
          %809 = sbr.rel (%p807) target = $region84
        $region83: #{transformer_forward.3} parent=39 // pred_region
          %p810 = scmp.lt.s32.totalorder %s33, 1
          %s811 = scalar_select %p810, %s33, 1
          %s812 = smul.addr %s811, 4
          %s813 = smul.addr %s812, 4
          %s814 = scalar_lea.vmem %s14, %s813
        $region84: #{transformer_forward.3} parent=39 // pred_fallthru
          _
        // Predicated region
        $region85: #{transformer_forward.3} parent=39 // pred_check
          %p815 = pneg %p423
        $region86: #{transformer_forward.3} parent=39 // pred_check_branch
          %817 = sbr.rel (%p815) target = $region88
        $region87: #{transformer_forward.3} parent=39 // pred_region
          %p818 = scmp.lt.s32.totalorder %s33, 1
          %s819 = scalar_select %p818, %s33, 1
          %s820 = scalar_lea.vmem %s15, %s819
        $region88: #{transformer_forward.3} parent=39 // pred_fallthru
          _
        // Predicated region
        $region89: #{transformer_forward.3} parent=39 // pred_check
          %p821 = pneg %p449
        $region90: #{transformer_forward.3} parent=39 // pred_check_branch
          %823 = sbr.rel (%p821) target = $region92
        $region91: #{transformer_forward.3} parent=39 // pred_region
          %p824 = scmp.lt.s32.totalorder %s33, 1
          %s825 = scalar_select %p824, %s33, 1
          %s826 = smul.addr %s825, 8
          %s827 = smul.addr %s826, 4
          %s828 = scalar_lea.vmem %s16, %s827
        $region92: #{transformer_forward.3} parent=39 // pred_fallthru
          _
        // Predicated region
        $region93: #{transformer_forward.3} parent=39 // pred_check
          %p829 = pneg %p475
        $region94: #{transformer_forward.3} parent=39 // pred_check_branch
          %831 = sbr.rel (%p829) target = $region96
        $region95: #{transformer_forward.3} parent=39 // pred_region
          %p832 = scmp.lt.s32.totalorder %s33, 1
          %s833 = scalar_select %p832, %s33, 1
          %s834 = scalar_lea.vmem %s17, %s833
        $region96: #{transformer_forward.3} parent=39 // pred_fallthru
          _
        // Predicated region
        $region97: #{transformer_forward.3} parent=39 // pred_check
          %p835 = pneg %p501
        $region98: #{transformer_forward.3} parent=39 // pred_check_branch
          %837 = sbr.rel (%p835) target = $region100
        $region99: #{transformer_forward.3} parent=39 // pred_region
          %p838 = scmp.lt.s32.totalorder %s33, 1
          %s839 = scalar_select %p838, %s33, 1
          %s840 = scalar_lea.vmem %s18, %s839
        $region100: #{transformer_forward.3} parent=39 // pred_fallthru
          _
        // Predicated region
        $region101: #{transformer_forward.3} parent=39 // pred_check
          %p841 = pneg %p527
        $region102: #{transformer_forward.3} parent=39 // pred_check_branch
          %843 = sbr.rel (%p841) target = $region104
        $region103: #{transformer_forward.3} parent=39 // pred_region
          %p844 = scmp.lt.s32.totalorder %s33, 1
          %s845 = scalar_select %p844, %s33, 1
          %s846 = scalar_lea.vmem %s19, %s845
        $region104: #{transformer_forward.3} parent=39 // pred_fallthru
          _
        // Predicated region
        $region105: #{transformer_forward.3} parent=39 // pred_check
          %p847 = pneg %p553
        $region106: #{transformer_forward.3} parent=39 // pred_check_branch
          %849 = sbr.rel (%p847) target = $region108
        $region107: #{transformer_forward.3} parent=39 // pred_region
          %p850 = scmp.lt.s32.totalorder %s33, 1
          %s851 = scalar_select %p850, %s33, 1
          %s852 = scalar_lea.vmem %s20, %s851
        $region108: #{transformer_forward.3} parent=39 // pred_fallthru
          _
        // Predicated region
        $region109: #{transformer_forward.3} parent=39 // pred_check
          %p853 = pneg %p579
        $region110: #{transformer_forward.3} parent=39 // pred_check_branch
          %855 = sbr.rel (%p853) target = $region112
        $region111: #{transformer_forward.3} parent=39 // pred_region
          %p856 = scmp.lt.s32.totalorder %s33, 1
          %s857 = scalar_select %p856, %s33, 1
          %s858 = scalar_lea.vmem %s21, %s857
        $region112: #{transformer_forward.3} parent=39 // pred_fallthru
          _
        // Predicated region
        $region113: #{transformer_forward.3} parent=39 // pred_check
          %p859 = pneg %p605
        $region114: #{transformer_forward.3} parent=39 // pred_check_branch
          %861 = sbr.rel (%p859) target = $region116
        $region115: #{transformer_forward.3} parent=39 // pred_region
          %p862 = scmp.lt.s32.totalorder %s33, 1
          %s863 = scalar_select %p862, %s33, 1
          %s864 = scalar_lea.vmem %s22, %s863
        $region116: #{transformer_forward.3} parent=39 // pred_fallthru
          _
        // Predicated region
        $region117: #{transformer_forward.3} parent=39 // pred_check
          %p865 = pneg %p631
        $region118: #{transformer_forward.3} parent=39 // pred_check_branch
          %867 = sbr.rel (%p865) target = $region120
        $region119: #{transformer_forward.3} parent=39 // pred_region
          %p868 = scmp.lt.s32.totalorder %s33, 1
          %s869 = scalar_select %p868, %s33, 1
          %s870 = scalar_lea.vmem %s23, %s869
        $region120: #{transformer_forward.3} parent=39 // pred_fallthru
          _
      $region40: #{transformer_forward.3} parent=5 // pred_fallthru
        _
      %p871 = scmp.le.s32.totalorder 1, %s33
      %p872 = scmp.lt.s32.totalorder %s33, 3
      %p873 = pnand %p871, %p872
      %p874 = pneg %p873
      // Predicated region
      $region121: #{transformer_forward.3} parent=5 // pred_check
        _
      $region122: #{transformer_forward.3} parent=5 // pred_check_branch
        %876 = sbr.rel (%p873) target = $region124
      $region123: #{transformer_forward.3} parent=5 // pred_region
        %s877 = ssub.s32 %s33, 1
        %p878 = pneg %p54
        %p879 = pneg %p51
        %p880 = pneg %p75
        %p881 = pneg %p72
        %p882 = pneg %p96
        %p883 = pneg %p93
        %p884 = pneg %p117
        %p885 = pneg %p114
        %p886 = scmp.lt.s32.totalorder %s38, 1
        %s887 = scalar_select %p886, %s38, 1
        %s888 = smul.addr %s887, 4
        %s889 = smul.addr %s888, 4
        %s890 = scalar_lea.vmem %s4, %s889
        %p891 = pneg %p143
        %p892 = pneg %p140
        %p893 = scmp.lt.s32.totalorder %s38, 1
        %s894 = scalar_select %p893, %s38, 1
        %s895 = scalar_lea.vmem %s5, %s894
        %p896 = pneg %p169
        %p897 = pneg %p166
        %p898 = scmp.lt.s32.totalorder %s38, 1
        %s899 = scalar_select %p898, %s38, 1
        %s900 = smul.addr %s899, 4
        %s901 = smul.addr %s900, 4
        %s902 = scalar_lea.vmem %s6, %s901
        %p903 = pneg %p195
        %p904 = pneg %p192
        %p905 = scmp.lt.s32.totalorder %s38, 1
        %s906 = scalar_select %p905, %s38, 1
        %s907 = scalar_lea.vmem %s7, %s906
        %p908 = pneg %p221
        %p909 = pneg %p218
        %p910 = scmp.lt.s32.totalorder %s38, 1
        %s911 = scalar_select %p910, %s38, 1
        %s912 = smul.addr %s911, 4
        %s913 = smul.addr %s912, 4
        %s914 = scalar_lea.vmem %s8, %s913
        %p915 = pneg %p247
        %p916 = pneg %p244
        %p917 = scmp.lt.s32.totalorder %s38, 1
        %s918 = scalar_select %p917, %s38, 1
        %s919 = scalar_lea.vmem %s9, %s918
        %p920 = pneg %p273
        %p921 = pneg %p270
        %p922 = scmp.lt.s32.totalorder %s38, 1
        %s923 = scalar_select %p922, %s38, 1
        %s924 = smul.addr %s923, 4
        %s925 = smul.addr %s924, 4
        %s926 = scalar_lea.vmem %s10, %s925
        %p927 = pneg %p299
        %p928 = pneg %p296
        %p929 = scmp.lt.s32.totalorder %s38, 1
        %s930 = scalar_select %p929, %s38, 1
        %s931 = scalar_lea.vmem %s11, %s930
        %p932 = pneg %p325
        %p933 = pneg %p322
        %p934 = scmp.lt.s32.totalorder %s38, 1
        %s935 = scalar_select %p934, %s38, 1
        %s936 = smul.addr %s935, 4
        %s937 = smul.addr %s936, 4
        %s938 = scalar_lea.vmem %s12, %s937
        %p939 = pneg %p351
        %p940 = pneg %p348
        %p941 = scmp.lt.s32.totalorder %s38, 1
        %s942 = scalar_select %p941, %s38, 1
        %s943 = scalar_lea.vmem %s13, %s942
        %p944 = pneg %p377
        %p945 = pneg %p374
        %p946 = scmp.lt.s32.totalorder %s38, 1
        %s947 = scalar_select %p946, %s38, 1
        %s948 = smul.addr %s947, 4
        %s949 = smul.addr %s948, 4
        %s950 = scalar_lea.vmem %s14, %s949
        %p951 = pneg %p403
        %p952 = pneg %p400
        %p953 = scmp.lt.s32.totalorder %s38, 1
        %s954 = scalar_select %p953, %s38, 1
        %s955 = scalar_lea.vmem %s15, %s954
        %p956 = pneg %p429
        %p957 = pneg %p426
        %p958 = scmp.lt.s32.totalorder %s38, 1
        %s959 = scalar_select %p958, %s38, 1
        %s960 = smul.addr %s959, 8
        %s961 = smul.addr %s960, 4
        %s962 = scalar_lea.vmem %s16, %s961
        %p963 = pneg %p455
        %p964 = pneg %p452
        %p965 = scmp.lt.s32.totalorder %s38, 1
        %s966 = scalar_select %p965, %s38, 1
        %s967 = scalar_lea.vmem %s17, %s966
        %p968 = pneg %p481
        %p969 = pneg %p478
        %p970 = scmp.lt.s32.totalorder %s38, 1
        %s971 = scalar_select %p970, %s38, 1
        %s972 = scalar_lea.vmem %s18, %s971
        %p973 = pneg %p507
        %p974 = pneg %p504
        %p975 = scmp.lt.s32.totalorder %s38, 1
        %s976 = scalar_select %p975, %s38, 1
        %s977 = scalar_lea.vmem %s19, %s976
        %p978 = pneg %p533
        %p979 = pneg %p530
        %p980 = scmp.lt.s32.totalorder %s38, 1
        %s981 = scalar_select %p980, %s38, 1
        %s982 = scalar_lea.vmem %s20, %s981
        %p983 = pneg %p559
        %p984 = pneg %p556
        %p985 = scmp.lt.s32.totalorder %s38, 1
        %s986 = scalar_select %p985, %s38, 1
        %s987 = scalar_lea.vmem %s21, %s986
        %p988 = pneg %p585
        %p989 = pneg %p582
        %p990 = scmp.lt.s32.totalorder %s38, 1
        %s991 = scalar_select %p990, %s38, 1
        %s992 = scalar_lea.vmem %s22, %s991
        %p993 = pneg %p611
        %p994 = pneg %p608
        %p995 = scmp.lt.s32.totalorder %s38, 1
        %s996 = scalar_select %p995, %s38, 1
        %s997 = scalar_lea.vmem %s23, %s996
        %p998 = pneg %p637
        %p999 = pneg %p634
        %p1000 = pneg %p658
        %p1001 = pneg %p655
        %p1002 = pneg %p679
        %p1003 = pneg %p676
        %p1004 = pneg %p700
        %p1005 = pneg %p697
        %p1006 = scmp.lt.s32.totalorder %s38, 1
        %s1007 = scalar_select %p1006, %s38, 1
        %s1008 = smul.addr %s1007, 4
        %s1009 = smul.addr %s1008, 4
        %s1010 = scalar_lea.vmem %s4, %s1009
        %p1011 = scmp.lt.s32.totalorder %s38, 1
        %s1012 = scalar_select %p1011, %s38, 1
        %s1013 = scalar_lea.vmem %s5, %s1012
        %p1014 = scmp.lt.s32.totalorder %s38, 1
        %s1015 = scalar_select %p1014, %s38, 1
        %s1016 = smul.addr %s1015, 4
        %s1017 = smul.addr %s1016, 4
        %s1018 = scalar_lea.vmem %s6, %s1017
        %p1019 = scmp.lt.s32.totalorder %s38, 1
        %s1020 = scalar_select %p1019, %s38, 1
        %s1021 = scalar_lea.vmem %s7, %s1020
        %p1022 = scmp.lt.s32.totalorder %s38, 1
        %s1023 = scalar_select %p1022, %s38, 1
        %s1024 = smul.addr %s1023, 4
        %s1025 = smul.addr %s1024, 4
        %s1026 = scalar_lea.vmem %s8, %s1025
        %p1027 = scmp.lt.s32.totalorder %s38, 1
        %s1028 = scalar_select %p1027, %s38, 1
        %s1029 = scalar_lea.vmem %s9, %s1028
        %p1030 = scmp.lt.s32.totalorder %s38, 1
        %s1031 = scalar_select %p1030, %s38, 1
        %s1032 = smul.addr %s1031, 4
        %s1033 = smul.addr %s1032, 4
        %s1034 = scalar_lea.vmem %s10, %s1033
        %p1035 = scmp.lt.s32.totalorder %s38, 1
        %s1036 = scalar_select %p1035, %s38, 1
        %s1037 = scalar_lea.vmem %s11, %s1036
        %p1038 = scmp.lt.s32.totalorder %s38, 1
        %s1039 = scalar_select %p1038, %s38, 1
        %s1040 = smul.addr %s1039, 4
        %s1041 = smul.addr %s1040, 4
        %s1042 = scalar_lea.vmem %s12, %s1041
        %p1043 = scmp.lt.s32.totalorder %s38, 1
        %s1044 = scalar_select %p1043, %s38, 1
        %s1045 = scalar_lea.vmem %s13, %s1044
        %p1046 = scmp.lt.s32.totalorder %s38, 1
        %s1047 = scalar_select %p1046, %s38, 1
        %s1048 = smul.addr %s1047, 4
        %s1049 = smul.addr %s1048, 4
        %s1050 = scalar_lea.vmem %s14, %s1049
        %p1051 = scmp.lt.s32.totalorder %s38, 1
        %s1052 = scalar_select %p1051, %s38, 1
        %s1053 = scalar_lea.vmem %s15, %s1052
        %p1054 = scmp.lt.s32.totalorder %s38, 1
        %s1055 = scalar_select %p1054, %s38, 1
        %s1056 = smul.addr %s1055, 8
        %s1057 = smul.addr %s1056, 4
        %s1058 = scalar_lea.vmem %s16, %s1057
        %p1059 = scmp.lt.s32.totalorder %s38, 1
        %s1060 = scalar_select %p1059, %s38, 1
        %s1061 = scalar_lea.vmem %s17, %s1060
        %p1062 = scmp.lt.s32.totalorder %s38, 1
        %s1063 = scalar_select %p1062, %s38, 1
        %s1064 = scalar_lea.vmem %s18, %s1063
        %p1065 = scmp.lt.s32.totalorder %s38, 1
        %s1066 = scalar_select %p1065, %s38, 1
        %s1067 = scalar_lea.vmem %s19, %s1066
        %p1068 = scmp.lt.s32.totalorder %s38, 1
        %s1069 = scalar_select %p1068, %s38, 1
        %s1070 = scalar_lea.vmem %s20, %s1069
        %p1071 = scmp.lt.s32.totalorder %s38, 1
        %s1072 = scalar_select %p1071, %s38, 1
        %s1073 = scalar_lea.vmem %s21, %s1072
        %p1074 = scmp.lt.s32.totalorder %s38, 1
        %s1075 = scalar_select %p1074, %s38, 1
        %s1076 = scalar_lea.vmem %s22, %s1075
        %p1077 = scmp.lt.s32.totalorder %s38, 1
        %s1078 = scalar_select %p1077, %s38, 1
        %s1079 = scalar_lea.vmem %s23, %s1078
        %p1081 = scmp.eq.s32.totalorder %s38, 0
        // Predicated region
        $region125: #{transformer_forward.3} parent=123 // pred_check
          %p1082 = pneg %p1081
        $region126: #{transformer_forward.3} parent=123 // pred_check_branch
          %1084 = sbr.rel (%p1082) target = $region128
        $region127: #{transformer_forward.3} parent=123 // pred_region
          %v1085 = vld [vmem:[%s0] sm:$0xff]
          %v1086 = vld [vmem:[%s0 + $0x8] sm:$0xff]
          %vm1087 = vcmask 261120
          %1088 = vst.msk [vmem:[#allocation2] sm:$0xff] %vm1087, %v1085
          %1089 = vst.msk [vmem:[#allocation2 + $0x8] sm:$0xff] %vm1087, %v1086
        $region128: #{transformer_forward.3} parent=123 // pred_fallthru
          _
        %v1090 = vld [vmem:[#allocation2] sm:$0xff]
        %v1091 = vld [vmem:[#allocation2 + $0x8] sm:$0xff]
        %v1092 = vld [vmem:[%s1] sm:$0xff]
        %v1093 = vld [vmem:[%s1 + $0x8] sm:$0xff]
        %v1094 = vlaneseq
        %v1095 = vshrl.u32 %v1094, 7
        %v1096 = vlaneseq
        %v1097 = vand.u32 %v1096, 127
        %vm1098 = vcmp.le.s32.totalorder %v1097, %v1095
        %v1099 = vld [vmem:[%s2] sm:$0x1]
        %vm1100 = vcmp.gt.f32.partialorder %v1099, 0.5
        %s1101 = scalar_lea.vmem %s2, 1
        %v1102 = vld [vmem:[%s1101] sm:$0x1]
        %vm1103 = vcmp.gt.f32.partialorder %v1102, 0.5
        %v1104 = vld [vmem:[%s3] sm:$0xff]
        %vm1105 = vcmp.gt.f32.partialorder %v1104, 0.5
        %v1106 = vsel %vm1105, 1, 0
        %1107 = vset.pattern.permute.xlu0 0
        %1108 = vperm.xlu0 %1107, %v1106
        %v1109 = vpop.permute.xlu0 %1108
        %vm1110 = vcmp.eq.s32.totalorder %v1109, 1
        %vm1111 = vmand %vm1110, %vm1098
        %s1112 = scalar_lea.vmem %s3, 8
        %v1113 = vld [vmem:[%s1112] sm:$0xff]
        %vm1114 = vcmp.gt.f32.partialorder %v1113, 0.5
        %v1115 = vsel %vm1114, 1, 0
        %1116 = vset.pattern.permute.xlu0 0
        %1117 = vperm.xlu0 %1116, %v1115
        %v1118 = vpop.permute.xlu0 %1117
        %vm1119 = vcmp.eq.s32.totalorder %v1118, 1
        %vm1120 = vmand %vm1119, %vm1098
        %v1121 = vld [vmem:[%s1010] sm:$0xf]
        %v1122 = vld [vmem:[%s1010 + $0x4] sm:$0xf]
        %v1123 = vld [vmem:[%s1010 + $0x8] sm:$0xf]
        %v1124 = vld [vmem:[%s1010 + $0xc] sm:$0xf]
        %v1125 = vld [vmem:[%s1013] sm:$0x1]
        %v1126 = vld [vmem:[%s1018] sm:$0xf]
        %v1127 = vld [vmem:[%s1018 + $0x4] sm:$0xf]
        %v1128 = vld [vmem:[%s1018 + $0x8] sm:$0xf]
        %v1129 = vld [vmem:[%s1018 + $0xc] sm:$0xf]
        %v1130 = vld [vmem:[%s1021] sm:$0x1]
        %v1131 = vld [vmem:[%s1026] sm:$0xf]
        %v1132 = vld [vmem:[%s1026 + $0x4] sm:$0xf]
        %v1133 = vld [vmem:[%s1026 + $0x8] sm:$0xf]
        %v1134 = vld [vmem:[%s1026 + $0xc] sm:$0xf]
        %v1135 = vld [vmem:[%s1029] sm:$0x1]
        %v1136 = vld [vmem:[%s1034] sm:$0xf]
        %v1137 = vld [vmem:[%s1034 + $0x4] sm:$0xf]
        %v1138 = vld [vmem:[%s1034 + $0x8] sm:$0xf]
        %v1139 = vld [vmem:[%s1034 + $0xc] sm:$0xf]
        %v1140 = vld [vmem:[%s1037] sm:$0x1]
        %v1141 = vld [vmem:[%s1042] sm:$0xf]
        %v1142 = vld [vmem:[%s1042 + $0x4] sm:$0xf]
        %v1143 = vld [vmem:[%s1042 + $0x8] sm:$0xf]
        %v1144 = vld [vmem:[%s1042 + $0xc] sm:$0xf]
        %v1145 = vld [vmem:[%s1045] sm:$0x1]
        %v1146 = vld [vmem:[%s1050] sm:$0xf]
        %v1147 = vld [vmem:[%s1050 + $0x4] sm:$0xf]
        %v1148 = vld [vmem:[%s1050 + $0x8] sm:$0xf]
        %v1149 = vld [vmem:[%s1050 + $0xc] sm:$0xf]
        %v1150 = vld [vmem:[%s1053] sm:$0x1]
        %v1151 = vld [vmem:[%s1058] sm:$0xf]
        %v1152 = vld [vmem:[%s1058 + $0x4] sm:$0xf]
        %v1153 = vld [vmem:[%s1058 + $0x8] sm:$0xf]
        %v1154 = vld [vmem:[%s1058 + $0xc] sm:$0xf]
        %v1155 = vld [vmem:[%s1058 + $0x10] sm:$0xf]
        %v1156 = vld [vmem:[%s1058 + $0x14] sm:$0xf]
        %v1157 = vld [vmem:[%s1058 + $0x18] sm:$0xf]
        %v1158 = vld [vmem:[%s1058 + $0x1c] sm:$0xf]
        %v1159 = vld [vmem:[%s1061] sm:$0x1]
        %v1160 = vld [vmem:[%s1064] sm:$0x1]
        %v1161 = vld [vmem:[%s1067] sm:$0x1]
        %v1162 = vld [vmem:[%s1070] sm:$0x1]
        %v1163 = vld [vmem:[%s1073] sm:$0x1]
        %v1164 = vld [vmem:[%s1076] sm:$0x1]
        %v1165 = vld [vmem:[%s1079] sm:$0x1]
        %v1166 = vpack.c.bf16 %v1091, %v1090
        %v1168 = vperm.slane %v1125, 0
        %v1174 = vunpack.c.l.b16 %v1121
        %v1175 = vunpack.c.l.b16 %v1122
        %v1176 = vunpack.c.l.b16 %v1123
        %v1177 = vunpack.c.l.b16 %v1124
        %v1178 = vpack.c.b16 %v1175, %v1174
        %v1179 = vpack.c.b16 %v1177, %v1176
        %vm1182 = vcmask 261120
        %v1184 = vsel %vm1182, %v1166, 0
        %1186 = vmatpush.bf16.msra.mxu0 0
        %1187 = vmatpush.bf16.msra.mxu0 0
        %1188 = vmatpush.bf16.msra.mxu0 0
        %1189 = vmatpush.bf16.msra.mxu0 0
        %1190 = vmatpush.bf16.msra.mxu0 0
        %1191 = vmatpush.bf16.msra.mxu0 0
        %1192 = vmatpush.bf16.msra.mxu0 %v1179
        %1193 = vmatpush.bf16.msra.mxu0 %v1178
        %1194 = vmatmul.bf16.gmra.mxu0 %v1184
        %v1195 = vpop.f32.mrf.mxu0
        %v1196 = vadd.f32 %v1168, %v1195
        %v1197 = vpop.f32.mrf.mxu0
        %v1198 = vadd.f32 %v1168, %v1197
        %1199 = vdwg.mxu0
        %v1200 = vpack.c.bf16 %v1196, %v1196
        %v1201 = vpack.c.bf16 %v1198, %v1198
        %v1203 = vunpack.c.l.b16 %v1200
        %v1204 = vpack.c.b16 %v1203, %v1203
        %1205 = vrot.lane.b32.xlu0 %v1204, 96
        %v1206 = vpop.permute.xlu0 %1205
        %vm1207 = vcmask 64512
        %v1209 = vsel %vm1207, %v1200, 0
        %v1212 = vsel %vm1207, %v1206, 0
        %1214 = vmatpush.bf16.xpose.msra.mxu0 0
        %1215 = vmatpush.bf16.xpose.msra.mxu0 0
        %1216 = vmatpush.bf16.xpose.msra.mxu0 0
        %1217 = vmatpush.bf16.xpose.msra.mxu0 0
        %1218 = vmatpush.bf16.xpose.msra.mxu0 0
        %1219 = vmatpush.bf16.xpose.msra.mxu0 0
        %1220 = vmatpush.bf16.xpose.msra.mxu0 0
        %1221 = vmatpush.bf16.xpose.msra.mxu0 %v1212
        %1222 = vmatmul.bf16.gmra.mxu0 %v1209
        %v1223 = vpop.f32.mrf.mxu0
        %v1224 = vadd.f32 0.0, %v1223
        %v1225 = vpop.f32.mrf.mxu0
        %1226 = vdwg.mxu0
        %v1227 = vmul.f32 %v1224, 0.35355338
        %v1228 = vsel %vm1111, %v1227, -1e+09
        %v1229 = vsel %vm1207, %v1228, -inf
        %1230 = vmax.xlane.f32.xlu0 %v1229
        %v1231 = vpop.xlane.xlu0 %1230
        %v1232 = vsub.f32 %v1228, %v1231
        %v1233 = vmul.f32 %v1232, 1.442695
        %v1234 = vpow.pop %v1233
        %v1235 = vsel %vm1207, %v1234, 0.0
        %1236 = vadd.xlane.f32.xlu0 %v1235
        %v1237 = vpop.xlane.xlu0 %1236
        %v1238 = vrcp.pop %v1237
        %v1239 = vmul.f32 %v1237, %v1238
        %v1240 = vsub.f32 1.0, %v1239
        %v1241 = vmul.f32 %v1238, %v1240
        %v1242 = vadd.f32 %v1238, %v1241
        %vm1243 = vweird.f32 %v1237
        %vm1244 = vweird.f32 %v1238
        %vm1245 = vmor %vm1243, %vm1244
        %v1246 = vsel %vm1245, %v1238, %v1242
        %v1247 = vand.u32 2147483647, %v1237
        %vm1248 = vcmp.eq.f32.partialorder %v1247, 8.507059e+37
        %v1249 = vand.u32 %v1237, 2147483648
        %v1250 = vor.u32 1.1754944e-38, %v1249
        %v1251 = vsel %vm1248, %v1250, %v1246
        %v1252 = vmul.f32 %v1234, %v1251
        %v1253 = vpack.c.bf16 %v1252, %v1252
        %1254 = vrot.lane.b32.xlu0 %v1204, 64
        %v1255 = vpop.permute.xlu0 %1254
        %v1257 = vsel %vm1207, %v1253, 0
        %vm1259 = vcmask 1043456
        %v1261 = vsel %vm1259, %v1255, 0
        %1263 = vmatpush.bf16.msra.mxu0 0
        %1264 = vmatpush.bf16.msra.mxu0 0
        %1265 = vmatpush.bf16.msra.mxu0 0
        %1266 = vmatpush.bf16.msra.mxu0 0
        %1267 = vmatpush.bf16.msra.mxu0 0
        %1268 = vmatpush.bf16.msra.mxu0 0
        %1269 = vmatpush.bf16.msra.mxu0 0
        %1270 = vmatpush.bf16.msra.mxu0 %v1261
        %1271 = vmatmul.bf16.gmra.mxu0 %v1257
        %v1272 = vpop.f32.mrf.mxu0
        %v1273 = vadd.f32 0.0, %v1272
        %v1274 = vpop.f32.mrf.mxu0
        %1275 = vdwg.mxu0
        %v1276 = vpack.c.bf16 %v1273, %v1273
        %1277 = vrot.lane.b32.xlu0 %v1204, 120
        %v1278 = vpop.permute.xlu0 %1277
        %1279 = vrot.lane.b32.xlu0 %v1204, 88
        %v1280 = vpop.permute.xlu0 %1279
        %v1282 = vsel %vm1207, %v1278, 0
        %v1285 = vsel %vm1207, %v1280, 0
        %1287 = vmatpush.bf16.xpose.msra.mxu0 0
        %1288 = vmatpush.bf16.xpose.msra.mxu0 0
        %1289 = vmatpush.bf16.xpose.msra.mxu0 0
        %1290 = vmatpush.bf16.xpose.msra.mxu0 0
        %1291 = vmatpush.bf16.xpose.msra.mxu0 0
        %1292 = vmatpush.bf16.xpose.msra.mxu0 0
        %1293 = vmatpush.bf16.xpose.msra.mxu0 0
        %1294 = vmatpush.bf16.xpose.msra.mxu0 %v1285
        %1295 = vmatmul.bf16.gmra.mxu0 %v1282
        %v1296 = vpop.f32.mrf.mxu0
        %v1297 = vadd.f32 0.0, %v1296
        %v1298 = vpop.f32.mrf.mxu0
        %1299 = vdwg.mxu0
        %v1300 = vmul.f32 %v1297, 0.35355338
        %v1301 = vsel %vm1111, %v1300, -1e+09
        %v1302 = vsel %vm1207, %v1301, -inf
        %1303 = vmax.xlane.f32.xlu0 %v1302
        %v1304 = vpop.xlane.xlu0 %1303
        %v1305 = vsub.f32 %v1301, %v1304
        %v1306 = vmul.f32 %v1305, 1.442695
        %v1307 = vpow.pop %v1306
        %v1308 = vsel %vm1207, %v1307, 0.0
        %1309 = vadd.xlane.f32.xlu0 %v1308
        %v1310 = vpop.xlane.xlu0 %1309
        %v1311 = vrcp.pop %v1310
        %v1312 = vmul.f32 %v1310, %v1311
        %v1313 = vsub.f32 1.0, %v1312
        %v1314 = vmul.f32 %v1311, %v1313
        %v1315 = vadd.f32 %v1311, %v1314
        %vm1316 = vweird.f32 %v1310
        %vm1317 = vweird.f32 %v1311
        %vm1318 = vmor %vm1316, %vm1317
        %v1319 = vsel %vm1318, %v1311, %v1315
        %v1320 = vand.u32 2147483647, %v1310
        %vm1321 = vcmp.eq.f32.partialorder %v1320, 8.507059e+37
        %v1322 = vand.u32 %v1310, 2147483648
        %v1323 = vor.u32 1.1754944e-38, %v1322
        %v1324 = vsel %vm1321, %v1323, %v1319
        %v1325 = vmul.f32 %v1307, %v1324
        %v1326 = vpack.c.bf16 %v1325, %v1325
        %1327 = vrot.lane.b32.xlu0 %v1204, 56
        %v1328 = vpop.permute.xlu0 %1327
        %v1330 = vsel %vm1207, %v1326, 0
        %v1333 = vsel %vm1259, %v1328, 0
        %1335 = vmatpush.bf16.msra.mxu0 0
        %1336 = vmatpush.bf16.msra.mxu0 0
        %1337 = vmatpush.bf16.msra.mxu0 0
        %1338 = vmatpush.bf16.msra.mxu0 0
        %1339 = vmatpush.bf16.msra.mxu0 0
        %1340 = vmatpush.bf16.msra.mxu0 0
        %1341 = vmatpush.bf16.msra.mxu0 0
        %1342 = vmatpush.bf16.msra.mxu0 %v1333
        %1343 = vmatmul.bf16.gmra.mxu0 %v1330
        %v1344 = vpop.f32.mrf.mxu0
        %v1345 = vadd.f32 0.0, %v1344
        %v1346 = vpop.f32.mrf.mxu0
        %1347 = vdwg.mxu0
        %v1348 = vpack.c.bf16 %v1345, %v1345
        %v1350 = vsel %vm1207, %v1348, 0
        %v1353 = vsel %vm1259, %v1127, 0
        %1355 = vmatpush.bf16.msra.mxu0 0
        %1356 = vmatpush.bf16.msra.mxu0 0
        %1357 = vmatpush.bf16.msra.mxu0 0
        %1358 = vmatpush.bf16.msra.mxu0 0
        %1359 = vmatpush.bf16.msra.mxu0 0
        %1360 = vmatpush.bf16.msra.mxu0 0
        %1361 = vmatpush.bf16.msra.mxu0 0
        %1362 = vmatpush.bf16.msra.mxu0 %v1353
        %1363 = vmatmul.bf16.gmra.mxu0 %v1350
        %v1364 = vpop.f32.mrf.mxu0
        %v1365 = vadd.f32 0.0, %v1364
        %v1366 = vpop.f32.mrf.mxu0
        %1367 = vdwg.mxu0
        %v1369 = vsel %vm1207, %v1276, 0
        %v1372 = vsel %vm1259, %v1126, 0
        %1374 = vmatpush.bf16.msra.mxu0 0
        %1375 = vmatpush.bf16.msra.mxu0 0
        %1376 = vmatpush.bf16.msra.mxu0 0
        %1377 = vmatpush.bf16.msra.mxu0 0
        %1378 = vmatpush.bf16.msra.mxu0 0
        %1379 = vmatpush.bf16.msra.mxu0 0
        %1380 = vmatpush.bf16.msra.mxu0 0
        %1381 = vmatpush.bf16.msra.mxu0 %v1372
        %1382 = vmatmul.bf16.gmra.mxu0 %v1369
        %v1383 = vpop.f32.mrf.mxu0
        %v1384 = vadd.f32 %v1365, %v1383
        %v1385 = vpop.f32.mrf.mxu0
        %1386 = vdwg.mxu0
        %1387 = vrot.lane.b32.xlu0 %v1204, 112
        %v1388 = vpop.permute.xlu0 %1387
        %1389 = vrot.lane.b32.xlu0 %v1204, 80
        %v1390 = vpop.permute.xlu0 %1389
        %v1392 = vsel %vm1207, %v1388, 0
        %v1395 = vsel %vm1207, %v1390, 0
        %1397 = vmatpush.bf16.xpose.msra.mxu0 0
        %1398 = vmatpush.bf16.xpose.msra.mxu0 0
        %1399 = vmatpush.bf16.xpose.msra.mxu0 0
        %1400 = vmatpush.bf16.xpose.msra.mxu0 0
        %1401 = vmatpush.bf16.xpose.msra.mxu0 0
        %1402 = vmatpush.bf16.xpose.msra.mxu0 0
        %1403 = vmatpush.bf16.xpose.msra.mxu0 0
        %1404 = vmatpush.bf16.xpose.msra.mxu0 %v1395
        %1405 = vmatmul.bf16.gmra.mxu0 %v1392
        %v1406 = vpop.f32.mrf.mxu0
        %v1407 = vadd.f32 0.0, %v1406
        %v1408 = vpop.f32.mrf.mxu0
        %1409 = vdwg.mxu0
        %v1410 = vmul.f32 %v1407, 0.35355338
        %v1411 = vsel %vm1111, %v1410, -1e+09
        %v1412 = vsel %vm1207, %v1411, -inf
        %1413 = vmax.xlane.f32.xlu0 %v1412
        %v1414 = vpop.xlane.xlu0 %1413
        %v1415 = vsub.f32 %v1411, %v1414
        %v1416 = vmul.f32 %v1415, 1.442695
        %v1417 = vpow.pop %v1416
        %v1418 = vsel %vm1207, %v1417, 0.0
        %1419 = vadd.xlane.f32.xlu0 %v1418
        %v1420 = vpop.xlane.xlu0 %1419
        %v1421 = vrcp.pop %v1420
        %v1422 = vmul.f32 %v1420, %v1421
        %v1423 = vsub.f32 1.0, %v1422
        %v1424 = vmul.f32 %v1421, %v1423
        %v1425 = vadd.f32 %v1421, %v1424
        %vm1426 = vweird.f32 %v1420
        %vm1427 = vweird.f32 %v1421
        %vm1428 = vmor %vm1426, %vm1427
        %v1429 = vsel %vm1428, %v1421, %v1425
        %v1430 = vand.u32 2147483647, %v1420
        %vm1431 = vcmp.eq.f32.partialorder %v1430, 8.507059e+37
        %v1432 = vand.u32 %v1420, 2147483648
        %v1433 = vor.u32 1.1754944e-38, %v1432
        %v1434 = vsel %vm1431, %v1433, %v1429
        %v1435 = vmul.f32 %v1417, %v1434
        %v1436 = vpack.c.bf16 %v1435, %v1435
        %1437 = vrot.lane.b32.xlu0 %v1204, 48
        %v1438 = vpop.permute.xlu0 %1437
        %v1440 = vsel %vm1207, %v1436, 0
        %v1443 = vsel %vm1259, %v1438, 0
        %1445 = vmatpush.bf16.msra.mxu0 0
        %1446 = vmatpush.bf16.msra.mxu0 0
        %1447 = vmatpush.bf16.msra.mxu0 0
        %1448 = vmatpush.bf16.msra.mxu0 0
        %1449 = vmatpush.bf16.msra.mxu0 0
        %1450 = vmatpush.bf16.msra.mxu0 0
        %1451 = vmatpush.bf16.msra.mxu0 0
        %1452 = vmatpush.bf16.msra.mxu0 %v1443
        %1453 = vmatmul.bf16.gmra.mxu0 %v1440
        %v1454 = vpop.f32.mrf.mxu0
        %v1455 = vadd.f32 0.0, %v1454
        %v1456 = vpop.f32.mrf.mxu0
        %1457 = vdwg.mxu0
        %v1458 = vpack.c.bf16 %v1455, %v1455
        %v1460 = vsel %vm1207, %v1458, 0
        %v1463 = vsel %vm1259, %v1128, 0
        %1465 = vmatpush.bf16.msra.mxu0 0
        %1466 = vmatpush.bf16.msra.mxu0 0
        %1467 = vmatpush.bf16.msra.mxu0 0
        %1468 = vmatpush.bf16.msra.mxu0 0
        %1469 = vmatpush.bf16.msra.mxu0 0
        %1470 = vmatpush.bf16.msra.mxu0 0
        %1471 = vmatpush.bf16.msra.mxu0 0
        %1472 = vmatpush.bf16.msra.mxu0 %v1463
        %1473 = vmatmul.bf16.gmra.mxu0 %v1460
        %v1474 = vpop.f32.mrf.mxu0
        %v1475 = vadd.f32 0.0, %v1474
        %v1476 = vpop.f32.mrf.mxu0
        %1477 = vdwg.mxu0
        %v1478 = vadd.f32 %v1384, %v1475
        %1479 = vrot.lane.b32.xlu0 %v1204, 104
        %v1480 = vpop.permute.xlu0 %1479
        %1481 = vrot.lane.b32.xlu0 %v1204, 72
        %v1482 = vpop.permute.xlu0 %1481
        %v1484 = vsel %vm1207, %v1480, 0
        %v1487 = vsel %vm1207, %v1482, 0
        %1489 = vmatpush.bf16.xpose.msra.mxu0 0
        %1490 = vmatpush.bf16.xpose.msra.mxu0 0
        %1491 = vmatpush.bf16.xpose.msra.mxu0 0
        %1492 = vmatpush.bf16.xpose.msra.mxu0 0
        %1493 = vmatpush.bf16.xpose.msra.mxu0 0
        %1494 = vmatpush.bf16.xpose.msra.mxu0 0
        %1495 = vmatpush.bf16.xpose.msra.mxu0 0
        %1496 = vmatpush.bf16.xpose.msra.mxu0 %v1487
        %1497 = vmatmul.bf16.gmra.mxu0 %v1484
        %v1498 = vpop.f32.mrf.mxu0
        %v1499 = vadd.f32 0.0, %v1498
        %v1500 = vpop.f32.mrf.mxu0
        %1501 = vdwg.mxu0
        %v1502 = vmul.f32 %v1499, 0.35355338
        %v1503 = vsel %vm1111, %v1502, -1e+09
        %v1504 = vsel %vm1207, %v1503, -inf
        %1505 = vmax.xlane.f32.xlu0 %v1504
        %v1506 = vpop.xlane.xlu0 %1505
        %v1507 = vsub.f32 %v1503, %v1506
        %v1508 = vmul.f32 %v1507, 1.442695
        %v1509 = vpow.pop %v1508
        %v1510 = vsel %vm1207, %v1509, 0.0
        %1511 = vadd.xlane.f32.xlu0 %v1510
        %v1512 = vpop.xlane.xlu0 %1511
        %v1513 = vrcp.pop %v1512
        %v1514 = vmul.f32 %v1512, %v1513
        %v1515 = vsub.f32 1.0, %v1514
        %v1516 = vmul.f32 %v1513, %v1515
        %v1517 = vadd.f32 %v1513, %v1516
        %vm1518 = vweird.f32 %v1512
        %vm1519 = vweird.f32 %v1513
        %vm1520 = vmor %vm1518, %vm1519
        %v1521 = vsel %vm1520, %v1513, %v1517
        %v1522 = vand.u32 2147483647, %v1512
        %vm1523 = vcmp.eq.f32.partialorder %v1522, 8.507059e+37
        %v1524 = vand.u32 %v1512, 2147483648
        %v1525 = vor.u32 1.1754944e-38, %v1524
        %v1526 = vsel %vm1523, %v1525, %v1521
        %v1527 = vmul.f32 %v1509, %v1526
        %v1528 = vpack.c.bf16 %v1527, %v1527
        %1529 = vrot.lane.b32.xlu0 %v1204, 40
        %v1530 = vpop.permute.xlu0 %1529
        %v1532 = vsel %vm1207, %v1528, 0
        %v1535 = vsel %vm1259, %v1530, 0
        %1537 = vmatpush.bf16.msra.mxu0 0
        %1538 = vmatpush.bf16.msra.mxu0 0
        %1539 = vmatpush.bf16.msra.mxu0 0
        %1540 = vmatpush.bf16.msra.mxu0 0
        %1541 = vmatpush.bf16.msra.mxu0 0
        %1542 = vmatpush.bf16.msra.mxu0 0
        %1543 = vmatpush.bf16.msra.mxu0 0
        %1544 = vmatpush.bf16.msra.mxu0 %v1535
        %1545 = vmatmul.bf16.gmra.mxu0 %v1532
        %v1546 = vpop.f32.mrf.mxu0
        %v1547 = vadd.f32 0.0, %v1546
        %v1548 = vpop.f32.mrf.mxu0
        %1549 = vdwg.mxu0
        %v1550 = vpack.c.bf16 %v1547, %v1547
        %v1552 = vsel %vm1207, %v1550, 0
        %v1555 = vsel %vm1259, %v1129, 0
        %1557 = vmatpush.bf16.msra.mxu0 0
        %1558 = vmatpush.bf16.msra.mxu0 0
        %1559 = vmatpush.bf16.msra.mxu0 0
        %1560 = vmatpush.bf16.msra.mxu0 0
        %1561 = vmatpush.bf16.msra.mxu0 0
        %1562 = vmatpush.bf16.msra.mxu0 0
        %1563 = vmatpush.bf16.msra.mxu0 0
        %1564 = vmatpush.bf16.msra.mxu0 %v1555
        %1565 = vmatmul.bf16.gmra.mxu0 %v1552
        %v1566 = vpop.f32.mrf.mxu0
        %v1567 = vadd.f32 0.0, %v1566
        %v1568 = vpop.f32.mrf.mxu0
        %1569 = vdwg.mxu0
        %v1570 = vadd.f32 %v1478, %v1567
        %v1572 = vunpack.c.l.b16 %v1201
        %v1573 = vpack.c.b16 %v1572, %v1572
        %1574 = vrot.lane.b32.xlu0 %v1573, 96
        %v1575 = vpop.permute.xlu0 %1574
        %v1577 = vsel %vm1207, %v1201, 0
        %v1580 = vsel %vm1207, %v1575, 0
        %1582 = vmatpush.bf16.xpose.msra.mxu0 0
        %1583 = vmatpush.bf16.xpose.msra.mxu0 0
        %1584 = vmatpush.bf16.xpose.msra.mxu0 0
        %1585 = vmatpush.bf16.xpose.msra.mxu0 0
        %1586 = vmatpush.bf16.xpose.msra.mxu0 0
        %1587 = vmatpush.bf16.xpose.msra.mxu0 0
        %1588 = vmatpush.bf16.xpose.msra.mxu0 0
        %1589 = vmatpush.bf16.xpose.msra.mxu0 %v1580
        %1590 = vmatmul.bf16.gmra.mxu0 %v1577
        %v1591 = vpop.f32.mrf.mxu0
        %v1592 = vadd.f32 0.0, %v1591
        %v1593 = vpop.f32.mrf.mxu0
        %1594 = vdwg.mxu0
        %v1595 = vmul.f32 %v1592, 0.35355338
        %v1596 = vsel %vm1120, %v1595, -1e+09
        %v1597 = vsel %vm1207, %v1596, -inf
        %1598 = vmax.xlane.f32.xlu0 %v1597
        %v1599 = vpop.xlane.xlu0 %1598
        %v1600 = vsub.f32 %v1596, %v1599
        %v1601 = vmul.f32 %v1600, 1.442695
        %v1602 = vpow.pop %v1601
        %v1603 = vsel %vm1207, %v1602, 0.0
        %1604 = vadd.xlane.f32.xlu0 %v1603
        %v1605 = vpop.xlane.xlu0 %1604
        %v1606 = vrcp.pop %v1605
        %v1607 = vmul.f32 %v1605, %v1606
        %v1608 = vsub.f32 1.0, %v1607
        %v1609 = vmul.f32 %v1606, %v1608
        %v1610 = vadd.f32 %v1606, %v1609
        %vm1611 = vweird.f32 %v1605
        %vm1612 = vweird.f32 %v1606
        %vm1613 = vmor %vm1611, %vm1612
        %v1614 = vsel %vm1613, %v1606, %v1610
        %v1615 = vand.u32 2147483647, %v1605
        %vm1616 = vcmp.eq.f32.partialorder %v1615, 8.507059e+37
        %v1617 = vand.u32 %v1605, 2147483648
        %v1618 = vor.u32 1.1754944e-38, %v1617
        %v1619 = vsel %vm1616, %v1618, %v1614
        %v1620 = vmul.f32 %v1602, %v1619
        %v1621 = vpack.c.bf16 %v1620, %v1620
        %1622 = vrot.lane.b32.xlu0 %v1573, 64
        %v1623 = vpop.permute.xlu0 %1622
        %v1625 = vsel %vm1207, %v1621, 0
        %v1628 = vsel %vm1259, %v1623, 0
        %1630 = vmatpush.bf16.msra.mxu0 0
        %1631 = vmatpush.bf16.msra.mxu0 0
        %1632 = vmatpush.bf16.msra.mxu0 0
        %1633 = vmatpush.bf16.msra.mxu0 0
        %1634 = vmatpush.bf16.msra.mxu0 0
        %1635 = vmatpush.bf16.msra.mxu0 0
        %1636 = vmatpush.bf16.msra.mxu0 0
        %1637 = vmatpush.bf16.msra.mxu0 %v1628
        %1638 = vmatmul.bf16.gmra.mxu0 %v1625
        %v1639 = vpop.f32.mrf.mxu0
        %v1640 = vadd.f32 0.0, %v1639
        %v1641 = vpop.f32.mrf.mxu0
        %1642 = vdwg.mxu0
        %v1643 = vpack.c.bf16 %v1640, %v1640
        %1644 = vrot.lane.b32.xlu0 %v1573, 120
        %v1645 = vpop.permute.xlu0 %1644
        %1646 = vrot.lane.b32.xlu0 %v1573, 88
        %v1647 = vpop.permute.xlu0 %1646
        %v1649 = vsel %vm1207, %v1645, 0
        %v1652 = vsel %vm1207, %v1647, 0
        %1654 = vmatpush.bf16.xpose.msra.mxu0 0
        %1655 = vmatpush.bf16.xpose.msra.mxu0 0
        %1656 = vmatpush.bf16.xpose.msra.mxu0 0
        %1657 = vmatpush.bf16.xpose.msra.mxu0 0
        %1658 = vmatpush.bf16.xpose.msra.mxu0 0
        %1659 = vmatpush.bf16.xpose.msra.mxu0 0
        %1660 = vmatpush.bf16.xpose.msra.mxu0 0
        %1661 = vmatpush.bf16.xpose.msra.mxu0 %v1652
        %1662 = vmatmul.bf16.gmra.mxu0 %v1649
        %v1663 = vpop.f32.mrf.mxu0
        %v1664 = vadd.f32 0.0, %v1663
        %v1665 = vpop.f32.mrf.mxu0
        %1666 = vdwg.mxu0
        %v1667 = vmul.f32 %v1664, 0.35355338
        %v1668 = vsel %vm1120, %v1667, -1e+09
        %v1669 = vsel %vm1207, %v1668, -inf
        %1670 = vmax.xlane.f32.xlu0 %v1669
        %v1671 = vpop.xlane.xlu0 %1670
        %v1672 = vsub.f32 %v1668, %v1671
        %v1673 = vmul.f32 %v1672, 1.442695
        %v1674 = vpow.pop %v1673
        %v1675 = vsel %vm1207, %v1674, 0.0
        %1676 = vadd.xlane.f32.xlu0 %v1675
        %v1677 = vpop.xlane.xlu0 %1676
        %v1678 = vrcp.pop %v1677
        %v1679 = vmul.f32 %v1677, %v1678
        %v1680 = vsub.f32 1.0, %v1679
        %v1681 = vmul.f32 %v1678, %v1680
        %v1682 = vadd.f32 %v1678, %v1681
        %vm1683 = vweird.f32 %v1677
        %vm1684 = vweird.f32 %v1678
        %vm1685 = vmor %vm1683, %vm1684
        %v1686 = vsel %vm1685, %v1678, %v1682
        %v1687 = vand.u32 2147483647, %v1677
        %vm1688 = vcmp.eq.f32.partialorder %v1687, 8.507059e+37
        %v1689 = vand.u32 %v1677, 2147483648
        %v1690 = vor.u32 1.1754944e-38, %v1689
        %v1691 = vsel %vm1688, %v1690, %v1686
        %v1692 = vmul.f32 %v1674, %v1691
        %v1693 = vpack.c.bf16 %v1692, %v1692
        %1694 = vrot.lane.b32.xlu0 %v1573, 56
        %v1695 = vpop.permute.xlu0 %1694
        %v1697 = vsel %vm1207, %v1693, 0
        %v1700 = vsel %vm1259, %v1695, 0
        %1702 = vmatpush.bf16.msra.mxu0 0
        %1703 = vmatpush.bf16.msra.mxu0 0
        %1704 = vmatpush.bf16.msra.mxu0 0
        %1705 = vmatpush.bf16.msra.mxu0 0
        %1706 = vmatpush.bf16.msra.mxu0 0
        %1707 = vmatpush.bf16.msra.mxu0 0
        %1708 = vmatpush.bf16.msra.mxu0 0
        %1709 = vmatpush.bf16.msra.mxu0 %v1700
        %1710 = vmatmul.bf16.gmra.mxu0 %v1697
        %v1711 = vpop.f32.mrf.mxu0
        %v1712 = vadd.f32 0.0, %v1711
        %v1713 = vpop.f32.mrf.mxu0
        %1714 = vdwg.mxu0
        %v1715 = vpack.c.bf16 %v1712, %v1712
        %v1717 = vsel %vm1207, %v1715, 0
        %1719 = vmatpush.bf16.msra.mxu0 0
        %1720 = vmatpush.bf16.msra.mxu0 0
        %1721 = vmatpush.bf16.msra.mxu0 0
        %1722 = vmatpush.bf16.msra.mxu0 0
        %1723 = vmatpush.bf16.msra.mxu0 0
        %1724 = vmatpush.bf16.msra.mxu0 0
        %1725 = vmatpush.bf16.msra.mxu0 0
        %1726 = vmatpush.bf16.msra.mxu0 %v1353
        %1727 = vmatmul.bf16.gmra.mxu0 %v1717
        %v1728 = vpop.f32.mrf.mxu0
        %v1729 = vadd.f32 0.0, %v1728
        %v1730 = vpop.f32.mrf.mxu0
        %1731 = vdwg.mxu0
        %v1733 = vsel %vm1207, %v1643, 0
        %1735 = vmatpush.bf16.msra.mxu0 0
        %1736 = vmatpush.bf16.msra.mxu0 0
        %1737 = vmatpush.bf16.msra.mxu0 0
        %1738 = vmatpush.bf16.msra.mxu0 0
        %1739 = vmatpush.bf16.msra.mxu0 0
        %1740 = vmatpush.bf16.msra.mxu0 0
        %1741 = vmatpush.bf16.msra.mxu0 0
        %1742 = vmatpush.bf16.msra.mxu0 %v1372
        %1743 = vmatmul.bf16.gmra.mxu0 %v1733
        %v1744 = vpop.f32.mrf.mxu0
        %v1745 = vadd.f32 %v1729, %v1744
        %v1746 = vpop.f32.mrf.mxu0
        %1747 = vdwg.mxu0
        %1748 = vrot.lane.b32.xlu0 %v1573, 112
        %v1749 = vpop.permute.xlu0 %1748
        %1750 = vrot.lane.b32.xlu0 %v1573, 80
        %v1751 = vpop.permute.xlu0 %1750
        %v1753 = vsel %vm1207, %v1749, 0
        %v1756 = vsel %vm1207, %v1751, 0
        %1758 = vmatpush.bf16.xpose.msra.mxu0 0
        %1759 = vmatpush.bf16.xpose.msra.mxu0 0
        %1760 = vmatpush.bf16.xpose.msra.mxu0 0
        %1761 = vmatpush.bf16.xpose.msra.mxu0 0
        %1762 = vmatpush.bf16.xpose.msra.mxu0 0
        %1763 = vmatpush.bf16.xpose.msra.mxu0 0
        %1764 = vmatpush.bf16.xpose.msra.mxu0 0
        %1765 = vmatpush.bf16.xpose.msra.mxu0 %v1756
        %1766 = vmatmul.bf16.gmra.mxu0 %v1753
        %v1767 = vpop.f32.mrf.mxu0
        %v1768 = vadd.f32 0.0, %v1767
        %v1769 = vpop.f32.mrf.mxu0
        %1770 = vdwg.mxu0
        %v1771 = vmul.f32 %v1768, 0.35355338
        %v1772 = vsel %vm1120, %v1771, -1e+09
        %v1773 = vsel %vm1207, %v1772, -inf
        %1774 = vmax.xlane.f32.xlu0 %v1773
        %v1775 = vpop.xlane.xlu0 %1774
        %v1776 = vsub.f32 %v1772, %v1775
        %v1777 = vmul.f32 %v1776, 1.442695
        %v1778 = vpow.pop %v1777
        %v1779 = vsel %vm1207, %v1778, 0.0
        %1780 = vadd.xlane.f32.xlu0 %v1779
        %v1781 = vpop.xlane.xlu0 %1780
        %v1782 = vrcp.pop %v1781
        %v1783 = vmul.f32 %v1781, %v1782
        %v1784 = vsub.f32 1.0, %v1783
        %v1785 = vmul.f32 %v1782, %v1784
        %v1786 = vadd.f32 %v1782, %v1785
        %vm1787 = vweird.f32 %v1781
        %vm1788 = vweird.f32 %v1782
        %vm1789 = vmor %vm1787, %vm1788
        %v1790 = vsel %vm1789, %v1782, %v1786
        %v1791 = vand.u32 2147483647, %v1781
        %vm1792 = vcmp.eq.f32.partialorder %v1791, 8.507059e+37
        %v1793 = vand.u32 %v1781, 2147483648
        %v1794 = vor.u32 1.1754944e-38, %v1793
        %v1795 = vsel %vm1792, %v1794, %v1790
        %v1796 = vmul.f32 %v1778, %v1795
        %v1797 = vpack.c.bf16 %v1796, %v1796
        %1798 = vrot.lane.b32.xlu0 %v1573, 48
        %v1799 = vpop.permute.xlu0 %1798
        %v1801 = vsel %vm1207, %v1797, 0
        %v1804 = vsel %vm1259, %v1799, 0
        %1806 = vmatpush.bf16.msra.mxu0 0
        %1807 = vmatpush.bf16.msra.mxu0 0
        %1808 = vmatpush.bf16.msra.mxu0 0
        %1809 = vmatpush.bf16.msra.mxu0 0
        %1810 = vmatpush.bf16.msra.mxu0 0
        %1811 = vmatpush.bf16.msra.mxu0 0
        %1812 = vmatpush.bf16.msra.mxu0 0
        %1813 = vmatpush.bf16.msra.mxu0 %v1804
        %1814 = vmatmul.bf16.gmra.mxu0 %v1801
        %v1815 = vpop.f32.mrf.mxu0
        %v1816 = vadd.f32 0.0, %v1815
        %v1817 = vpop.f32.mrf.mxu0
        %1818 = vdwg.mxu0
        %v1819 = vpack.c.bf16 %v1816, %v1816
        %v1821 = vsel %vm1207, %v1819, 0
        %1823 = vmatpush.bf16.msra.mxu0 0
        %1824 = vmatpush.bf16.msra.mxu0 0
        %1825 = vmatpush.bf16.msra.mxu0 0
        %1826 = vmatpush.bf16.msra.mxu0 0
        %1827 = vmatpush.bf16.msra.mxu0 0
        %1828 = vmatpush.bf16.msra.mxu0 0
        %1829 = vmatpush.bf16.msra.mxu0 0
        %1830 = vmatpush.bf16.msra.mxu0 %v1463
        %1831 = vmatmul.bf16.gmra.mxu0 %v1821
        %v1832 = vpop.f32.mrf.mxu0
        %v1833 = vadd.f32 0.0, %v1832
        %v1834 = vpop.f32.mrf.mxu0
        %1835 = vdwg.mxu0
        %v1836 = vadd.f32 %v1745, %v1833
        %1837 = vrot.lane.b32.xlu0 %v1573, 104
        %v1838 = vpop.permute.xlu0 %1837
        %1839 = vrot.lane.b32.xlu0 %v1573, 72
        %v1840 = vpop.permute.xlu0 %1839
        %v1842 = vsel %vm1207, %v1838, 0
        %v1845 = vsel %vm1207, %v1840, 0
        %1847 = vmatpush.bf16.xpose.msra.mxu0 0
        %1848 = vmatpush.bf16.xpose.msra.mxu0 0
        %1849 = vmatpush.bf16.xpose.msra.mxu0 0
        %1850 = vmatpush.bf16.xpose.msra.mxu0 0
        %1851 = vmatpush.bf16.xpose.msra.mxu0 0
        %1852 = vmatpush.bf16.xpose.msra.mxu0 0
        %1853 = vmatpush.bf16.xpose.msra.mxu0 0
        %1854 = vmatpush.bf16.xpose.msra.mxu0 %v1845
        %1855 = vmatmul.bf16.gmra.mxu0 %v1842
        %v1856 = vpop.f32.mrf.mxu0
        %v1857 = vadd.f32 0.0, %v1856
        %v1858 = vpop.f32.mrf.mxu0
        %1859 = vdwg.mxu0
        %v1860 = vmul.f32 %v1857, 0.35355338
        %v1861 = vsel %vm1120, %v1860, -1e+09
        %v1862 = vsel %vm1207, %v1861, -inf
        %1863 = vmax.xlane.f32.xlu0 %v1862
        %v1864 = vpop.xlane.xlu0 %1863
        %v1865 = vsub.f32 %v1861, %v1864
        %v1866 = vmul.f32 %v1865, 1.442695
        %v1867 = vpow.pop %v1866
        %v1868 = vsel %vm1207, %v1867, 0.0
        %1869 = vadd.xlane.f32.xlu0 %v1868
        %v1870 = vpop.xlane.xlu0 %1869
        %v1871 = vrcp.pop %v1870
        %v1872 = vmul.f32 %v1870, %v1871
        %v1873 = vsub.f32 1.0, %v1872
        %v1874 = vmul.f32 %v1871, %v1873
        %v1875 = vadd.f32 %v1871, %v1874
        %vm1876 = vweird.f32 %v1870
        %vm1877 = vweird.f32 %v1871
        %vm1878 = vmor %vm1876, %vm1877
        %v1879 = vsel %vm1878, %v1871, %v1875
        %v1880 = vand.u32 2147483647, %v1870
        %vm1881 = vcmp.eq.f32.partialorder %v1880, 8.507059e+37
        %v1882 = vand.u32 %v1870, 2147483648
        %v1883 = vor.u32 1.1754944e-38, %v1882
        %v1884 = vsel %vm1881, %v1883, %v1879
        %v1885 = vmul.f32 %v1867, %v1884
        %v1886 = vpack.c.bf16 %v1885, %v1885
        %1887 = vrot.lane.b32.xlu0 %v1573, 40
        %v1888 = vpop.permute.xlu0 %1887
        %v1890 = vsel %vm1207, %v1886, 0
        %v1893 = vsel %vm1259, %v1888, 0
        %1895 = vmatpush.bf16.msra.mxu0 0
        %1896 = vmatpush.bf16.msra.mxu0 0
        %1897 = vmatpush.bf16.msra.mxu0 0
        %1898 = vmatpush.bf16.msra.mxu0 0
        %1899 = vmatpush.bf16.msra.mxu0 0
        %1900 = vmatpush.bf16.msra.mxu0 0
        %1901 = vmatpush.bf16.msra.mxu0 0
        %1902 = vmatpush.bf16.msra.mxu0 %v1893
        %1903 = vmatmul.bf16.gmra.mxu0 %v1890
        %v1904 = vpop.f32.mrf.mxu0
        %v1905 = vadd.f32 0.0, %v1904
        %v1906 = vpop.f32.mrf.mxu0
        %1907 = vdwg.mxu0
        %v1908 = vpack.c.bf16 %v1905, %v1905
        %v1910 = vsel %vm1207, %v1908, 0
        %1912 = vmatpush.bf16.msra.mxu0 0
        %1913 = vmatpush.bf16.msra.mxu0 0
        %1914 = vmatpush.bf16.msra.mxu0 0
        %1915 = vmatpush.bf16.msra.mxu0 0
        %1916 = vmatpush.bf16.msra.mxu0 0
        %1917 = vmatpush.bf16.msra.mxu0 0
        %1918 = vmatpush.bf16.msra.mxu0 0
        %1919 = vmatpush.bf16.msra.mxu0 %v1555
        %1920 = vmatmul.bf16.gmra.mxu0 %v1910
        %v1921 = vpop.f32.mrf.mxu0
        %v1922 = vadd.f32 0.0, %v1921
        %v1923 = vpop.f32.mrf.mxu0
        %1924 = vdwg.mxu0
        %v1925 = vadd.f32 %v1836, %v1922
        %v1927 = vperm.slane %v1130, 0
        %v1929 = vadd.f32 %v1570, %v1927
        %v1930 = vadd.f32 %v1925, %v1927
        %v1931 = vadd.f32 %v1090, %v1929
        %v1932 = vadd.f32 %v1091, %v1930
        %v1933 = vsel %vm1182, %v1931, 0.0
        %1934 = vadd.xlane.f32.xlu0 %v1933
        %v1935 = vpop.xlane.xlu0 %1934
        %v1936 = vsel %vm1182, %v1932, 0.0
        %1937 = vadd.xlane.f32.xlu0 %v1936
        %v1938 = vpop.xlane.xlu0 %1937
        %v1939 = vrcp.pop 32.0
        %v1940 = vmul.f32 32.0, %v1939
        %v1941 = vsub.f32 1.0, %v1940
        %v1942 = vmul.f32 %v1939, %v1941
        %v1943 = vadd.f32 %v1939, %v1942
        %vm1944 = vweird.f32 %v1939
        %v1945 = vsel %vm1944, %v1939, %v1943
        %v1946 = vmul.f32 %v1935, %v1945
        %v1947 = vmul.f32 %v1938, %v1945
        %v1948 = vsub.f32 %v1931, %v1946
        %v1949 = vsub.f32 %v1932, %v1947
        %v1950 = vmul.f32 %v1948, %v1948
        %v1951 = vmul.f32 %v1949, %v1949
        %v1952 = vsel %vm1182, %v1950, 0.0
        %1953 = vadd.xlane.f32.xlu0 %v1952
        %v1954 = vpop.xlane.xlu0 %1953
        %v1955 = vsel %vm1182, %v1951, 0.0
        %1956 = vadd.xlane.f32.xlu0 %v1955
        %v1957 = vpop.xlane.xlu0 %1956
        %v1958 = vmul.f32 %v1954, %v1945
        %v1959 = vmul.f32 %v1957, %v1945
        %v1960 = vadd.f32 %v1958, 1e-05
        %v1961 = vadd.f32 %v1959, 1e-05
        %v1962 = vrsqrt.pop %v1960
        %v1963 = vmul.f32 %v1962, %v1960
        %v1964 = vmul.f32 %v1963, %v1962
        %v1965 = vmul.f32 0.5, %v1964
        %v1966 = vsub.f32 1.5, %v1965
        %v1967 = vmul.f32 %v1962, %v1966
        %vm1968 = vweird.f32 %v1960
        %vm1969 = vweird.f32 %v1962
        %vm1970 = vmor %vm1968, %vm1969
        %v1971 = vsel %vm1970, %v1962, %v1967
        %v1972 = vrsqrt.pop %v1961
        %v1973 = vmul.f32 %v1972, %v1961
        %v1974 = vmul.f32 %v1973, %v1972
        %v1975 = vmul.f32 0.5, %v1974
        %v1976 = vsub.f32 1.5, %v1975
        %v1977 = vmul.f32 %v1972, %v1976
        %vm1978 = vweird.f32 %v1961
        %vm1979 = vweird.f32 %v1972
        %vm1980 = vmor %vm1978, %vm1979
        %v1981 = vsel %vm1980, %v1972, %v1977
        %v1982 = vmul.f32 %v1948, %v1971
        %v1983 = vmul.f32 %v1949, %v1981
        %v1985 = vperm.slane %v1160, 0
        %v1987 = vmul.f32 %v1982, %v1985
        %v1988 = vmul.f32 %v1983, %v1985
        %v1990 = vperm.slane %v1161, 0
        %v1992 = vadd.f32 %v1987, %v1990
        %v1993 = vadd.f32 %v1988, %v1990
        %v1994 = vpack.c.bf16 %v1993, %v1992
        %v1996 = vperm.slane %v1135, 0
        %v2002 = vunpack.c.l.b16 %v1131
        %v2003 = vunpack.c.l.b16 %v1132
        %v2004 = vunpack.c.l.b16 %v1133
        %v2005 = vunpack.c.l.b16 %v1134
        %v2006 = vpack.c.b16 %v2003, %v2002
        %v2007 = vpack.c.b16 %v2005, %v2004
        %v2011 = vsel %vm1182, %v1994, 0
        %2013 = vmatpush.bf16.msra.mxu0 0
        %2014 = vmatpush.bf16.msra.mxu0 0
        %2015 = vmatpush.bf16.msra.mxu0 0
        %2016 = vmatpush.bf16.msra.mxu0 0
        %2017 = vmatpush.bf16.msra.mxu0 0
        %2018 = vmatpush.bf16.msra.mxu0 0
        %2019 = vmatpush.bf16.msra.mxu0 %v2007
        %2020 = vmatpush.bf16.msra.mxu0 %v2006
        %2021 = vmatmul.bf16.gmra.mxu0 %v2011
        %v2022 = vpop.f32.mrf.mxu0
        %v2023 = vadd.f32 %v1996, %v2022
        %v2024 = vpop.f32.mrf.mxu0
        %v2025 = vadd.f32 %v1996, %v2024
        %2026 = vdwg.mxu0
        %v2027 = vpack.c.bf16 %v1093, %v1092
        %v2029 = vperm.slane %v1140, 0
        %v2035 = vunpack.c.l.b16 %v1136
        %v2036 = vunpack.c.l.b16 %v1137
        %v2037 = vunpack.c.l.b16 %v1138
        %v2038 = vunpack.c.l.b16 %v1139
        %v2039 = vpack.c.b16 %v2036, %v2035
        %v2040 = vpack.c.b16 %v2038, %v2037
        %v2044 = vsel %vm1182, %v2027, 0
        %2046 = vmatpush.bf16.msra.mxu0 0
        %2047 = vmatpush.bf16.msra.mxu0 0
        %2048 = vmatpush.bf16.msra.mxu0 0
        %2049 = vmatpush.bf16.msra.mxu0 0
        %2050 = vmatpush.bf16.msra.mxu0 0
        %2051 = vmatpush.bf16.msra.mxu0 0
        %2052 = vmatpush.bf16.msra.mxu0 %v2040
        %2053 = vmatpush.bf16.msra.mxu0 %v2039
        %2054 = vmatmul.bf16.gmra.mxu0 %v2044
        %v2055 = vpop.f32.mrf.mxu0
        %v2056 = vadd.f32 %v2029, %v2055
        %v2057 = vpop.f32.mrf.mxu0
        %v2058 = vadd.f32 %v2029, %v2057
        %2059 = vdwg.mxu0
        %v2060 = vpack.c.bf16 %v2023, %v2023
        %v2061 = vpack.c.bf16 %v2025, %v2025
        %v2062 = vpack.c.bf16 %v2056, %v2056
        %v2063 = vpack.c.bf16 %v2058, %v2058
        %v2065 = vsel %vm1207, %v2060, 0
        %v2068 = vsel %vm1207, %v2062, 0
        %2070 = vmatpush.bf16.xpose.msra.mxu0 0
        %2071 = vmatpush.bf16.xpose.msra.mxu0 0
        %2072 = vmatpush.bf16.xpose.msra.mxu0 0
        %2073 = vmatpush.bf16.xpose.msra.mxu0 0
        %2074 = vmatpush.bf16.xpose.msra.mxu0 0
        %2075 = vmatpush.bf16.xpose.msra.mxu0 0
        %2076 = vmatpush.bf16.xpose.msra.mxu0 0
        %2077 = vmatpush.bf16.xpose.msra.mxu0 %v2068
        %2078 = vmatmul.bf16.gmra.mxu0 %v2065
        %v2079 = vpop.f32.mrf.mxu0
        %v2080 = vadd.f32 0.0, %v2079
        %v2081 = vpop.f32.mrf.mxu0
        %2082 = vdwg.mxu0
        %v2083 = vmul.f32 %v2080, 0.35355338
        %v2084 = vsel %vm1100, 1, 0
        %v2085 = vperm.slane %v2084, 0
        %vm2086 = vcmp.eq.s32.totalorder %v2085, 1
        %v2087 = vsel %vm2086, %v2083, -1e+09
        %v2088 = vsel %vm1207, %v2087, -inf
        %2089 = vmax.xlane.f32.xlu0 %v2088
        %v2090 = vpop.xlane.xlu0 %2089
        %v2091 = vsub.f32 %v2087, %v2090
        %v2092 = vmul.f32 %v2091, 1.442695
        %v2093 = vpow.pop %v2092
        %v2094 = vsel %vm1207, %v2093, 0.0
        %2095 = vadd.xlane.f32.xlu0 %v2094
        %v2096 = vpop.xlane.xlu0 %2095
        %v2097 = vrcp.pop %v2096
        %v2098 = vmul.f32 %v2096, %v2097
        %v2099 = vsub.f32 1.0, %v2098
        %v2100 = vmul.f32 %v2097, %v2099
        %v2101 = vadd.f32 %v2097, %v2100
        %vm2102 = vweird.f32 %v2096
        %vm2103 = vweird.f32 %v2097
        %vm2104 = vmor %vm2102, %vm2103
        %v2105 = vsel %vm2104, %v2097, %v2101
        %v2106 = vand.u32 2147483647, %v2096
        %vm2107 = vcmp.eq.f32.partialorder %v2106, 8.507059e+37
        %v2108 = vand.u32 %v2096, 2147483648
        %v2109 = vor.u32 1.1754944e-38, %v2108
        %v2110 = vsel %vm2107, %v2109, %v2105
        %v2111 = vmul.f32 %v2093, %v2110
        %v2112 = vpack.c.bf16 %v2111, %v2111
        %v2114 = vunpack.c.l.b16 %v2062
        %v2115 = vpack.c.b16 %v2114, %v2114
        %2116 = vrot.lane.b32.xlu0 %v2115, 96
        %v2117 = vpop.permute.xlu0 %2116
        %v2119 = vsel %vm1207, %v2112, 0
        %v2122 = vsel %vm1259, %v2117, 0
        %2124 = vmatpush.bf16.msra.mxu0 0
        %2125 = vmatpush.bf16.msra.mxu0 0
        %2126 = vmatpush.bf16.msra.mxu0 0
        %2127 = vmatpush.bf16.msra.mxu0 0
        %2128 = vmatpush.bf16.msra.mxu0 0
        %2129 = vmatpush.bf16.msra.mxu0 0
        %2130 = vmatpush.bf16.msra.mxu0 0
        %2131 = vmatpush.bf16.msra.mxu0 %v2122
        %2132 = vmatmul.bf16.gmra.mxu0 %v2119
        %v2133 = vpop.f32.mrf.mxu0
        %v2134 = vadd.f32 0.0, %v2133
        %v2135 = vpop.f32.mrf.mxu0
        %2136 = vdwg.mxu0
        %v2137 = vpack.c.bf16 %v2134, %v2134
        %v2139 = vunpack.c.l.b16 %v2060
        %v2140 = vpack.c.b16 %v2139, %v2139
        %2141 = vrot.lane.b32.xlu0 %v2140, 120
        %v2142 = vpop.permute.xlu0 %2141
        %2143 = vrot.lane.b32.xlu0 %v2115, 120
        %v2144 = vpop.permute.xlu0 %2143
        %v2146 = vsel %vm1207, %v2142, 0
        %v2149 = vsel %vm1207, %v2144, 0
        %2151 = vmatpush.bf16.xpose.msra.mxu0 0
        %2152 = vmatpush.bf16.xpose.msra.mxu0 0
        %2153 = vmatpush.bf16.xpose.msra.mxu0 0
        %2154 = vmatpush.bf16.xpose.msra.mxu0 0
        %2155 = vmatpush.bf16.xpose.msra.mxu0 0
        %2156 = vmatpush.bf16.xpose.msra.mxu0 0
        %2157 = vmatpush.bf16.xpose.msra.mxu0 0
        %2158 = vmatpush.bf16.xpose.msra.mxu0 %v2149
        %2159 = vmatmul.bf16.gmra.mxu0 %v2146
        %v2160 = vpop.f32.mrf.mxu0
        %v2161 = vadd.f32 0.0, %v2160
        %v2162 = vpop.f32.mrf.mxu0
        %2163 = vdwg.mxu0
        %v2164 = vmul.f32 %v2161, 0.35355338
        %v2165 = vsel %vm2086, %v2164, -1e+09
        %v2166 = vsel %vm1207, %v2165, -inf
        %2167 = vmax.xlane.f32.xlu0 %v2166
        %v2168 = vpop.xlane.xlu0 %2167
        %v2169 = vsub.f32 %v2165, %v2168
        %v2170 = vmul.f32 %v2169, 1.442695
        %v2171 = vpow.pop %v2170
        %v2172 = vsel %vm1207, %v2171, 0.0
        %2173 = vadd.xlane.f32.xlu0 %v2172
        %v2174 = vpop.xlane.xlu0 %2173
        %v2175 = vrcp.pop %v2174
        %v2176 = vmul.f32 %v2174, %v2175
        %v2177 = vsub.f32 1.0, %v2176
        %v2178 = vmul.f32 %v2175, %v2177
        %v2179 = vadd.f32 %v2175, %v2178
        %vm2180 = vweird.f32 %v2174
        %vm2181 = vweird.f32 %v2175
        %vm2182 = vmor %vm2180, %vm2181
        %v2183 = vsel %vm2182, %v2175, %v2179
        %v2184 = vand.u32 2147483647, %v2174
        %vm2185 = vcmp.eq.f32.partialorder %v2184, 8.507059e+37
        %v2186 = vand.u32 %v2174, 2147483648
        %v2187 = vor.u32 1.1754944e-38, %v2186
        %v2188 = vsel %vm2185, %v2187, %v2183
        %v2189 = vmul.f32 %v2171, %v2188
        %v2190 = vpack.c.bf16 %v2189, %v2189
        %2191 = vrot.lane.b32.xlu0 %v2115, 88
        %v2192 = vpop.permute.xlu0 %2191
        %v2194 = vsel %vm1207, %v2190, 0
        %v2197 = vsel %vm1259, %v2192, 0
        %2199 = vmatpush.bf16.msra.mxu0 0
        %2200 = vmatpush.bf16.msra.mxu0 0
        %2201 = vmatpush.bf16.msra.mxu0 0
        %2202 = vmatpush.bf16.msra.mxu0 0
        %2203 = vmatpush.bf16.msra.mxu0 0
        %2204 = vmatpush.bf16.msra.mxu0 0
        %2205 = vmatpush.bf16.msra.mxu0 0
        %2206 = vmatpush.bf16.msra.mxu0 %v2197
        %2207 = vmatmul.bf16.gmra.mxu0 %v2194
        %v2208 = vpop.f32.mrf.mxu0
        %v2209 = vadd.f32 0.0, %v2208
        %v2210 = vpop.f32.mrf.mxu0
        %2211 = vdwg.mxu0
        %v2212 = vpack.c.bf16 %v2209, %v2209
        %v2214 = vsel %vm1207, %v2212, 0
        %v2217 = vsel %vm1259, %v1142, 0
        %2219 = vmatpush.bf16.msra.mxu0 0
        %2220 = vmatpush.bf16.msra.mxu0 0
        %2221 = vmatpush.bf16.msra.mxu0 0
        %2222 = vmatpush.bf16.msra.mxu0 0
        %2223 = vmatpush.bf16.msra.mxu0 0
        %2224 = vmatpush.bf16.msra.mxu0 0
        %2225 = vmatpush.bf16.msra.mxu0 0
        %2226 = vmatpush.bf16.msra.mxu0 %v2217
        %2227 = vmatmul.bf16.gmra.mxu0 %v2214
        %v2228 = vpop.f32.mrf.mxu0
        %v2229 = vadd.f32 0.0, %v2228
        %v2230 = vpop.f32.mrf.mxu0
        %2231 = vdwg.mxu0
        %v2233 = vsel %vm1207, %v2137, 0
        %v2236 = vsel %vm1259, %v1141, 0
        %2238 = vmatpush.bf16.msra.mxu0 0
        %2239 = vmatpush.bf16.msra.mxu0 0
        %2240 = vmatpush.bf16.msra.mxu0 0
        %2241 = vmatpush.bf16.msra.mxu0 0
        %2242 = vmatpush.bf16.msra.mxu0 0
        %2243 = vmatpush.bf16.msra.mxu0 0
        %2244 = vmatpush.bf16.msra.mxu0 0
        %2245 = vmatpush.bf16.msra.mxu0 %v2236
        %2246 = vmatmul.bf16.gmra.mxu0 %v2233
        %v2247 = vpop.f32.mrf.mxu0
        %v2248 = vadd.f32 %v2229, %v2247
        %v2249 = vpop.f32.mrf.mxu0
        %2250 = vdwg.mxu0
        %2251 = vrot.lane.b32.xlu0 %v2140, 112
        %v2252 = vpop.permute.xlu0 %2251
        %2253 = vrot.lane.b32.xlu0 %v2115, 112
        %v2254 = vpop.permute.xlu0 %2253
        %v2256 = vsel %vm1207, %v2252, 0
        %v2259 = vsel %vm1207, %v2254, 0
        %2261 = vmatpush.bf16.xpose.msra.mxu0 0
        %2262 = vmatpush.bf16.xpose.msra.mxu0 0
        %2263 = vmatpush.bf16.xpose.msra.mxu0 0
        %2264 = vmatpush.bf16.xpose.msra.mxu0 0
        %2265 = vmatpush.bf16.xpose.msra.mxu0 0
        %2266 = vmatpush.bf16.xpose.msra.mxu0 0
        %2267 = vmatpush.bf16.xpose.msra.mxu0 0
        %2268 = vmatpush.bf16.xpose.msra.mxu0 %v2259
        %2269 = vmatmul.bf16.gmra.mxu0 %v2256
        %v2270 = vpop.f32.mrf.mxu0
        %v2271 = vadd.f32 0.0, %v2270
        %v2272 = vpop.f32.mrf.mxu0
        %2273 = vdwg.mxu0
        %v2274 = vmul.f32 %v2271, 0.35355338
        %v2275 = vsel %vm2086, %v2274, -1e+09
        %v2276 = vsel %vm1207, %v2275, -inf
        %2277 = vmax.xlane.f32.xlu0 %v2276
        %v2278 = vpop.xlane.xlu0 %2277
        %v2279 = vsub.f32 %v2275, %v2278
        %v2280 = vmul.f32 %v2279, 1.442695
        %v2281 = vpow.pop %v2280
        %v2282 = vsel %vm1207, %v2281, 0.0
        %2283 = vadd.xlane.f32.xlu0 %v2282
        %v2284 = vpop.xlane.xlu0 %2283
        %v2285 = vrcp.pop %v2284
        %v2286 = vmul.f32 %v2284, %v2285
        %v2287 = vsub.f32 1.0, %v2286
        %v2288 = vmul.f32 %v2285, %v2287
        %v2289 = vadd.f32 %v2285, %v2288
        %vm2290 = vweird.f32 %v2284
        %vm2291 = vweird.f32 %v2285
        %vm2292 = vmor %vm2290, %vm2291
        %v2293 = vsel %vm2292, %v2285, %v2289
        %v2294 = vand.u32 2147483647, %v2284
        %vm2295 = vcmp.eq.f32.partialorder %v2294, 8.507059e+37
        %v2296 = vand.u32 %v2284, 2147483648
        %v2297 = vor.u32 1.1754944e-38, %v2296
        %v2298 = vsel %vm2295, %v2297, %v2293
        %v2299 = vmul.f32 %v2281, %v2298
        %v2300 = vpack.c.bf16 %v2299, %v2299
        %2301 = vrot.lane.b32.xlu0 %v2115, 80
        %v2302 = vpop.permute.xlu0 %2301
        %v2304 = vsel %vm1207, %v2300, 0
        %v2307 = vsel %vm1259, %v2302, 0
        %2309 = vmatpush.bf16.msra.mxu0 0
        %2310 = vmatpush.bf16.msra.mxu0 0
        %2311 = vmatpush.bf16.msra.mxu0 0
        %2312 = vmatpush.bf16.msra.mxu0 0
        %2313 = vmatpush.bf16.msra.mxu0 0
        %2314 = vmatpush.bf16.msra.mxu0 0
        %2315 = vmatpush.bf16.msra.mxu0 0
        %2316 = vmatpush.bf16.msra.mxu0 %v2307
        %2317 = vmatmul.bf16.gmra.mxu0 %v2304
        %v2318 = vpop.f32.mrf.mxu0
        %v2319 = vadd.f32 0.0, %v2318
        %v2320 = vpop.f32.mrf.mxu0
        %2321 = vdwg.mxu0
        %v2322 = vpack.c.bf16 %v2319, %v2319
        %v2324 = vsel %vm1207, %v2322, 0
        %v2327 = vsel %vm1259, %v1143, 0
        %2329 = vmatpush.bf16.msra.mxu0 0
        %2330 = vmatpush.bf16.msra.mxu0 0
        %2331 = vmatpush.bf16.msra.mxu0 0
        %2332 = vmatpush.bf16.msra.mxu0 0
        %2333 = vmatpush.bf16.msra.mxu0 0
        %2334 = vmatpush.bf16.msra.mxu0 0
        %2335 = vmatpush.bf16.msra.mxu0 0
        %2336 = vmatpush.bf16.msra.mxu0 %v2327
        %2337 = vmatmul.bf16.gmra.mxu0 %v2324
        %v2338 = vpop.f32.mrf.mxu0
        %v2339 = vadd.f32 0.0, %v2338
        %v2340 = vpop.f32.mrf.mxu0
        %2341 = vdwg.mxu0
        %v2342 = vadd.f32 %v2248, %v2339
        %2343 = vrot.lane.b32.xlu0 %v2140, 104
        %v2344 = vpop.permute.xlu0 %2343
        %2345 = vrot.lane.b32.xlu0 %v2115, 104
        %v2346 = vpop.permute.xlu0 %2345
        %v2348 = vsel %vm1207, %v2344, 0
        %v2351 = vsel %vm1207, %v2346, 0
        %2353 = vmatpush.bf16.xpose.msra.mxu0 0
        %2354 = vmatpush.bf16.xpose.msra.mxu0 0
        %2355 = vmatpush.bf16.xpose.msra.mxu0 0
        %2356 = vmatpush.bf16.xpose.msra.mxu0 0
        %2357 = vmatpush.bf16.xpose.msra.mxu0 0
        %2358 = vmatpush.bf16.xpose.msra.mxu0 0
        %2359 = vmatpush.bf16.xpose.msra.mxu0 0
        %2360 = vmatpush.bf16.xpose.msra.mxu0 %v2351
        %2361 = vmatmul.bf16.gmra.mxu0 %v2348
        %v2362 = vpop.f32.mrf.mxu0
        %v2363 = vadd.f32 0.0, %v2362
        %v2364 = vpop.f32.mrf.mxu0
        %2365 = vdwg.mxu0
        %v2366 = vmul.f32 %v2363, 0.35355338
        %v2367 = vsel %vm2086, %v2366, -1e+09
        %v2368 = vsel %vm1207, %v2367, -inf
        %2369 = vmax.xlane.f32.xlu0 %v2368
        %v2370 = vpop.xlane.xlu0 %2369
        %v2371 = vsub.f32 %v2367, %v2370
        %v2372 = vmul.f32 %v2371, 1.442695
        %v2373 = vpow.pop %v2372
        %v2374 = vsel %vm1207, %v2373, 0.0
        %2375 = vadd.xlane.f32.xlu0 %v2374
        %v2376 = vpop.xlane.xlu0 %2375
        %v2377 = vrcp.pop %v2376
        %v2378 = vmul.f32 %v2376, %v2377
        %v2379 = vsub.f32 1.0, %v2378
        %v2380 = vmul.f32 %v2377, %v2379
        %v2381 = vadd.f32 %v2377, %v2380
        %vm2382 = vweird.f32 %v2376
        %vm2383 = vweird.f32 %v2377
        %vm2384 = vmor %vm2382, %vm2383
        %v2385 = vsel %vm2384, %v2377, %v2381
        %v2386 = vand.u32 2147483647, %v2376
        %vm2387 = vcmp.eq.f32.partialorder %v2386, 8.507059e+37
        %v2388 = vand.u32 %v2376, 2147483648
        %v2389 = vor.u32 1.1754944e-38, %v2388
        %v2390 = vsel %vm2387, %v2389, %v2385
        %v2391 = vmul.f32 %v2373, %v2390
        %v2392 = vpack.c.bf16 %v2391, %v2391
        %2393 = vrot.lane.b32.xlu0 %v2115, 72
        %v2394 = vpop.permute.xlu0 %2393
        %v2396 = vsel %vm1207, %v2392, 0
        %v2399 = vsel %vm1259, %v2394, 0
        %2401 = vmatpush.bf16.msra.mxu0 0
        %2402 = vmatpush.bf16.msra.mxu0 0
        %2403 = vmatpush.bf16.msra.mxu0 0
        %2404 = vmatpush.bf16.msra.mxu0 0
        %2405 = vmatpush.bf16.msra.mxu0 0
        %2406 = vmatpush.bf16.msra.mxu0 0
        %2407 = vmatpush.bf16.msra.mxu0 0
        %2408 = vmatpush.bf16.msra.mxu0 %v2399
        %2409 = vmatmul.bf16.gmra.mxu0 %v2396
        %v2410 = vpop.f32.mrf.mxu0
        %v2411 = vadd.f32 0.0, %v2410
        %v2412 = vpop.f32.mrf.mxu0
        %2413 = vdwg.mxu0
        %v2414 = vpack.c.bf16 %v2411, %v2411
        %v2416 = vsel %vm1207, %v2414, 0
        %v2419 = vsel %vm1259, %v1144, 0
        %2421 = vmatpush.bf16.msra.mxu0 0
        %2422 = vmatpush.bf16.msra.mxu0 0
        %2423 = vmatpush.bf16.msra.mxu0 0
        %2424 = vmatpush.bf16.msra.mxu0 0
        %2425 = vmatpush.bf16.msra.mxu0 0
        %2426 = vmatpush.bf16.msra.mxu0 0
        %2427 = vmatpush.bf16.msra.mxu0 0
        %2428 = vmatpush.bf16.msra.mxu0 %v2419
        %2429 = vmatmul.bf16.gmra.mxu0 %v2416
        %v2430 = vpop.f32.mrf.mxu0
        %v2431 = vadd.f32 0.0, %v2430
        %v2432 = vpop.f32.mrf.mxu0
        %2433 = vdwg.mxu0
        %v2434 = vadd.f32 %v2342, %v2431
        %v2436 = vsel %vm1207, %v2061, 0
        %v2439 = vsel %vm1207, %v2063, 0
        %2441 = vmatpush.bf16.xpose.msra.mxu0 0
        %2442 = vmatpush.bf16.xpose.msra.mxu0 0
        %2443 = vmatpush.bf16.xpose.msra.mxu0 0
        %2444 = vmatpush.bf16.xpose.msra.mxu0 0
        %2445 = vmatpush.bf16.xpose.msra.mxu0 0
        %2446 = vmatpush.bf16.xpose.msra.mxu0 0
        %2447 = vmatpush.bf16.xpose.msra.mxu0 0
        %2448 = vmatpush.bf16.xpose.msra.mxu0 %v2439
        %2449 = vmatmul.bf16.gmra.mxu0 %v2436
        %v2450 = vpop.f32.mrf.mxu0
        %v2451 = vadd.f32 0.0, %v2450
        %v2452 = vpop.f32.mrf.mxu0
        %2453 = vdwg.mxu0
        %v2454 = vmul.f32 %v2451, 0.35355338
        %v2455 = vsel %vm1103, 1, 0
        %v2456 = vperm.slane %v2455, 0
        %vm2457 = vcmp.eq.s32.totalorder %v2456, 1
        %v2458 = vsel %vm2457, %v2454, -1e+09
        %v2459 = vsel %vm1207, %v2458, -inf
        %2460 = vmax.xlane.f32.xlu0 %v2459
        %v2461 = vpop.xlane.xlu0 %2460
        %v2462 = vsub.f32 %v2458, %v2461
        %v2463 = vmul.f32 %v2462, 1.442695
        %v2464 = vpow.pop %v2463
        %v2465 = vsel %vm1207, %v2464, 0.0
        %2466 = vadd.xlane.f32.xlu0 %v2465
        %v2467 = vpop.xlane.xlu0 %2466
        %v2468 = vrcp.pop %v2467
        %v2469 = vmul.f32 %v2467, %v2468
        %v2470 = vsub.f32 1.0, %v2469
        %v2471 = vmul.f32 %v2468, %v2470
        %v2472 = vadd.f32 %v2468, %v2471
        %vm2473 = vweird.f32 %v2467
        %vm2474 = vweird.f32 %v2468
        %vm2475 = vmor %vm2473, %vm2474
        %v2476 = vsel %vm2475, %v2468, %v2472
        %v2477 = vand.u32 2147483647, %v2467
        %vm2478 = vcmp.eq.f32.partialorder %v2477, 8.507059e+37
        %v2479 = vand.u32 %v2467, 2147483648
        %v2480 = vor.u32 1.1754944e-38, %v2479
        %v2481 = vsel %vm2478, %v2480, %v2476
        %v2482 = vmul.f32 %v2464, %v2481
        %v2483 = vpack.c.bf16 %v2482, %v2482
        %v2485 = vunpack.c.l.b16 %v2063
        %v2486 = vpack.c.b16 %v2485, %v2485
        %2487 = vrot.lane.b32.xlu0 %v2486, 96
        %v2488 = vpop.permute.xlu0 %2487
        %v2490 = vsel %vm1207, %v2483, 0
        %v2493 = vsel %vm1259, %v2488, 0
        %2495 = vmatpush.bf16.msra.mxu0 0
        %2496 = vmatpush.bf16.msra.mxu0 0
        %2497 = vmatpush.bf16.msra.mxu0 0
        %2498 = vmatpush.bf16.msra.mxu0 0
        %2499 = vmatpush.bf16.msra.mxu0 0
        %2500 = vmatpush.bf16.msra.mxu0 0
        %2501 = vmatpush.bf16.msra.mxu0 0
        %2502 = vmatpush.bf16.msra.mxu0 %v2493
        %2503 = vmatmul.bf16.gmra.mxu0 %v2490
        %v2504 = vpop.f32.mrf.mxu0
        %v2505 = vadd.f32 0.0, %v2504
        %v2506 = vpop.f32.mrf.mxu0
        %2507 = vdwg.mxu0
        %v2508 = vpack.c.bf16 %v2505, %v2505
        %v2510 = vunpack.c.l.b16 %v2061
        %v2511 = vpack.c.b16 %v2510, %v2510
        %2512 = vrot.lane.b32.xlu0 %v2511, 120
        %v2513 = vpop.permute.xlu0 %2512
        %2514 = vrot.lane.b32.xlu0 %v2486, 120
        %v2515 = vpop.permute.xlu0 %2514
        %v2517 = vsel %vm1207, %v2513, 0
        %v2520 = vsel %vm1207, %v2515, 0
        %2522 = vmatpush.bf16.xpose.msra.mxu0 0
        %2523 = vmatpush.bf16.xpose.msra.mxu0 0
        %2524 = vmatpush.bf16.xpose.msra.mxu0 0
        %2525 = vmatpush.bf16.xpose.msra.mxu0 0
        %2526 = vmatpush.bf16.xpose.msra.mxu0 0
        %2527 = vmatpush.bf16.xpose.msra.mxu0 0
        %2528 = vmatpush.bf16.xpose.msra.mxu0 0
        %2529 = vmatpush.bf16.xpose.msra.mxu0 %v2520
        %2530 = vmatmul.bf16.gmra.mxu0 %v2517
        %v2531 = vpop.f32.mrf.mxu0
        %v2532 = vadd.f32 0.0, %v2531
        %v2533 = vpop.f32.mrf.mxu0
        %2534 = vdwg.mxu0
        %v2535 = vmul.f32 %v2532, 0.35355338
        %v2536 = vsel %vm2457, %v2535, -1e+09
        %v2537 = vsel %vm1207, %v2536, -inf
        %2538 = vmax.xlane.f32.xlu0 %v2537
        %v2539 = vpop.xlane.xlu0 %2538
        %v2540 = vsub.f32 %v2536, %v2539
        %v2541 = vmul.f32 %v2540, 1.442695
        %v2542 = vpow.pop %v2541
        %v2543 = vsel %vm1207, %v2542, 0.0
        %2544 = vadd.xlane.f32.xlu0 %v2543
        %v2545 = vpop.xlane.xlu0 %2544
        %v2546 = vrcp.pop %v2545
        %v2547 = vmul.f32 %v2545, %v2546
        %v2548 = vsub.f32 1.0, %v2547
        %v2549 = vmul.f32 %v2546, %v2548
        %v2550 = vadd.f32 %v2546, %v2549
        %vm2551 = vweird.f32 %v2545
        %vm2552 = vweird.f32 %v2546
        %vm2553 = vmor %vm2551, %vm2552
        %v2554 = vsel %vm2553, %v2546, %v2550
        %v2555 = vand.u32 2147483647, %v2545
        %vm2556 = vcmp.eq.f32.partialorder %v2555, 8.507059e+37
        %v2557 = vand.u32 %v2545, 2147483648
        %v2558 = vor.u32 1.1754944e-38, %v2557
        %v2559 = vsel %vm2556, %v2558, %v2554
        %v2560 = vmul.f32 %v2542, %v2559
        %v2561 = vpack.c.bf16 %v2560, %v2560
        %2562 = vrot.lane.b32.xlu0 %v2486, 88
        %v2563 = vpop.permute.xlu0 %2562
        %v2565 = vsel %vm1207, %v2561, 0
        %v2568 = vsel %vm1259, %v2563, 0
        %2570 = vmatpush.bf16.msra.mxu0 0
        %2571 = vmatpush.bf16.msra.mxu0 0
        %2572 = vmatpush.bf16.msra.mxu0 0
        %2573 = vmatpush.bf16.msra.mxu0 0
        %2574 = vmatpush.bf16.msra.mxu0 0
        %2575 = vmatpush.bf16.msra.mxu0 0
        %2576 = vmatpush.bf16.msra.mxu0 0
        %2577 = vmatpush.bf16.msra.mxu0 %v2568
        %2578 = vmatmul.bf16.gmra.mxu0 %v2565
        %v2579 = vpop.f32.mrf.mxu0
        %v2580 = vadd.f32 0.0, %v2579
        %v2581 = vpop.f32.mrf.mxu0
        %2582 = vdwg.mxu0
        %v2583 = vpack.c.bf16 %v2580, %v2580
        %v2585 = vsel %vm1207, %v2583, 0
        %2587 = vmatpush.bf16.msra.mxu0 0
        %2588 = vmatpush.bf16.msra.mxu0 0
        %2589 = vmatpush.bf16.msra.mxu0 0
        %2590 = vmatpush.bf16.msra.mxu0 0
        %2591 = vmatpush.bf16.msra.mxu0 0
        %2592 = vmatpush.bf16.msra.mxu0 0
        %2593 = vmatpush.bf16.msra.mxu0 0
        %2594 = vmatpush.bf16.msra.mxu0 %v2217
        %2595 = vmatmul.bf16.gmra.mxu0 %v2585
        %v2596 = vpop.f32.mrf.mxu0
        %v2597 = vadd.f32 0.0, %v2596
        %v2598 = vpop.f32.mrf.mxu0
        %2599 = vdwg.mxu0
        %v2601 = vsel %vm1207, %v2508, 0
        %2603 = vmatpush.bf16.msra.mxu0 0
        %2604 = vmatpush.bf16.msra.mxu0 0
        %2605 = vmatpush.bf16.msra.mxu0 0
        %2606 = vmatpush.bf16.msra.mxu0 0
        %2607 = vmatpush.bf16.msra.mxu0 0
        %2608 = vmatpush.bf16.msra.mxu0 0
        %2609 = vmatpush.bf16.msra.mxu0 0
        %2610 = vmatpush.bf16.msra.mxu0 %v2236
        %2611 = vmatmul.bf16.gmra.mxu0 %v2601
        %v2612 = vpop.f32.mrf.mxu0
        %v2613 = vadd.f32 %v2597, %v2612
        %v2614 = vpop.f32.mrf.mxu0
        %2615 = vdwg.mxu0
        %2616 = vrot.lane.b32.xlu0 %v2511, 112
        %v2617 = vpop.permute.xlu0 %2616
        %2618 = vrot.lane.b32.xlu0 %v2486, 112
        %v2619 = vpop.permute.xlu0 %2618
        %v2621 = vsel %vm1207, %v2617, 0
        %v2624 = vsel %vm1207, %v2619, 0
        %2626 = vmatpush.bf16.xpose.msra.mxu0 0
        %2627 = vmatpush.bf16.xpose.msra.mxu0 0
        %2628 = vmatpush.bf16.xpose.msra.mxu0 0
        %2629 = vmatpush.bf16.xpose.msra.mxu0 0
        %2630 = vmatpush.bf16.xpose.msra.mxu0 0
        %2631 = vmatpush.bf16.xpose.msra.mxu0 0
        %2632 = vmatpush.bf16.xpose.msra.mxu0 0
        %2633 = vmatpush.bf16.xpose.msra.mxu0 %v2624
        %2634 = vmatmul.bf16.gmra.mxu0 %v2621
        %v2635 = vpop.f32.mrf.mxu0
        %v2636 = vadd.f32 0.0, %v2635
        %v2637 = vpop.f32.mrf.mxu0
        %2638 = vdwg.mxu0
        %v2639 = vmul.f32 %v2636, 0.35355338
        %v2640 = vsel %vm2457, %v2639, -1e+09
        %v2641 = vsel %vm1207, %v2640, -inf
        %2642 = vmax.xlane.f32.xlu0 %v2641
        %v2643 = vpop.xlane.xlu0 %2642
        %v2644 = vsub.f32 %v2640, %v2643
        %v2645 = vmul.f32 %v2644, 1.442695
        %v2646 = vpow.pop %v2645
        %v2647 = vsel %vm1207, %v2646, 0.0
        %2648 = vadd.xlane.f32.xlu0 %v2647
        %v2649 = vpop.xlane.xlu0 %2648
        %v2650 = vrcp.pop %v2649
        %v2651 = vmul.f32 %v2649, %v2650
        %v2652 = vsub.f32 1.0, %v2651
        %v2653 = vmul.f32 %v2650, %v2652
        %v2654 = vadd.f32 %v2650, %v2653
        %vm2655 = vweird.f32 %v2649
        %vm2656 = vweird.f32 %v2650
        %vm2657 = vmor %vm2655, %vm2656
        %v2658 = vsel %vm2657, %v2650, %v2654
        %v2659 = vand.u32 2147483647, %v2649
        %vm2660 = vcmp.eq.f32.partialorder %v2659, 8.507059e+37
        %v2661 = vand.u32 %v2649, 2147483648
        %v2662 = vor.u32 1.1754944e-38, %v2661
        %v2663 = vsel %vm2660, %v2662, %v2658
        %v2664 = vmul.f32 %v2646, %v2663
        %v2665 = vpack.c.bf16 %v2664, %v2664
        %2666 = vrot.lane.b32.xlu0 %v2486, 80
        %v2667 = vpop.permute.xlu0 %2666
        %v2669 = vsel %vm1207, %v2665, 0
        %v2672 = vsel %vm1259, %v2667, 0
        %2674 = vmatpush.bf16.msra.mxu0 0
        %2675 = vmatpush.bf16.msra.mxu0 0
        %2676 = vmatpush.bf16.msra.mxu0 0
        %2677 = vmatpush.bf16.msra.mxu0 0
        %2678 = vmatpush.bf16.msra.mxu0 0
        %2679 = vmatpush.bf16.msra.mxu0 0
        %2680 = vmatpush.bf16.msra.mxu0 0
        %2681 = vmatpush.bf16.msra.mxu0 %v2672
        %2682 = vmatmul.bf16.gmra.mxu0 %v2669
        %v2683 = vpop.f32.mrf.mxu0
        %v2684 = vadd.f32 0.0, %v2683
        %v2685 = vpop.f32.mrf.mxu0
        %2686 = vdwg.mxu0
        %v2687 = vpack.c.bf16 %v2684, %v2684
        %v2689 = vsel %vm1207, %v2687, 0
        %2691 = vmatpush.bf16.msra.mxu0 0
        %2692 = vmatpush.bf16.msra.mxu0 0
        %2693 = vmatpush.bf16.msra.mxu0 0
        %2694 = vmatpush.bf16.msra.mxu0 0
        %2695 = vmatpush.bf16.msra.mxu0 0
        %2696 = vmatpush.bf16.msra.mxu0 0
        %2697 = vmatpush.bf16.msra.mxu0 0
        %2698 = vmatpush.bf16.msra.mxu0 %v2327
        %2699 = vmatmul.bf16.gmra.mxu0 %v2689
        %v2700 = vpop.f32.mrf.mxu0
        %v2701 = vadd.f32 0.0, %v2700
        %v2702 = vpop.f32.mrf.mxu0
        %2703 = vdwg.mxu0
        %v2704 = vadd.f32 %v2613, %v2701
        %2705 = vrot.lane.b32.xlu0 %v2511, 104
        %v2706 = vpop.permute.xlu0 %2705
        %2707 = vrot.lane.b32.xlu0 %v2486, 104
        %v2708 = vpop.permute.xlu0 %2707
        %v2710 = vsel %vm1207, %v2706, 0
        %v2713 = vsel %vm1207, %v2708, 0
        %2715 = vmatpush.bf16.xpose.msra.mxu0 0
        %2716 = vmatpush.bf16.xpose.msra.mxu0 0
        %2717 = vmatpush.bf16.xpose.msra.mxu0 0
        %2718 = vmatpush.bf16.xpose.msra.mxu0 0
        %2719 = vmatpush.bf16.xpose.msra.mxu0 0
        %2720 = vmatpush.bf16.xpose.msra.mxu0 0
        %2721 = vmatpush.bf16.xpose.msra.mxu0 0
        %2722 = vmatpush.bf16.xpose.msra.mxu0 %v2713
        %2723 = vmatmul.bf16.gmra.mxu0 %v2710
        %v2724 = vpop.f32.mrf.mxu0
        %v2725 = vadd.f32 0.0, %v2724
        %v2726 = vpop.f32.mrf.mxu0
        %2727 = vdwg.mxu0
        %v2728 = vmul.f32 %v2725, 0.35355338
        %v2729 = vsel %vm2457, %v2728, -1e+09
        %v2730 = vsel %vm1207, %v2729, -inf
        %2731 = vmax.xlane.f32.xlu0 %v2730
        %v2732 = vpop.xlane.xlu0 %2731
        %v2733 = vsub.f32 %v2729, %v2732
        %v2734 = vmul.f32 %v2733, 1.442695
        %v2735 = vpow.pop %v2734
        %v2736 = vsel %vm1207, %v2735, 0.0
        %2737 = vadd.xlane.f32.xlu0 %v2736
        %v2738 = vpop.xlane.xlu0 %2737
        %v2739 = vrcp.pop %v2738
        %v2740 = vmul.f32 %v2738, %v2739
        %v2741 = vsub.f32 1.0, %v2740
        %v2742 = vmul.f32 %v2739, %v2741
        %v2743 = vadd.f32 %v2739, %v2742
        %vm2744 = vweird.f32 %v2738
        %vm2745 = vweird.f32 %v2739
        %vm2746 = vmor %vm2744, %vm2745
        %v2747 = vsel %vm2746, %v2739, %v2743
        %v2748 = vand.u32 2147483647, %v2738
        %vm2749 = vcmp.eq.f32.partialorder %v2748, 8.507059e+37
        %v2750 = vand.u32 %v2738, 2147483648
        %v2751 = vor.u32 1.1754944e-38, %v2750
        %v2752 = vsel %vm2749, %v2751, %v2747
        %v2753 = vmul.f32 %v2735, %v2752
        %v2754 = vpack.c.bf16 %v2753, %v2753
        %2755 = vrot.lane.b32.xlu0 %v2486, 72
        %v2756 = vpop.permute.xlu0 %2755
        %v2758 = vsel %vm1207, %v2754, 0
        %v2761 = vsel %vm1259, %v2756, 0
        %2763 = vmatpush.bf16.msra.mxu0 0
        %2764 = vmatpush.bf16.msra.mxu0 0
        %2765 = vmatpush.bf16.msra.mxu0 0
        %2766 = vmatpush.bf16.msra.mxu0 0
        %2767 = vmatpush.bf16.msra.mxu0 0
        %2768 = vmatpush.bf16.msra.mxu0 0
        %2769 = vmatpush.bf16.msra.mxu0 0
        %2770 = vmatpush.bf16.msra.mxu0 %v2761
        %2771 = vmatmul.bf16.gmra.mxu0 %v2758
        %v2772 = vpop.f32.mrf.mxu0
        %v2773 = vadd.f32 0.0, %v2772
        %v2774 = vpop.f32.mrf.mxu0
        %2775 = vdwg.mxu0
        %v2776 = vpack.c.bf16 %v2773, %v2773
        %v2778 = vsel %vm1207, %v2776, 0
        %2780 = vmatpush.bf16.msra.mxu0 0
        %2781 = vmatpush.bf16.msra.mxu0 0
        %2782 = vmatpush.bf16.msra.mxu0 0
        %2783 = vmatpush.bf16.msra.mxu0 0
        %2784 = vmatpush.bf16.msra.mxu0 0
        %2785 = vmatpush.bf16.msra.mxu0 0
        %2786 = vmatpush.bf16.msra.mxu0 0
        %2787 = vmatpush.bf16.msra.mxu0 %v2419
        %2788 = vmatmul.bf16.gmra.mxu0 %v2778
        %v2789 = vpop.f32.mrf.mxu0
        %v2790 = vadd.f32 0.0, %v2789
        %v2791 = vpop.f32.mrf.mxu0
        %2792 = vdwg.mxu0
        %v2793 = vadd.f32 %v2704, %v2790
        %v2795 = vperm.slane %v1145, 0
        %v2797 = vadd.f32 %v2434, %v2795
        %v2798 = vadd.f32 %v2793, %v2795
        %v2799 = vadd.f32 %v1992, %v2797
        %v2800 = vadd.f32 %v1993, %v2798
        %v2801 = vsel %vm1182, %v2799, 0.0
        %2802 = vadd.xlane.f32.xlu0 %v2801
        %v2803 = vpop.xlane.xlu0 %2802
        %v2804 = vsel %vm1182, %v2800, 0.0
        %2805 = vadd.xlane.f32.xlu0 %v2804
        %v2806 = vpop.xlane.xlu0 %2805
        %v2807 = vmul.f32 %v2803, %v1945
        %v2808 = vmul.f32 %v2806, %v1945
        %v2809 = vsub.f32 %v2799, %v2807
        %v2810 = vsub.f32 %v2800, %v2808
        %v2811 = vmul.f32 %v2809, %v2809
        %v2812 = vmul.f32 %v2810, %v2810
        %v2813 = vsel %vm1182, %v2811, 0.0
        %2814 = vadd.xlane.f32.xlu0 %v2813
        %v2815 = vpop.xlane.xlu0 %2814
        %v2816 = vsel %vm1182, %v2812, 0.0
        %2817 = vadd.xlane.f32.xlu0 %v2816
        %v2818 = vpop.xlane.xlu0 %2817
        %v2819 = vmul.f32 %v2815, %v1945
        %v2820 = vmul.f32 %v2818, %v1945
        %v2821 = vadd.f32 %v2819, 1e-05
        %v2822 = vadd.f32 %v2820, 1e-05
        %v2823 = vrsqrt.pop %v2821
        %v2824 = vmul.f32 %v2823, %v2821
        %v2825 = vmul.f32 %v2824, %v2823
        %v2826 = vmul.f32 0.5, %v2825
        %v2827 = vsub.f32 1.5, %v2826
        %v2828 = vmul.f32 %v2823, %v2827
        %vm2829 = vweird.f32 %v2821
        %vm2830 = vweird.f32 %v2823
        %vm2831 = vmor %vm2829, %vm2830
        %v2832 = vsel %vm2831, %v2823, %v2828
        %v2833 = vrsqrt.pop %v2822
        %v2834 = vmul.f32 %v2833, %v2822
        %v2835 = vmul.f32 %v2834, %v2833
        %v2836 = vmul.f32 0.5, %v2835
        %v2837 = vsub.f32 1.5, %v2836
        %v2838 = vmul.f32 %v2833, %v2837
        %vm2839 = vweird.f32 %v2822
        %vm2840 = vweird.f32 %v2833
        %vm2841 = vmor %vm2839, %vm2840
        %v2842 = vsel %vm2841, %v2833, %v2838
        %v2843 = vmul.f32 %v2809, %v2832
        %v2844 = vmul.f32 %v2810, %v2842
        %v2846 = vperm.slane %v1162, 0
        %v2848 = vmul.f32 %v2843, %v2846
        %v2849 = vmul.f32 %v2844, %v2846
        %v2851 = vperm.slane %v1163, 0
        %v2853 = vadd.f32 %v2848, %v2851
        %v2854 = vadd.f32 %v2849, %v2851
        %v2855 = vpack.c.bf16 %v2854, %v2853
        %v2857 = vperm.slane %v1150, 0
        %v2863 = vunpack.c.l.b16 %v1146
        %v2864 = vunpack.c.l.b16 %v1147
        %v2865 = vunpack.c.l.b16 %v1148
        %v2866 = vunpack.c.l.b16 %v1149
        %v2867 = vpack.c.b16 %v2864, %v2863
        %v2868 = vpack.c.b16 %v2866, %v2865
        %v2872 = vsel %vm1182, %v2855, 0
        %2874 = vmatpush.bf16.msra.mxu0 0
        %2875 = vmatpush.bf16.msra.mxu0 0
        %2876 = vmatpush.bf16.msra.mxu0 0
        %2877 = vmatpush.bf16.msra.mxu0 0
        %2878 = vmatpush.bf16.msra.mxu0 0
        %2879 = vmatpush.bf16.msra.mxu0 0
        %2880 = vmatpush.bf16.msra.mxu0 %v2868
        %2881 = vmatpush.bf16.msra.mxu0 %v2867
        %2882 = vmatmul.bf16.gmra.mxu0 %v2872
        %v2883 = vpop.f32.mrf.mxu0
        %v2884 = vadd.f32 %v2857, %v2883
        %v2885 = vpop.f32.mrf.mxu0
        %v2886 = vadd.f32 %v2857, %v2885
        %2887 = vdwg.mxu0
        %v2888 = vmax.f32 %v2884, 0.0
        %v2889 = vmax.f32 %v2886, 0.0
        %v2890 = vpack.c.bf16 %v2889, %v2888
        %v2892 = vperm.slane %v1159, 0
        %v2902 = vunpack.c.l.b16 %v1151
        %v2903 = vunpack.c.l.b16 %v1152
        %v2904 = vunpack.c.l.b16 %v1153
        %v2905 = vunpack.c.l.b16 %v1154
        %v2906 = vunpack.c.l.b16 %v1155
        %v2907 = vunpack.c.l.b16 %v1156
        %v2908 = vunpack.c.l.b16 %v1157
        %v2909 = vunpack.c.l.b16 %v1158
        %v2910 = vpack.c.b16 %v2903, %v2902
        %v2911 = vpack.c.b16 %v2905, %v2904
        %v2912 = vpack.c.b16 %v2907, %v2906
        %v2913 = vpack.c.b16 %v2909, %v2908
        %vm2918 = vcmask 523264
        %v2920 = vsel %vm2918, %v2890, 0
        %2922 = vmatpush.bf16.msra.mxu0 0
        %2923 = vmatpush.bf16.msra.mxu0 0
        %2924 = vmatpush.bf16.msra.mxu0 0
        %2925 = vmatpush.bf16.msra.mxu0 0
        %2926 = vmatpush.bf16.msra.mxu0 %v2913
        %2927 = vmatpush.bf16.msra.mxu0 %v2912
        %2928 = vmatpush.bf16.msra.mxu0 %v2911
        %2929 = vmatpush.bf16.msra.mxu0 %v2910
        %2930 = vmatmul.bf16.gmra.mxu0 %v2920
        %v2931 = vpop.f32.mrf.mxu0
        %v2932 = vadd.f32 %v2892, %v2931
        %v2933 = vpop.f32.mrf.mxu0
        %v2934 = vadd.f32 %v2892, %v2933
        %2935 = vdwg.mxu0
        %v2936 = vadd.f32 %v2853, %v2932
        %v2937 = vadd.f32 %v2854, %v2934
        %v2938 = vsel %vm1182, %v2936, 0.0
        %2939 = vadd.xlane.f32.xlu0 %v2938
        %v2940 = vpop.xlane.xlu0 %2939
        %v2941 = vsel %vm1182, %v2937, 0.0
        %2942 = vadd.xlane.f32.xlu0 %v2941
        %v2943 = vpop.xlane.xlu0 %2942
        %v2944 = vmul.f32 %v2940, %v1945
        %v2945 = vmul.f32 %v2943, %v1945
        %v2946 = vsub.f32 %v2936, %v2944
        %v2947 = vsub.f32 %v2937, %v2945
        %v2948 = vmul.f32 %v2946, %v2946
        %v2949 = vmul.f32 %v2947, %v2947
        %v2950 = vsel %vm1182, %v2948, 0.0
        %2951 = vadd.xlane.f32.xlu0 %v2950
        %v2952 = vpop.xlane.xlu0 %2951
        %v2953 = vsel %vm1182, %v2949, 0.0
        %2954 = vadd.xlane.f32.xlu0 %v2953
        %v2955 = vpop.xlane.xlu0 %2954
        %v2956 = vmul.f32 %v2952, %v1945
        %v2957 = vmul.f32 %v2955, %v1945
        %v2958 = vadd.f32 %v2956, 1e-05
        %v2959 = vadd.f32 %v2957, 1e-05
        %v2960 = vrsqrt.pop %v2958
        %v2961 = vmul.f32 %v2960, %v2958
        %v2962 = vmul.f32 %v2961, %v2960
        %v2963 = vmul.f32 0.5, %v2962
        %v2964 = vsub.f32 1.5, %v2963
        %v2965 = vmul.f32 %v2960, %v2964
        %vm2966 = vweird.f32 %v2958
        %vm2967 = vweird.f32 %v2960
        %vm2968 = vmor %vm2966, %vm2967
        %v2969 = vsel %vm2968, %v2960, %v2965
        %v2970 = vrsqrt.pop %v2959
        %v2971 = vmul.f32 %v2970, %v2959
        %v2972 = vmul.f32 %v2971, %v2970
        %v2973 = vmul.f32 0.5, %v2972
        %v2974 = vsub.f32 1.5, %v2973
        %v2975 = vmul.f32 %v2970, %v2974
        %vm2976 = vweird.f32 %v2959
        %vm2977 = vweird.f32 %v2970
        %vm2978 = vmor %vm2976, %vm2977
        %v2979 = vsel %vm2978, %v2970, %v2975
        %v2980 = vmul.f32 %v2946, %v2969
        %v2981 = vmul.f32 %v2947, %v2979
        %v2983 = vperm.slane %v1164, 0
        %v2985 = vmul.f32 %v2980, %v2983
        %v2986 = vmul.f32 %v2981, %v2983
        %v2988 = vperm.slane %v1165, 0
        %v2990 = vadd.f32 %v2985, %v2988
        %v2991 = vadd.f32 %v2986, %v2988
        %2992 = vst.msk [vmem:[#allocation2] sm:$0xff] %vm1182, %v2990
        %2993 = vst.msk [vmem:[#allocation2 + $0x8] sm:$0xff] %vm1182, %v2991
        %p2994 = scmp.eq.s32.totalorder %s38, 1
        // Predicated region
        $region129: #{transformer_forward.3} parent=123 // pred_check
          %p2995 = pneg %p2994
        $region130: #{transformer_forward.3} parent=123 // pred_check_branch
          %2997 = sbr.rel (%p2995) target = $region132
        $region131: #{transformer_forward.3} parent=123 // pred_region
          %v2998 = vld [vmem:[%s24] sm:$0xf]
          %v2999 = vld [vmem:[%s24 + $0x4] sm:$0xf]
          %v3000 = vld [vmem:[%s24 + $0x8] sm:$0xf]
          %v3001 = vld [vmem:[%s24 + $0xc] sm:$0xf]
          %v3002 = vpack.c.bf16 %v2991, %v2990
          %v3003 = vld [vmem:[%s25] sm:$0x1]
          %v3005 = vperm.slane %v3003, 0
          %v3011 = vunpack.c.l.b16 %v2998
          %v3012 = vunpack.c.l.b16 %v2999
          %v3013 = vunpack.c.l.b16 %v3000
          %v3014 = vunpack.c.l.b16 %v3001
          %v3015 = vpack.c.b16 %v3012, %v3011
          %v3016 = vpack.c.b16 %v3014, %v3013
          %v3020 = vsel %vm1182, %v3002, 0
          %3022 = vmatpush.bf16.msra.mxu0 0
          %3023 = vmatpush.bf16.msra.mxu0 0
          %3024 = vmatpush.bf16.msra.mxu0 0
          %3025 = vmatpush.bf16.msra.mxu0 0
          %3026 = vmatpush.bf16.msra.mxu0 0
          %3027 = vmatpush.bf16.msra.mxu0 0
          %3028 = vmatpush.bf16.msra.mxu0 %v3016
          %3029 = vmatpush.bf16.msra.mxu0 %v3015
          %3030 = vmatmul.bf16.gmra.mxu0 %v3020
          %v3031 = vpop.f32.mrf.mxu0
          %v3032 = vadd.f32 %v3005, %v3031
          %v3033 = vpop.f32.mrf.mxu0
          %v3034 = vadd.f32 %v3005, %v3033
          %3035 = vdwg.mxu0
          %vm3036 = vcmask 130048
          %3037 = vst.msk [vmem:[#allocation3] sm:$0xff] %vm3036, %v3032
          %3038 = vst.msk [vmem:[#allocation3 + $0x8] sm:$0xff] %vm3036, %v3034
        $region132: #{transformer_forward.3} parent=123 // pred_fallthru
          _
        // Predicated region
        $region133: #{transformer_forward.3} parent=123 // pred_check
          %p3039 = pneg %p697
        $region134: #{transformer_forward.3} parent=123 // pred_check_branch
          %3041 = sbr.rel (%p3039) target = $region136
        $region135: #{transformer_forward.3} parent=123 // pred_region
          %3043 = vsyncadd [#allocation4], 0
          %s3044 = sshll.u32 [#allocation3], 4
          %s3045 = int_to_ptr.vmem [resolvable:$true] %s3044
          %s3046 = sshll.u32 %s26, 4
          %s3047 = int_to_ptr.hbm [resolvable:$true] %s3046
          %3052 = dma.vmem_to_hbm [thread:$0]  %s3045, 256, %s3047, [#allocation4], 128, 128, 8
        $region136: #{transformer_forward.3} parent=123 // pred_fallthru
          _
        // Predicated region
        $region137: #{transformer_forward.3} parent=123 // pred_check
          %p3053 = pneg %p697
        $region138: #{transformer_forward.3} parent=123 // pred_check_branch
          %3055 = sbr.rel (%p3053) target = $region140
        $region139: #{transformer_forward.3} parent=123 // pred_region
          %3057 = dma.done [#allocation4], 256
        $region140: #{transformer_forward.3} parent=123 // pred_fallthru
          _
      $region124: #{transformer_forward.3} parent=5 // pred_fallthru
        _
      %p3058 = scmp.le.s32.totalorder 2, %s33
      // Predicated region
      $region141: #{transformer_forward.3} parent=5 // pred_check
        %p3059 = pneg %p3058
      $region142: #{transformer_forward.3} parent=5 // pred_check_branch
        %3061 = sbr.rel (%p3059) target = $region144
      $region143: #{transformer_forward.3} parent=5 // pred_region
        %s3062 = ssub.s32 %s33, 2
      $region144: #{transformer_forward.3} parent=5 // pred_fallthru
        _
    $region6: #{transformer_forward.3} parent=1 // loop_footer
      %s37 = sadd.s32 1, %s33
    $region7: #{transformer_forward.3} parent=1 // loop_footer_branch
      %32 = sbr.rel target = $region3
    $region8: #{transformer_forward.3} parent=1 // loop_exit
      _
    %3063 = vsyncpa [#allocation4], 1
    %s3064 = scalar_lea.sflag [#allocation4], 1
    %3065 = vsyncpa %s3064, 1

</llo_original>
